<compile_context>
chip_gen: v7x
topology: tpu7x:2x2x1
jax: 0.10.0
libtpu: 0.0.40
codegen_flags: <defaults>
</compile_context>

<pallas_src>
import functools
import math

import jax
import jax.numpy as jnp
from jax.experimental import pallas as pl
from jax.experimental.pallas import tpu as pltpu


# ----------------------------------------------------------------------------
# Kernel 1: all-heads qkv 1x1 conv.  K = C is tiny, so use VPU broadcast-FMA
# outer products instead of an almost-idle MXU contraction.  Lane-dense HW out.
# ----------------------------------------------------------------------------
def _qkv_conv_kernel(x_ref, w_ref, b_ref, o_ref):
    x = x_ref[0]                                  # (C, HW)
    C = x.shape[0]
    O = w_ref.shape[0]
    rc = math.gcd(O, 64)                          # output-row chunk (bounds vregs)
    for o0 in range(0, O, rc):
        w = w_ref[o0:o0 + rc, :]                  # (rc, C)
        acc = w[:, 0:1] * x[0:1, :] + b_ref[o0:o0 + rc, :]
        for c in range(1, C):
            acc = acc + w[:, c:c + 1] * x[c:c + 1, :]
        o_ref[0, o0:o0 + rc, :] = acc.astype(o_ref.dtype)


# ----------------------------------------------------------------------------
# Kernel 2: fused Nystrom attention for ALL heads of one batch element,
# plus the folded (out_transform -> concat -> out_blend) projection.
# grid = (batch,), marked "parallel".
# ----------------------------------------------------------------------------
def _nystrom_fused_kernel(qkv_ref, p_ref, wexp_ref, bias_ref, o_ref, *,
                          num_landmarks, embed_dim):
    L = num_landmarks
    E = embed_dim
    nh = qkv_ref.shape[1]
    CG = wexp_ref.shape[1]                        # C * (HW // E)
    f32 = jnp.float32

    mm = lambda a, b: jnp.dot(a, b, preferred_element_type=f32)

    def mm_k(a, b):
        # (m, L) @ (L, n) on the VPU via L broadcast-FMA outer products:
        # keeps K=4 contractions off the MXU (which would pad K to 128/256).
        acc = a[:, 0:1] * b[0:1, :]
        for t in range(1, a.shape[1]):
            acc = acc + a[:, t:t + 1] * b[t:t + 1, :]
        return acc

    def softmax(x, axis, approx=True):
        m = jnp.max(x, axis=axis, keepdims=True)
        e = jnp.exp(x - m)
        s = jnp.sum(e, axis=axis, keepdims=True)
        if approx:
            return e * pl.reciprocal(s, approx=True)   # EUP slot, otherwise idle
        return e / s

    # identity + scaled copies for Newton-Schulz, hoisted out of all loops
    ri = jax.lax.broadcasted_iota(jnp.int32, (L, L), 0)
    ci = jax.lax.broadcasted_iota(jnp.int32, (L, L), 1)
    eye = jnp.where(ri == ci, 1.0, 0.0).astype(f32)
    i7, i13, i15 = 7.0 * eye, 13.0 * eye, 15.0 * eye

    p_avg = p_ref[...]                            # (L, HW) constant averaging matrix
    zero_le = jnp.zeros((L, E), f32)

    y_acc = bias_ref[...]                         # fused out/blend bias, (CG, E)

    for h in range(nh):                           # static unroll; nh is small
        qkv = qkv_ref[0, h]                       # (HW, 3E): PyTorch raw-reshape view
        wexp = wexp_ref[h]                        # (CG, HW)

        # landmark means for q and k in ONE matmul; slice only the tiny result.
        land = mm(p_avg, qkv)                     # (L, 3E)
        q_land = land[:, 0:E]
        k_land = land[:, E:2 * E]

        # merged k1/k3 logits: one trans-B matmul against the whole qkv block
        # (never lane-slice the big (HW, 3E) array into q / k / v).
        lhs = jnp.concatenate(
            [jnp.concatenate([k_land, zero_le, zero_le], axis=1),   # -> k_land @ q.T
             jnp.concatenate([zero_le, q_land, zero_le], axis=1)],  # -> q_land @ k.T
            axis=0)                               # (2L, 3E)
        logits = pl.dot(lhs, qkv, trans_b=True)   # (2L, HW), MXU trans-B path

        k1t = softmax(logits[0:L], axis=1)        # (L, HW) == softmax(q@k_land.T, -2).T
        k3 = softmax(logits[L:2 * L], axis=0)     # (L, HW)

        # 4x4 landmark kernel + Newton-Schulz pseudo-inverse (VPU only).
        # Exact divide here: it feeds the ill-conditioned 6-step pinv where an
        # approx-reciprocal perturbation would be amplified; it is only 4 lanes.
        k2 = softmax(pl.dot(q_land, k_land, trans_b=True), axis=0, approx=False)
        ka = jnp.abs(k2)
        v0 = jnp.max(jnp.sum(ka, axis=0, keepdims=True), axis=1, keepdims=True)
        vi = jnp.max(jnp.sum(ka, axis=1, keepdims=True), axis=0, keepdims=True)
        z = jnp.transpose(k2) * pl.reciprocal(v0 * vi, approx=True)
        for _ in range(6):
            kz = mm_k(k2, z)
            z = 0.25 * mm_k(z, i13 - mm_k(kz, i15 - mm_k(kz, i7 - kz)))
        k2_inv = z

        # stacked final contraction against the whole qkv block:
        #   [wexp ; k3] @ qkv -> rows 0:CG = wexp@{q,k,v}, rows CG: = k3@{q,k,v}
        # (k3 placed after wexp so both pieces start sublane-aligned); only the
        # small (CG+L, 3E) result is lane-sliced for the v columns.
        stacked = jnp.concatenate([wexp, k3], axis=0)        # (CG + L, HW)
        prod = mm(stacked, qkv)                              # (CG + L, 3E)
        wv = prod[0:CG, 2 * E:3 * E]                         # (CG, E) = wexp @ v
        kv = prod[CG:CG + L, 2 * E:3 * E]                    # (L, E)  = k3 @ v

        # out = k1 @ (k2_inv @ (k3 @ v)) + v ;   y = Wexp @ out
        w2 = mm_k(k2_inv, kv)                                # (L, E)   VPU
        wk1 = pl.dot(wexp, k1t, trans_b=True)                # (CG, L)  = Wexp @ k1
        y_acc = y_acc + mm_k(wk1, w2) + wv                   # (CG, E)  VPU finish

    o_ref[0] = y_acc.astype(o_ref.dtype)          # single write per batch step


# ----------------------------------------------------------------------------
# Module forward: 2 pallas_calls + XLA reshapes reproducing the raw PyTorch
# channel/spatial-mixing views.
# ----------------------------------------------------------------------------
def nystrom_multihead_forward(x, params, embed_dim, num_landmarks=4):
    N, C, H, W = x.shape
    HW = H * W
    E = embed_dim
    L = num_landmarks
    heads = params["heads"]
    nh = len(heads)
    assert HW % E == 0 and HW % L == 0
    G = HW // E
    f32 = jnp.float32

    # ---- fold weights (tiny, plain JAX under jit) ----
    qkv_w_all = jnp.concatenate([p["qkv_w"] for p in heads], axis=0)            # (nh*3E, C)
    qkv_b_all = jnp.concatenate([p["qkv_b"] for p in heads], axis=0)[:, None]   # (nh*3E, 1)

    seg = HW // L
    p_avg = jnp.kron(jnp.eye(L, dtype=f32), jnp.ones((1, seg), f32)) / (seg * math.sqrt(HW))

    eye_g = jnp.eye(G, dtype=f32)
    blend_w, blend_b = params["blend_w"], params["blend_b"]
    wexp_list = []
    fused_b = blend_b
    for hh, p in enumerate(heads):
        bw = blend_w[:, hh * C:(hh + 1) * C]                 # (C, C)
        fw = bw @ p["out_w"]                                 # (C, E)
        wexp_list.append(jnp.kron(fw, eye_g))                # (C*G, HW)
        fused_b = fused_b + bw @ p["out_b"]
    wexp_all = jnp.stack(wexp_list, axis=0)                  # (nh, C*G, HW)
    bias_exp = jnp.tile(jnp.repeat(fused_b, G)[:, None], (1, E))   # (C*G, E)

    # ---- kernel 1: all-heads qkv conv (VPU outer products, lane-dense HW) ----
    x_cm = x.reshape(N, C, HW)
    qkv_cm = pl.pallas_call(
        _qkv_conv_kernel,
        out_shape=jax.ShapeDtypeStruct((N, nh * 3 * E, HW), f32),
        grid=(N,),
        in_specs=[
            pl.BlockSpec((1, C, HW), lambda n: (n, 0, 0)),
            pl.BlockSpec((nh * 3 * E, C), lambda n: (0, 0)),
            pl.BlockSpec((nh * 3 * E, 1), lambda n: (0, 0)),
        ],
        out_specs=pl.BlockSpec((1, nh * 3 * E, HW), lambda n: (n, 0, 0)),
        compiler_params=pltpu.CompilerParams(dimension_semantics=("parallel",)),
    )(x_cm, qkv_w_all, qkv_b_all)

    # reference's raw per-head (N, 3E, H, W) -> (N, HW, 3E) reshape
    # (channel/spatial mixing is intended); left to XLA between the kernels.
    qkv_sm = qkv_cm.reshape(N, nh, HW, 3 * E)

    # ---- kernel 2: fused attention + projection, all heads in-body ----
    kern = functools.partial(_nystrom_fused_kernel, num_landmarks=L, embed_dim=E)
    out = pl.pallas_call(
        kern,
        out_shape=jax.ShapeDtypeStruct((N, C * G, E), f32),
        grid=(N,),
        in_specs=[
            pl.BlockSpec((1, nh, HW, 3 * E), lambda n: (n, 0, 0, 0)),
            pl.BlockSpec((L, HW), lambda n: (0, 0)),
            pl.BlockSpec((nh, C * G, HW), lambda n: (0, 0, 0)),
            pl.BlockSpec((C * G, E), lambda n: (0, 0)),
        ],
        out_specs=pl.BlockSpec((1, C * G, E), lambda n: (n, 0, 0)),
        compiler_params=pltpu.CompilerParams(dimension_semantics=("parallel",)),
    )(qkv_sm, p_avg, wexp_all, bias_exp)

    # (N, C*G, E) flat == (N, C, HW) == (N, C, H, W)
    return out.reshape(N, C, H, W)


# ----------------------------------------------------------------------------
# Pure-JAX reference (mirrors the PyTorch module op-for-op) for a sanity check
# ----------------------------------------------------------------------------
def _reference_forward(x, params, embed_dim, num_landmarks):
    N, C, H, W = x.shape
    HW = H * W
    E = embed_dim
    L = num_landmarks
    head_outs = []
    for p in params["heads"]:
        qkv = jnp.einsum("oc,nchw->nohw", p["qkv_w"], x) + p["qkv_b"][None, :, None, None]
        qkv_flat = qkv.reshape(N, HW, 3 * E)
        q, k, v = jnp.split(qkv_flat, 3, axis=-1)
        q_land = q.reshape(N, L, HW // L, E).mean(axis=-2) / math.sqrt(HW)
        k_land = k.reshape(N, L, HW // L, E).mean(axis=-2) / math.sqrt(HW)
        k1 = jax.nn.softmax(jnp.einsum("nie,nle->nil", q, k_land), axis=-2)
        k2 = jax.nn.softmax(jnp.einsum("nae,nbe->nab", q_land, k_land), axis=-2)
        k3 = jax.nn.softmax(jnp.einsum("nle,nie->nli", q_land, k), axis=-2)
        I = jnp.eye(L, dtype=x.dtype)
        K = k2
        KA = jnp.abs(K)
        V0 = jnp.max(jnp.sum(KA, axis=-2, keepdims=True), axis=-1, keepdims=True)
        VI = jnp.max(jnp.sum(KA, axis=-1, keepdims=True), axis=-2, keepdims=True)
        V = jnp.swapaxes(K, -1, -2) / (V0 * VI)
        for _ in range(6):
            KV = K @ V
            V = 0.25 * V @ (13 * I - KV @ (15 * I - KV @ (7 * I - KV)))
        out = (k1 @ V) @ (k3 @ v) + v
        out_nchw = out.reshape(N, E, H, W)
        y = jnp.einsum("ce,nehw->nchw", p["out_w"], out_nchw) + p["out_b"][None, :, None, None]
        head_outs.append(y)
    cat = jnp.concatenate(head_outs, axis=1)
    return (jnp.einsum("oc,nchw->nohw", params["blend_w"], cat)
            + params["blend_b"][None, :, None, None])


# ----------------------------------------------------------------------------
# Deterministic parameter init (synthetic; shapes from the module __init__)
# ----------------------------------------------------------------------------
def init_params(key, in_channels, embed_dim, num_heads):
    heads = []
    for _ in range(num_heads):
        key, k1, k2, k3, k4 = jax.random.split(key, 5)
        heads.append(
            {
                "qkv_w": jax.random.normal(k1, (3 * embed_dim, in_channels), jnp.float32)
                / math.sqrt(in_channels),
                "qkv_b": jax.random.normal(k2, (3 * embed_dim,), jnp.float32) * 0.01,
                "out_w": jax.random.normal(k3, (in_channels, embed_dim), jnp.float32)
                / math.sqrt(embed_dim),
                "out_b": jax.random.normal(k4, (in_channels,), jnp.float32) * 0.01,
            }
        )
    key, k5, k6 = jax.random.split(key, 3)
    return {
        "heads": heads,
        "blend_w": jax.random.normal(
            k5, (in_channels, in_channels * num_heads), jnp.float32
        )
        / math.sqrt(in_channels * num_heads),
        "blend_b": jax.random.normal(k6, (in_channels,), jnp.float32) * 0.01,
    }


if __name__ == "__main__":
    in_channels, embed_dim, num_heads = 4, 32, 2
    N, H, W = 2, 16, 16  # H*W = 256: divisible by embed_dim (32) and num_landmarks (4)

    key = jax.random.PRNGKey(0)
    key, xk = jax.random.split(key)
    x = jax.random.normal(xk, (N, in_channels, H, W), jnp.float32)
    params = init_params(key, in_channels, embed_dim, num_heads)

    fwd = jax.jit(
        functools.partial(nystrom_multihead_forward, embed_dim=embed_dim, num_landmarks=4)
    )
    out = fwd(x, params)
    jax.block_until_ready(out)
    assert out.shape == (N, in_channels, H, W), out.shape

    ref = jax.jit(
        functools.partial(_reference_forward, embed_dim=embed_dim, num_landmarks=4)
    )(x, params)
    err = float(jnp.max(jnp.abs(out - ref)))
    assert err < 5e-3, f"max abs diff vs reference: {err}"
    print("KERNEL_OK")
</pallas_src>

<mosaic_0001>
module attributes {stable_mosaic.version = 11 : i64} {
  func.func @_qkv_conv_kernel(%arg0: i32, %arg1: memref<1x4x256xf32, #tpu.memory_space<vmem>>, %arg2: memref<192x4xf32, #tpu.memory_space<vmem>>, %arg3: memref<192x1xf32, #tpu.memory_space<vmem>>, %arg4: memref<1x192x256xf32, #tpu.memory_space<vmem>>) attributes {dimension_semantics = [#tpu.dimension_semantics<parallel>], iteration_bounds = array<i64: 2>, scalar_prefetch = 0 : i64, scratch_operands = 0 : i64, tpu.core_type = #tpu.core_type<tc>, window_params = [{transform_indices = @transform_0, window_bounds = array<i64: 1, 4, 256>}, {pipeline_mode = #tpu.pipeline_mode<synchronous>, transform_indices = @transform_1, window_bounds = array<i64: 192, 4>}, {pipeline_mode = #tpu.pipeline_mode<synchronous>, transform_indices = @transform_2, window_bounds = array<i64: 192, 1>}, {transform_indices = @transform_3, window_bounds = array<i64: 1, 192, 256>}]} {
    %c0 = arith.constant 0 : index
    %c0_0 = arith.constant 0 : index
    %c0_1 = arith.constant 0 : index
    %0 = vector.load %arg1[%c0, %c0_0, %c0_1] : memref<1x4x256xf32, #tpu.memory_space<vmem>>, vector<1x4x256xf32>
    %1 = vector.shape_cast %0 : vector<1x4x256xf32> to vector<4x256xf32>
    %c0_2 = arith.constant 0 : index
    %c0_3 = arith.constant 0 : index
    %2 = vector.load %arg2[%c0_2, %c0_3] : memref<192x4xf32, #tpu.memory_space<vmem>>, vector<64x4xf32>
    %3 = vector.extract_strided_slice %2 {offsets = [0, 0], sizes = [64, 1], strides = [1, 1]} : vector<64x4xf32> to vector<64x1xf32>
    %4 = vector.extract_strided_slice %1 {offsets = [0, 0], sizes = [1, 256], strides = [1, 1]} : vector<4x256xf32> to vector<1x256xf32>
    %5 = vector.broadcast %3 : vector<64x1xf32> to vector<64x256xf32>
    %6 = vector.broadcast %4 : vector<1x256xf32> to vector<64x256xf32>
    %7 = arith.mulf %5, %6 : vector<64x256xf32>
    %c0_4 = arith.constant 0 : index
    %c0_5 = arith.constant 0 : index
    %8 = vector.load %arg3[%c0_4, %c0_5] : memref<192x1xf32, #tpu.memory_space<vmem>>, vector<64x1xf32>
    %9 = vector.broadcast %8 : vector<64x1xf32> to vector<64x256xf32>
    %10 = arith.addf %7, %9 : vector<64x256xf32>
    %11 = vector.extract_strided_slice %2 {offsets = [0, 1], sizes = [64, 1], strides = [1, 1]} : vector<64x4xf32> to vector<64x1xf32>
    %12 = vector.extract_strided_slice %1 {offsets = [1, 0], sizes = [1, 256], strides = [1, 1]} : vector<4x256xf32> to vector<1x256xf32>
    %13 = vector.broadcast %11 : vector<64x1xf32> to vector<64x256xf32>
    %14 = vector.broadcast %12 : vector<1x256xf32> to vector<64x256xf32>
    %15 = arith.mulf %13, %14 : vector<64x256xf32>
    %16 = arith.addf %10, %15 : vector<64x256xf32>
    %17 = vector.extract_strided_slice %2 {offsets = [0, 2], sizes = [64, 1], strides = [1, 1]} : vector<64x4xf32> to vector<64x1xf32>
    %18 = vector.extract_strided_slice %1 {offsets = [2, 0], sizes = [1, 256], strides = [1, 1]} : vector<4x256xf32> to vector<1x256xf32>
    %19 = vector.broadcast %17 : vector<64x1xf32> to vector<64x256xf32>
    %20 = vector.broadcast %18 : vector<1x256xf32> to vector<64x256xf32>
    %21 = arith.mulf %19, %20 : vector<64x256xf32>
    %22 = arith.addf %16, %21 : vector<64x256xf32>
    %23 = vector.extract_strided_slice %2 {offsets = [0, 3], sizes = [64, 1], strides = [1, 1]} : vector<64x4xf32> to vector<64x1xf32>
    %24 = vector.extract_strided_slice %1 {offsets = [3, 0], sizes = [1, 256], strides = [1, 1]} : vector<4x256xf32> to vector<1x256xf32>
    %25 = vector.broadcast %23 : vector<64x1xf32> to vector<64x256xf32>
    %26 = vector.broadcast %24 : vector<1x256xf32> to vector<64x256xf32>
    %27 = arith.mulf %25, %26 : vector<64x256xf32>
    %28 = arith.addf %22, %27 : vector<64x256xf32>
    %c0_6 = arith.constant 0 : index
    %c0_7 = arith.constant 0 : index
    %c0_8 = arith.constant 0 : index
    %29 = vector.load %arg4[%c0_6, %c0_7, %c0_8] : memref<1x192x256xf32, #tpu.memory_space<vmem>>, vector<1x64x256xf32>
    %30 = vector.shape_cast %29 : vector<1x64x256xf32> to vector<64x256xf32>
    %31 = vector.shape_cast %28 : vector<64x256xf32> to vector<1x64x256xf32>
    tpu.vector_store %arg4[%c0_6, %c0_7, %c0_8], %31 {strides = array<i32>} : memref<1x192x256xf32, #tpu.memory_space<vmem>>, vector<1x64x256xf32>,
    %c64 = arith.constant 64 : index
    %c0_9 = arith.constant 0 : index
    %32 = vector.load %arg2[%c64, %c0_9] : memref<192x4xf32, #tpu.memory_space<vmem>>, vector<64x4xf32>
    %33 = vector.extract_strided_slice %32 {offsets = [0, 0], sizes = [64, 1], strides = [1, 1]} : vector<64x4xf32> to vector<64x1xf32>
    %34 = vector.extract_strided_slice %1 {offsets = [0, 0], sizes = [1, 256], strides = [1, 1]} : vector<4x256xf32> to vector<1x256xf32>
    %35 = vector.broadcast %33 : vector<64x1xf32> to vector<64x256xf32>
    %36 = vector.broadcast %34 : vector<1x256xf32> to vector<64x256xf32>
    %37 = arith.mulf %35, %36 : vector<64x256xf32>
    %c64_10 = arith.constant 64 : index
    %c0_11 = arith.constant 0 : index
    %38 = vector.load %arg3[%c64_10, %c0_11] : memref<192x1xf32, #tpu.memory_space<vmem>>, vector<64x1xf32>
    %39 = vector.broadcast %38 : vector<64x1xf32> to vector<64x256xf32>
    %40 = arith.addf %37, %39 : vector<64x256xf32>
    %41 = vector.extract_strided_slice %32 {offsets = [0, 1], sizes = [64, 1], strides = [1, 1]} : vector<64x4xf32> to vector<64x1xf32>
    %42 = vector.extract_strided_slice %1 {offsets = [1, 0], sizes = [1, 256], strides = [1, 1]} : vector<4x256xf32> to vector<1x256xf32>
    %43 = vector.broadcast %41 : vector<64x1xf32> to vector<64x256xf32>
    %44 = vector.broadcast %42 : vector<1x256xf32> to vector<64x256xf32>
    %45 = arith.mulf %43, %44 : vector<64x256xf32>
    %46 = arith.addf %40, %45 : vector<64x256xf32>
    %47 = vector.extract_strided_slice %32 {offsets = [0, 2], sizes = [64, 1], strides = [1, 1]} : vector<64x4xf32> to vector<64x1xf32>
    %48 = vector.extract_strided_slice %1 {offsets = [2, 0], sizes = [1, 256], strides = [1, 1]} : vector<4x256xf32> to vector<1x256xf32>
    %49 = vector.broadcast %47 : vector<64x1xf32> to vector<64x256xf32>
    %50 = vector.broadcast %48 : vector<1x256xf32> to vector<64x256xf32>
    %51 = arith.mulf %49, %50 : vector<64x256xf32>
    %52 = arith.addf %46, %51 : vector<64x256xf32>
    %53 = vector.extract_strided_slice %32 {offsets = [0, 3], sizes = [64, 1], strides = [1, 1]} : vector<64x4xf32> to vector<64x1xf32>
    %54 = vector.extract_strided_slice %1 {offsets = [3, 0], sizes = [1, 256], strides = [1, 1]} : vector<4x256xf32> to vector<1x256xf32>
    %55 = vector.broadcast %53 : vector<64x1xf32> to vector<64x256xf32>
    %56 = vector.broadcast %54 : vector<1x256xf32> to vector<64x256xf32>
    %57 = arith.mulf %55, %56 : vector<64x256xf32>
    %58 = arith.addf %52, %57 : vector<64x256xf32>
    %c0_12 = arith.constant 0 : index
    %c64_13 = arith.constant 64 : index
    %c0_14 = arith.constant 0 : index
    %59 = vector.load %arg4[%c0_12, %c64_13, %c0_14] : memref<1x192x256xf32, #tpu.memory_space<vmem>>, vector<1x64x256xf32>
    %60 = vector.shape_cast %59 : vector<1x64x256xf32> to vector<64x256xf32>
    %61 = vector.shape_cast %58 : vector<64x256xf32> to vector<1x64x256xf32>
    tpu.vector_store %arg4[%c0_12, %c64_13, %c0_14], %61 {strides = array<i32>} : memref<1x192x256xf32, #tpu.memory_space<vmem>>, vector<1x64x256xf32>,
    %c128 = arith.constant 128 : index
    %c0_15 = arith.constant 0 : index
    %62 = vector.load %arg2[%c128, %c0_15] : memref<192x4xf32, #tpu.memory_space<vmem>>, vector<64x4xf32>
    %63 = vector.extract_strided_slice %62 {offsets = [0, 0], sizes = [64, 1], strides = [1, 1]} : vector<64x4xf32> to vector<64x1xf32>
    %64 = vector.extract_strided_slice %1 {offsets = [0, 0], sizes = [1, 256], strides = [1, 1]} : vector<4x256xf32> to vector<1x256xf32>
    %65 = vector.broadcast %63 : vector<64x1xf32> to vector<64x256xf32>
    %66 = vector.broadcast %64 : vector<1x256xf32> to vector<64x256xf32>
    %67 = arith.mulf %65, %66 : vector<64x256xf32>
    %c128_16 = arith.constant 128 : index
    %c0_17 = arith.constant 0 : index
    %68 = vector.load %arg3[%c128_16, %c0_17] : memref<192x1xf32, #tpu.memory_space<vmem>>, vector<64x1xf32>
    %69 = vector.broadcast %68 : vector<64x1xf32> to vector<64x256xf32>
    %70 = arith.addf %67, %69 : vector<64x256xf32>
    %71 = vector.extract_strided_slice %62 {offsets = [0, 1], sizes = [64, 1], strides = [1, 1]} : vector<64x4xf32> to vector<64x1xf32>
    %72 = vector.extract_strided_slice %1 {offsets = [1, 0], sizes = [1, 256], strides = [1, 1]} : vector<4x256xf32> to vector<1x256xf32>
    %73 = vector.broadcast %71 : vector<64x1xf32> to vector<64x256xf32>
    %74 = vector.broadcast %72 : vector<1x256xf32> to vector<64x256xf32>
    %75 = arith.mulf %73, %74 : vector<64x256xf32>
    %76 = arith.addf %70, %75 : vector<64x256xf32>
    %77 = vector.extract_strided_slice %62 {offsets = [0, 2], sizes = [64, 1], strides = [1, 1]} : vector<64x4xf32> to vector<64x1xf32>
    %78 = vector.extract_strided_slice %1 {offsets = [2, 0], sizes = [1, 256], strides = [1, 1]} : vector<4x256xf32> to vector<1x256xf32>
    %79 = vector.broadcast %77 : vector<64x1xf32> to vector<64x256xf32>
    %80 = vector.broadcast %78 : vector<1x256xf32> to vector<64x256xf32>
    %81 = arith.mulf %79, %80 : vector<64x256xf32>
    %82 = arith.addf %76, %81 : vector<64x256xf32>
    %83 = vector.extract_strided_slice %62 {offsets = [0, 3], sizes = [64, 1], strides = [1, 1]} : vector<64x4xf32> to vector<64x1xf32>
    %84 = vector.extract_strided_slice %1 {offsets = [3, 0], sizes = [1, 256], strides = [1, 1]} : vector<4x256xf32> to vector<1x256xf32>
    %85 = vector.broadcast %83 : vector<64x1xf32> to vector<64x256xf32>
    %86 = vector.broadcast %84 : vector<1x256xf32> to vector<64x256xf32>
    %87 = arith.mulf %85, %86 : vector<64x256xf32>
    %88 = arith.addf %82, %87 : vector<64x256xf32>
    %c0_18 = arith.constant 0 : index
    %c128_19 = arith.constant 128 : index
    %c0_20 = arith.constant 0 : index
    %89 = vector.load %arg4[%c0_18, %c128_19, %c0_20] : memref<1x192x256xf32, #tpu.memory_space<vmem>>, vector<1x64x256xf32>
    %90 = vector.shape_cast %89 : vector<1x64x256xf32> to vector<64x256xf32>
    %91 = vector.shape_cast %88 : vector<64x256xf32> to vector<1x64x256xf32>
    tpu.vector_store %arg4[%c0_18, %c128_19, %c0_20], %91 {strides = array<i32>} : memref<1x192x256xf32, #tpu.memory_space<vmem>>, vector<1x64x256xf32>,
    return
  }
  func.func @transform_0(%arg0: i32) -> (i32, i32, i32) {
    %c0_i32 = arith.constant 0 : i32
    %c0_i32_0 = arith.constant 0 : i32
    %c0_i32_1 = arith.constant 0 : i32
    return %arg0, %c0_i32, %c0_i32_0 : i32, i32, i32
  }
  func.func @transform_1(%arg0: i32) -> (i32, i32) {
    %c0_i32 = arith.constant 0 : i32
    %c0_i32_0 = arith.constant 0 : i32
    %c0_i32_1 = arith.constant 0 : i32
    return %c0_i32, %c0_i32_0 : i32, i32
  }
  func.func @transform_2(%arg0: i32) -> (i32, i32) {
    %c0_i32 = arith.constant 0 : i32
    %c0_i32_0 = arith.constant 0 : i32
    %c0_i32_1 = arith.constant 0 : i32
    return %c0_i32, %c0_i32_0 : i32, i32
  }
  func.func @transform_3(%arg0: i32) -> (i32, i32, i32) {
    %c0_i32 = arith.constant 0 : i32
    %c0_i32_0 = arith.constant 0 : i32
    %c0_i32_1 = arith.constant 0 : i32
    return %arg0, %c0_i32, %c0_i32_0 : i32, i32, i32
  }
}

module attributes {stable_mosaic.version = 11 : i64} {
  func.func @_nystrom_fused_kernel(%arg0: i32, %arg1: memref<1x2x256x96xf32, #tpu.memory_space<vmem>>, %arg2: memref<4x256xf32, #tpu.memory_space<vmem>>, %arg3: memref<2x32x256xf32, #tpu.memory_space<vmem>>, %arg4: memref<32x32xf32, #tpu.memory_space<vmem>>, %arg5: memref<1x32x32xf32, #tpu.memory_space<vmem>>) attributes {dimension_semantics = [#tpu.dimension_semantics<parallel>], iteration_bounds = array<i64: 2>, scalar_prefetch = 0 : i64, scratch_operands = 0 : i64, tpu.core_type = #tpu.core_type<tc>, window_params = [{transform_indices = @transform_0, window_bounds = array<i64: 1, 2, 256, 96>}, {pipeline_mode = #tpu.pipeline_mode<synchronous>, transform_indices = @transform_1, window_bounds = array<i64: 4, 256>}, {pipeline_mode = #tpu.pipeline_mode<synchronous>, transform_indices = @transform_2, window_bounds = array<i64: 2, 32, 256>}, {pipeline_mode = #tpu.pipeline_mode<synchronous>, transform_indices = @transform_3, window_bounds = array<i64: 32, 32>}, {transform_indices = @transform_4, window_bounds = array<i64: 1, 32, 32>}]} {
    %0 = tpu.iota {dimensions = array<i32: 0>} : vector<4x4xi32>
    %1 = tpu.iota {dimensions = array<i32: 1>} : vector<4x4xi32>
    %2 = arith.cmpi eq, %0, %1 : vector<4x4xi32>
    %cst = arith.constant 1.000000e+00 : f32
    %cst_0 = arith.constant 0.000000e+00 : f32
    %3 = vector.broadcast %cst : f32 to vector<4x4xf32>
    %4 = vector.broadcast %cst_0 : f32 to vector<4x4xf32>
    %5 = arith.select %2, %3, %4 : vector<4x4xi1>, vector<4x4xf32>
    %cst_1 = arith.constant 7.000000e+00 : f32
    %6 = vector.broadcast %cst_1 : f32 to vector<4x4xf32>
    %7 = arith.mulf %6, %5 : vector<4x4xf32>
    %cst_2 = arith.constant 1.300000e+01 : f32
    %8 = vector.broadcast %cst_2 : f32 to vector<4x4xf32>
    %9 = arith.mulf %8, %5 : vector<4x4xf32>
    %cst_3 = arith.constant 1.500000e+01 : f32
    %10 = vector.broadcast %cst_3 : f32 to vector<4x4xf32>
    %11 = arith.mulf %10, %5 : vector<4x4xf32>
    %c0 = arith.constant 0 : index
    %c0_4 = arith.constant 0 : index
    %12 = vector.load %arg2[%c0, %c0_4] : memref<4x256xf32, #tpu.memory_space<vmem>>, vector<4x256xf32>
    %cst_5 = arith.constant 0.000000e+00 : f32
    %13 = vector.broadcast %cst_5 : f32 to vector<4x32xf32>
    %c0_6 = arith.constant 0 : index
    %c0_7 = arith.constant 0 : index
    %14 = vector.load %arg4[%c0_6, %c0_7] : memref<32x32xf32, #tpu.memory_space<vmem>>, vector<32x32xf32>
    %c0_8 = arith.constant 0 : index
    %c0_9 = arith.constant 0 : index
    %c0_10 = arith.constant 0 : index
    %c0_11 = arith.constant 0 : index
    %15 = vector.load %arg1[%c0_8, %c0_9, %c0_10, %c0_11] : memref<1x2x256x96xf32, #tpu.memory_space<vmem>>, vector<1x1x256x96xf32>
    %16 = vector.shape_cast %15 : vector<1x1x256x96xf32> to vector<256x96xf32>
    %c0_12 = arith.constant 0 : index
    %c0_13 = arith.constant 0 : index
    %c0_14 = arith.constant 0 : index
    %17 = vector.load %arg3[%c0_12, %c0_13, %c0_14] : memref<2x32x256xf32, #tpu.memory_space<vmem>>, vector<1x32x256xf32>
    %18 = vector.shape_cast %17 : vector<1x32x256xf32> to vector<32x256xf32>
    %cst_15 = arith.constant dense<0.000000e+00> : vector<4x96xf32>
    %19 = tpu.matmul %12, %16, %cst_15 {dimension_numbers = #tpu.dot_dimension_numbers<[1], [0], [0], [1], [0, 0, 1, 1], [], []>} : vector<4x256xf32>, vector<256x96xf32>, vector<4x96xf32> -> vector<4x96xf32>
    %20 = vector.extract_strided_slice %19 {offsets = [0, 0], sizes = [4, 32], strides = [1, 1]} : vector<4x96xf32> to vector<4x32xf32>
    %21 = vector.extract_strided_slice %19 {offsets = [0, 32], sizes = [4, 32], strides = [1, 1]} : vector<4x96xf32> to vector<4x32xf32>
    %22 = tpu.concatenate %21, %13, %13 in 1 : vector<4x32xf32>, vector<4x32xf32>, vector<4x32xf32> -> vector<4x96xf32>
    %23 = tpu.concatenate %13, %20, %13 in 1 : vector<4x32xf32>, vector<4x32xf32>, vector<4x32xf32> -> vector<4x96xf32>
    %24 = tpu.concatenate %22, %23 in 0 : vector<4x96xf32>, vector<4x96xf32> -> vector<8x96xf32>
    %cst_16 = arith.constant dense<0.000000e+00> : vector<8x256xf32>
    %25 = tpu.matmul %24, %16, %cst_16 {dimension_numbers = #tpu.dot_dimension_numbers<[1], [1], [0], [0], [0, 0, 1, 0], [], []>} : vector<8x96xf32>, vector<256x96xf32>, vector<8x256xf32> -> vector<8x256xf32>
    %26 = vector.extract_strided_slice %25 {offsets = [0, 0], sizes = [4, 256], strides = [1, 1]} : vector<8x256xf32> to vector<4x256xf32>
    %cst_17 = arith.constant dense<0xFF800000> : vector<4xf32>
    %27 = vector.multi_reduction <maximumf>, %26, %cst_17 [1] : vector<4x256xf32> to vector<4xf32>
    %28 = vector.shape_cast %27 : vector<4xf32> to vector<4x1xf32>
    %29 = vector.broadcast %28 : vector<4x1xf32> to vector<4x256xf32>
    %30 = arith.subf %26, %29 : vector<4x256xf32>
    %31 = math.exp %30 : vector<4x256xf32>
    %cst_18 = arith.constant dense<0.000000e+00> : vector<4xf32>
    %32 = vector.multi_reduction <add>, %31, %cst_18 [1] : vector<4x256xf32> to vector<4xf32>
    %33 = vector.shape_cast %32 : vector<4xf32> to vector<4x1xf32>
    %34 = tpu.reciprocal %33 {approx = true} : vector<4x1xf32> -> vector<4x1xf32>
    %35 = vector.broadcast %34 : vector<4x1xf32> to vector<4x256xf32>
    %36 = arith.mulf %31, %35 : vector<4x256xf32>
    %37 = vector.extract_strided_slice %25 {offsets = [4, 0], sizes = [4, 256], strides = [1, 1]} : vector<8x256xf32> to vector<4x256xf32>
    %cst_19 = arith.constant dense<0xFF800000> : vector<256xf32>
    %38 = vector.multi_reduction <maximumf>, %37, %cst_19 [0] : vector<4x256xf32> to vector<256xf32>
    %39 = vector.shape_cast %38 : vector<256xf32> to vector<1x256xf32>
    %40 = vector.broadcast %39 : vector<1x256xf32> to vector<4x256xf32>
    %41 = arith.subf %37, %40 : vector<4x256xf32>
    %42 = math.exp %41 : vector<4x256xf32>
    %cst_20 = arith.constant dense<0.000000e+00> : vector<256xf32>
    %43 = vector.multi_reduction <add>, %42, %cst_20 [0] : vector<4x256xf32> to vector<256xf32>
    %44 = vector.shape_cast %43 : vector<256xf32> to vector<1x256xf32>
    %45 = tpu.reciprocal %44 {approx = true} : vector<1x256xf32> -> vector<1x256xf32>
    %46 = vector.broadcast %45 : vector<1x256xf32> to vector<4x256xf32>
    %47 = arith.mulf %42, %46 : vector<4x256xf32>
    %cst_21 = arith.constant dense<0.000000e+00> : vector<4x4xf32>
    %48 = tpu.matmul %20, %21, %cst_21 {dimension_numbers = #tpu.dot_dimension_numbers<[1], [1], [0], [0], [0, 0, 1, 0], [], []>} : vector<4x32xf32>, vector<4x32xf32>, vector<4x4xf32> -> vector<4x4xf32>
    %cst_22 = arith.constant dense<0xFF800000> : vector<4xf32>
    %49 = vector.multi_reduction <maximumf>, %48, %cst_22 [0] : vector<4x4xf32> to vector<4xf32>
    %50 = vector.shape_cast %49 : vector<4xf32> to vector<1x4xf32>
    %51 = vector.broadcast %50 : vector<1x4xf32> to vector<4x4xf32>
    %52 = arith.subf %48, %51 : vector<4x4xf32>
    %53 = math.exp %52 : vector<4x4xf32>
    %cst_23 = arith.constant dense<0.000000e+00> : vector<4xf32>
    %54 = vector.multi_reduction <add>, %53, %cst_23 [0] : vector<4x4xf32> to vector<4xf32>
    %55 = vector.shape_cast %54 : vector<4xf32> to vector<1x4xf32>
    %56 = vector.broadcast %55 : vector<1x4xf32> to vector<4x4xf32>
    %57 = arith.divf %53, %56 : vector<4x4xf32>
    %58 = math.absf %57 : vector<4x4xf32>
    %cst_24 = arith.constant dense<0.000000e+00> : vector<4xf32>
    %59 = vector.multi_reduction <add>, %58, %cst_24 [0] : vector<4x4xf32> to vector<4xf32>
    %60 = vector.shape_cast %59 : vector<4xf32> to vector<1x4xf32>
    %cst_25 = arith.constant dense<0xFF800000> : vector<1xf32>
    %61 = vector.multi_reduction <maximumf>, %60, %cst_25 [1] : vector<1x4xf32> to vector<1xf32>
    %62 = vector.shape_cast %61 : vector<1xf32> to vector<1x1xf32>
    %cst_26 = arith.constant dense<0.000000e+00> : vector<4xf32>
    %63 = vector.multi_reduction <add>, %58, %cst_26 [1] : vector<4x4xf32> to vector<4xf32>
    %64 = vector.shape_cast %63 : vector<4xf32> to vector<4x1xf32>
    %cst_27 = arith.constant dense<0xFF800000> : vector<1xf32>
    %65 = vector.multi_reduction <maximumf>, %64, %cst_27 [0] : vector<4x1xf32> to vector<1xf32>
    %66 = vector.shape_cast %65 : vector<1xf32> to vector<1x1xf32>
    %67 = tpu.transpose %57, [1, 0] : vector<4x4xf32> -> vector<4x4xf32>
    %68 = arith.mulf %62, %66 : vector<1x1xf32>
    %69 = tpu.reciprocal %68 {approx = true} : vector<1x1xf32> -> vector<1x1xf32>
    %70 = vector.broadcast %69 : vector<1x1xf32> to vector<4x4xf32>
    %71 = arith.mulf %67, %70 : vector<4x4xf32>
    %72 = vector.extract_strided_slice %57 {offsets = [0, 0], sizes = [4, 1], strides = [1, 1]} : vector<4x4xf32> to vector<4x1xf32>
    %73 = vector.extract_strided_slice %71 {offsets = [0, 0], sizes = [1, 4], strides = [1, 1]} : vector<4x4xf32> to vector<1x4xf32>
    %74 = vector.broadcast %72 : vector<4x1xf32> to vector<4x4xf32>
    %75 = vector.broadcast %73 : vector<1x4xf32> to vector<4x4xf32>
    %76 = arith.mulf %74, %75 : vector<4x4xf32>
    %77 = vector.extract_strided_slice %57 {offsets = [0, 1], sizes = [4, 1], strides = [1, 1]} : vector<4x4xf32> to vector<4x1xf32>
    %78 = vector.extract_strided_slice %71 {offsets = [1, 0], sizes = [1, 4], strides = [1, 1]} : vector<4x4xf32> to vector<1x4xf32>
    %79 = vector.broadcast %77 : vector<4x1xf32> to vector<4x4xf32>
    %80 = vector.broadcast %78 : vector<1x4xf32> to vector<4x4xf32>
    %81 = arith.mulf %79, %80 : vector<4x4xf32>
    %82 = arith.addf %76, %81 : vector<4x4xf32>
    %83 = vector.extract_strided_slice %57 {offsets = [0, 2], sizes = [4, 1], strides = [1, 1]} : vector<4x4xf32> to vector<4x1xf32>
    %84 = vector.extract_strided_slice %71 {offsets = [2, 0], sizes = [1, 4], strides = [1, 1]} : vector<4x4xf32> to vector<1x4xf32>
    %85 = vector.broadcast %83 : vector<4x1xf32> to vector<4x4xf32>
    %86 = vector.broadcast %84 : vector<1x4xf32> to vector<4x4xf32>
    %87 = arith.mulf %85, %86 : vector<4x4xf32>
    %88 = arith.addf %82, %87 : vector<4x4xf32>
    %89 = vector.extract_strided_slice %57 {offsets = [0, 3], sizes = [4, 1], strides = [1, 1]} : vector<4x4xf32> to vector<4x1xf32>
    %90 = vector.extract_strided_slice %71 {offsets = [3, 0], sizes = [1, 4], strides = [1, 1]} : vector<4x4xf32> to vector<1x4xf32>
    %91 = vector.broadcast %89 : vector<4x1xf32> to vector<4x4xf32>
    %92 = vector.broadcast %90 : vector<1x4xf32> to vector<4x4xf32>
    %93 = arith.mulf %91, %92 : vector<4x4xf32>
    %94 = arith.addf %88, %93 : vector<4x4xf32>
    %95 = arith.subf %7, %94 : vector<4x4xf32>
    %96 = vector.extract_strided_slice %94 {offsets = [0, 0], sizes = [4, 1], strides = [1, 1]} : vector<4x4xf32> to vector<4x1xf32>
    %97 = vector.extract_strided_slice %95 {offsets = [0, 0], sizes = [1, 4], strides = [1, 1]} : vector<4x4xf32> to vector<1x4xf32>
    %98 = vector.broadcast %96 : vector<4x1xf32> to vector<4x4xf32>
    %99 = vector.broadcast %97 : vector<1x4xf32> to vector<4x4xf32>
    %100 = arith.mulf %98, %99 : vector<4x4xf32>
    %101 = vector.extract_strided_slice %94 {offsets = [0, 1], sizes = [4, 1], strides = [1, 1]} : vector<4x4xf32> to vector<4x1xf32>
    %102 = vector.extract_strided_slice %95 {offsets = [1, 0], sizes = [1, 4], strides = [1, 1]} : vector<4x4xf32> to vector<1x4xf32>
    %103 = vector.broadcast %101 : vector<4x1xf32> to vector<4x4xf32>
    %104 = vector.broadcast %102 : vector<1x4xf32> to vector<4x4xf32>
    %105 = arith.mulf %103, %104 : vector<4x4xf32>
    %106 = arith.addf %100, %105 : vector<4x4xf32>
    %107 = vector.extract_strided_slice %94 {offsets = [0, 2], sizes = [4, 1], strides = [1, 1]} : vector<4x4xf32> to vector<4x1xf32>
    %108 = vector.extract_strided_slice %95 {offsets = [2, 0], sizes = [1, 4], strides = [1, 1]} : vector<4x4xf32> to vector<1x4xf32>
    %109 = vector.broadcast %107 : vector<4x1xf32> to vector<4x4xf32>
    %110 = vector.broadcast %108 : vector<1x4xf32> to vector<4x4xf32>
    %111 = arith.mulf %109, %110 : vector<4x4xf32>
    %112 = arith.addf %106, %111 : vector<4x4xf32>
    %113 = vector.extract_strided_slice %94 {offsets = [0, 3], sizes = [4, 1], strides = [1, 1]} : vector<4x4xf32> to vector<4x1xf32>
    %114 = vector.extract_strided_slice %95 {offsets = [3, 0], sizes = [1, 4], strides = [1, 1]} : vector<4x4xf32> to vector<1x4xf32>
    %115 = vector.broadcast %113 : vector<4x1xf32> to vector<4x4xf32>
    %116 = vector.broadcast %114 : vector<1x4xf32> to vector<4x4xf32>
    %117 = arith.mulf %115, %116 : vector<4x4xf32>
    %118 = arith.addf %112, %117 : vector<4x4xf32>
    %119 = arith.subf %11, %118 : vector<4x4xf32>
    %120 = vector.extract_strided_slice %94 {offsets = [0, 0], sizes = [4, 1], strides = [1, 1]} : vector<4x4xf32> to vector<4x1xf32>
    %121 = vector.extract_strided_slice %119 {offsets = [0, 0], sizes = [1, 4], strides = [1, 1]} : vector<4x4xf32> to vector<1x4xf32>
    %122 = vector.broadcast %120 : vector<4x1xf32> to vector<4x4xf32>
    %123 = vector.broadcast %121 : vector<1x4xf32> to vector<4x4xf32>
    %124 = arith.mulf %122, %123 : vector<4x4xf32>
    %125 = vector.extract_strided_slice %94 {offsets = [0, 1], sizes = [4, 1], strides = [1, 1]} : vector<4x4xf32> to vector<4x1xf32>
    %126 = vector.extract_strided_slice %119 {offsets = [1, 0], sizes = [1, 4], strides = [1, 1]} : vector<4x4xf32> to vector<1x4xf32>
    %127 = vector.broadcast %125 : vector<4x1xf32> to vector<4x4xf32>
    %128 = vector.broadcast %126 : vector<1x4xf32> to vector<4x4xf32>
    %129 = arith.mulf %127, %128 : vector<4x4xf32>
    %130 = arith.addf %124, %129 : vector<4x4xf32>
    %131 = vector.extract_strided_slice %94 {offsets = [0, 2], sizes = [4, 1], strides = [1, 1]} : vector<4x4xf32> to vector<4x1xf32>
    %132 = vector.extract_strided_slice %119 {offsets = [2, 0], sizes = [1, 4], strides = [1, 1]} : vector<4x4xf32> to vector<1x4xf32>
    %133 = vector.broadcast %131 : vector<4x1xf32> to vector<4x4xf32>
    %134 = vector.broadcast %132 : vector<1x4xf32> to vector<4x4xf32>
    %135 = arith.mulf %133, %134 : vector<4x4xf32>
    %136 = arith.addf %130, %135 : vector<4x4xf32>
    %137 = vector.extract_strided_slice %94 {offsets = [0, 3], sizes = [4, 1], strides = [1, 1]} : vector<4x4xf32> to vector<4x1xf32>
    %138 = vector.extract_strided_slice %119 {offsets = [3, 0], sizes = [1, 4], strides = [1, 1]} : vector<4x4xf32> to vector<1x4xf32>
    %139 = vector.broadcast %137 : vector<4x1xf32> to vector<4x4xf32>
    %140 = vector.broadcast %138 : vector<1x4xf32> to vector<4x4xf32>
    %141 = arith.mulf %139, %140 : vector<4x4xf32>
    %142 = arith.addf %136, %141 : vector<4x4xf32>
    %143 = arith.subf %9, %142 : vector<4x4xf32>
    %144 = vector.extract_strided_slice %71 {offsets = [0, 0], sizes = [4, 1], strides = [1, 1]} : vector<4x4xf32> to vector<4x1xf32>
    %145 = vector.extract_strided_slice %143 {offsets = [0, 0], sizes = [1, 4], strides = [1, 1]} : vector<4x4xf32> to vector<1x4xf32>
    %146 = vector.broadcast %144 : vector<4x1xf32> to vector<4x4xf32>
    %147 = vector.broadcast %145 : vector<1x4xf32> to vector<4x4xf32>
    %148 = arith.mulf %146, %147 : vector<4x4xf32>
    %149 = vector.extract_strided_slice %71 {offsets = [0, 1], sizes = [4, 1], strides = [1, 1]} : vector<4x4xf32> to vector<4x1xf32>
    %150 = vector.extract_strided_slice %143 {offsets = [1, 0], sizes = [1, 4], strides = [1, 1]} : vector<4x4xf32> to vector<1x4xf32>
    %151 = vector.broadcast %149 : vector<4x1xf32> to vector<4x4xf32>
    %152 = vector.broadcast %150 : vector<1x4xf32> to vector<4x4xf32>
    %153 = arith.mulf %151, %152 : vector<4x4xf32>
    %154 = arith.addf %148, %153 : vector<4x4xf32>
    %155 = vector.extract_strided_slice %71 {offsets = [0, 2], sizes = [4, 1], strides = [1, 1]} : vector<4x4xf32> to vector<4x1xf32>
    %156 = vector.extract_strided_slice %143 {offsets = [2, 0], sizes = [1, 4], strides = [1, 1]} : vector<4x4xf32> to vector<1x4xf32>
    %157 = vector.broadcast %155 : vector<4x1xf32> to vector<4x4xf32>
    %158 = vector.broadcast %156 : vector<1x4xf32> to vector<4x4xf32>
    %159 = arith.mulf %157, %158 : vector<4x4xf32>
    %160 = arith.addf %154, %159 : vector<4x4xf32>
    %161 = vector.extract_strided_slice %71 {offsets = [0, 3], sizes = [4, 1], strides = [1, 1]} : vector<4x4xf32> to vector<4x1xf32>
    %162 = vector.extract_strided_slice %143 {offsets = [3, 0], sizes = [1, 4], strides = [1, 1]} : vector<4x4xf32> to vector<1x4xf32>
    %163 = vector.broadcast %161 : vector<4x1xf32> to vector<4x4xf32>
    %164 = vector.broadcast %162 : vector<1x4xf32> to vector<4x4xf32>
    %165 = arith.mulf %163, %164 : vector<4x4xf32>
    %166 = arith.addf %160, %165 : vector<4x4xf32>
    %cst_28 = arith.constant 2.500000e-01 : f32
    %167 = vector.broadcast %cst_28 : f32 to vector<4x4xf32>
    %168 = arith.mulf %167, %166 : vector<4x4xf32>
    %169 = vector.extract_strided_slice %57 {offsets = [0, 0], sizes = [4, 1], strides = [1, 1]} : vector<4x4xf32> to vector<4x1xf32>
    %170 = vector.extract_strided_slice %168 {offsets = [0, 0], sizes = [1, 4], strides = [1, 1]} : vector<4x4xf32> to vector<1x4xf32>
    %171 = vector.broadcast %169 : vector<4x1xf32> to vector<4x4xf32>
    %172 = vector.broadcast %170 : vector<1x4xf32> to vector<4x4xf32>
    %173 = arith.mulf %171, %172 : vector<4x4xf32>
    %174 = vector.extract_strided_slice %57 {offsets = [0, 1], sizes = [4, 1], strides = [1, 1]} : vector<4x4xf32> to vector<4x1xf32>
    %175 = vector.extract_strided_slice %168 {offsets = [1, 0], sizes = [1, 4], strides = [1, 1]} : vector<4x4xf32> to vector<1x4xf32>
    %176 = vector.broadcast %174 : vector<4x1xf32> to vector<4x4xf32>
    %177 = vector.broadcast %175 : vector<1x4xf32> to vector<4x4xf32>
    %178 = arith.mulf %176, %177 : vector<4x4xf32>
    %179 = arith.addf %173, %178 : vector<4x4xf32>
    %180 = vector.extract_strided_slice %57 {offsets = [0, 2], sizes = [4, 1], strides = [1, 1]} : vector<4x4xf32> to vector<4x1xf32>
    %181 = vector.extract_strided_slice %168 {offsets = [2, 0], sizes = [1, 4], strides = [1, 1]} : vector<4x4xf32> to vector<1x4xf32>
    %182 = vector.broadcast %180 : vector<4x1xf32> to vector<4x4xf32>
    %183 = vector.broadcast %181 : vector<1x4xf32> to vector<4x4xf32>
    %184 = arith.mulf %182, %183 : vector<4x4xf32>
    %185 = arith.addf %179, %184 : vector<4x4xf32>
    %186 = vector.extract_strided_slice %57 {offsets = [0, 3], sizes = [4, 1], strides = [1, 1]} : vector<4x4xf32> to vector<4x1xf32>
    %187 = vector.extract_strided_slice %168 {offsets = [3, 0], sizes = [1, 4], strides = [1, 1]} : vector<4x4xf32> to vector<1x4xf32>
    %188 = vector.broadcast %186 : vector<4x1xf32> to vector<4x4xf32>
    %189 = vector.broadcast %187 : vector<1x4xf32> to vector<4x4xf32>
    %190 = arith.mulf %188, %189 : vector<4x4xf32>
    %191 = arith.addf %185, %190 : vector<4x4xf32>
    %192 = arith.subf %7, %191 : vector<4x4xf32>
    %193 = vector.extract_strided_slice %191 {offsets = [0, 0], sizes = [4, 1], strides = [1, 1]} : vector<4x4xf32> to vector<4x1xf32>
    %194 = vector.extract_strided_slice %192 {offsets = [0, 0], sizes = [1, 4], strides = [1, 1]} : vector<4x4xf32> to vector<1x4xf32>
    %195 = vector.broadcast %193 : vector<4x1xf32> to vector<4x4xf32>
    %196 = vector.broadcast %194 : vector<1x4xf32> to vector<4x4xf32>
    %197 = arith.mulf %195, %196 : vector<4x4xf32>
    %198 = vector.extract_strided_slice %191 {offsets = [0, 1], sizes = [4, 1], strides = [1, 1]} : vector<4x4xf32> to vector<4x1xf32>
    %199 = vector.extract_strided_slice %192 {offsets = [1, 0], sizes = [1, 4], strides = [1, 1]} : vector<4x4xf32> to vector<1x4xf32>
    %200 = vector.broadcast %198 : vector<4x1xf32> to vector<4x4xf32>
    %201 = vector.broadcast %199 : vector<1x4xf32> to vector<4x4xf32>
    %202 = arith.mulf %200, %201 : vector<4x4xf32>
    %203 = arith.addf %197, %202 : vector<4x4xf32>
    %204 = vector.extract_strided_slice %191 {offsets = [0, 2], sizes = [4, 1], strides = [1, 1]} : vector<4x4xf32> to vector<4x1xf32>
    %205 = vector.extract_strided_slice %192 {offsets = [2, 0], sizes = [1, 4], strides = [1, 1]} : vector<4x4xf32> to vector<1x4xf32>
    %206 = vector.broadcast %204 : vector<4x1xf32> to vector<4x4xf32>
    %207 = vector.broadcast %205 : vector<1x4xf32> to vector<4x4xf32>
    %208 = arith.mulf %206, %207 : vector<4x4xf32>
    %209 = arith.addf %203, %208 : vector<4x4xf32>
    %210 = vector.extract_strided_slice %191 {offsets = [0, 3], sizes = [4, 1], strides = [1, 1]} : vector<4x4xf32> to vector<4x1xf32>
    %211 = vector.extract_strided_slice %192 {offsets = [3, 0], sizes = [1, 4], strides = [1, 1]} : vector<4x4xf32> to vector<1x4xf32>
    %212 = vector.broadcast %210 : vector<4x1xf32> to vector<4x4xf32>
    %213 = vector.broadcast %211 : vector<1x4xf32> to vector<4x4xf32>
    %214 = arith.mulf %212, %213 : vector<4x4xf32>
    %215 = arith.addf %209, %214 : vector<4x4xf32>
    %216 = arith.subf %11, %215 : vector<4x4xf32>
    %217 = vector.extract_strided_slice %191 {offsets = [0, 0], sizes = [4, 1], strides = [1, 1]} : vector<4x4xf32> to vector<4x1xf32>
    %218 = vector.extract_strided_slice %216 {offsets = [0, 0], sizes = [1, 4], strides = [1, 1]} : vector<4x4xf32> to vector<1x4xf32>
    %219 = vector.broadcast %217 : vector<4x1xf32> to vector<4x4xf32>
    %220 = vector.broadcast %218 : vector<1x4xf32> to vector<4x4xf32>
    %221 = arith.mulf %219, %220 : vector<4x4xf32>
    %222 = vector.extract_strided_slice %191 {offsets = [0, 1], sizes = [4, 1], strides = [1, 1]} : vector<4x4xf32> to vector<4x1xf32>
    %223 = vector.extract_strided_slice %216 {offsets = [1, 0], sizes = [1, 4], strides = [1, 1]} : vector<4x4xf32> to vector<1x4xf32>
    %224 = vector.broadcast %222 : vector<4x1xf32> to vector<4x4xf32>
    %225 = vector.broadcast %223 : vector<1x4xf32> to vector<4x4xf32>
    %226 = arith.mulf %224, %225 : vector<4x4xf32>
    %227 = arith.addf %221, %226 : vector<4x4xf32>
    %228 = vector.extract_strided_slice %191 {offsets = [0, 2], sizes = [4, 1], strides = [1, 1]} : vector<4x4xf32> to vector<4x1xf32>
    %229 = vector.extract_strided_slice %216 {offsets = [2, 0], sizes = [1, 4], strides = [1, 1]} : vector<4x4xf32> to vector<1x4xf32>
    %230 = vector.broadcast %228 : vector<4x1xf32> to vector<4x4xf32>
    %231 = vector.broadcast %229 : vector<1x4xf32> to vector<4x4xf32>
    %232 = arith.mulf %230, %231 : vector<4x4xf32>
    %233 = arith.addf %227, %232 : vector<4x4xf32>
    %234 = vector.extract_strided_slice %191 {offsets = [0, 3], sizes = [4, 1], strides = [1, 1]} : vector<4x4xf32> to vector<4x1xf32>
    %235 = vector.extract_strided_slice %216 {offsets = [3, 0], sizes = [1, 4], strides = [1, 1]} : vector<4x4xf32> to vector<1x4xf32>
    %236 = vector.broadcast %234 : vector<4x1xf32> to vector<4x4xf32>
    %237 = vector.broadcast %235 : vector<1x4xf32> to vector<4x4xf32>
    %238 = arith.mulf %236, %237 : vector<4x4xf32>
    %239 = arith.addf %233, %238 : vector<4x4xf32>
    %240 = arith.subf %9, %239 : vector<4x4xf32>
    %241 = vector.extract_strided_slice %168 {offsets = [0, 0], sizes = [4, 1], strides = [1, 1]} : vector<4x4xf32> to vector<4x1xf32>
    %242 = vector.extract_strided_slice %240 {offsets = [0, 0], sizes = [1, 4], strides = [1, 1]} : vector<4x4xf32> to vector<1x4xf32>
    %243 = vector.broadcast %241 : vector<4x1xf32> to vector<4x4xf32>
    %244 = vector.broadcast %242 : vector<1x4xf32> to vector<4x4xf32>
    %245 = arith.mulf %243, %244 : vector<4x4xf32>
    %246 = vector.extract_strided_slice %168 {offsets = [0, 1], sizes = [4, 1], strides = [1, 1]} : vector<4x4xf32> to vector<4x1xf32>
    %247 = vector.extract_strided_slice %240 {offsets = [1, 0], sizes = [1, 4], strides = [1, 1]} : vector<4x4xf32> to vector<1x4xf32>
    %248 = vector.broadcast %246 : vector<4x1xf32> to vector<4x4xf32>
    %249 = vector.broadcast %247 : vector<1x4xf32> to vector<4x4xf32>
    %250 = arith.mulf %248, %249 : vector<4x4xf32>
    %251 = arith.addf %245, %250 : vector<4x4xf32>
    %252 = vector.extract_strided_slice %168 {offsets = [0, 2], sizes = [4, 1], strides = [1, 1]} : vector<4x4xf32> to vector<4x1xf32>
    %253 = vector.extract_strided_slice %240 {offsets = [2, 0], sizes = [1, 4], strides = [1, 1]} : vector<4x4xf32> to vector<1x4xf32>
    %254 = vector.broadcast %252 : vector<4x1xf32> to vector<4x4xf32>
    %255 = vector.broadcast %253 : vector<1x4xf32> to vector<4x4xf32>
    %256 = arith.mulf %254, %255 : vector<4x4xf32>
    %257 = arith.addf %251, %256 : vector<4x4xf32>
    %258 = vector.extract_strided_slice %168 {offsets = [0, 3], sizes = [4, 1], strides = [1, 1]} : vector<4x4xf32> to vector<4x1xf32>
    %259 = vector.extract_strided_slice %240 {offsets = [3, 0], sizes = [1, 4], strides = [1, 1]} : vector<4x4xf32> to vector<1x4xf32>
    %260 = vector.broadcast %258 : vector<4x1xf32> to vector<4x4xf32>
    %261 = vector.broadcast %259 : vector<1x4xf32> to vector<4x4xf32>
    %262 = arith.mulf %260, %261 : vector<4x4xf32>
    %263 = arith.addf %257, %262 : vector<4x4xf32>
    %cst_29 = arith.constant 2.500000e-01 : f32
    %264 = vector.broadcast %cst_29 : f32 to vector<4x4xf32>
    %265 = arith.mulf %264, %263 : vector<4x4xf32>
    %266 = vector.extract_strided_slice %57 {offsets = [0, 0], sizes = [4, 1], strides = [1, 1]} : vector<4x4xf32> to vector<4x1xf32>
    %267 = vector.extract_strided_slice %265 {offsets = [0, 0], sizes = [1, 4], strides = [1, 1]} : vector<4x4xf32> to vector<1x4xf32>
    %268 = vector.broadcast %266 : vector<4x1xf32> to vector<4x4xf32>
    %269 = vector.broadcast %267 : vector<1x4xf32> to vector<4x4xf32>
    %270 = arith.mulf %268, %269 : vector<4x4xf32>
    %271 = vector.extract_strided_slice %57 {offsets = [0, 1], sizes = [4, 1], strides = [1, 1]} : vector<4x4xf32> to vector<4x1xf32>
    %272 = vector.extract_strided_slice %265 {offsets = [1, 0], sizes = [1, 4], strides = [1, 1]} : vector<4x4xf32> to vector<1x4xf32>
    %273 = vector.broadcast %271 : vector<4x1xf32> to vector<4x4xf32>
    %274 = vector.broadcast %272 : vector<1x4xf32> to vector<4x4xf32>
    %275 = arith.mulf %273, %274 : vector<4x4xf32>
    %276 = arith.addf %270, %275 : vector<4x4xf32>
    %277 = vector.extract_strided_slice %57 {offsets = [0, 2], sizes = [4, 1], strides = [1, 1]} : vector<4x4xf32> to vector<4x1xf32>
    %278 = vector.extract_strided_slice %265 {offsets = [2, 0], sizes = [1, 4], strides = [1, 1]} : vector<4x4xf32> to vector<1x4xf32>
    %279 = vector.broadcast %277 : vector<4x1xf32> to vector<4x4xf32>
    %280 = vector.broadcast %278 : vector<1x4xf32> to vector<4x4xf32>
    %281 = arith.mulf %279, %280 : vector<4x4xf32>
    %282 = arith.addf %276, %281 : vector<4x4xf32>
    %283 = vector.extract_strided_slice %57 {offsets = [0, 3], sizes = [4, 1], strides = [1, 1]} : vector<4x4xf32> to vector<4x1xf32>
    %284 = vector.extract_strided_slice %265 {offsets = [3, 0], sizes = [1, 4], strides = [1, 1]} : vector<4x4xf32> to vector<1x4xf32>
    %285 = vector.broadcast %283 : vector<4x1xf32> to vector<4x4xf32>
    %286 = vector.broadcast %284 : vector<1x4xf32> to vector<4x4xf32>
    %287 = arith.mulf %285, %286 : vector<4x4xf32>
    %288 = arith.addf %282, %287 : vector<4x4xf32>
    %289 = arith.subf %7, %288 : vector<4x4xf32>
    %290 = vector.extract_strided_slice %288 {offsets = [0, 0], sizes = [4, 1], strides = [1, 1]} : vector<4x4xf32> to vector<4x1xf32>
    %291 = vector.extract_strided_slice %289 {offsets = [0, 0], sizes = [1, 4], strides = [1, 1]} : vector<4x4xf32> to vector<1x4xf32>
    %292 = vector.broadcast %290 : vector<4x1xf32> to vector<4x4xf32>
    %293 = vector.broadcast %291 : vector<1x4xf32> to vector<4x4xf32>
    %294 = arith.mulf %292, %293 : vector<4x4xf32>
    %295 = vector.extract_strided_slice %288 {offsets = [0, 1], sizes = [4, 1], strides = [1, 1]} : vector<4x4xf32> to vector<4x1xf32>
    %296 = vector.extract_strided_slice %289 {offsets = [1, 0], sizes = [1, 4], strides = [1, 1]} : vector<4x4xf32> to vector<1x4xf32>
    %297 = vector.broadcast %295 : vector<4x1xf32> to vector<4x4xf32>
    %298 = vector.broadcast %296 : vector<1x4xf32> to vector<4x4xf32>
    %299 = arith.mulf %297, %298 : vector<4x4xf32>
    %300 = arith.addf %294, %299 : vector<4x4xf32>
    %301 = vector.extract_strided_slice %288 {offsets = [0, 2], sizes = [4, 1], strides = [1, 1]} : vector<4x4xf32> to vector<4x1xf32>
    %302 = vector.extract_strided_slice %289 {offsets = [2, 0], sizes = [1, 4], strides = [1, 1]} : vector<4x4xf32> to vector<1x4xf32>
    %303 = vector.broadcast %301 : vector<4x1xf32> to vector<4x4xf32>
    %304 = vector.broadcast %302 : vector<1x4xf32> to vector<4x4xf32>
    %305 = arith.mulf %303, %304 : vector<4x4xf32>
    %306 = arith.addf %300, %305 : vector<4x4xf32>
    %307 = vector.extract_strided_slice %288 {offsets = [0, 3], sizes = [4, 1], strides = [1, 1]} : vector<4x4xf32> to vector<4x1xf32>
    %308 = vector.extract_strided_slice %289 {offsets = [3, 0], sizes = [1, 4], strides = [1, 1]} : vector<4x4xf32> to vector<1x4xf32>
    %309 = vector.broadcast %307 : vector<4x1xf32> to vector<4x4xf32>
    %310 = vector.broadcast %308 : vector<1x4xf32> to vector<4x4xf32>
    %311 = arith.mulf %309, %310 : vector<4x4xf32>
    %312 = arith.addf %306, %311 : vector<4x4xf32>
    %313 = arith.subf %11, %312 : vector<4x4xf32>
    %314 = vector.extract_strided_slice %288 {offsets = [0, 0], sizes = [4, 1], strides = [1, 1]} : vector<4x4xf32> to vector<4x1xf32>
    %315 = vector.extract_strided_slice %313 {offsets = [0, 0], sizes = [1, 4], strides = [1, 1]} : vector<4x4xf32> to vector<1x4xf32>
    %316 = vector.broadcast %314 : vector<4x1xf32> to vector<4x4xf32>
    %317 = vector.broadcast %315 : vector<1x4xf32> to vector<4x4xf32>
    %318 = arith.mulf %316, %317 : vector<4x4xf32>
    %319 = vector.extract_strided_slice %288 {offsets = [0, 1], sizes = [4, 1], strides = [1, 1]} : vector<4x4xf32> to vector<4x1xf32>
    %320 = vector.extract_strided_slice %313 {offsets = [1, 0], sizes = [1, 4], strides = [1, 1]} : vector<4x4xf32> to vector<1x4xf32>
    %321 = vector.broadcast %319 : vector<4x1xf32> to vector<4x4xf32>
    %322 = vector.broadcast %320 : vector<1x4xf32> to vector<4x4xf32>
    %323 = arith.mulf %321, %322 : vector<4x4xf32>
    %324 = arith.addf %318, %323 : vector<4x4xf32>
    %325 = vector.extract_strided_slice %288 {offsets = [0, 2], sizes = [4, 1], strides = [1, 1]} : vector<4x4xf32> to vector<4x1xf32>
    %326 = vector.extract_strided_slice %313 {offsets = [2, 0], sizes = [1, 4], strides = [1, 1]} : vector<4x4xf32> to vector<1x4xf32>
    %327 = vector.broadcast %325 : vector<4x1xf32> to vector<4x4xf32>
    %328 = vector.broadcast %326 : vector<1x4xf32> to vector<4x4xf32>
    %329 = arith.mulf %327, %328 : vector<4x4xf32>
    %330 = arith.addf %324, %329 : vector<4x4xf32>
    %331 = vector.extract_strided_slice %288 {offsets = [0, 3], sizes = [4, 1], strides = [1, 1]} : vector<4x4xf32> to vector<4x1xf32>
    %332 = vector.extract_strided_slice %313 {offsets = [3, 0], sizes = [1, 4], strides = [1, 1]} : vector<4x4xf32> to vector<1x4xf32>
    %333 = vector.broadcast %331 : vector<4x1xf32> to vector<4x4xf32>
    %334 = vector.broadcast %332 : vector<1x4xf32> to vector<4x4xf32>
    %335 = arith.mulf %333, %334 : vector<4x4xf32>
    %336 = arith.addf %330, %335 : vector<4x4xf32>
    %337 = arith.subf %9, %336 : vector<4x4xf32>
    %338 = vector.extract_strided_slice %265 {offsets = [0, 0], sizes = [4, 1], strides = [1, 1]} : vector<4x4xf32> to vector<4x1xf32>
    %339 = vector.extract_strided_slice %337 {offsets = [0, 0], sizes = [1, 4], strides = [1, 1]} : vector<4x4xf32> to vector<1x4xf32>
    %340 = vector.broadcast %338 : vector<4x1xf32> to vector<4x4xf32>
    %341 = vector.broadcast %339 : vector<1x4xf32> to vector<4x4xf32>
    %342 = arith.mulf %340, %341 : vector<4x4xf32>
    %343 = vector.extract_strided_slice %265 {offsets = [0, 1], sizes = [4, 1], strides = [1, 1]} : vector<4x4xf32> to vector<4x1xf32>
    %344 = vector.extract_strided_slice %337 {offsets = [1, 0], sizes = [1, 4], strides = [1, 1]} : vector<4x4xf32> to vector<1x4xf32>
    %345 = vector.broadcast %343 : vector<4x1xf32> to vector<4x4xf32>
    %346 = vector.broadcast %344 : vector<1x4xf32> to vector<4x4xf32>
    %347 = arith.mulf %345, %346 : vector<4x4xf32>
    %348 = arith.addf %342, %347 : vector<4x4xf32>
    %349 = vector.extract_strided_slice %265 {offsets = [0, 2], sizes = [4, 1], strides = [1, 1]} : vector<4x4xf32> to vector<4x1xf32>
    %350 = vector.extract_strided_slice %337 {offsets = [2, 0], sizes = [1, 4], strides = [1, 1]} : vector<4x4xf32> to vector<1x4xf32>
    %351 = vector.broadcast %349 : vector<4x1xf32> to vector<4x4xf32>
    %352 = vector.broadcast %350 : vector<1x4xf32> to vector<4x4xf32>
    %353 = arith.mulf %351, %352 : vector<4x4xf32>
    %354 = arith.addf %348, %353 : vector<4x4xf32>
    %355 = vector.extract_strided_slice %265 {offsets = [0, 3], sizes = [4, 1], strides = [1, 1]} : vector<4x4xf32> to vector<4x1xf32>
    %356 = vector.extract_strided_slice %337 {offsets = [3, 0], sizes = [1, 4], strides = [1, 1]} : vector<4x4xf32> to vector<1x4xf32>
    %357 = vector.broadcast %355 : vector<4x1xf32> to vector<4x4xf32>
    %358 = vector.broadcast %356 : vector<1x4xf32> to vector<4x4xf32>
    %359 = arith.mulf %357, %358 : vector<4x4xf32>
    %360 = arith.addf %354, %359 : vector<4x4xf32>
    %cst_30 = arith.constant 2.500000e-01 : f32
    %361 = vector.broadcast %cst_30 : f32 to vector<4x4xf32>
    %362 = arith.mulf %361, %360 : vector<4x4xf32>
    %363 = vector.extract_strided_slice %57 {offsets = [0, 0], sizes = [4, 1], strides = [1, 1]} : vector<4x4xf32> to vector<4x1xf32>
    %364 = vector.extract_strided_slice %362 {offsets = [0, 0], sizes = [1, 4], strides = [1, 1]} : vector<4x4xf32> to vector<1x4xf32>
    %365 = vector.broadcast %363 : vector<4x1xf32> to vector<4x4xf32>
    %366 = vector.broadcast %364 : vector<1x4xf32> to vector<4x4xf32>
    %367 = arith.mulf %365, %366 : vector<4x4xf32>
    %368 = vector.extract_strided_slice %57 {offsets = [0, 1], sizes = [4, 1], strides = [1, 1]} : vector<4x4xf32> to vector<4x1xf32>
    %369 = vector.extract_strided_slice %362 {offsets = [1, 0], sizes = [1, 4], strides = [1, 1]} : vector<4x4xf32> to vector<1x4xf32>
    %370 = vector.broadcast %368 : vector<4x1xf32> to vector<4x4xf32>
    %371 = vector.broadcast %369 : vector<1x4xf32> to vector<4x4xf32>
    %372 = arith.mulf %370, %371 : vector<4x4xf32>
    %373 = arith.addf %367, %372 : vector<4x4xf32>
    %374 = vector.extract_strided_slice %57 {offsets = [0, 2], sizes = [4, 1], strides = [1, 1]} : vector<4x4xf32> to vector<4x1xf32>
    %375 = vector.extract_strided_slice %362 {offsets = [2, 0], sizes = [1, 4], strides = [1, 1]} : vector<4x4xf32> to vector<1x4xf32>
    %376 = vector.broadcast %374 : vector<4x1xf32> to vector<4x4xf32>
    %377 = vector.broadcast %375 : vector<1x4xf32> to vector<4x4xf32>
    %378 = arith.mulf %376, %377 : vector<4x4xf32>
    %379 = arith.addf %373, %378 : vector<4x4xf32>
    %380 = vector.extract_strided_slice %57 {offsets = [0, 3], sizes = [4, 1], strides = [1, 1]} : vector<4x4xf32> to vector<4x1xf32>
    %381 = vector.extract_strided_slice %362 {offsets = [3, 0], sizes = [1, 4], strides = [1, 1]} : vector<4x4xf32> to vector<1x4xf32>
    %382 = vector.broadcast %380 : vector<4x1xf32> to vector<4x4xf32>
    %383 = vector.broadcast %381 : vector<1x4xf32> to vector<4x4xf32>
    %384 = arith.mulf %382, %383 : vector<4x4xf32>
    %385 = arith.addf %379, %384 : vector<4x4xf32>
    %386 = arith.subf %7, %385 : vector<4x4xf32>
    %387 = vector.extract_strided_slice %385 {offsets = [0, 0], sizes = [4, 1], strides = [1, 1]} : vector<4x4xf32> to vector<4x1xf32>
    %388 = vector.extract_strided_slice %386 {offsets = [0, 0], sizes = [1, 4], strides = [1, 1]} : vector<4x4xf32> to vector<1x4xf32>
    %389 = vector.broadcast %387 : vector<4x1xf32> to vector<4x4xf32>
    %390 = vector.broadcast %388 : vector<1x4xf32> to vector<4x4xf32>
    %391 = arith.mulf %389, %390 : vector<4x4xf32>
    %392 = vector.extract_strided_slice %385 {offsets = [0, 1], sizes = [4, 1], strides = [1, 1]} : vector<4x4xf32> to vector<4x1xf32>
    %393 = vector.extract_strided_slice %386 {offsets = [1, 0], sizes = [1, 4], strides = [1, 1]} : vector<4x4xf32> to vector<1x4xf32>
    %394 = vector.broadcast %392 : vector<4x1xf32> to vector<4x4xf32>
    %395 = vector.broadcast %393 : vector<1x4xf32> to vector<4x4xf32>
    %396 = arith.mulf %394, %395 : vector<4x4xf32>
    %397 = arith.addf %391, %396 : vector<4x4xf32>
    %398 = vector.extract_strided_slice %385 {offsets = [0, 2], sizes = [4, 1], strides = [1, 1]} : vector<4x4xf32> to vector<4x1xf32>
    %399 = vector.extract_strided_slice %386 {offsets = [2, 0], sizes = [1, 4], strides = [1, 1]} : vector<4x4xf32> to vector<1x4xf32>
    %400 = vector.broadcast %398 : vector<4x1xf32> to vector<4x4xf32>
    %401 = vector.broadcast %399 : vector<1x4xf32> to vector<4x4xf32>
    %402 = arith.mulf %400, %401 : vector<4x4xf32>
    %403 = arith.addf %397, %402 : vector<4x4xf32>
    %404 = vector.extract_strided_slice %385 {offsets = [0, 3], sizes = [4, 1], strides = [1, 1]} : vector<4x4xf32> to vector<4x1xf32>
    %405 = vector.extract_strided_slice %386 {offsets = [3, 0], sizes = [1, 4], strides = [1, 1]} : vector<4x4xf32> to vector<1x4xf32>
    %406 = vector.broadcast %404 : vector<4x1xf32> to vector<4x4xf32>
    %407 = vector.broadcast %405 : vector<1x4xf32> to vector<4x4xf32>
    %408 = arith.mulf %406, %407 : vector<4x4xf32>
    %409 = arith.addf %403, %408 : vector<4x4xf32>
    %410 = arith.subf %11, %409 : vector<4x4xf32>
    %411 = vector.extract_strided_slice %385 {offsets = [0, 0], sizes = [4, 1], strides = [1, 1]} : vector<4x4xf32> to vector<4x1xf32>
    %412 = vector.extract_strided_slice %410 {offsets = [0, 0], sizes = [1, 4], strides = [1, 1]} : vector<4x4xf32> to vector<1x4xf32>
    %413 = vector.broadcast %411 : vector<4x1xf32> to vector<4x4xf32>
    %414 = vector.broadcast %412 : vector<1x4xf32> to vector<4x4xf32>
    %415 = arith.mulf %413, %414 : vector<4x4xf32>
    %416 = vector.extract_strided_slice %385 {offsets = [0, 1], sizes = [4, 1], strides = [1, 1]} : vector<4x4xf32> to vector<4x1xf32>
    %417 = vector.extract_strided_slice %410 {offsets = [1, 0], sizes = [1, 4], strides = [1, 1]} : vector<4x4xf32> to vector<1x4xf32>
    %418 = vector.broadcast %416 : vector<4x1xf32> to vector<4x4xf32>
    %419 = vector.broadcast %417 : vector<1x4xf32> to vector<4x4xf32>
    %420 = arith.mulf %418, %419 : vector<4x4xf32>
    %421 = arith.addf %415, %420 : vector<4x4xf32>
    %422 = vector.extract_strided_slice %385 {offsets = [0, 2], sizes = [4, 1], strides = [1, 1]} : vector<4x4xf32> to vector<4x1xf32>
    %423 = vector.extract_strided_slice %410 {offsets = [2, 0], sizes = [1, 4], strides = [1, 1]} : vector<4x4xf32> to vector<1x4xf32>
    %424 = vector.broadcast %422 : vector<4x1xf32> to vector<4x4xf32>
    %425 = vector.broadcast %423 : vector<1x4xf32> to vector<4x4xf32>
    %426 = arith.mulf %424, %425 : vector<4x4xf32>
    %427 = arith.addf %421, %426 : vector<4x4xf32>
    %428 = vector.extract_strided_slice %385 {offsets = [0, 3], sizes = [4, 1], strides = [1, 1]} : vector<4x4xf32> to vector<4x1xf32>
    %429 = vector.extract_strided_slice %410 {offsets = [3, 0], sizes = [1, 4], strides = [1, 1]} : vector<4x4xf32> to vector<1x4xf32>
    %430 = vector.broadcast %428 : vector<4x1xf32> to vector<4x4xf32>
    %431 = vector.broadcast %429 : vector<1x4xf32> to vector<4x4xf32>
    %432 = arith.mulf %430, %431 : vector<4x4xf32>
    %433 = arith.addf %427, %432 : vector<4x4xf32>
    %434 = arith.subf %9, %433 : vector<4x4xf32>
    %435 = vector.extract_strided_slice %362 {offsets = [0, 0], sizes = [4, 1], strides = [1, 1]} : vector<4x4xf32> to vector<4x1xf32>
    %436 = vector.extract_strided_slice %434 {offsets = [0, 0], sizes = [1, 4], strides = [1, 1]} : vector<4x4xf32> to vector<1x4xf32>
    %437 = vector.broadcast %435 : vector<4x1xf32> to vector<4x4xf32>
    %438 = vector.broadcast %436 : vector<1x4xf32> to vector<4x4xf32>
    %439 = arith.mulf %437, %438 : vector<4x4xf32>
    %440 = vector.extract_strided_slice %362 {offsets = [0, 1], sizes = [4, 1], strides = [1, 1]} : vector<4x4xf32> to vector<4x1xf32>
    %441 = vector.extract_strided_slice %434 {offsets = [1, 0], sizes = [1, 4], strides = [1, 1]} : vector<4x4xf32> to vector<1x4xf32>
    %442 = vector.broadcast %440 : vector<4x1xf32> to vector<4x4xf32>
    %443 = vector.broadcast %441 : vector<1x4xf32> to vector<4x4xf32>
    %444 = arith.mulf %442, %443 : vector<4x4xf32>
    %445 = arith.addf %439, %444 : vector<4x4xf32>
    %446 = vector.extract_strided_slice %362 {offsets = [0, 2], sizes = [4, 1], strides = [1, 1]} : vector<4x4xf32> to vector<4x1xf32>
    %447 = vector.extract_strided_slice %434 {offsets = [2, 0], sizes = [1, 4], strides = [1, 1]} : vector<4x4xf32> to vector<1x4xf32>
    %448 = vector.broadcast %446 : vector<4x1xf32> to vector<4x4xf32>
    %449 = vector.broadcast %447 : vector<1x4xf32> to vector<4x4xf32>
    %450 = arith.mulf %448, %449 : vector<4x4xf32>
    %451 = arith.addf %445, %450 : vector<4x4xf32>
    %452 = vector.extract_strided_slice %362 {offsets = [0, 3], sizes = [4, 1], strides = [1, 1]} : vector<4x4xf32> to vector<4x1xf32>
    %453 = vector.extract_strided_slice %434 {offsets = [3, 0], sizes = [1, 4], strides = [1, 1]} : vector<4x4xf32> to vector<1x4xf32>
    %454 = vector.broadcast %452 : vector<4x1xf32> to vector<4x4xf32>
    %455 = vector.broadcast %453 : vector<1x4xf32> to vector<4x4xf32>
    %456 = arith.mulf %454, %455 : vector<4x4xf32>
    %457 = arith.addf %451, %456 : vector<4x4xf32>
    %cst_31 = arith.constant 2.500000e-01 : f32
    %458 = vector.broadcast %cst_31 : f32 to vector<4x4xf32>
    %459 = arith.mulf %458, %457 : vector<4x4xf32>
    %460 = vector.extract_strided_slice %57 {offsets = [0, 0], sizes = [4, 1], strides = [1, 1]} : vector<4x4xf32> to vector<4x1xf32>
    %461 = vector.extract_strided_slice %459 {offsets = [0, 0], sizes = [1, 4], strides = [1, 1]} : vector<4x4xf32> to vector<1x4xf32>
    %462 = vector.broadcast %460 : vector<4x1xf32> to vector<4x4xf32>
    %463 = vector.broadcast %461 : vector<1x4xf32> to vector<4x4xf32>
    %464 = arith.mulf %462, %463 : vector<4x4xf32>
    %465 = vector.extract_strided_slice %57 {offsets = [0, 1], sizes = [4, 1], strides = [1, 1]} : vector<4x4xf32> to vector<4x1xf32>
    %466 = vector.extract_strided_slice %459 {offsets = [1, 0], sizes = [1, 4], strides = [1, 1]} : vector<4x4xf32> to vector<1x4xf32>
    %467 = vector.broadcast %465 : vector<4x1xf32> to vector<4x4xf32>
    %468 = vector.broadcast %466 : vector<1x4xf32> to vector<4x4xf32>
    %469 = arith.mulf %467, %468 : vector<4x4xf32>
    %470 = arith.addf %464, %469 : vector<4x4xf32>
    %471 = vector.extract_strided_slice %57 {offsets = [0, 2], sizes = [4, 1], strides = [1, 1]} : vector<4x4xf32> to vector<4x1xf32>
    %472 = vector.extract_strided_slice %459 {offsets = [2, 0], sizes = [1, 4], strides = [1, 1]} : vector<4x4xf32> to vector<1x4xf32>
    %473 = vector.broadcast %471 : vector<4x1xf32> to vector<4x4xf32>
    %474 = vector.broadcast %472 : vector<1x4xf32> to vector<4x4xf32>
    %475 = arith.mulf %473, %474 : vector<4x4xf32>
    %476 = arith.addf %470, %475 : vector<4x4xf32>
    %477 = vector.extract_strided_slice %57 {offsets = [0, 3], sizes = [4, 1], strides = [1, 1]} : vector<4x4xf32> to vector<4x1xf32>
    %478 = vector.extract_strided_slice %459 {offsets = [3, 0], sizes = [1, 4], strides = [1, 1]} : vector<4x4xf32> to vector<1x4xf32>
    %479 = vector.broadcast %477 : vector<4x1xf32> to vector<4x4xf32>
    %480 = vector.broadcast %478 : vector<1x4xf32> to vector<4x4xf32>
    %481 = arith.mulf %479, %480 : vector<4x4xf32>
    %482 = arith.addf %476, %481 : vector<4x4xf32>
    %483 = arith.subf %7, %482 : vector<4x4xf32>
    %484 = vector.extract_strided_slice %482 {offsets = [0, 0], sizes = [4, 1], strides = [1, 1]} : vector<4x4xf32> to vector<4x1xf32>
    %485 = vector.extract_strided_slice %483 {offsets = [0, 0], sizes = [1, 4], strides = [1, 1]} : vector<4x4xf32> to vector<1x4xf32>
    %486 = vector.broadcast %484 : vector<4x1xf32> to vector<4x4xf32>
    %487 = vector.broadcast %485 : vector<1x4xf32> to vector<4x4xf32>
    %488 = arith.mulf %486, %487 : vector<4x4xf32>
    %489 = vector.extract_strided_slice %482 {offsets = [0, 1], sizes = [4, 1], strides = [1, 1]} : vector<4x4xf32> to vector<4x1xf32>
    %490 = vector.extract_strided_slice %483 {offsets = [1, 0], sizes = [1, 4], strides = [1, 1]} : vector<4x4xf32> to vector<1x4xf32>
    %491 = vector.broadcast %489 : vector<4x1xf32> to vector<4x4xf32>
    %492 = vector.broadcast %490 : vector<1x4xf32> to vector<4x4xf32>
    %493 = arith.mulf %491, %492 : vector<4x4xf32>
    %494 = arith.addf %488, %493 : vector<4x4xf32>
    %495 = vector.extract_strided_slice %482 {offsets = [0, 2], sizes = [4, 1], strides = [1, 1]} : vector<4x4xf32> to vector<4x1xf32>
    %496 = vector.extract_strided_slice %483 {offsets = [2, 0], sizes = [1, 4], strides = [1, 1]} : vector<4x4xf32> to vector<1x4xf32>
    %497 = vector.broadcast %495 : vector<4x1xf32> to vector<4x4xf32>
    %498 = vector.broadcast %496 : vector<1x4xf32> to vector<4x4xf32>
    %499 = arith.mulf %497, %498 : vector<4x4xf32>
    %500 = arith.addf %494, %499 : vector<4x4xf32>
    %501 = vector.extract_strided_slice %482 {offsets = [0, 3], sizes = [4, 1], strides = [1, 1]} : vector<4x4xf32> to vector<4x1xf32>
    %502 = vector.extract_strided_slice %483 {offsets = [3, 0], sizes = [1, 4], strides = [1, 1]} : vector<4x4xf32> to vector<1x4xf32>
    %503 = vector.broadcast %501 : vector<4x1xf32> to vector<4x4xf32>
    %504 = vector.broadcast %502 : vector<1x4xf32> to vector<4x4xf32>
    %505 = arith.mulf %503, %504 : vector<4x4xf32>
    %506 = arith.addf %500, %505 : vector<4x4xf32>
    %507 = arith.subf %11, %506 : vector<4x4xf32>
    %508 = vector.extract_strided_slice %482 {offsets = [0, 0], sizes = [4, 1], strides = [1, 1]} : vector<4x4xf32> to vector<4x1xf32>
    %509 = vector.extract_strided_slice %507 {offsets = [0, 0], sizes = [1, 4], strides = [1, 1]} : vector<4x4xf32> to vector<1x4xf32>
    %510 = vector.broadcast %508 : vector<4x1xf32> to vector<4x4xf32>
    %511 = vector.broadcast %509 : vector<1x4xf32> to vector<4x4xf32>
    %512 = arith.mulf %510, %511 : vector<4x4xf32>
    %513 = vector.extract_strided_slice %482 {offsets = [0, 1], sizes = [4, 1], strides = [1, 1]} : vector<4x4xf32> to vector<4x1xf32>
    %514 = vector.extract_strided_slice %507 {offsets = [1, 0], sizes = [1, 4], strides = [1, 1]} : vector<4x4xf32> to vector<1x4xf32>
    %515 = vector.broadcast %513 : vector<4x1xf32> to vector<4x4xf32>
    %516 = vector.broadcast %514 : vector<1x4xf32> to vector<4x4xf32>
    %517 = arith.mulf %515, %516 : vector<4x4xf32>
    %518 = arith.addf %512, %517 : vector<4x4xf32>
    %519 = vector.extract_strided_slice %482 {offsets = [0, 2], sizes = [4, 1], strides = [1, 1]} : vector<4x4xf32> to vector<4x1xf32>
    %520 = vector.extract_strided_slice %507 {offsets = [2, 0], sizes = [1, 4], strides = [1, 1]} : vector<4x4xf32> to vector<1x4xf32>
    %521 = vector.broadcast %519 : vector<4x1xf32> to vector<4x4xf32>
    %522 = vector.broadcast %520 : vector<1x4xf32> to vector<4x4xf32>
    %523 = arith.mulf %521, %522 : vector<4x4xf32>
    %524 = arith.addf %518, %523 : vector<4x4xf32>
    %525 = vector.extract_strided_slice %482 {offsets = [0, 3], sizes = [4, 1], strides = [1, 1]} : vector<4x4xf32> to vector<4x1xf32>
    %526 = vector.extract_strided_slice %507 {offsets = [3, 0], sizes = [1, 4], strides = [1, 1]} : vector<4x4xf32> to vector<1x4xf32>
    %527 = vector.broadcast %525 : vector<4x1xf32> to vector<4x4xf32>
    %528 = vector.broadcast %526 : vector<1x4xf32> to vector<4x4xf32>
    %529 = arith.mulf %527, %528 : vector<4x4xf32>
    %530 = arith.addf %524, %529 : vector<4x4xf32>
    %531 = arith.subf %9, %530 : vector<4x4xf32>
    %532 = vector.extract_strided_slice %459 {offsets = [0, 0], sizes = [4, 1], strides = [1, 1]} : vector<4x4xf32> to vector<4x1xf32>
    %533 = vector.extract_strided_slice %531 {offsets = [0, 0], sizes = [1, 4], strides = [1, 1]} : vector<4x4xf32> to vector<1x4xf32>
    %534 = vector.broadcast %532 : vector<4x1xf32> to vector<4x4xf32>
    %535 = vector.broadcast %533 : vector<1x4xf32> to vector<4x4xf32>
    %536 = arith.mulf %534, %535 : vector<4x4xf32>
    %537 = vector.extract_strided_slice %459 {offsets = [0, 1], sizes = [4, 1], strides = [1, 1]} : vector<4x4xf32> to vector<4x1xf32>
    %538 = vector.extract_strided_slice %531 {offsets = [1, 0], sizes = [1, 4], strides = [1, 1]} : vector<4x4xf32> to vector<1x4xf32>
    %539 = vector.broadcast %537 : vector<4x1xf32> to vector<4x4xf32>
    %540 = vector.broadcast %538 : vector<1x4xf32> to vector<4x4xf32>
    %541 = arith.mulf %539, %540 : vector<4x4xf32>
    %542 = arith.addf %536, %541 : vector<4x4xf32>
    %543 = vector.extract_strided_slice %459 {offsets = [0, 2], sizes = [4, 1], strides = [1, 1]} : vector<4x4xf32> to vector<4x1xf32>
    %544 = vector.extract_strided_slice %531 {offsets = [2, 0], sizes = [1, 4], strides = [1, 1]} : vector<4x4xf32> to vector<1x4xf32>
    %545 = vector.broadcast %543 : vector<4x1xf32> to vector<4x4xf32>
    %546 = vector.broadcast %544 : vector<1x4xf32> to vector<4x4xf32>
    %547 = arith.mulf %545, %546 : vector<4x4xf32>
    %548 = arith.addf %542, %547 : vector<4x4xf32>
    %549 = vector.extract_strided_slice %459 {offsets = [0, 3], sizes = [4, 1], strides = [1, 1]} : vector<4x4xf32> to vector<4x1xf32>
    %550 = vector.extract_strided_slice %531 {offsets = [3, 0], sizes = [1, 4], strides = [1, 1]} : vector<4x4xf32> to vector<1x4xf32>
    %551 = vector.broadcast %549 : vector<4x1xf32> to vector<4x4xf32>
    %552 = vector.broadcast %550 : vector<1x4xf32> to vector<4x4xf32>
    %553 = arith.mulf %551, %552 : vector<4x4xf32>
    %554 = arith.addf %548, %553 : vector<4x4xf32>
    %cst_32 = arith.constant 2.500000e-01 : f32
    %555 = vector.broadcast %cst_32 : f32 to vector<4x4xf32>
    %556 = arith.mulf %555, %554 : vector<4x4xf32>
    %557 = vector.extract_strided_slice %57 {offsets = [0, 0], sizes = [4, 1], strides = [1, 1]} : vector<4x4xf32> to vector<4x1xf32>
    %558 = vector.extract_strided_slice %556 {offsets = [0, 0], sizes = [1, 4], strides = [1, 1]} : vector<4x4xf32> to vector<1x4xf32>
    %559 = vector.broadcast %557 : vector<4x1xf32> to vector<4x4xf32>
    %560 = vector.broadcast %558 : vector<1x4xf32> to vector<4x4xf32>
    %561 = arith.mulf %559, %560 : vector<4x4xf32>
    %562 = vector.extract_strided_slice %57 {offsets = [0, 1], sizes = [4, 1], strides = [1, 1]} : vector<4x4xf32> to vector<4x1xf32>
    %563 = vector.extract_strided_slice %556 {offsets = [1, 0], sizes = [1, 4], strides = [1, 1]} : vector<4x4xf32> to vector<1x4xf32>
    %564 = vector.broadcast %562 : vector<4x1xf32> to vector<4x4xf32>
    %565 = vector.broadcast %563 : vector<1x4xf32> to vector<4x4xf32>
    %566 = arith.mulf %564, %565 : vector<4x4xf32>
    %567 = arith.addf %561, %566 : vector<4x4xf32>
    %568 = vector.extract_strided_slice %57 {offsets = [0, 2], sizes = [4, 1], strides = [1, 1]} : vector<4x4xf32> to vector<4x1xf32>
    %569 = vector.extract_strided_slice %556 {offsets = [2, 0], sizes = [1, 4], strides = [1, 1]} : vector<4x4xf32> to vector<1x4xf32>
    %570 = vector.broadcast %568 : vector<4x1xf32> to vector<4x4xf32>
    %571 = vector.broadcast %569 : vector<1x4xf32> to vector<4x4xf32>
    %572 = arith.mulf %570, %571 : vector<4x4xf32>
    %573 = arith.addf %567, %572 : vector<4x4xf32>
    %574 = vector.extract_strided_slice %57 {offsets = [0, 3], sizes = [4, 1], strides = [1, 1]} : vector<4x4xf32> to vector<4x1xf32>
    %575 = vector.extract_strided_slice %556 {offsets = [3, 0], sizes = [1, 4], strides = [1, 1]} : vector<4x4xf32> to vector<1x4xf32>
    %576 = vector.broadcast %574 : vector<4x1xf32> to vector<4x4xf32>
    %577 = vector.broadcast %575 : vector<1x4xf32> to vector<4x4xf32>
    %578 = arith.mulf %576, %577 : vector<4x4xf32>
    %579 = arith.addf %573, %578 : vector<4x4xf32>
    %580 = arith.subf %7, %579 : vector<4x4xf32>
    %581 = vector.extract_strided_slice %579 {offsets = [0, 0], sizes = [4, 1], strides = [1, 1]} : vector<4x4xf32> to vector<4x1xf32>
    %582 = vector.extract_strided_slice %580 {offsets = [0, 0], sizes = [1, 4], strides = [1, 1]} : vector<4x4xf32> to vector<1x4xf32>
    %583 = vector.broadcast %581 : vector<4x1xf32> to vector<4x4xf32>
    %584 = vector.broadcast %582 : vector<1x4xf32> to vector<4x4xf32>
    %585 = arith.mulf %583, %584 : vector<4x4xf32>
    %586 = vector.extract_strided_slice %579 {offsets = [0, 1], sizes = [4, 1], strides = [1, 1]} : vector<4x4xf32> to vector<4x1xf32>
    %587 = vector.extract_strided_slice %580 {offsets = [1, 0], sizes = [1, 4], strides = [1, 1]} : vector<4x4xf32> to vector<1x4xf32>
    %588 = vector.broadcast %586 : vector<4x1xf32> to vector<4x4xf32>
    %589 = vector.broadcast %587 : vector<1x4xf32> to vector<4x4xf32>
    %590 = arith.mulf %588, %589 : vector<4x4xf32>
    %591 = arith.addf %585, %590 : vector<4x4xf32>
    %592 = vector.extract_strided_slice %579 {offsets = [0, 2], sizes = [4, 1], strides = [1, 1]} : vector<4x4xf32> to vector<4x1xf32>
    %593 = vector.extract_strided_slice %580 {offsets = [2, 0], sizes = [1, 4], strides = [1, 1]} : vector<4x4xf32> to vector<1x4xf32>
    %594 = vector.broadcast %592 : vector<4x1xf32> to vector<4x4xf32>
    %595 = vector.broadcast %593 : vector<1x4xf32> to vector<4x4xf32>
    %596 = arith.mulf %594, %595 : vector<4x4xf32>
    %597 = arith.addf %591, %596 : vector<4x4xf32>
    %598 = vector.extract_strided_slice %579 {offsets = [0, 3], sizes = [4, 1], strides = [1, 1]} : vector<4x4xf32> to vector<4x1xf32>
    %599 = vector.extract_strided_slice %580 {offsets = [3, 0], sizes = [1, 4], strides = [1, 1]} : vector<4x4xf32> to vector<1x4xf32>
    %600 = vector.broadcast %598 : vector<4x1xf32> to vector<4x4xf32>
    %601 = vector.broadcast %599 : vector<1x4xf32> to vector<4x4xf32>
    %602 = arith.mulf %600, %601 : vector<4x4xf32>
    %603 = arith.addf %597, %602 : vector<4x4xf32>
    %604 = arith.subf %11, %603 : vector<4x4xf32>
    %605 = vector.extract_strided_slice %579 {offsets = [0, 0], sizes = [4, 1], strides = [1, 1]} : vector<4x4xf32> to vector<4x1xf32>
    %606 = vector.extract_strided_slice %604 {offsets = [0, 0], sizes = [1, 4], strides = [1, 1]} : vector<4x4xf32> to vector<1x4xf32>
    %607 = vector.broadcast %605 : vector<4x1xf32> to vector<4x4xf32>
    %608 = vector.broadcast %606 : vector<1x4xf32> to vector<4x4xf32>
    %609 = arith.mulf %607, %608 : vector<4x4xf32>
    %610 = vector.extract_strided_slice %579 {offsets = [0, 1], sizes = [4, 1], strides = [1, 1]} : vector<4x4xf32> to vector<4x1xf32>
    %611 = vector.extract_strided_slice %604 {offsets = [1, 0], sizes = [1, 4], strides = [1, 1]} : vector<4x4xf32> to vector<1x4xf32>
    %612 = vector.broadcast %610 : vector<4x1xf32> to vector<4x4xf32>
    %613 = vector.broadcast %611 : vector<1x4xf32> to vector<4x4xf32>
    %614 = arith.mulf %612, %613 : vector<4x4xf32>
    %615 = arith.addf %609, %614 : vector<4x4xf32>
    %616 = vector.extract_strided_slice %579 {offsets = [0, 2], sizes = [4, 1], strides = [1, 1]} : vector<4x4xf32> to vector<4x1xf32>
    %617 = vector.extract_strided_slice %604 {offsets = [2, 0], sizes = [1, 4], strides = [1, 1]} : vector<4x4xf32> to vector<1x4xf32>
    %618 = vector.broadcast %616 : vector<4x1xf32> to vector<4x4xf32>
    %619 = vector.broadcast %617 : vector<1x4xf32> to vector<4x4xf32>
    %620 = arith.mulf %618, %619 : vector<4x4xf32>
    %621 = arith.addf %615, %620 : vector<4x4xf32>
    %622 = vector.extract_strided_slice %579 {offsets = [0, 3], sizes = [4, 1], strides = [1, 1]} : vector<4x4xf32> to vector<4x1xf32>
    %623 = vector.extract_strided_slice %604 {offsets = [3, 0], sizes = [1, 4], strides = [1, 1]} : vector<4x4xf32> to vector<1x4xf32>
    %624 = vector.broadcast %622 : vector<4x1xf32> to vector<4x4xf32>
    %625 = vector.broadcast %623 : vector<1x4xf32> to vector<4x4xf32>
    %626 = arith.mulf %624, %625 : vector<4x4xf32>
    %627 = arith.addf %621, %626 : vector<4x4xf32>
    %628 = arith.subf %9, %627 : vector<4x4xf32>
    %629 = vector.extract_strided_slice %556 {offsets = [0, 0], sizes = [4, 1], strides = [1, 1]} : vector<4x4xf32> to vector<4x1xf32>
    %630 = vector.extract_strided_slice %628 {offsets = [0, 0], sizes = [1, 4], strides = [1, 1]} : vector<4x4xf32> to vector<1x4xf32>
    %631 = vector.broadcast %629 : vector<4x1xf32> to vector<4x4xf32>
    %632 = vector.broadcast %630 : vector<1x4xf32> to vector<4x4xf32>
    %633 = arith.mulf %631, %632 : vector<4x4xf32>
    %634 = vector.extract_strided_slice %556 {offsets = [0, 1], sizes = [4, 1], strides = [1, 1]} : vector<4x4xf32> to vector<4x1xf32>
    %635 = vector.extract_strided_slice %628 {offsets = [1, 0], sizes = [1, 4], strides = [1, 1]} : vector<4x4xf32> to vector<1x4xf32>
    %636 = vector.broadcast %634 : vector<4x1xf32> to vector<4x4xf32>
    %637 = vector.broadcast %635 : vector<1x4xf32> to vector<4x4xf32>
    %638 = arith.mulf %636, %637 : vector<4x4xf32>
    %639 = arith.addf %633, %638 : vector<4x4xf32>
    %640 = vector.extract_strided_slice %556 {offsets = [0, 2], sizes = [4, 1], strides = [1, 1]} : vector<4x4xf32> to vector<4x1xf32>
    %641 = vector.extract_strided_slice %628 {offsets = [2, 0], sizes = [1, 4], strides = [1, 1]} : vector<4x4xf32> to vector<1x4xf32>
    %642 = vector.broadcast %640 : vector<4x1xf32> to vector<4x4xf32>
    %643 = vector.broadcast %641 : vector<1x4xf32> to vector<4x4xf32>
    %644 = arith.mulf %642, %643 : vector<4x4xf32>
    %645 = arith.addf %639, %644 : vector<4x4xf32>
    %646 = vector.extract_strided_slice %556 {offsets = [0, 3], sizes = [4, 1], strides = [1, 1]} : vector<4x4xf32> to vector<4x1xf32>
    %647 = vector.extract_strided_slice %628 {offsets = [3, 0], sizes = [1, 4], strides = [1, 1]} : vector<4x4xf32> to vector<1x4xf32>
    %648 = vector.broadcast %646 : vector<4x1xf32> to vector<4x4xf32>
    %649 = vector.broadcast %647 : vector<1x4xf32> to vector<4x4xf32>
    %650 = arith.mulf %648, %649 : vector<4x4xf32>
    %651 = arith.addf %645, %650 : vector<4x4xf32>
    %cst_33 = arith.constant 2.500000e-01 : f32
    %652 = vector.broadcast %cst_33 : f32 to vector<4x4xf32>
    %653 = arith.mulf %652, %651 : vector<4x4xf32>
    %654 = tpu.concatenate %18, %47 in 0 : vector<32x256xf32>, vector<4x256xf32> -> vector<36x256xf32>
    %cst_34 = arith.constant dense<0.000000e+00> : vector<36x96xf32>
    %655 = tpu.matmul %654, %16, %cst_34 {dimension_numbers = #tpu.dot_dimension_numbers<[1], [0], [0], [1], [0, 0, 1, 1], [], []>} : vector<36x256xf32>, vector<256x96xf32>, vector<36x96xf32> -> vector<36x96xf32>
    %656 = vector.extract_strided_slice %655 {offsets = [0, 64], sizes = [32, 32], strides = [1, 1]} : vector<36x96xf32> to vector<32x32xf32>
    %657 = vector.extract_strided_slice %655 {offsets = [32, 64], sizes = [4, 32], strides = [1, 1]} : vector<36x96xf32> to vector<4x32xf32>
    %658 = vector.extract_strided_slice %653 {offsets = [0, 0], sizes = [4, 1], strides = [1, 1]} : vector<4x4xf32> to vector<4x1xf32>
    %659 = vector.extract_strided_slice %657 {offsets = [0, 0], sizes = [1, 32], strides = [1, 1]} : vector<4x32xf32> to vector<1x32xf32>
    %660 = vector.broadcast %658 : vector<4x1xf32> to vector<4x32xf32>
    %661 = vector.broadcast %659 : vector<1x32xf32> to vector<4x32xf32>
    %662 = arith.mulf %660, %661 : vector<4x32xf32>
    %663 = vector.extract_strided_slice %653 {offsets = [0, 1], sizes = [4, 1], strides = [1, 1]} : vector<4x4xf32> to vector<4x1xf32>
    %664 = vector.extract_strided_slice %657 {offsets = [1, 0], sizes = [1, 32], strides = [1, 1]} : vector<4x32xf32> to vector<1x32xf32>
    %665 = vector.broadcast %663 : vector<4x1xf32> to vector<4x32xf32>
    %666 = vector.broadcast %664 : vector<1x32xf32> to vector<4x32xf32>
    %667 = arith.mulf %665, %666 : vector<4x32xf32>
    %668 = arith.addf %662, %667 : vector<4x32xf32>
    %669 = vector.extract_strided_slice %653 {offsets = [0, 2], sizes = [4, 1], strides = [1, 1]} : vector<4x4xf32> to vector<4x1xf32>
    %670 = vector.extract_strided_slice %657 {offsets = [2, 0], sizes = [1, 32], strides = [1, 1]} : vector<4x32xf32> to vector<1x32xf32>
    %671 = vector.broadcast %669 : vector<4x1xf32> to vector<4x32xf32>
    %672 = vector.broadcast %670 : vector<1x32xf32> to vector<4x32xf32>
    %673 = arith.mulf %671, %672 : vector<4x32xf32>
    %674 = arith.addf %668, %673 : vector<4x32xf32>
    %675 = vector.extract_strided_slice %653 {offsets = [0, 3], sizes = [4, 1], strides = [1, 1]} : vector<4x4xf32> to vector<4x1xf32>
    %676 = vector.extract_strided_slice %657 {offsets = [3, 0], sizes = [1, 32], strides = [1, 1]} : vector<4x32xf32> to vector<1x32xf32>
    %677 = vector.broadcast %675 : vector<4x1xf32> to vector<4x32xf32>
    %678 = vector.broadcast %676 : vector<1x32xf32> to vector<4x32xf32>
    %679 = arith.mulf %677, %678 : vector<4x32xf32>
    %680 = arith.addf %674, %679 : vector<4x32xf32>
    %cst_35 = arith.constant dense<0.000000e+00> : vector<32x4xf32>
    %681 = tpu.matmul %18, %36, %cst_35 {dimension_numbers = #tpu.dot_dimension_numbers<[1], [1], [0], [0], [0, 0, 1, 0], [], []>} : vector<32x256xf32>, vector<4x256xf32>, vector<32x4xf32> -> vector<32x4xf32>
    %682 = vector.extract_strided_slice %681 {offsets = [0, 0], sizes = [32, 1], strides = [1, 1]} : vector<32x4xf32> to vector<32x1xf32>
    %683 = vector.extract_strided_slice %680 {offsets = [0, 0], sizes = [1, 32], strides = [1, 1]} : vector<4x32xf32> to vector<1x32xf32>
    %684 = vector.broadcast %682 : vector<32x1xf32> to vector<32x32xf32>
    %685 = vector.broadcast %683 : vector<1x32xf32> to vector<32x32xf32>
    %686 = arith.mulf %684, %685 : vector<32x32xf32>
    %687 = vector.extract_strided_slice %681 {offsets = [0, 1], sizes = [32, 1], strides = [1, 1]} : vector<32x4xf32> to vector<32x1xf32>
    %688 = vector.extract_strided_slice %680 {offsets = [1, 0], sizes = [1, 32], strides = [1, 1]} : vector<4x32xf32> to vector<1x32xf32>
    %689 = vector.broadcast %687 : vector<32x1xf32> to vector<32x32xf32>
    %690 = vector.broadcast %688 : vector<1x32xf32> to vector<32x32xf32>
    %691 = arith.mulf %689, %690 : vector<32x32xf32>
    %692 = arith.addf %686, %691 : vector<32x32xf32>
    %693 = vector.extract_strided_slice %681 {offsets = [0, 2], sizes = [32, 1], strides = [1, 1]} : vector<32x4xf32> to vector<32x1xf32>
    %694 = vector.extract_strided_slice %680 {offsets = [2, 0], sizes = [1, 32], strides = [1, 1]} : vector<4x32xf32> to vector<1x32xf32>
    %695 = vector.broadcast %693 : vector<32x1xf32> to vector<32x32xf32>
    %696 = vector.broadcast %694 : vector<1x32xf32> to vector<32x32xf32>
    %697 = arith.mulf %695, %696 : vector<32x32xf32>
    %698 = arith.addf %692, %697 : vector<32x32xf32>
    %699 = vector.extract_strided_slice %681 {offsets = [0, 3], sizes = [32, 1], strides = [1, 1]} : vector<32x4xf32> to vector<32x1xf32>
    %700 = vector.extract_strided_slice %680 {offsets = [3, 0], sizes = [1, 32], strides = [1, 1]} : vector<4x32xf32> to vector<1x32xf32>
    %701 = vector.broadcast %699 : vector<32x1xf32> to vector<32x32xf32>
    %702 = vector.broadcast %700 : vector<1x32xf32> to vector<32x32xf32>
    %703 = arith.mulf %701, %702 : vector<32x32xf32>
    %704 = arith.addf %698, %703 : vector<32x32xf32>
    %705 = arith.addf %14, %704 : vector<32x32xf32>
    %706 = arith.addf %705, %656 : vector<32x32xf32>
    %c0_36 = arith.constant 0 : index
    %c1 = arith.constant 1 : index
    %c0_37 = arith.constant 0 : index
    %c0_38 = arith.constant 0 : index
    %707 = vector.load %arg1[%c0_36, %c1, %c0_37, %c0_38] : memref<1x2x256x96xf32, #tpu.memory_space<vmem>>, vector<1x1x256x96xf32>
    %708 = vector.shape_cast %707 : vector<1x1x256x96xf32> to vector<256x96xf32>
    %c1_39 = arith.constant 1 : index
    %c0_40 = arith.constant 0 : index
    %c0_41 = arith.constant 0 : index
    %709 = vector.load %arg3[%c1_39, %c0_40, %c0_41] : memref<2x32x256xf32, #tpu.memory_space<vmem>>, vector<1x32x256xf32>
    %710 = vector.shape_cast %709 : vector<1x32x256xf32> to vector<32x256xf32>
    %cst_42 = arith.constant dense<0.000000e+00> : vector<4x96xf32>
    %711 = tpu.matmul %12, %708, %cst_42 {dimension_numbers = #tpu.dot_dimension_numbers<[1], [0], [0], [1], [0, 0, 1, 1], [], []>} : vector<4x256xf32>, vector<256x96xf32>, vector<4x96xf32> -> vector<4x96xf32>
    %712 = vector.extract_strided_slice %711 {offsets = [0, 0], sizes = [4, 32], strides = [1, 1]} : vector<4x96xf32> to vector<4x32xf32>
    %713 = vector.extract_strided_slice %711 {offsets = [0, 32], sizes = [4, 32], strides = [1, 1]} : vector<4x96xf32> to vector<4x32xf32>
    %714 = tpu.concatenate %713, %13, %13 in 1 : vector<4x32xf32>, vector<4x32xf32>, vector<4x32xf32> -> vector<4x96xf32>
    %715 = tpu.concatenate %13, %712, %13 in 1 : vector<4x32xf32>, vector<4x32xf32>, vector<4x32xf32> -> vector<4x96xf32>
    %716 = tpu.concatenate %714, %715 in 0 : vector<4x96xf32>, vector<4x96xf32> -> vector<8x96xf32>
    %cst_43 = arith.constant dense<0.000000e+00> : vector<8x256xf32>
    %717 = tpu.matmul %716, %708, %cst_43 {dimension_numbers = #tpu.dot_dimension_numbers<[1], [1], [0], [0], [0, 0, 1, 0], [], []>} : vector<8x96xf32>, vector<256x96xf32>, vector<8x256xf32> -> vector<8x256xf32>
    %718 = vector.extract_strided_slice %717 {offsets = [0, 0], sizes = [4, 256], strides = [1, 1]} : vector<8x256xf32> to vector<4x256xf32>
    %cst_44 = arith.constant dense<0xFF800000> : vector<4xf32>
    %719 = vector.multi_reduction <maximumf>, %718, %cst_44 [1] : vector<4x256xf32> to vector<4xf32>
    %720 = vector.shape_cast %719 : vector<4xf32> to vector<4x1xf32>
    %721 = vector.broadcast %720 : vector<4x1xf32> to vector<4x256xf32>
    %722 = arith.subf %718, %721 : vector<4x256xf32>
    %723 = math.exp %722 : vector<4x256xf32>
    %cst_45 = arith.constant dense<0.000000e+00> : vector<4xf32>
    %724 = vector.multi_reduction <add>, %723, %cst_45 [1] : vector<4x256xf32> to vector<4xf32>
    %725 = vector.shape_cast %724 : vector<4xf32> to vector<4x1xf32>
    %726 = tpu.reciprocal %725 {approx = true} : vector<4x1xf32> -> vector<4x1xf32>
    %727 = vector.broadcast %726 : vector<4x1xf32> to vector<4x256xf32>
    %728 = arith.mulf %723, %727 : vector<4x256xf32>
    %729 = vector.extract_strided_slice %717 {offsets = [4, 0], sizes = [4, 256], strides = [1, 1]} : vector<8x256xf32> to vector<4x256xf32>
    %cst_46 = arith.constant dense<0xFF800000> : vector<256xf32>
    %730 = vector.multi_reduction <maximumf>, %729, %cst_46 [0] : vector<4x256xf32> to vector<256xf32>
    %731 = vector.shape_cast %730 : vector<256xf32> to vector<1x256xf32>
    %732 = vector.broadcast %731 : vector<1x256xf32> to vector<4x256xf32>
    %733 = arith.subf %729, %732 : vector<4x256xf32>
    %734 = math.exp %733 : vector<4x256xf32>
    %cst_47 = arith.constant dense<0.000000e+00> : vector<256xf32>
    %735 = vector.multi_reduction <add>, %734, %cst_47 [0] : vector<4x256xf32> to vector<256xf32>
    %736 = vector.shape_cast %735 : vector<256xf32> to vector<1x256xf32>
    %737 = tpu.reciprocal %736 {approx = true} : vector<1x256xf32> -> vector<1x256xf32>
    %738 = vector.broadcast %737 : vector<1x256xf32> to vector<4x256xf32>
    %739 = arith.mulf %734, %738 : vector<4x256xf32>
    %cst_48 = arith.constant dense<0.000000e+00> : vector<4x4xf32>
    %740 = tpu.matmul %712, %713, %cst_48 {dimension_numbers = #tpu.dot_dimension_numbers<[1], [1], [0], [0], [0, 0, 1, 0], [], []>} : vector<4x32xf32>, vector<4x32xf32>, vector<4x4xf32> -> vector<4x4xf32>
    %cst_49 = arith.constant dense<0xFF800000> : vector<4xf32>
    %741 = vector.multi_reduction <maximumf>, %740, %cst_49 [0] : vector<4x4xf32> to vector<4xf32>
    %742 = vector.shape_cast %741 : vector<4xf32> to vector<1x4xf32>
    %743 = vector.broadcast %742 : vector<1x4xf32> to vector<4x4xf32>
    %744 = arith.subf %740, %743 : vector<4x4xf32>
    %745 = math.exp %744 : vector<4x4xf32>
    %cst_50 = arith.constant dense<0.000000e+00> : vector<4xf32>
    %746 = vector.multi_reduction <add>, %745, %cst_50 [0] : vector<4x4xf32> to vector<4xf32>
    %747 = vector.shape_cast %746 : vector<4xf32> to vector<1x4xf32>
    %748 = vector.broadcast %747 : vector<1x4xf32> to vector<4x4xf32>
    %749 = arith.divf %745, %748 : vector<4x4xf32>
    %750 = math.absf %749 : vector<4x4xf32>
    %cst_51 = arith.constant dense<0.000000e+00> : vector<4xf32>
    %751 = vector.multi_reduction <add>, %750, %cst_51 [0] : vector<4x4xf32> to vector<4xf32>
    %752 = vector.shape_cast %751 : vector<4xf32> to vector<1x4xf32>
    %cst_52 = arith.constant dense<0xFF800000> : vector<1xf32>
    %753 = vector.multi_reduction <maximumf>, %752, %cst_52 [1] : vector<1x4xf32> to vector<1xf32>
    %754 = vector.shape_cast %753 : vector<1xf32> to vector<1x1xf32>
    %cst_53 = arith.constant dense<0.000000e+00> : vector<4xf32>
    %755 = vector.multi_reduction <add>, %750, %cst_53 [1] : vector<4x4xf32> to vector<4xf32>
    %756 = vector.shape_cast %755 : vector<4xf32> to vector<4x1xf32>
    %cst_54 = arith.constant dense<0xFF800000> : vector<1xf32>
    %757 = vector.multi_reduction <maximumf>, %756, %cst_54 [0] : vector<4x1xf32> to vector<1xf32>
    %758 = vector.shape_cast %757 : vector<1xf32> to vector<1x1xf32>
    %759 = tpu.transpose %749, [1, 0] : vector<4x4xf32> -> vector<4x4xf32>
    %760 = arith.mulf %754, %758 : vector<1x1xf32>
    %761 = tpu.reciprocal %760 {approx = true} : vector<1x1xf32> -> vector<1x1xf32>
    %762 = vector.broadcast %761 : vector<1x1xf32> to vector<4x4xf32>
    %763 = arith.mulf %759, %762 : vector<4x4xf32>
    %764 = vector.extract_strided_slice %749 {offsets = [0, 0], sizes = [4, 1], strides = [1, 1]} : vector<4x4xf32> to vector<4x1xf32>
    %765 = vector.extract_strided_slice %763 {offsets = [0, 0], sizes = [1, 4], strides = [1, 1]} : vector<4x4xf32> to vector<1x4xf32>
    %766 = vector.broadcast %764 : vector<4x1xf32> to vector<4x4xf32>
    %767 = vector.broadcast %765 : vector<1x4xf32> to vector<4x4xf32>
    %768 = arith.mulf %766, %767 : vector<4x4xf32>
    %769 = vector.extract_strided_slice %749 {offsets = [0, 1], sizes = [4, 1], strides = [1, 1]} : vector<4x4xf32> to vector<4x1xf32>
    %770 = vector.extract_strided_slice %763 {offsets = [1, 0], sizes = [1, 4], strides = [1, 1]} : vector<4x4xf32> to vector<1x4xf32>
    %771 = vector.broadcast %769 : vector<4x1xf32> to vector<4x4xf32>
    %772 = vector.broadcast %770 : vector<1x4xf32> to vector<4x4xf32>
    %773 = arith.mulf %771, %772 : vector<4x4xf32>
    %774 = arith.addf %768, %773 : vector<4x4xf32>
    %775 = vector.extract_strided_slice %749 {offsets = [0, 2], sizes = [4, 1], strides = [1, 1]} : vector<4x4xf32> to vector<4x1xf32>
    %776 = vector.extract_strided_slice %763 {offsets = [2, 0], sizes = [1, 4], strides = [1, 1]} : vector<4x4xf32> to vector<1x4xf32>
    %777 = vector.broadcast %775 : vector<4x1xf32> to vector<4x4xf32>
    %778 = vector.broadcast %776 : vector<1x4xf32> to vector<4x4xf32>
    %779 = arith.mulf %777, %778 : vector<4x4xf32>
    %780 = arith.addf %774, %779 : vector<4x4xf32>
    %781 = vector.extract_strided_slice %749 {offsets = [0, 3], sizes = [4, 1], strides = [1, 1]} : vector<4x4xf32> to vector<4x1xf32>
    %782 = vector.extract_strided_slice %763 {offsets = [3, 0], sizes = [1, 4], strides = [1, 1]} : vector<4x4xf32> to vector<1x4xf32>
    %783 = vector.broadcast %781 : vector<4x1xf32> to vector<4x4xf32>
    %784 = vector.broadcast %782 : vector<1x4xf32> to vector<4x4xf32>
    %785 = arith.mulf %783, %784 : vector<4x4xf32>
    %786 = arith.addf %780, %785 : vector<4x4xf32>
    %787 = arith.subf %7, %786 : vector<4x4xf32>
    %788 = vector.extract_strided_slice %786 {offsets = [0, 0], sizes = [4, 1], strides = [1, 1]} : vector<4x4xf32> to vector<4x1xf32>
    %789 = vector.extract_strided_slice %787 {offsets = [0, 0], sizes = [1, 4], strides = [1, 1]} : vector<4x4xf32> to vector<1x4xf32>
    %790 = vector.broadcast %788 : vector<4x1xf32> to vector<4x4xf32>
    %791 = vector.broadcast %789 : vector<1x4xf32> to vector<4x4xf32>
    %792 = arith.mulf %790, %791 : vector<4x4xf32>
    %793 = vector.extract_strided_slice %786 {offsets = [0, 1], sizes = [4, 1], strides = [1, 1]} : vector<4x4xf32> to vector<4x1xf32>
    %794 = vector.extract_strided_slice %787 {offsets = [1, 0], sizes = [1, 4], strides = [1, 1]} : vector<4x4xf32> to vector<1x4xf32>
    %795 = vector.broadcast %793 : vector<4x1xf32> to vector<4x4xf32>
    %796 = vector.broadcast %794 : vector<1x4xf32> to vector<4x4xf32>
    %797 = arith.mulf %795, %796 : vector<4x4xf32>
    %798 = arith.addf %792, %797 : vector<4x4xf32>
    %799 = vector.extract_strided_slice %786 {offsets = [0, 2], sizes = [4, 1], strides = [1, 1]} : vector<4x4xf32> to vector<4x1xf32>
    %800 = vector.extract_strided_slice %787 {offsets = [2, 0], sizes = [1, 4], strides = [1, 1]} : vector<4x4xf32> to vector<1x4xf32>
    %801 = vector.broadcast %799 : vector<4x1xf32> to vector<4x4xf32>
    %802 = vector.broadcast %800 : vector<1x4xf32> to vector<4x4xf32>
    %803 = arith.mulf %801, %802 : vector<4x4xf32>
    %804 = arith.addf %798, %803 : vector<4x4xf32>
    %805 = vector.extract_strided_slice %786 {offsets = [0, 3], sizes = [4, 1], strides = [1, 1]} : vector<4x4xf32> to vector<4x1xf32>
    %806 = vector.extract_strided_slice %787 {offsets = [3, 0], sizes = [1, 4], strides = [1, 1]} : vector<4x4xf32> to vector<1x4xf32>
    %807 = vector.broadcast %805 : vector<4x1xf32> to vector<4x4xf32>
    %808 = vector.broadcast %806 : vector<1x4xf32> to vector<4x4xf32>
    %809 = arith.mulf %807, %808 : vector<4x4xf32>
    %810 = arith.addf %804, %809 : vector<4x4xf32>
    %811 = arith.subf %11, %810 : vector<4x4xf32>
    %812 = vector.extract_strided_slice %786 {offsets = [0, 0], sizes = [4, 1], strides = [1, 1]} : vector<4x4xf32> to vector<4x1xf32>
    %813 = vector.extract_strided_slice %811 {offsets = [0, 0], sizes = [1, 4], strides = [1, 1]} : vector<4x4xf32> to vector<1x4xf32>
    %814 = vector.broadcast %812 : vector<4x1xf32> to vector<4x4xf32>
    %815 = vector.broadcast %813 : vector<1x4xf32> to vector<4x4xf32>
    %816 = arith.mulf %814, %815 : vector<4x4xf32>
    %817 = vector.extract_strided_slice %786 {offsets = [0, 1], sizes = [4, 1], strides = [1, 1]} : vector<4x4xf32> to vector<4x1xf32>
    %818 = vector.extract_strided_slice %811 {offsets = [1, 0], sizes = [1, 4], strides = [1, 1]} : vector<4x4xf32> to vector<1x4xf32>
    %819 = vector.broadcast %817 : vector<4x1xf32> to vector<4x4xf32>
    %820 = vector.broadcast %818 : vector<1x4xf32> to vector<4x4xf32>
    %821 = arith.mulf %819, %820 : vector<4x4xf32>
    %822 = arith.addf %816, %821 : vector<4x4xf32>
    %823 = vector.extract_strided_slice %786 {offsets = [0, 2], sizes = [4, 1], strides = [1, 1]} : vector<4x4xf32> to vector<4x1xf32>
    %824 = vector.extract_strided_slice %811 {offsets = [2, 0], sizes = [1, 4], strides = [1, 1]} : vector<4x4xf32> to vector<1x4xf32>
    %825 = vector.broadcast %823 : vector<4x1xf32> to vector<4x4xf32>
    %826 = vector.broadcast %824 : vector<1x4xf32> to vector<4x4xf32>
    %827 = arith.mulf %825, %826 : vector<4x4xf32>
    %828 = arith.addf %822, %827 : vector<4x4xf32>
    %829 = vector.extract_strided_slice %786 {offsets = [0, 3], sizes = [4, 1], strides = [1, 1]} : vector<4x4xf32> to vector<4x1xf32>
    %830 = vector.extract_strided_slice %811 {offsets = [3, 0], sizes = [1, 4], strides = [1, 1]} : vector<4x4xf32> to vector<1x4xf32>
    %831 = vector.broadcast %829 : vector<4x1xf32> to vector<4x4xf32>
    %832 = vector.broadcast %830 : vector<1x4xf32> to vector<4x4xf32>
    %833 = arith.mulf %831, %832 : vector<4x4xf32>
    %834 = arith.addf %828, %833 : vector<4x4xf32>
    %835 = arith.subf %9, %834 : vector<4x4xf32>
    %836 = vector.extract_strided_slice %763 {offsets = [0, 0], sizes = [4, 1], strides = [1, 1]} : vector<4x4xf32> to vector<4x1xf32>
    %837 = vector.extract_strided_slice %835 {offsets = [0, 0], sizes = [1, 4], strides = [1, 1]} : vector<4x4xf32> to vector<1x4xf32>
    %838 = vector.broadcast %836 : vector<4x1xf32> to vector<4x4xf32>
    %839 = vector.broadcast %837 : vector<1x4xf32> to vector<4x4xf32>
    %840 = arith.mulf %838, %839 : vector<4x4xf32>
    %841 = vector.extract_strided_slice %763 {offsets = [0, 1], sizes = [4, 1], strides = [1, 1]} : vector<4x4xf32> to vector<4x1xf32>
    %842 = vector.extract_strided_slice %835 {offsets = [1, 0], sizes = [1, 4], strides = [1, 1]} : vector<4x4xf32> to vector<1x4xf32>
    %843 = vector.broadcast %841 : vector<4x1xf32> to vector<4x4xf32>
    %844 = vector.broadcast %842 : vector<1x4xf32> to vector<4x4xf32>
    %845 = arith.mulf %843, %844 : vector<4x4xf32>
    %846 = arith.addf %840, %845 : vector<4x4xf32>
    %847 = vector.extract_strided_slice %763 {offsets = [0, 2], sizes = [4, 1], strides = [1, 1]} : vector<4x4xf32> to vector<4x1xf32>
    %848 = vector.extract_strided_slice %835 {offsets = [2, 0], sizes = [1, 4], strides = [1, 1]} : vector<4x4xf32> to vector<1x4xf32>
    %849 = vector.broadcast %847 : vector<4x1xf32> to vector<4x4xf32>
    %850 = vector.broadcast %848 : vector<1x4xf32> to vector<4x4xf32>
    %851 = arith.mulf %849, %850 : vector<4x4xf32>
    %852 = arith.addf %846, %851 : vector<4x4xf32>
    %853 = vector.extract_strided_slice %763 {offsets = [0, 3], sizes = [4, 1], strides = [1, 1]} : vector<4x4xf32> to vector<4x1xf32>
    %854 = vector.extract_strided_slice %835 {offsets = [3, 0], sizes = [1, 4], strides = [1, 1]} : vector<4x4xf32> to vector<1x4xf32>
    %855 = vector.broadcast %853 : vector<4x1xf32> to vector<4x4xf32>
    %856 = vector.broadcast %854 : vector<1x4xf32> to vector<4x4xf32>
    %857 = arith.mulf %855, %856 : vector<4x4xf32>
    %858 = arith.addf %852, %857 : vector<4x4xf32>
    %cst_55 = arith.constant 2.500000e-01 : f32
    %859 = vector.broadcast %cst_55 : f32 to vector<4x4xf32>
    %860 = arith.mulf %859, %858 : vector<4x4xf32>
    %861 = vector.extract_strided_slice %749 {offsets = [0, 0], sizes = [4, 1], strides = [1, 1]} : vector<4x4xf32> to vector<4x1xf32>
    %862 = vector.extract_strided_slice %860 {offsets = [0, 0], sizes = [1, 4], strides = [1, 1]} : vector<4x4xf32> to vector<1x4xf32>
    %863 = vector.broadcast %861 : vector<4x1xf32> to vector<4x4xf32>
    %864 = vector.broadcast %862 : vector<1x4xf32> to vector<4x4xf32>
    %865 = arith.mulf %863, %864 : vector<4x4xf32>
    %866 = vector.extract_strided_slice %749 {offsets = [0, 1], sizes = [4, 1], strides = [1, 1]} : vector<4x4xf32> to vector<4x1xf32>
    %867 = vector.extract_strided_slice %860 {offsets = [1, 0], sizes = [1, 4], strides = [1, 1]} : vector<4x4xf32> to vector<1x4xf32>
    %868 = vector.broadcast %866 : vector<4x1xf32> to vector<4x4xf32>
    %869 = vector.broadcast %867 : vector<1x4xf32> to vector<4x4xf32>
    %870 = arith.mulf %868, %869 : vector<4x4xf32>
    %871 = arith.addf %865, %870 : vector<4x4xf32>
    %872 = vector.extract_strided_slice %749 {offsets = [0, 2], sizes = [4, 1], strides = [1, 1]} : vector<4x4xf32> to vector<4x1xf32>
    %873 = vector.extract_strided_slice %860 {offsets = [2, 0], sizes = [1, 4], strides = [1, 1]} : vector<4x4xf32> to vector<1x4xf32>
    %874 = vector.broadcast %872 : vector<4x1xf32> to vector<4x4xf32>
    %875 = vector.broadcast %873 : vector<1x4xf32> to vector<4x4xf32>
    %876 = arith.mulf %874, %875 : vector<4x4xf32>
    %877 = arith.addf %871, %876 : vector<4x4xf32>
    %878 = vector.extract_strided_slice %749 {offsets = [0, 3], sizes = [4, 1], strides = [1, 1]} : vector<4x4xf32> to vector<4x1xf32>
    %879 = vector.extract_strided_slice %860 {offsets = [3, 0], sizes = [1, 4], strides = [1, 1]} : vector<4x4xf32> to vector<1x4xf32>
    %880 = vector.broadcast %878 : vector<4x1xf32> to vector<4x4xf32>
    %881 = vector.broadcast %879 : vector<1x4xf32> to vector<4x4xf32>
    %882 = arith.mulf %880, %881 : vector<4x4xf32>
    %883 = arith.addf %877, %882 : vector<4x4xf32>
    %884 = arith.subf %7, %883 : vector<4x4xf32>
    %885 = vector.extract_strided_slice %883 {offsets = [0, 0], sizes = [4, 1], strides = [1, 1]} : vector<4x4xf32> to vector<4x1xf32>
    %886 = vector.extract_strided_slice %884 {offsets = [0, 0], sizes = [1, 4], strides = [1, 1]} : vector<4x4xf32> to vector<1x4xf32>
    %887 = vector.broadcast %885 : vector<4x1xf32> to vector<4x4xf32>
    %888 = vector.broadcast %886 : vector<1x4xf32> to vector<4x4xf32>
    %889 = arith.mulf %887, %888 : vector<4x4xf32>
    %890 = vector.extract_strided_slice %883 {offsets = [0, 1], sizes = [4, 1], strides = [1, 1]} : vector<4x4xf32> to vector<4x1xf32>
    %891 = vector.extract_strided_slice %884 {offsets = [1, 0], sizes = [1, 4], strides = [1, 1]} : vector<4x4xf32> to vector<1x4xf32>
    %892 = vector.broadcast %890 : vector<4x1xf32> to vector<4x4xf32>
    %893 = vector.broadcast %891 : vector<1x4xf32> to vector<4x4xf32>
    %894 = arith.mulf %892, %893 : vector<4x4xf32>
    %895 = arith.addf %889, %894 : vector<4x4xf32>
    %896 = vector.extract_strided_slice %883 {offsets = [0, 2], sizes = [4, 1], strides = [1, 1]} : vector<4x4xf32> to vector<4x1xf32>
    %897 = vector.extract_strided_slice %884 {offsets = [2, 0], sizes = [1, 4], strides = [1, 1]} : vector<4x4xf32> to vector<1x4xf32>
    %898 = vector.broadcast %896 : vector<4x1xf32> to vector<4x4xf32>
    %899 = vector.broadcast %897 : vector<1x4xf32> to vector<4x4xf32>
    %900 = arith.mulf %898, %899 : vector<4x4xf32>
    %901 = arith.addf %895, %900 : vector<4x4xf32>
    %902 = vector.extract_strided_slice %883 {offsets = [0, 3], sizes = [4, 1], strides = [1, 1]} : vector<4x4xf32> to vector<4x1xf32>
    %903 = vector.extract_strided_slice %884 {offsets = [3, 0], sizes = [1, 4], strides = [1, 1]} : vector<4x4xf32> to vector<1x4xf32>
    %904 = vector.broadcast %902 : vector<4x1xf32> to vector<4x4xf32>
    %905 = vector.broadcast %903 : vector<1x4xf32> to vector<4x4xf32>
    %906 = arith.mulf %904, %905 : vector<4x4xf32>
    %907 = arith.addf %901, %906 : vector<4x4xf32>
    %908 = arith.subf %11, %907 : vector<4x4xf32>
    %909 = vector.extract_strided_slice %883 {offsets = [0, 0], sizes = [4, 1], strides = [1, 1]} : vector<4x4xf32> to vector<4x1xf32>
    %910 = vector.extract_strided_slice %908 {offsets = [0, 0], sizes = [1, 4], strides = [1, 1]} : vector<4x4xf32> to vector<1x4xf32>
    %911 = vector.broadcast %909 : vector<4x1xf32> to vector<4x4xf32>
    %912 = vector.broadcast %910 : vector<1x4xf32> to vector<4x4xf32>
    %913 = arith.mulf %911, %912 : vector<4x4xf32>
    %914 = vector.extract_strided_slice %883 {offsets = [0, 1], sizes = [4, 1], strides = [1, 1]} : vector<4x4xf32> to vector<4x1xf32>
    %915 = vector.extract_strided_slice %908 {offsets = [1, 0], sizes = [1, 4], strides = [1, 1]} : vector<4x4xf32> to vector<1x4xf32>
    %916 = vector.broadcast %914 : vector<4x1xf32> to vector<4x4xf32>
    %917 = vector.broadcast %915 : vector<1x4xf32> to vector<4x4xf32>
    %918 = arith.mulf %916, %917 : vector<4x4xf32>
    %919 = arith.addf %913, %918 : vector<4x4xf32>
    %920 = vector.extract_strided_slice %883 {offsets = [0, 2], sizes = [4, 1], strides = [1, 1]} : vector<4x4xf32> to vector<4x1xf32>
    %921 = vector.extract_strided_slice %908 {offsets = [2, 0], sizes = [1, 4], strides = [1, 1]} : vector<4x4xf32> to vector<1x4xf32>
    %922 = vector.broadcast %920 : vector<4x1xf32> to vector<4x4xf32>
    %923 = vector.broadcast %921 : vector<1x4xf32> to vector<4x4xf32>
    %924 = arith.mulf %922, %923 : vector<4x4xf32>
    %925 = arith.addf %919, %924 : vector<4x4xf32>
    %926 = vector.extract_strided_slice %883 {offsets = [0, 3], sizes = [4, 1], strides = [1, 1]} : vector<4x4xf32> to vector<4x1xf32>
    %927 = vector.extract_strided_slice %908 {offsets = [3, 0], sizes = [1, 4], strides = [1, 1]} : vector<4x4xf32> to vector<1x4xf32>
    %928 = vector.broadcast %926 : vector<4x1xf32> to vector<4x4xf32>
    %929 = vector.broadcast %927 : vector<1x4xf32> to vector<4x4xf32>
    %930 = arith.mulf %928, %929 : vector<4x4xf32>
    %931 = arith.addf %925, %930 : vector<4x4xf32>
    %932 = arith.subf %9, %931 : vector<4x4xf32>
    %933 = vector.extract_strided_slice %860 {offsets = [0, 0], sizes = [4, 1], strides = [1, 1]} : vector<4x4xf32> to vector<4x1xf32>
    %934 = vector.extract_strided_slice %932 {offsets = [0, 0], sizes = [1, 4], strides = [1, 1]} : vector<4x4xf32> to vector<1x4xf32>
    %935 = vector.broadcast %933 : vector<4x1xf32> to vector<4x4xf32>
    %936 = vector.broadcast %934 : vector<1x4xf32> to vector<4x4xf32>
    %937 = arith.mulf %935, %936 : vector<4x4xf32>
    %938 = vector.extract_strided_slice %860 {offsets = [0, 1], sizes = [4, 1], strides = [1, 1]} : vector<4x4xf32> to vector<4x1xf32>
    %939 = vector.extract_strided_slice %932 {offsets = [1, 0], sizes = [1, 4], strides = [1, 1]} : vector<4x4xf32> to vector<1x4xf32>
    %940 = vector.broadcast %938 : vector<4x1xf32> to vector<4x4xf32>
    %941 = vector.broadcast %939 : vector<1x4xf32> to vector<4x4xf32>
    %942 = arith.mulf %940, %941 : vector<4x4xf32>
    %943 = arith.addf %937, %942 : vector<4x4xf32>
    %944 = vector.extract_strided_slice %860 {offsets = [0, 2], sizes = [4, 1], strides = [1, 1]} : vector<4x4xf32> to vector<4x1xf32>
    %945 = vector.extract_strided_slice %932 {offsets = [2, 0], sizes = [1, 4], strides = [1, 1]} : vector<4x4xf32> to vector<1x4xf32>
    %946 = vector.broadcast %944 : vector<4x1xf32> to vector<4x4xf32>
    %947 = vector.broadcast %945 : vector<1x4xf32> to vector<4x4xf32>
    %948 = arith.mulf %946, %947 : vector<4x4xf32>
    %949 = arith.addf %943, %948 : vector<4x4xf32>
    %950 = vector.extract_strided_slice %860 {offsets = [0, 3], sizes = [4, 1], strides = [1, 1]} : vector<4x4xf32> to vector<4x1xf32>
    %951 = vector.extract_strided_slice %932 {offsets = [3, 0], sizes = [1, 4], strides = [1, 1]} : vector<4x4xf32> to vector<1x4xf32>
    %952 = vector.broadcast %950 : vector<4x1xf32> to vector<4x4xf32>
    %953 = vector.broadcast %951 : vector<1x4xf32> to vector<4x4xf32>
    %954 = arith.mulf %952, %953 : vector<4x4xf32>
    %955 = arith.addf %949, %954 : vector<4x4xf32>
    %cst_56 = arith.constant 2.500000e-01 : f32
    %956 = vector.broadcast %cst_56 : f32 to vector<4x4xf32>
    %957 = arith.mulf %956, %955 : vector<4x4xf32>
    %958 = vector.extract_strided_slice %749 {offsets = [0, 0], sizes = [4, 1], strides = [1, 1]} : vector<4x4xf32> to vector<4x1xf32>
    %959 = vector.extract_strided_slice %957 {offsets = [0, 0], sizes = [1, 4], strides = [1, 1]} : vector<4x4xf32> to vector<1x4xf32>
    %960 = vector.broadcast %958 : vector<4x1xf32> to vector<4x4xf32>
    %961 = vector.broadcast %959 : vector<1x4xf32> to vector<4x4xf32>
    %962 = arith.mulf %960, %961 : vector<4x4xf32>
    %963 = vector.extract_strided_slice %749 {offsets = [0, 1], sizes = [4, 1], strides = [1, 1]} : vector<4x4xf32> to vector<4x1xf32>
    %964 = vector.extract_strided_slice %957 {offsets = [1, 0], sizes = [1, 4], strides = [1, 1]} : vector<4x4xf32> to vector<1x4xf32>
    %965 = vector.broadcast %963 : vector<4x1xf32> to vector<4x4xf32>
    %966 = vector.broadcast %964 : vector<1x4xf32> to vector<4x4xf32>
    %967 = arith.mulf %965, %966 : vector<4x4xf32>
    %968 = arith.addf %962, %967 : vector<4x4xf32>
    %969 = vector.extract_strided_slice %749 {offsets = [0, 2], sizes = [4, 1], strides = [1, 1]} : vector<4x4xf32> to vector<4x1xf32>
    %970 = vector.extract_strided_slice %957 {offsets = [2, 0], sizes = [1, 4], strides = [1, 1]} : vector<4x4xf32> to vector<1x4xf32>
    %971 = vector.broadcast %969 : vector<4x1xf32> to vector<4x4xf32>
    %972 = vector.broadcast %970 : vector<1x4xf32> to vector<4x4xf32>
    %973 = arith.mulf %971, %972 : vector<4x4xf32>
    %974 = arith.addf %968, %973 : vector<4x4xf32>
    %975 = vector.extract_strided_slice %749 {offsets = [0, 3], sizes = [4, 1], strides = [1, 1]} : vector<4x4xf32> to vector<4x1xf32>
    %976 = vector.extract_strided_slice %957 {offsets = [3, 0], sizes = [1, 4], strides = [1, 1]} : vector<4x4xf32> to vector<1x4xf32>
    %977 = vector.broadcast %975 : vector<4x1xf32> to vector<4x4xf32>
    %978 = vector.broadcast %976 : vector<1x4xf32> to vector<4x4xf32>
    %979 = arith.mulf %977, %978 : vector<4x4xf32>
    %980 = arith.addf %974, %979 : vector<4x4xf32>
    %981 = arith.subf %7, %980 : vector<4x4xf32>
    %982 = vector.extract_strided_slice %980 {offsets = [0, 0], sizes = [4, 1], strides = [1, 1]} : vector<4x4xf32> to vector<4x1xf32>
    %983 = vector.extract_strided_slice %981 {offsets = [0, 0], sizes = [1, 4], strides = [1, 1]} : vector<4x4xf32> to vector<1x4xf32>
    %984 = vector.broadcast %982 : vector<4x1xf32> to vector<4x4xf32>
    %985 = vector.broadcast %983 : vector<1x4xf32> to vector<4x4xf32>
    %986 = arith.mulf %984, %985 : vector<4x4xf32>
    %987 = vector.extract_strided_slice %980 {offsets = [0, 1], sizes = [4, 1], strides = [1, 1]} : vector<4x4xf32> to vector<4x1xf32>
    %988 = vector.extract_strided_slice %981 {offsets = [1, 0], sizes = [1, 4], strides = [1, 1]} : vector<4x4xf32> to vector<1x4xf32>
    %989 = vector.broadcast %987 : vector<4x1xf32> to vector<4x4xf32>
    %990 = vector.broadcast %988 : vector<1x4xf32> to vector<4x4xf32>
    %991 = arith.mulf %989, %990 : vector<4x4xf32>
    %992 = arith.addf %986, %991 : vector<4x4xf32>
    %993 = vector.extract_strided_slice %980 {offsets = [0, 2], sizes = [4, 1], strides = [1, 1]} : vector<4x4xf32> to vector<4x1xf32>
    %994 = vector.extract_strided_slice %981 {offsets = [2, 0], sizes = [1, 4], strides = [1, 1]} : vector<4x4xf32> to vector<1x4xf32>
    %995 = vector.broadcast %993 : vector<4x1xf32> to vector<4x4xf32>
    %996 = vector.broadcast %994 : vector<1x4xf32> to vector<4x4xf32>
    %997 = arith.mulf %995, %996 : vector<4x4xf32>
    %998 = arith.addf %992, %997 : vector<4x4xf32>
    %999 = vector.extract_strided_slice %980 {offsets = [0, 3], sizes = [4, 1], strides = [1, 1]} : vector<4x4xf32> to vector<4x1xf32>
    %1000 = vector.extract_strided_slice %981 {offsets = [3, 0], sizes = [1, 4], strides = [1, 1]} : vector<4x4xf32> to vector<1x4xf32>
    %1001 = vector.broadcast %999 : vector<4x1xf32> to vector<4x4xf32>
    %1002 = vector.broadcast %1000 : vector<1x4xf32> to vector<4x4xf32>
    %1003 = arith.mulf %1001, %1002 : vector<4x4xf32>
    %1004 = arith.addf %998, %1003 : vector<4x4xf32>
    %1005 = arith.subf %11, %1004 : vector<4x4xf32>
    %1006 = vector.extract_strided_slice %980 {offsets = [0, 0], sizes = [4, 1], strides = [1, 1]} : vector<4x4xf32> to vector<4x1xf32>
    %1007 = vector.extract_strided_slice %1005 {offsets = [0, 0], sizes = [1, 4], strides = [1, 1]} : vector<4x4xf32> to vector<1x4xf32>
    %1008 = vector.broadcast %1006 : vector<4x1xf32> to vector<4x4xf32>
    %1009 = vector.broadcast %1007 : vector<1x4xf32> to vector<4x4xf32>
    %1010 = arith.mulf %1008, %1009 : vector<4x4xf32>
    %1011 = vector.extract_strided_slice %980 {offsets = [0, 1], sizes = [4, 1], strides = [1, 1]} : vector<4x4xf32> to vector<4x1xf32>
    %1012 = vector.extract_strided_slice %1005 {offsets = [1, 0], sizes = [1, 4], strides = [1, 1]} : vector<4x4xf32> to vector<1x4xf32>
    %1013 = vector.broadcast %1011 : vector<4x1xf32> to vector<4x4xf32>
    %1014 = vector.broadcast %1012 : vector<1x4xf32> to vector<4x4xf32>
    %1015 = arith.mulf %1013, %1014 : vector<4x4xf32>
    %1016 = arith.addf %1010, %1015 : vector<4x4xf32>
    %1017 = vector.extract_strided_slice %980 {offsets = [0, 2], sizes = [4, 1], strides = [1, 1]} : vector<4x4xf32> to vector<4x1xf32>
    %1018 = vector.extract_strided_slice %1005 {offsets = [2, 0], sizes = [1, 4], strides = [1, 1]} : vector<4x4xf32> to vector<1x4xf32>
    %1019 = vector.broadcast %1017 : vector<4x1xf32> to vector<4x4xf32>
    %1020 = vector.broadcast %1018 : vector<1x4xf32> to vector<4x4xf32>
    %1021 = arith.mulf %1019, %1020 : vector<4x4xf32>
    %1022 = arith.addf %1016, %1021 : vector<4x4xf32>
    %1023 = vector.extract_strided_slice %980 {offsets = [0, 3], sizes = [4, 1], strides = [1, 1]} : vector<4x4xf32> to vector<4x1xf32>
    %1024 = vector.extract_strided_slice %1005 {offsets = [3, 0], sizes = [1, 4], strides = [1, 1]} : vector<4x4xf32> to vector<1x4xf32>
    %1025 = vector.broadcast %1023 : vector<4x1xf32> to vector<4x4xf32>
    %1026 = vector.broadcast %1024 : vector<1x4xf32> to vector<4x4xf32>
    %1027 = arith.mulf %1025, %1026 : vector<4x4xf32>
    %1028 = arith.addf %1022, %1027 : vector<4x4xf32>
    %1029 = arith.subf %9, %1028 : vector<4x4xf32>
    %1030 = vector.extract_strided_slice %957 {offsets = [0, 0], sizes = [4, 1], strides = [1, 1]} : vector<4x4xf32> to vector<4x1xf32>
    %1031 = vector.extract_strided_slice %1029 {offsets = [0, 0], sizes = [1, 4], strides = [1, 1]} : vector<4x4xf32> to vector<1x4xf32>
    %1032 = vector.broadcast %1030 : vector<4x1xf32> to vector<4x4xf32>
    %1033 = vector.broadcast %1031 : vector<1x4xf32> to vector<4x4xf32>
    %1034 = arith.mulf %1032, %1033 : vector<4x4xf32>
    %1035 = vector.extract_strided_slice %957 {offsets = [0, 1], sizes = [4, 1], strides = [1, 1]} : vector<4x4xf32> to vector<4x1xf32>
    %1036 = vector.extract_strided_slice %1029 {offsets = [1, 0], sizes = [1, 4], strides = [1, 1]} : vector<4x4xf32> to vector<1x4xf32>
    %1037 = vector.broadcast %1035 : vector<4x1xf32> to vector<4x4xf32>
    %1038 = vector.broadcast %1036 : vector<1x4xf32> to vector<4x4xf32>
    %1039 = arith.mulf %1037, %1038 : vector<4x4xf32>
    %1040 = arith.addf %1034, %1039 : vector<4x4xf32>
    %1041 = vector.extract_strided_slice %957 {offsets = [0, 2], sizes = [4, 1], strides = [1, 1]} : vector<4x4xf32> to vector<4x1xf32>
    %1042 = vector.extract_strided_slice %1029 {offsets = [2, 0], sizes = [1, 4], strides = [1, 1]} : vector<4x4xf32> to vector<1x4xf32>
    %1043 = vector.broadcast %1041 : vector<4x1xf32> to vector<4x4xf32>
    %1044 = vector.broadcast %1042 : vector<1x4xf32> to vector<4x4xf32>
    %1045 = arith.mulf %1043, %1044 : vector<4x4xf32>
    %1046 = arith.addf %1040, %1045 : vector<4x4xf32>
    %1047 = vector.extract_strided_slice %957 {offsets = [0, 3], sizes = [4, 1], strides = [1, 1]} : vector<4x4xf32> to vector<4x1xf32>
    %1048 = vector.extract_strided_slice %1029 {offsets = [3, 0], sizes = [1, 4], strides = [1, 1]} : vector<4x4xf32> to vector<1x4xf32>
    %1049 = vector.broadcast %1047 : vector<4x1xf32> to vector<4x4xf32>
    %1050 = vector.broadcast %1048 : vector<1x4xf32> to vector<4x4xf32>
    %1051 = arith.mulf %1049, %1050 : vector<4x4xf32>
    %1052 = arith.addf %1046, %1051 : vector<4x4xf32>
    %cst_57 = arith.constant 2.500000e-01 : f32
    %1053 = vector.broadcast %cst_57 : f32 to vector<4x4xf32>
    %1054 = arith.mulf %1053, %1052 : vector<4x4xf32>
    %1055 = vector.extract_strided_slice %749 {offsets = [0, 0], sizes = [4, 1], strides = [1, 1]} : vector<4x4xf32> to vector<4x1xf32>
    %1056 = vector.extract_strided_slice %1054 {offsets = [0, 0], sizes = [1, 4], strides = [1, 1]} : vector<4x4xf32> to vector<1x4xf32>
    %1057 = vector.broadcast %1055 : vector<4x1xf32> to vector<4x4xf32>
    %1058 = vector.broadcast %1056 : vector<1x4xf32> to vector<4x4xf32>
    %1059 = arith.mulf %1057, %1058 : vector<4x4xf32>
    %1060 = vector.extract_strided_slice %749 {offsets = [0, 1], sizes = [4, 1], strides = [1, 1]} : vector<4x4xf32> to vector<4x1xf32>
    %1061 = vector.extract_strided_slice %1054 {offsets = [1, 0], sizes = [1, 4], strides = [1, 1]} : vector<4x4xf32> to vector<1x4xf32>
    %1062 = vector.broadcast %1060 : vector<4x1xf32> to vector<4x4xf32>
    %1063 = vector.broadcast %1061 : vector<1x4xf32> to vector<4x4xf32>
    %1064 = arith.mulf %1062, %1063 : vector<4x4xf32>
    %1065 = arith.addf %1059, %1064 : vector<4x4xf32>
    %1066 = vector.extract_strided_slice %749 {offsets = [0, 2], sizes = [4, 1], strides = [1, 1]} : vector<4x4xf32> to vector<4x1xf32>
    %1067 = vector.extract_strided_slice %1054 {offsets = [2, 0], sizes = [1, 4], strides = [1, 1]} : vector<4x4xf32> to vector<1x4xf32>
    %1068 = vector.broadcast %1066 : vector<4x1xf32> to vector<4x4xf32>
    %1069 = vector.broadcast %1067 : vector<1x4xf32> to vector<4x4xf32>
    %1070 = arith.mulf %1068, %1069 : vector<4x4xf32>
    %1071 = arith.addf %1065, %1070 : vector<4x4xf32>
    %1072 = vector.extract_strided_slice %749 {offsets = [0, 3], sizes = [4, 1], strides = [1, 1]} : vector<4x4xf32> to vector<4x1xf32>
    %1073 = vector.extract_strided_slice %1054 {offsets = [3, 0], sizes = [1, 4], strides = [1, 1]} : vector<4x4xf32> to vector<1x4xf32>
    %1074 = vector.broadcast %1072 : vector<4x1xf32> to vector<4x4xf32>
    %1075 = vector.broadcast %1073 : vector<1x4xf32> to vector<4x4xf32>
    %1076 = arith.mulf %1074, %1075 : vector<4x4xf32>
    %1077 = arith.addf %1071, %1076 : vector<4x4xf32>
    %1078 = arith.subf %7, %1077 : vector<4x4xf32>
    %1079 = vector.extract_strided_slice %1077 {offsets = [0, 0], sizes = [4, 1], strides = [1, 1]} : vector<4x4xf32> to vector<4x1xf32>
    %1080 = vector.extract_strided_slice %1078 {offsets = [0, 0], sizes = [1, 4], strides = [1, 1]} : vector<4x4xf32> to vector<1x4xf32>
    %1081 = vector.broadcast %1079 : vector<4x1xf32> to vector<4x4xf32>
    %1082 = vector.broadcast %1080 : vector<1x4xf32> to vector<4x4xf32>
    %1083 = arith.mulf %1081, %1082 : vector<4x4xf32>
    %1084 = vector.extract_strided_slice %1077 {offsets = [0, 1], sizes = [4, 1], strides = [1, 1]} : vector<4x4xf32> to vector<4x1xf32>
    %1085 = vector.extract_strided_slice %1078 {offsets = [1, 0], sizes = [1, 4], strides = [1, 1]} : vector<4x4xf32> to vector<1x4xf32>
    %1086 = vector.broadcast %1084 : vector<4x1xf32> to vector<4x4xf32>
    %1087 = vector.broadcast %1085 : vector<1x4xf32> to vector<4x4xf32>
    %1088 = arith.mulf %1086, %1087 : vector<4x4xf32>
    %1089 = arith.addf %1083, %1088 : vector<4x4xf32>
    %1090 = vector.extract_strided_slice %1077 {offsets = [0, 2], sizes = [4, 1], strides = [1, 1]} : vector<4x4xf32> to vector<4x1xf32>
    %1091 = vector.extract_strided_slice %1078 {offsets = [2, 0], sizes = [1, 4], strides = [1, 1]} : vector<4x4xf32> to vector<1x4xf32>
    %1092 = vector.broadcast %1090 : vector<4x1xf32> to vector<4x4xf32>
    %1093 = vector.broadcast %1091 : vector<1x4xf32> to vector<4x4xf32>
    %1094 = arith.mulf %1092, %1093 : vector<4x4xf32>
    %1095 = arith.addf %1089, %1094 : vector<4x4xf32>
    %1096 = vector.extract_strided_slice %1077 {offsets = [0, 3], sizes = [4, 1], strides = [1, 1]} : vector<4x4xf32> to vector<4x1xf32>
    %1097 = vector.extract_strided_slice %1078 {offsets = [3, 0], sizes = [1, 4], strides = [1, 1]} : vector<4x4xf32> to vector<1x4xf32>
    %1098 = vector.broadcast %1096 : vector<4x1xf32> to vector<4x4xf32>
    %1099 = vector.broadcast %1097 : vector<1x4xf32> to vector<4x4xf32>
    %1100 = arith.mulf %1098, %1099 : vector<4x4xf32>
    %1101 = arith.addf %1095, %1100 : vector<4x4xf32>
    %1102 = arith.subf %11, %1101 : vector<4x4xf32>
    %1103 = vector.extract_strided_slice %1077 {offsets = [0, 0], sizes = [4, 1], strides = [1, 1]} : vector<4x4xf32> to vector<4x1xf32>
    %1104 = vector.extract_strided_slice %1102 {offsets = [0, 0], sizes = [1, 4], strides = [1, 1]} : vector<4x4xf32> to vector<1x4xf32>
    %1105 = vector.broadcast %1103 : vector<4x1xf32> to vector<4x4xf32>
    %1106 = vector.broadcast %1104 : vector<1x4xf32> to vector<4x4xf32>
    %1107 = arith.mulf %1105, %1106 : vector<4x4xf32>
    %1108 = vector.extract_strided_slice %1077 {offsets = [0, 1], sizes = [4, 1], strides = [1, 1]} : vector<4x4xf32> to vector<4x1xf32>
    %1109 = vector.extract_strided_slice %1102 {offsets = [1, 0], sizes = [1, 4], strides = [1, 1]} : vector<4x4xf32> to vector<1x4xf32>
    %1110 = vector.broadcast %1108 : vector<4x1xf32> to vector<4x4xf32>
    %1111 = vector.broadcast %1109 : vector<1x4xf32> to vector<4x4xf32>
    %1112 = arith.mulf %1110, %1111 : vector<4x4xf32>
    %1113 = arith.addf %1107, %1112 : vector<4x4xf32>
    %1114 = vector.extract_strided_slice %1077 {offsets = [0, 2], sizes = [4, 1], strides = [1, 1]} : vector<4x4xf32> to vector<4x1xf32>
    %1115 = vector.extract_strided_slice %1102 {offsets = [2, 0], sizes = [1, 4], strides = [1, 1]} : vector<4x4xf32> to vector<1x4xf32>
    %1116 = vector.broadcast %1114 : vector<4x1xf32> to vector<4x4xf32>
    %1117 = vector.broadcast %1115 : vector<1x4xf32> to vector<4x4xf32>
    %1118 = arith.mulf %1116, %1117 : vector<4x4xf32>
    %1119 = arith.addf %1113, %1118 : vector<4x4xf32>
    %1120 = vector.extract_strided_slice %1077 {offsets = [0, 3], sizes = [4, 1], strides = [1, 1]} : vector<4x4xf32> to vector<4x1xf32>
    %1121 = vector.extract_strided_slice %1102 {offsets = [3, 0], sizes = [1, 4], strides = [1, 1]} : vector<4x4xf32> to vector<1x4xf32>
    %1122 = vector.broadcast %1120 : vector<4x1xf32> to vector<4x4xf32>
    %1123 = vector.broadcast %1121 : vector<1x4xf32> to vector<4x4xf32>
    %1124 = arith.mulf %1122, %1123 : vector<4x4xf32>
    %1125 = arith.addf %1119, %1124 : vector<4x4xf32>
    %1126 = arith.subf %9, %1125 : vector<4x4xf32>
    %1127 = vector.extract_strided_slice %1054 {offsets = [0, 0], sizes = [4, 1], strides = [1, 1]} : vector<4x4xf32> to vector<4x1xf32>
    %1128 = vector.extract_strided_slice %1126 {offsets = [0, 0], sizes = [1, 4], strides = [1, 1]} : vector<4x4xf32> to vector<1x4xf32>
    %1129 = vector.broadcast %1127 : vector<4x1xf32> to vector<4x4xf32>
    %1130 = vector.broadcast %1128 : vector<1x4xf32> to vector<4x4xf32>
    %1131 = arith.mulf %1129, %1130 : vector<4x4xf32>
    %1132 = vector.extract_strided_slice %1054 {offsets = [0, 1], sizes = [4, 1], strides = [1, 1]} : vector<4x4xf32> to vector<4x1xf32>
    %1133 = vector.extract_strided_slice %1126 {offsets = [1, 0], sizes = [1, 4], strides = [1, 1]} : vector<4x4xf32> to vector<1x4xf32>
    %1134 = vector.broadcast %1132 : vector<4x1xf32> to vector<4x4xf32>
    %1135 = vector.broadcast %1133 : vector<1x4xf32> to vector<4x4xf32>
    %1136 = arith.mulf %1134, %1135 : vector<4x4xf32>
    %1137 = arith.addf %1131, %1136 : vector<4x4xf32>
    %1138 = vector.extract_strided_slice %1054 {offsets = [0, 2], sizes = [4, 1], strides = [1, 1]} : vector<4x4xf32> to vector<4x1xf32>
    %1139 = vector.extract_strided_slice %1126 {offsets = [2, 0], sizes = [1, 4], strides = [1, 1]} : vector<4x4xf32> to vector<1x4xf32>
    %1140 = vector.broadcast %1138 : vector<4x1xf32> to vector<4x4xf32>
    %1141 = vector.broadcast %1139 : vector<1x4xf32> to vector<4x4xf32>
    %1142 = arith.mulf %1140, %1141 : vector<4x4xf32>
    %1143 = arith.addf %1137, %1142 : vector<4x4xf32>
    %1144 = vector.extract_strided_slice %1054 {offsets = [0, 3], sizes = [4, 1], strides = [1, 1]} : vector<4x4xf32> to vector<4x1xf32>
    %1145 = vector.extract_strided_slice %1126 {offsets = [3, 0], sizes = [1, 4], strides = [1, 1]} : vector<4x4xf32> to vector<1x4xf32>
    %1146 = vector.broadcast %1144 : vector<4x1xf32> to vector<4x4xf32>
    %1147 = vector.broadcast %1145 : vector<1x4xf32> to vector<4x4xf32>
    %1148 = arith.mulf %1146, %1147 : vector<4x4xf32>
    %1149 = arith.addf %1143, %1148 : vector<4x4xf32>
    %cst_58 = arith.constant 2.500000e-01 : f32
    %1150 = vector.broadcast %cst_58 : f32 to vector<4x4xf32>
    %1151 = arith.mulf %1150, %1149 : vector<4x4xf32>
    %1152 = vector.extract_strided_slice %749 {offsets = [0, 0], sizes = [4, 1], strides = [1, 1]} : vector<4x4xf32> to vector<4x1xf32>
    %1153 = vector.extract_strided_slice %1151 {offsets = [0, 0], sizes = [1, 4], strides = [1, 1]} : vector<4x4xf32> to vector<1x4xf32>
    %1154 = vector.broadcast %1152 : vector<4x1xf32> to vector<4x4xf32>
    %1155 = vector.broadcast %1153 : vector<1x4xf32> to vector<4x4xf32>
    %1156 = arith.mulf %1154, %1155 : vector<4x4xf32>
    %1157 = vector.extract_strided_slice %749 {offsets = [0, 1], sizes = [4, 1], strides = [1, 1]} : vector<4x4xf32> to vector<4x1xf32>
    %1158 = vector.extract_strided_slice %1151 {offsets = [1, 0], sizes = [1, 4], strides = [1, 1]} : vector<4x4xf32> to vector<1x4xf32>
    %1159 = vector.broadcast %1157 : vector<4x1xf32> to vector<4x4xf32>
    %1160 = vector.broadcast %1158 : vector<1x4xf32> to vector<4x4xf32>
    %1161 = arith.mulf %1159, %1160 : vector<4x4xf32>
    %1162 = arith.addf %1156, %1161 : vector<4x4xf32>
    %1163 = vector.extract_strided_slice %749 {offsets = [0, 2], sizes = [4, 1], strides = [1, 1]} : vector<4x4xf32> to vector<4x1xf32>
    %1164 = vector.extract_strided_slice %1151 {offsets = [2, 0], sizes = [1, 4], strides = [1, 1]} : vector<4x4xf32> to vector<1x4xf32>
    %1165 = vector.broadcast %1163 : vector<4x1xf32> to vector<4x4xf32>
    %1166 = vector.broadcast %1164 : vector<1x4xf32> to vector<4x4xf32>
    %1167 = arith.mulf %1165, %1166 : vector<4x4xf32>
    %1168 = arith.addf %1162, %1167 : vector<4x4xf32>
    %1169 = vector.extract_strided_slice %749 {offsets = [0, 3], sizes = [4, 1], strides = [1, 1]} : vector<4x4xf32> to vector<4x1xf32>
    %1170 = vector.extract_strided_slice %1151 {offsets = [3, 0], sizes = [1, 4], strides = [1, 1]} : vector<4x4xf32> to vector<1x4xf32>
    %1171 = vector.broadcast %1169 : vector<4x1xf32> to vector<4x4xf32>
    %1172 = vector.broadcast %1170 : vector<1x4xf32> to vector<4x4xf32>
    %1173 = arith.mulf %1171, %1172 : vector<4x4xf32>
    %1174 = arith.addf %1168, %1173 : vector<4x4xf32>
    %1175 = arith.subf %7, %1174 : vector<4x4xf32>
    %1176 = vector.extract_strided_slice %1174 {offsets = [0, 0], sizes = [4, 1], strides = [1, 1]} : vector<4x4xf32> to vector<4x1xf32>
    %1177 = vector.extract_strided_slice %1175 {offsets = [0, 0], sizes = [1, 4], strides = [1, 1]} : vector<4x4xf32> to vector<1x4xf32>
    %1178 = vector.broadcast %1176 : vector<4x1xf32> to vector<4x4xf32>
    %1179 = vector.broadcast %1177 : vector<1x4xf32> to vector<4x4xf32>
    %1180 = arith.mulf %1178, %1179 : vector<4x4xf32>
    %1181 = vector.extract_strided_slice %1174 {offsets = [0, 1], sizes = [4, 1], strides = [1, 1]} : vector<4x4xf32> to vector<4x1xf32>
    %1182 = vector.extract_strided_slice %1175 {offsets = [1, 0], sizes = [1, 4], strides = [1, 1]} : vector<4x4xf32> to vector<1x4xf32>
    %1183 = vector.broadcast %1181 : vector<4x1xf32> to vector<4x4xf32>
    %1184 = vector.broadcast %1182 : vector<1x4xf32> to vector<4x4xf32>
    %1185 = arith.mulf %1183, %1184 : vector<4x4xf32>
    %1186 = arith.addf %1180, %1185 : vector<4x4xf32>
    %1187 = vector.extract_strided_slice %1174 {offsets = [0, 2], sizes = [4, 1], strides = [1, 1]} : vector<4x4xf32> to vector<4x1xf32>
    %1188 = vector.extract_strided_slice %1175 {offsets = [2, 0], sizes = [1, 4], strides = [1, 1]} : vector<4x4xf32> to vector<1x4xf32>
    %1189 = vector.broadcast %1187 : vector<4x1xf32> to vector<4x4xf32>
    %1190 = vector.broadcast %1188 : vector<1x4xf32> to vector<4x4xf32>
    %1191 = arith.mulf %1189, %1190 : vector<4x4xf32>
    %1192 = arith.addf %1186, %1191 : vector<4x4xf32>
    %1193 = vector.extract_strided_slice %1174 {offsets = [0, 3], sizes = [4, 1], strides = [1, 1]} : vector<4x4xf32> to vector<4x1xf32>
    %1194 = vector.extract_strided_slice %1175 {offsets = [3, 0], sizes = [1, 4], strides = [1, 1]} : vector<4x4xf32> to vector<1x4xf32>
    %1195 = vector.broadcast %1193 : vector<4x1xf32> to vector<4x4xf32>
    %1196 = vector.broadcast %1194 : vector<1x4xf32> to vector<4x4xf32>
    %1197 = arith.mulf %1195, %1196 : vector<4x4xf32>
    %1198 = arith.addf %1192, %1197 : vector<4x4xf32>
    %1199 = arith.subf %11, %1198 : vector<4x4xf32>
    %1200 = vector.extract_strided_slice %1174 {offsets = [0, 0], sizes = [4, 1], strides = [1, 1]} : vector<4x4xf32> to vector<4x1xf32>
    %1201 = vector.extract_strided_slice %1199 {offsets = [0, 0], sizes = [1, 4], strides = [1, 1]} : vector<4x4xf32> to vector<1x4xf32>
    %1202 = vector.broadcast %1200 : vector<4x1xf32> to vector<4x4xf32>
    %1203 = vector.broadcast %1201 : vector<1x4xf32> to vector<4x4xf32>
    %1204 = arith.mulf %1202, %1203 : vector<4x4xf32>
    %1205 = vector.extract_strided_slice %1174 {offsets = [0, 1], sizes = [4, 1], strides = [1, 1]} : vector<4x4xf32> to vector<4x1xf32>
    %1206 = vector.extract_strided_slice %1199 {offsets = [1, 0], sizes = [1, 4], strides = [1, 1]} : vector<4x4xf32> to vector<1x4xf32>
    %1207 = vector.broadcast %1205 : vector<4x1xf32> to vector<4x4xf32>
    %1208 = vector.broadcast %1206 : vector<1x4xf32> to vector<4x4xf32>
    %1209 = arith.mulf %1207, %1208 : vector<4x4xf32>
    %1210 = arith.addf %1204, %1209 : vector<4x4xf32>
    %1211 = vector.extract_strided_slice %1174 {offsets = [0, 2], sizes = [4, 1], strides = [1, 1]} : vector<4x4xf32> to vector<4x1xf32>
    %1212 = vector.extract_strided_slice %1199 {offsets = [2, 0], sizes = [1, 4], strides = [1, 1]} : vector<4x4xf32> to vector<1x4xf32>
    %1213 = vector.broadcast %1211 : vector<4x1xf32> to vector<4x4xf32>
    %1214 = vector.broadcast %1212 : vector<1x4xf32> to vector<4x4xf32>
    %1215 = arith.mulf %1213, %1214 : vector<4x4xf32>
    %1216 = arith.addf %1210, %1215 : vector<4x4xf32>
    %1217 = vector.extract_strided_slice %1174 {offsets = [0, 3], sizes = [4, 1], strides = [1, 1]} : vector<4x4xf32> to vector<4x1xf32>
    %1218 = vector.extract_strided_slice %1199 {offsets = [3, 0], sizes = [1, 4], strides = [1, 1]} : vector<4x4xf32> to vector<1x4xf32>
    %1219 = vector.broadcast %1217 : vector<4x1xf32> to vector<4x4xf32>
    %1220 = vector.broadcast %1218 : vector<1x4xf32> to vector<4x4xf32>
    %1221 = arith.mulf %1219, %1220 : vector<4x4xf32>
    %1222 = arith.addf %1216, %1221 : vector<4x4xf32>
    %1223 = arith.subf %9, %1222 : vector<4x4xf32>
    %1224 = vector.extract_strided_slice %1151 {offsets = [0, 0], sizes = [4, 1], strides = [1, 1]} : vector<4x4xf32> to vector<4x1xf32>
    %1225 = vector.extract_strided_slice %1223 {offsets = [0, 0], sizes = [1, 4], strides = [1, 1]} : vector<4x4xf32> to vector<1x4xf32>
    %1226 = vector.broadcast %1224 : vector<4x1xf32> to vector<4x4xf32>
    %1227 = vector.broadcast %1225 : vector<1x4xf32> to vector<4x4xf32>
    %1228 = arith.mulf %1226, %1227 : vector<4x4xf32>
    %1229 = vector.extract_strided_slice %1151 {offsets = [0, 1], sizes = [4, 1], strides = [1, 1]} : vector<4x4xf32> to vector<4x1xf32>
    %1230 = vector.extract_strided_slice %1223 {offsets = [1, 0], sizes = [1, 4], strides = [1, 1]} : vector<4x4xf32> to vector<1x4xf32>
    %1231 = vector.broadcast %1229 : vector<4x1xf32> to vector<4x4xf32>
    %1232 = vector.broadcast %1230 : vector<1x4xf32> to vector<4x4xf32>
    %1233 = arith.mulf %1231, %1232 : vector<4x4xf32>
    %1234 = arith.addf %1228, %1233 : vector<4x4xf32>
    %1235 = vector.extract_strided_slice %1151 {offsets = [0, 2], sizes = [4, 1], strides = [1, 1]} : vector<4x4xf32> to vector<4x1xf32>
    %1236 = vector.extract_strided_slice %1223 {offsets = [2, 0], sizes = [1, 4], strides = [1, 1]} : vector<4x4xf32> to vector<1x4xf32>
    %1237 = vector.broadcast %1235 : vector<4x1xf32> to vector<4x4xf32>
    %1238 = vector.broadcast %1236 : vector<1x4xf32> to vector<4x4xf32>
    %1239 = arith.mulf %1237, %1238 : vector<4x4xf32>
    %1240 = arith.addf %1234, %1239 : vector<4x4xf32>
    %1241 = vector.extract_strided_slice %1151 {offsets = [0, 3], sizes = [4, 1], strides = [1, 1]} : vector<4x4xf32> to vector<4x1xf32>
    %1242 = vector.extract_strided_slice %1223 {offsets = [3, 0], sizes = [1, 4], strides = [1, 1]} : vector<4x4xf32> to vector<1x4xf32>
    %1243 = vector.broadcast %1241 : vector<4x1xf32> to vector<4x4xf32>
    %1244 = vector.broadcast %1242 : vector<1x4xf32> to vector<4x4xf32>
    %1245 = arith.mulf %1243, %1244 : vector<4x4xf32>
    %1246 = arith.addf %1240, %1245 : vector<4x4xf32>
    %cst_59 = arith.constant 2.500000e-01 : f32
    %1247 = vector.broadcast %cst_59 : f32 to vector<4x4xf32>
    %1248 = arith.mulf %1247, %1246 : vector<4x4xf32>
    %1249 = vector.extract_strided_slice %749 {offsets = [0, 0], sizes = [4, 1], strides = [1, 1]} : vector<4x4xf32> to vector<4x1xf32>
    %1250 = vector.extract_strided_slice %1248 {offsets = [0, 0], sizes = [1, 4], strides = [1, 1]} : vector<4x4xf32> to vector<1x4xf32>
    %1251 = vector.broadcast %1249 : vector<4x1xf32> to vector<4x4xf32>
    %1252 = vector.broadcast %1250 : vector<1x4xf32> to vector<4x4xf32>
    %1253 = arith.mulf %1251, %1252 : vector<4x4xf32>
    %1254 = vector.extract_strided_slice %749 {offsets = [0, 1], sizes = [4, 1], strides = [1, 1]} : vector<4x4xf32> to vector<4x1xf32>
    %1255 = vector.extract_strided_slice %1248 {offsets = [1, 0], sizes = [1, 4], strides = [1, 1]} : vector<4x4xf32> to vector<1x4xf32>
    %1256 = vector.broadcast %1254 : vector<4x1xf32> to vector<4x4xf32>
    %1257 = vector.broadcast %1255 : vector<1x4xf32> to vector<4x4xf32>
    %1258 = arith.mulf %1256, %1257 : vector<4x4xf32>
    %1259 = arith.addf %1253, %1258 : vector<4x4xf32>
    %1260 = vector.extract_strided_slice %749 {offsets = [0, 2], sizes = [4, 1], strides = [1, 1]} : vector<4x4xf32> to vector<4x1xf32>
    %1261 = vector.extract_strided_slice %1248 {offsets = [2, 0], sizes = [1, 4], strides = [1, 1]} : vector<4x4xf32> to vector<1x4xf32>
    %1262 = vector.broadcast %1260 : vector<4x1xf32> to vector<4x4xf32>
    %1263 = vector.broadcast %1261 : vector<1x4xf32> to vector<4x4xf32>
    %1264 = arith.mulf %1262, %1263 : vector<4x4xf32>
    %1265 = arith.addf %1259, %1264 : vector<4x4xf32>
    %1266 = vector.extract_strided_slice %749 {offsets = [0, 3], sizes = [4, 1], strides = [1, 1]} : vector<4x4xf32> to vector<4x1xf32>
    %1267 = vector.extract_strided_slice %1248 {offsets = [3, 0], sizes = [1, 4], strides = [1, 1]} : vector<4x4xf32> to vector<1x4xf32>
    %1268 = vector.broadcast %1266 : vector<4x1xf32> to vector<4x4xf32>
    %1269 = vector.broadcast %1267 : vector<1x4xf32> to vector<4x4xf32>
    %1270 = arith.mulf %1268, %1269 : vector<4x4xf32>
    %1271 = arith.addf %1265, %1270 : vector<4x4xf32>
    %1272 = arith.subf %7, %1271 : vector<4x4xf32>
    %1273 = vector.extract_strided_slice %1271 {offsets = [0, 0], sizes = [4, 1], strides = [1, 1]} : vector<4x4xf32> to vector<4x1xf32>
    %1274 = vector.extract_strided_slice %1272 {offsets = [0, 0], sizes = [1, 4], strides = [1, 1]} : vector<4x4xf32> to vector<1x4xf32>
    %1275 = vector.broadcast %1273 : vector<4x1xf32> to vector<4x4xf32>
    %1276 = vector.broadcast %1274 : vector<1x4xf32> to vector<4x4xf32>
    %1277 = arith.mulf %1275, %1276 : vector<4x4xf32>
    %1278 = vector.extract_strided_slice %1271 {offsets = [0, 1], sizes = [4, 1], strides = [1, 1]} : vector<4x4xf32> to vector<4x1xf32>
    %1279 = vector.extract_strided_slice %1272 {offsets = [1, 0], sizes = [1, 4], strides = [1, 1]} : vector<4x4xf32> to vector<1x4xf32>
    %1280 = vector.broadcast %1278 : vector<4x1xf32> to vector<4x4xf32>
    %1281 = vector.broadcast %1279 : vector<1x4xf32> to vector<4x4xf32>
    %1282 = arith.mulf %1280, %1281 : vector<4x4xf32>
    %1283 = arith.addf %1277, %1282 : vector<4x4xf32>
    %1284 = vector.extract_strided_slice %1271 {offsets = [0, 2], sizes = [4, 1], strides = [1, 1]} : vector<4x4xf32> to vector<4x1xf32>
    %1285 = vector.extract_strided_slice %1272 {offsets = [2, 0], sizes = [1, 4], strides = [1, 1]} : vector<4x4xf32> to vector<1x4xf32>
    %1286 = vector.broadcast %1284 : vector<4x1xf32> to vector<4x4xf32>
    %1287 = vector.broadcast %1285 : vector<1x4xf32> to vector<4x4xf32>
    %1288 = arith.mulf %1286, %1287 : vector<4x4xf32>
    %1289 = arith.addf %1283, %1288 : vector<4x4xf32>
    %1290 = vector.extract_strided_slice %1271 {offsets = [0, 3], sizes = [4, 1], strides = [1, 1]} : vector<4x4xf32> to vector<4x1xf32>
    %1291 = vector.extract_strided_slice %1272 {offsets = [3, 0], sizes = [1, 4], strides = [1, 1]} : vector<4x4xf32> to vector<1x4xf32>
    %1292 = vector.broadcast %1290 : vector<4x1xf32> to vector<4x4xf32>
    %1293 = vector.broadcast %1291 : vector<1x4xf32> to vector<4x4xf32>
    %1294 = arith.mulf %1292, %1293 : vector<4x4xf32>
    %1295 = arith.addf %1289, %1294 : vector<4x4xf32>
    %1296 = arith.subf %11, %1295 : vector<4x4xf32>
    %1297 = vector.extract_strided_slice %1271 {offsets = [0, 0], sizes = [4, 1], strides = [1, 1]} : vector<4x4xf32> to vector<4x1xf32>
    %1298 = vector.extract_strided_slice %1296 {offsets = [0, 0], sizes = [1, 4], strides = [1, 1]} : vector<4x4xf32> to vector<1x4xf32>
    %1299 = vector.broadcast %1297 : vector<4x1xf32> to vector<4x4xf32>
    %1300 = vector.broadcast %1298 : vector<1x4xf32> to vector<4x4xf32>
    %1301 = arith.mulf %1299, %1300 : vector<4x4xf32>
    %1302 = vector.extract_strided_slice %1271 {offsets = [0, 1], sizes = [4, 1], strides = [1, 1]} : vector<4x4xf32> to vector<4x1xf32>
    %1303 = vector.extract_strided_slice %1296 {offsets = [1, 0], sizes = [1, 4], strides = [1, 1]} : vector<4x4xf32> to vector<1x4xf32>
    %1304 = vector.broadcast %1302 : vector<4x1xf32> to vector<4x4xf32>
    %1305 = vector.broadcast %1303 : vector<1x4xf32> to vector<4x4xf32>
    %1306 = arith.mulf %1304, %1305 : vector<4x4xf32>
    %1307 = arith.addf %1301, %1306 : vector<4x4xf32>
    %1308 = vector.extract_strided_slice %1271 {offsets = [0, 2], sizes = [4, 1], strides = [1, 1]} : vector<4x4xf32> to vector<4x1xf32>
    %1309 = vector.extract_strided_slice %1296 {offsets = [2, 0], sizes = [1, 4], strides = [1, 1]} : vector<4x4xf32> to vector<1x4xf32>
    %1310 = vector.broadcast %1308 : vector<4x1xf32> to vector<4x4xf32>
    %1311 = vector.broadcast %1309 : vector<1x4xf32> to vector<4x4xf32>
    %1312 = arith.mulf %1310, %1311 : vector<4x4xf32>
    %1313 = arith.addf %1307, %1312 : vector<4x4xf32>
    %1314 = vector.extract_strided_slice %1271 {offsets = [0, 3], sizes = [4, 1], strides = [1, 1]} : vector<4x4xf32> to vector<4x1xf32>
    %1315 = vector.extract_strided_slice %1296 {offsets = [3, 0], sizes = [1, 4], strides = [1, 1]} : vector<4x4xf32> to vector<1x4xf32>
    %1316 = vector.broadcast %1314 : vector<4x1xf32> to vector<4x4xf32>
    %1317 = vector.broadcast %1315 : vector<1x4xf32> to vector<4x4xf32>
    %1318 = arith.mulf %1316, %1317 : vector<4x4xf32>
    %1319 = arith.addf %1313, %1318 : vector<4x4xf32>
    %1320 = arith.subf %9, %1319 : vector<4x4xf32>
    %1321 = vector.extract_strided_slice %1248 {offsets = [0, 0], sizes = [4, 1], strides = [1, 1]} : vector<4x4xf32> to vector<4x1xf32>
    %1322 = vector.extract_strided_slice %1320 {offsets = [0, 0], sizes = [1, 4], strides = [1, 1]} : vector<4x4xf32> to vector<1x4xf32>
    %1323 = vector.broadcast %1321 : vector<4x1xf32> to vector<4x4xf32>
    %1324 = vector.broadcast %1322 : vector<1x4xf32> to vector<4x4xf32>
    %1325 = arith.mulf %1323, %1324 : vector<4x4xf32>
    %1326 = vector.extract_strided_slice %1248 {offsets = [0, 1], sizes = [4, 1], strides = [1, 1]} : vector<4x4xf32> to vector<4x1xf32>
    %1327 = vector.extract_strided_slice %1320 {offsets = [1, 0], sizes = [1, 4], strides = [1, 1]} : vector<4x4xf32> to vector<1x4xf32>
    %1328 = vector.broadcast %1326 : vector<4x1xf32> to vector<4x4xf32>
    %1329 = vector.broadcast %1327 : vector<1x4xf32> to vector<4x4xf32>
    %1330 = arith.mulf %1328, %1329 : vector<4x4xf32>
    %1331 = arith.addf %1325, %1330 : vector<4x4xf32>
    %1332 = vector.extract_strided_slice %1248 {offsets = [0, 2], sizes = [4, 1], strides = [1, 1]} : vector<4x4xf32> to vector<4x1xf32>
    %1333 = vector.extract_strided_slice %1320 {offsets = [2, 0], sizes = [1, 4], strides = [1, 1]} : vector<4x4xf32> to vector<1x4xf32>
    %1334 = vector.broadcast %1332 : vector<4x1xf32> to vector<4x4xf32>
    %1335 = vector.broadcast %1333 : vector<1x4xf32> to vector<4x4xf32>
    %1336 = arith.mulf %1334, %1335 : vector<4x4xf32>
    %1337 = arith.addf %1331, %1336 : vector<4x4xf32>
    %1338 = vector.extract_strided_slice %1248 {offsets = [0, 3], sizes = [4, 1], strides = [1, 1]} : vector<4x4xf32> to vector<4x1xf32>
    %1339 = vector.extract_strided_slice %1320 {offsets = [3, 0], sizes = [1, 4], strides = [1, 1]} : vector<4x4xf32> to vector<1x4xf32>
    %1340 = vector.broadcast %1338 : vector<4x1xf32> to vector<4x4xf32>
    %1341 = vector.broadcast %1339 : vector<1x4xf32> to vector<4x4xf32>
    %1342 = arith.mulf %1340, %1341 : vector<4x4xf32>
    %1343 = arith.addf %1337, %1342 : vector<4x4xf32>
    %cst_60 = arith.constant 2.500000e-01 : f32
    %1344 = vector.broadcast %cst_60 : f32 to vector<4x4xf32>
    %1345 = arith.mulf %1344, %1343 : vector<4x4xf32>
    %1346 = tpu.concatenate %710, %739 in 0 : vector<32x256xf32>, vector<4x256xf32> -> vector<36x256xf32>
    %cst_61 = arith.constant dense<0.000000e+00> : vector<36x96xf32>
    %1347 = tpu.matmul %1346, %708, %cst_61 {dimension_numbers = #tpu.dot_dimension_numbers<[1], [0], [0], [1], [0, 0, 1, 1], [], []>} : vector<36x256xf32>, vector<256x96xf32>, vector<36x96xf32> -> vector<36x96xf32>
    %1348 = vector.extract_strided_slice %1347 {offsets = [0, 64], sizes = [32, 32], strides = [1, 1]} : vector<36x96xf32> to vector<32x32xf32>
    %1349 = vector.extract_strided_slice %1347 {offsets = [32, 64], sizes = [4, 32], strides = [1, 1]} : vector<36x96xf32> to vector<4x32xf32>
    %1350 = vector.extract_strided_slice %1345 {offsets = [0, 0], sizes = [4, 1], strides = [1, 1]} : vector<4x4xf32> to vector<4x1xf32>
    %1351 = vector.extract_strided_slice %1349 {offsets = [0, 0], sizes = [1, 32], strides = [1, 1]} : vector<4x32xf32> to vector<1x32xf32>
    %1352 = vector.broadcast %1350 : vector<4x1xf32> to vector<4x32xf32>
    %1353 = vector.broadcast %1351 : vector<1x32xf32> to vector<4x32xf32>
    %1354 = arith.mulf %1352, %1353 : vector<4x32xf32>
    %1355 = vector.extract_strided_slice %1345 {offsets = [0, 1], sizes = [4, 1], strides = [1, 1]} : vector<4x4xf32> to vector<4x1xf32>
    %1356 = vector.extract_strided_slice %1349 {offsets = [1, 0], sizes = [1, 32], strides = [1, 1]} : vector<4x32xf32> to vector<1x32xf32>
    %1357 = vector.broadcast %1355 : vector<4x1xf32> to vector<4x32xf32>
    %1358 = vector.broadcast %1356 : vector<1x32xf32> to vector<4x32xf32>
    %1359 = arith.mulf %1357, %1358 : vector<4x32xf32>
    %1360 = arith.addf %1354, %1359 : vector<4x32xf32>
    %1361 = vector.extract_strided_slice %1345 {offsets = [0, 2], sizes = [4, 1], strides = [1, 1]} : vector<4x4xf32> to vector<4x1xf32>
    %1362 = vector.extract_strided_slice %1349 {offsets = [2, 0], sizes = [1, 32], strides = [1, 1]} : vector<4x32xf32> to vector<1x32xf32>
    %1363 = vector.broadcast %1361 : vector<4x1xf32> to vector<4x32xf32>
    %1364 = vector.broadcast %1362 : vector<1x32xf32> to vector<4x32xf32>
    %1365 = arith.mulf %1363, %1364 : vector<4x32xf32>
    %1366 = arith.addf %1360, %1365 : vector<4x32xf32>
    %1367 = vector.extract_strided_slice %1345 {offsets = [0, 3], sizes = [4, 1], strides = [1, 1]} : vector<4x4xf32> to vector<4x1xf32>
    %1368 = vector.extract_strided_slice %1349 {offsets = [3, 0], sizes = [1, 32], strides = [1, 1]} : vector<4x32xf32> to vector<1x32xf32>
    %1369 = vector.broadcast %1367 : vector<4x1xf32> to vector<4x32xf32>
    %1370 = vector.broadcast %1368 : vector<1x32xf32> to vector<4x32xf32>
    %1371 = arith.mulf %1369, %1370 : vector<4x32xf32>
    %1372 = arith.addf %1366, %1371 : vector<4x32xf32>
    %cst_62 = arith.constant dense<0.000000e+00> : vector<32x4xf32>
    %1373 = tpu.matmul %710, %728, %cst_62 {dimension_numbers = #tpu.dot_dimension_numbers<[1], [1], [0], [0], [0, 0, 1, 0], [], []>} : vector<32x256xf32>, vector<4x256xf32>, vector<32x4xf32> -> vector<32x4xf32>
    %1374 = vector.extract_strided_slice %1373 {offsets = [0, 0], sizes = [32, 1], strides = [1, 1]} : vector<32x4xf32> to vector<32x1xf32>
    %1375 = vector.extract_strided_slice %1372 {offsets = [0, 0], sizes = [1, 32], strides = [1, 1]} : vector<4x32xf32> to vector<1x32xf32>
    %1376 = vector.broadcast %1374 : vector<32x1xf32> to vector<32x32xf32>
    %1377 = vector.broadcast %1375 : vector<1x32xf32> to vector<32x32xf32>
    %1378 = arith.mulf %1376, %1377 : vector<32x32xf32>
    %1379 = vector.extract_strided_slice %1373 {offsets = [0, 1], sizes = [32, 1], strides = [1, 1]} : vector<32x4xf32> to vector<32x1xf32>
    %1380 = vector.extract_strided_slice %1372 {offsets = [1, 0], sizes = [1, 32], strides = [1, 1]} : vector<4x32xf32> to vector<1x32xf32>
    %1381 = vector.broadcast %1379 : vector<32x1xf32> to vector<32x32xf32>
    %1382 = vector.broadcast %1380 : vector<1x32xf32> to vector<32x32xf32>
    %1383 = arith.mulf %1381, %1382 : vector<32x32xf32>
    %1384 = arith.addf %1378, %1383 : vector<32x32xf32>
    %1385 = vector.extract_strided_slice %1373 {offsets = [0, 2], sizes = [32, 1], strides = [1, 1]} : vector<32x4xf32> to vector<32x1xf32>
    %1386 = vector.extract_strided_slice %1372 {offsets = [2, 0], sizes = [1, 32], strides = [1, 1]} : vector<4x32xf32> to vector<1x32xf32>
    %1387 = vector.broadcast %1385 : vector<32x1xf32> to vector<32x32xf32>
    %1388 = vector.broadcast %1386 : vector<1x32xf32> to vector<32x32xf32>
    %1389 = arith.mulf %1387, %1388 : vector<32x32xf32>
    %1390 = arith.addf %1384, %1389 : vector<32x32xf32>
    %1391 = vector.extract_strided_slice %1373 {offsets = [0, 3], sizes = [32, 1], strides = [1, 1]} : vector<32x4xf32> to vector<32x1xf32>
    %1392 = vector.extract_strided_slice %1372 {offsets = [3, 0], sizes = [1, 32], strides = [1, 1]} : vector<4x32xf32> to vector<1x32xf32>
    %1393 = vector.broadcast %1391 : vector<32x1xf32> to vector<32x32xf32>
    %1394 = vector.broadcast %1392 : vector<1x32xf32> to vector<32x32xf32>
    %1395 = arith.mulf %1393, %1394 : vector<32x32xf32>
    %1396 = arith.addf %1390, %1395 : vector<32x32xf32>
    %1397 = arith.addf %706, %1396 : vector<32x32xf32>
    %1398 = arith.addf %1397, %1348 : vector<32x32xf32>
    %c0_63 = arith.constant 0 : index
    %c0_64 = arith.constant 0 : index
    %c0_65 = arith.constant 0 : index
    %1399 = vector.load %arg5[%c0_63, %c0_64, %c0_65] : memref<1x32x32xf32, #tpu.memory_space<vmem>>, vector<1x32x32xf32>
    %1400 = vector.shape_cast %1399 : vector<1x32x32xf32> to vector<32x32xf32>
    %1401 = vector.shape_cast %1398 : vector<32x32xf32> to vector<1x32x32xf32>
    tpu.vector_store %arg5[%c0_63, %c0_64, %c0_65], %1401 {strides = array<i32>} : memref<1x32x32xf32, #tpu.memory_space<vmem>>, vector<1x32x32xf32>,
    return
  }
  func.func @transform_0(%arg0: i32) -> (i32, i32, i32, i32) {
    %c0_i32 = arith.constant 0 : i32
    %c0_i32_0 = arith.constant 0 : i32
    %c0_i32_1 = arith.constant 0 : i32
    %c0_i32_2 = arith.constant 0 : i32
    return %arg0, %c0_i32, %c0_i32_0, %c0_i32_1 : i32, i32, i32, i32
  }
  func.func @transform_1(%arg0: i32) -> (i32, i32) {
    %c0_i32 = arith.constant 0 : i32
    %c0_i32_0 = arith.constant 0 : i32
    %c0_i32_1 = arith.constant 0 : i32
    return %c0_i32, %c0_i32_0 : i32, i32
  }
  func.func @transform_2(%arg0: i32) -> (i32, i32, i32) {
    %c0_i32 = arith.constant 0 : i32
    %c0_i32_0 = arith.constant 0 : i32
    %c0_i32_1 = arith.constant 0 : i32
    %c0_i32_2 = arith.constant 0 : i32
    return %c0_i32, %c0_i32_0, %c0_i32_1 : i32, i32, i32
  }
  func.func @transform_3(%arg0: i32) -> (i32, i32) {
    %c0_i32 = arith.constant 0 : i32
    %c0_i32_0 = arith.constant 0 : i32
    %c0_i32_1 = arith.constant 0 : i32
    return %c0_i32, %c0_i32_0 : i32, i32
  }
  func.func @transform_4(%arg0: i32) -> (i32, i32, i32) {
    %c0_i32 = arith.constant 0 : i32
    %c0_i32_0 = arith.constant 0 : i32
    %c0_i32_1 = arith.constant 0 : i32
    return %arg0, %c0_i32, %c0_i32_0 : i32, i32, i32
  }
}

</mosaic_0001>

<llo_original>
// kernel: nystrom_multihead_forward.2
$region0: #{nystrom_multihead_forward.2}
  #allocation0 [shape = 'u32[]', space=smem, size = 0x4, offset = 0x4, fixed_abs, tag = 'smem constant byte address 0x4 - core index']
  #allocation1 [shape = 'u32[144,128]{1,0:T(1,128)}', space=vmem, size = 0x12000, scoped, tag = 'internal scratch']
  %s0 = inlined_call_operand.vmem [shape: f32[2,4,256], index: 0, kind: input, shape index: {}]
  %s1 = inlined_call_operand.vmem [shape: f32[192,4], index: 1, kind: input, shape index: {}]
  %s2 = inlined_call_operand.vmem [shape: f32[192,1], index: 2, kind: input, shape index: {}]
  %s3 = inlined_call_operand.vmem [shape: f32[2,192,256], index: 3, kind: output, shape index: {}]
  %s4 = sld [smem:[#allocation0]]
  $region45: #{nystrom_multihead_forward.2} parent=0
    _
  %s6 = ssub.s32 1, %s4
  %s7 = scalar_select 0, %s6, %s4
  loop: start=0, step=1, limit=4
  $region2: #{nystrom_multihead_forward.2} parent=0 // loop_pre_header
    _
  $region3: #{nystrom_multihead_forward.2} parent=0 // loop_header
    %s9 = sphi 0, %s13
    %p10 = scmp.ge.s32.totalorder %s9, 4
    %s19 = sphi 0, %s21
    %s22 = sphi 0, %s19
    %s23 = sphi 0, %s22
    %s39 = sphi 0, %s23
    %s43 = sphi 0, %s43
    %s45 = sphi 0, %s43
    %s46 = sphi 0, %s45
    %s60 = sphi 0, %s46
    %s64 = sphi 0, %s64
    %s66 = sphi 0, %s64
    %s67 = sphi 0, %s66
    %s81 = sphi 0, %s67
    %s87 = sphi 0, %s89
    %s90 = sphi 0, %s87
    %s91 = sphi 0, %s90
    %s107 = sphi 0, %s91
  $region4: #{nystrom_multihead_forward.2} parent=0 // loop_header_branch
    %12 = sbr.rel (%p10) target = $region8
  $region5: #{nystrom_multihead_forward.2} parent=0 // loop_body
    %s14 = ssub.s32 %s9, 1
    %s15 = ssub.s32 %s9, 2
    %s16 = sadd.s32 %s9, 1
    %s17 = ssub.s32 %s9, %s16
    %p18 = scmp.eq.s32.totalorder %s17, 0
    %s20 = sadd.s32 %s19, 1
    %s21 = scalar_select %p18, %s19, %s20
    %p24 = pneg %p18
    %p25 = scmp.eq.s32.totalorder %s9, 1
    %p26 = por %p24, %p25
    %p27 = scmp.ne.s32.totalorder %s19, %s22
    %p28 = scmp.eq.s32.totalorder %s9, 0
    %p29 = por %p27, %p28
    %p30 = scmp.ne.s32.totalorder %s19, %s22
    %p31 = scmp.eq.s32.totalorder %s14, 1
    %p32 = por %p30, %p31
    %p33 = scmp.ne.s32.totalorder %s22, %s23
    %p34 = scmp.eq.s32.totalorder %s14, 0
    %p35 = por %p33, %p34
    %p36 = scmp.ne.s32.totalorder %s22, %s23
    %p37 = scmp.eq.s32.totalorder %s15, 1
    %p38 = por %p36, %p37
    %p40 = scmp.ne.s32.totalorder %s23, %s39
    %p41 = scmp.eq.s32.totalorder %s15, 0
    %p42 = por %p40, %p41
    %s44 = sadd.s32 %s43, 1
    %p47 = scmp.eq.s32.totalorder %s9, 1
    %p48 = scmp.ne.s32.totalorder %s43, %s45
    %p49 = scmp.eq.s32.totalorder %s9, 0
    %p50 = por %p48, %p49
    %p51 = scmp.ne.s32.totalorder %s43, %s45
    %p52 = scmp.eq.s32.totalorder %s14, 1
    %p53 = por %p51, %p52
    %p54 = scmp.ne.s32.totalorder %s45, %s46
    %p55 = scmp.eq.s32.totalorder %s14, 0
    %p56 = por %p54, %p55
    %p57 = scmp.ne.s32.totalorder %s45, %s46
    %p58 = scmp.eq.s32.totalorder %s15, 1
    %p59 = por %p57, %p58
    %p61 = scmp.ne.s32.totalorder %s46, %s60
    %p62 = scmp.eq.s32.totalorder %s15, 0
    %p63 = por %p61, %p62
    %s65 = sadd.s32 %s64, 1
    %p68 = scmp.eq.s32.totalorder %s9, 1
    %p69 = scmp.ne.s32.totalorder %s64, %s66
    %p70 = scmp.eq.s32.totalorder %s9, 0
    %p71 = por %p69, %p70
    %p72 = scmp.ne.s32.totalorder %s64, %s66
    %p73 = scmp.eq.s32.totalorder %s14, 1
    %p74 = por %p72, %p73
    %p75 = scmp.ne.s32.totalorder %s66, %s67
    %p76 = scmp.eq.s32.totalorder %s14, 0
    %p77 = por %p75, %p76
    %p78 = scmp.ne.s32.totalorder %s66, %s67
    %p79 = scmp.eq.s32.totalorder %s15, 1
    %p80 = por %p78, %p79
    %p82 = scmp.ne.s32.totalorder %s67, %s81
    %p83 = scmp.eq.s32.totalorder %s15, 0
    %p84 = por %p82, %p83
    %s85 = ssub.s32 %s9, %s16
    %p86 = scmp.eq.s32.totalorder %s85, 0
    %s88 = sadd.s32 %s87, 1
    %s89 = scalar_select %p86, %s87, %s88
    %p92 = pneg %p86
    %p93 = scmp.eq.s32.totalorder %s9, 1
    %p94 = por %p92, %p93
    %p95 = scmp.ne.s32.totalorder %s87, %s90
    %p96 = scmp.eq.s32.totalorder %s9, 0
    %p97 = por %p95, %p96
    %p98 = scmp.ne.s32.totalorder %s87, %s90
    %p99 = scmp.eq.s32.totalorder %s14, 1
    %p100 = por %p98, %p99
    %p101 = scmp.ne.s32.totalorder %s90, %s91
    %p102 = scmp.eq.s32.totalorder %s14, 0
    %p103 = por %p101, %p102
    %p104 = scmp.ne.s32.totalorder %s90, %s91
    %p105 = scmp.eq.s32.totalorder %s15, 1
    %p106 = por %p104, %p105
    %p108 = scmp.ne.s32.totalorder %s91, %s107
    %p109 = scmp.eq.s32.totalorder %s15, 0
    %p110 = por %p108, %p109
    %p111 = scmp.le.s32.totalorder 1, %s9
    %p112 = scmp.lt.s32.totalorder %s9, 3
    %p113 = pnand %p111, %p112
    %p114 = pneg %p113
    // Predicated region
    $region9: #{nystrom_multihead_forward.2} parent=5 // pred_check
      _
    $region10: #{nystrom_multihead_forward.2} parent=5 // pred_check_branch
      %116 = sbr.rel (%p113) target = $region12
    $region11: #{nystrom_multihead_forward.2} parent=5 // pred_region
      %s117 = ssub.s32 %s9, 1
      // Predicated region
      $region13: #{nystrom_multihead_forward.2} parent=11 // pred_check
        %p118 = pneg %p56
      $region14: #{nystrom_multihead_forward.2} parent=11 // pred_check_branch
        %120 = sbr.rel (%p118) target = $region16
      $region15: #{nystrom_multihead_forward.2} parent=11 // pred_region
        _
      $region16: #{nystrom_multihead_forward.2} parent=11 // pred_fallthru
        _
      // Predicated region
      $region17: #{nystrom_multihead_forward.2} parent=11 // pred_check
        %p121 = pneg %p77
      $region18: #{nystrom_multihead_forward.2} parent=11 // pred_check_branch
        %123 = sbr.rel (%p121) target = $region20
      $region19: #{nystrom_multihead_forward.2} parent=11 // pred_region
        _
      $region20: #{nystrom_multihead_forward.2} parent=11 // pred_fallthru
        _
    $region12: #{nystrom_multihead_forward.2} parent=5 // pred_fallthru
      _
    %p124 = scmp.lt.s32.totalorder %s9, 2
    // Predicated region
    $region21: #{nystrom_multihead_forward.2} parent=5 // pred_check
      %p125 = pneg %p124
    $region22: #{nystrom_multihead_forward.2} parent=5 // pred_check_branch
      %127 = sbr.rel (%p125) target = $region24
    $region23: #{nystrom_multihead_forward.2} parent=5 // pred_region
      // Predicated region
      $region25: #{nystrom_multihead_forward.2} parent=23 // pred_check
        %p128 = pneg %p29
      $region26: #{nystrom_multihead_forward.2} parent=23 // pred_check_branch
        %130 = sbr.rel (%p128) target = $region28
      $region27: #{nystrom_multihead_forward.2} parent=23 // pred_region
        %p131 = scmp.lt.s32.totalorder %s9, 1
        %s132 = scalar_select %p131, %s9, 1
        %s133 = smul.addr %s132, 2
        %s134 = smul.addr %s133, 4
        %s135 = scalar_lea.vmem %s0, %s134
      $region28: #{nystrom_multihead_forward.2} parent=23 // pred_fallthru
        _
    $region24: #{nystrom_multihead_forward.2} parent=5 // pred_fallthru
      _
    %p136 = scmp.le.s32.totalorder 1, %s9
    %p137 = scmp.lt.s32.totalorder %s9, 3
    %p138 = pnand %p136, %p137
    %p139 = pneg %p138
    // Predicated region
    $region29: #{nystrom_multihead_forward.2} parent=5 // pred_check
      _
    $region30: #{nystrom_multihead_forward.2} parent=5 // pred_check_branch
      %141 = sbr.rel (%p138) target = $region32
    $region31: #{nystrom_multihead_forward.2} parent=5 // pred_region
      %s142 = ssub.s32 %s9, 1
      %p143 = scmp.lt.s32.totalorder %s14, 1
      %s144 = scalar_select %p143, %s14, 1
      %s145 = smul.addr %s144, 2
      %s146 = smul.addr %s145, 4
      %s147 = scalar_lea.vmem %s0, %s146
      %p148 = pneg %p35
      %p149 = pneg %p32
      %p150 = pneg %p56
      %p151 = pneg %p53
      %p152 = pneg %p77
      %p153 = pneg %p74
      %p154 = pneg %p103
      %p155 = pneg %p100
      %p156 = scmp.lt.s32.totalorder %s14, 1
      %s157 = scalar_select %p156, %s14, 1
      %s158 = smul.addr %s157, 48
      %s159 = smul.addr %s158, 8
      %s160 = scalar_lea.vmem %s3, %s159
      %p161 = scmp.lt.s32.totalorder %s14, 1
      %s162 = scalar_select %p161, %s14, 1
      %s163 = smul.addr %s162, 2
      %s164 = smul.addr %s163, 4
      %s165 = scalar_lea.vmem %s0, %s164
      %p166 = scmp.lt.s32.totalorder %s14, 1
      %s167 = scalar_select %p166, %s14, 1
      %s168 = smul.addr %s167, 48
      %s169 = smul.addr %s168, 8
      %s170 = scalar_lea.vmem %s3, %s169
      %v171 = vld [vmem:[%s165] sm:$0xff]
      %v172 = vld [vmem:[%s1] sm:$0xff]
      %v173 = vld [vmem:[%s1 + $0x8] sm:$0xff]
      %v174 = vld [vmem:[%s1 + $0x10] sm:$0xff]
      %v175 = vld [vmem:[%s1 + $0x18] sm:$0xff]
      %v176 = vld [vmem:[%s1 + $0x20] sm:$0xff]
      %v177 = vld [vmem:[%s1 + $0x28] sm:$0xff]
      %v178 = vld [vmem:[%s1 + $0x30] sm:$0xff]
      %v179 = vld [vmem:[%s1 + $0x38] sm:$0xff]
      %181 = vset.pattern.permute.xlu0 0
      %182 = vperm.xlu0 %181, %v172
      %v183 = vpop.permute.xlu0 %182
      %186 = vset.pattern.permute.xlu0 0
      %187 = vperm.xlu0 %186, %v173
      %v188 = vpop.permute.xlu0 %187
      %191 = vset.pattern.permute.xlu0 0
      %192 = vperm.xlu0 %191, %v174
      %v193 = vpop.permute.xlu0 %192
      %196 = vset.pattern.permute.xlu0 0
      %197 = vperm.xlu0 %196, %v175
      %v198 = vpop.permute.xlu0 %197
      %201 = vset.pattern.permute.xlu0 0
      %202 = vperm.xlu0 %201, %v176
      %v203 = vpop.permute.xlu0 %202
      %206 = vset.pattern.permute.xlu0 0
      %207 = vperm.xlu0 %206, %v177
      %v208 = vpop.permute.xlu0 %207
      %211 = vset.pattern.permute.xlu0 0
      %212 = vperm.xlu0 %211, %v178
      %v213 = vpop.permute.xlu0 %212
      %216 = vset.pattern.permute.xlu0 0
      %217 = vperm.xlu0 %216, %v179
      %v218 = vpop.permute.xlu0 %217
      %v221 = vlaneseq
      %v222 = vshrl.u32 %v221, 7
      %v223 = vsub.s32 0, %v222
      %v224 = vrot.slane %v171, %v223
      %v225 = vlaneseq
      %v226 = vshrl.u32 %v225, 7
      %v227 = vsub.s32 4, %v226
      %v228 = vrot.slane %v171, %v227
      %v231 = vlaneseq
      %v232 = vshrl.u32 %v231, 7
      %v233 = vsub.s32 0, %v232
      %v234 = vrot.slane %v224, %v233
      %v235 = vlaneseq
      %v236 = vshrl.u32 %v235, 7
      %v237 = vsub.s32 0, %v236
      %v238 = vrot.slane %v228, %v237
      %v239 = vmul.f32 %v183, %v234
      %v240 = vmul.f32 %v183, %v238
      %v241 = vmul.f32 %v188, %v234
      %v242 = vmul.f32 %v188, %v238
      %v243 = vmul.f32 %v193, %v234
      %v244 = vmul.f32 %v193, %v238
      %v245 = vmul.f32 %v198, %v234
      %v246 = vmul.f32 %v198, %v238
      %v247 = vmul.f32 %v203, %v234
      %v248 = vmul.f32 %v203, %v238
      %v249 = vmul.f32 %v208, %v234
      %v250 = vmul.f32 %v208, %v238
      %v251 = vmul.f32 %v213, %v234
      %v252 = vmul.f32 %v213, %v238
      %v253 = vmul.f32 %v218, %v234
      %v254 = vmul.f32 %v218, %v238
      %v255 = vld [vmem:[%s2] sm:$0xff]
      %v256 = vld [vmem:[%s2 + $0x8] sm:$0xff]
      %v257 = vld [vmem:[%s2 + $0x10] sm:$0xff]
      %v258 = vld [vmem:[%s2 + $0x18] sm:$0xff]
      %v259 = vld [vmem:[%s2 + $0x20] sm:$0xff]
      %v260 = vld [vmem:[%s2 + $0x28] sm:$0xff]
      %v261 = vld [vmem:[%s2 + $0x30] sm:$0xff]
      %v262 = vld [vmem:[%s2 + $0x38] sm:$0xff]
      %264 = vset.pattern.permute.xlu0 0
      %265 = vperm.xlu0 %264, %v255
      %v266 = vpop.permute.xlu0 %265
      %269 = vset.pattern.permute.xlu0 0
      %270 = vperm.xlu0 %269, %v256
      %v271 = vpop.permute.xlu0 %270
      %274 = vset.pattern.permute.xlu0 0
      %275 = vperm.xlu0 %274, %v257
      %v276 = vpop.permute.xlu0 %275
      %279 = vset.pattern.permute.xlu0 0
      %280 = vperm.xlu0 %279, %v258
      %v281 = vpop.permute.xlu0 %280
      %284 = vset.pattern.permute.xlu0 0
      %285 = vperm.xlu0 %284, %v259
      %v286 = vpop.permute.xlu0 %285
      %289 = vset.pattern.permute.xlu0 0
      %290 = vperm.xlu0 %289, %v260
      %v291 = vpop.permute.xlu0 %290
      %294 = vset.pattern.permute.xlu0 0
      %295 = vperm.xlu0 %294, %v261
      %v296 = vpop.permute.xlu0 %295
      %299 = vset.pattern.permute.xlu0 0
      %300 = vperm.xlu0 %299, %v262
      %v301 = vpop.permute.xlu0 %300
      %v303 = vadd.f32 %v239, %v266
      %v304 = vadd.f32 %v240, %v266
      %v305 = vadd.f32 %v241, %v271
      %v306 = vadd.f32 %v242, %v271
      %v307 = vadd.f32 %v243, %v276
      %v308 = vadd.f32 %v244, %v276
      %v309 = vadd.f32 %v245, %v281
      %v310 = vadd.f32 %v246, %v281
      %v311 = vadd.f32 %v247, %v286
      %v312 = vadd.f32 %v248, %v286
      %v313 = vadd.f32 %v249, %v291
      %v314 = vadd.f32 %v250, %v291
      %v315 = vadd.f32 %v251, %v296
      %v316 = vadd.f32 %v252, %v296
      %v317 = vadd.f32 %v253, %v301
      %v318 = vadd.f32 %v254, %v301
      %319 = vset.pattern.permute.xlu0 1
      %320 = vperm.xlu0 %319, %v172
      %v321 = vpop.permute.xlu0 %320
      %323 = vset.pattern.permute.xlu0 1
      %324 = vperm.xlu0 %323, %v173
      %v325 = vpop.permute.xlu0 %324
      %327 = vset.pattern.permute.xlu0 1
      %328 = vperm.xlu0 %327, %v174
      %v329 = vpop.permute.xlu0 %328
      %331 = vset.pattern.permute.xlu0 1
      %332 = vperm.xlu0 %331, %v175
      %v333 = vpop.permute.xlu0 %332
      %335 = vset.pattern.permute.xlu0 1
      %336 = vperm.xlu0 %335, %v176
      %v337 = vpop.permute.xlu0 %336
      %339 = vset.pattern.permute.xlu0 1
      %340 = vperm.xlu0 %339, %v177
      %v341 = vpop.permute.xlu0 %340
      %343 = vset.pattern.permute.xlu0 1
      %344 = vperm.xlu0 %343, %v178
      %v345 = vpop.permute.xlu0 %344
      %347 = vset.pattern.permute.xlu0 1
      %348 = vperm.xlu0 %347, %v179
      %v349 = vpop.permute.xlu0 %348
      %v351 = vlaneseq
      %v352 = vshrl.u32 %v351, 7
      %v353 = vsub.s32 1, %v352
      %v354 = vrot.slane %v171, %v353
      %v355 = vlaneseq
      %v356 = vshrl.u32 %v355, 7
      %v357 = vsub.s32 5, %v356
      %v358 = vrot.slane %v171, %v357
      %v361 = vlaneseq
      %v362 = vshrl.u32 %v361, 7
      %v363 = vsub.s32 1, %v362
      %v364 = vrot.slane %v354, %v363
      %v365 = vlaneseq
      %v366 = vshrl.u32 %v365, 7
      %v367 = vsub.s32 1, %v366
      %v368 = vrot.slane %v358, %v367
      %v369 = vmul.f32 %v321, %v364
      %v370 = vmul.f32 %v321, %v368
      %v371 = vmul.f32 %v325, %v364
      %v372 = vmul.f32 %v325, %v368
      %v373 = vmul.f32 %v329, %v364
      %v374 = vmul.f32 %v329, %v368
      %v375 = vmul.f32 %v333, %v364
      %v376 = vmul.f32 %v333, %v368
      %v377 = vmul.f32 %v337, %v364
      %v378 = vmul.f32 %v337, %v368
      %v379 = vmul.f32 %v341, %v364
      %v380 = vmul.f32 %v341, %v368
      %v381 = vmul.f32 %v345, %v364
      %v382 = vmul.f32 %v345, %v368
      %v383 = vmul.f32 %v349, %v364
      %v384 = vmul.f32 %v349, %v368
      %v385 = vadd.f32 %v303, %v369
      %v386 = vadd.f32 %v304, %v370
      %v387 = vadd.f32 %v305, %v371
      %v388 = vadd.f32 %v306, %v372
      %v389 = vadd.f32 %v307, %v373
      %v390 = vadd.f32 %v308, %v374
      %v391 = vadd.f32 %v309, %v375
      %v392 = vadd.f32 %v310, %v376
      %v393 = vadd.f32 %v311, %v377
      %v394 = vadd.f32 %v312, %v378
      %v395 = vadd.f32 %v313, %v379
      %v396 = vadd.f32 %v314, %v380
      %v397 = vadd.f32 %v315, %v381
      %v398 = vadd.f32 %v316, %v382
      %v399 = vadd.f32 %v317, %v383
      %v400 = vadd.f32 %v318, %v384
      %401 = vset.pattern.permute.xlu0 2
      %402 = vperm.xlu0 %401, %v172
      %v403 = vpop.permute.xlu0 %402
      %405 = vset.pattern.permute.xlu0 2
      %406 = vperm.xlu0 %405, %v173
      %v407 = vpop.permute.xlu0 %406
      %409 = vset.pattern.permute.xlu0 2
      %410 = vperm.xlu0 %409, %v174
      %v411 = vpop.permute.xlu0 %410
      %413 = vset.pattern.permute.xlu0 2
      %414 = vperm.xlu0 %413, %v175
      %v415 = vpop.permute.xlu0 %414
      %417 = vset.pattern.permute.xlu0 2
      %418 = vperm.xlu0 %417, %v176
      %v419 = vpop.permute.xlu0 %418
      %421 = vset.pattern.permute.xlu0 2
      %422 = vperm.xlu0 %421, %v177
      %v423 = vpop.permute.xlu0 %422
      %425 = vset.pattern.permute.xlu0 2
      %426 = vperm.xlu0 %425, %v178
      %v427 = vpop.permute.xlu0 %426
      %429 = vset.pattern.permute.xlu0 2
      %430 = vperm.xlu0 %429, %v179
      %v431 = vpop.permute.xlu0 %430
      %v433 = vlaneseq
      %v434 = vshrl.u32 %v433, 7
      %v435 = vsub.s32 2, %v434
      %v436 = vrot.slane %v171, %v435
      %v437 = vlaneseq
      %v438 = vshrl.u32 %v437, 7
      %v439 = vsub.s32 6, %v438
      %v440 = vrot.slane %v171, %v439
      %v443 = vlaneseq
      %v444 = vshrl.u32 %v443, 7
      %v445 = vsub.s32 2, %v444
      %v446 = vrot.slane %v436, %v445
      %v447 = vlaneseq
      %v448 = vshrl.u32 %v447, 7
      %v449 = vsub.s32 2, %v448
      %v450 = vrot.slane %v440, %v449
      %v451 = vmul.f32 %v403, %v446
      %v452 = vmul.f32 %v403, %v450
      %v453 = vmul.f32 %v407, %v446
      %v454 = vmul.f32 %v407, %v450
      %v455 = vmul.f32 %v411, %v446
      %v456 = vmul.f32 %v411, %v450
      %v457 = vmul.f32 %v415, %v446
      %v458 = vmul.f32 %v415, %v450
      %v459 = vmul.f32 %v419, %v446
      %v460 = vmul.f32 %v419, %v450
      %v461 = vmul.f32 %v423, %v446
      %v462 = vmul.f32 %v423, %v450
      %v463 = vmul.f32 %v427, %v446
      %v464 = vmul.f32 %v427, %v450
      %v465 = vmul.f32 %v431, %v446
      %v466 = vmul.f32 %v431, %v450
      %v467 = vadd.f32 %v385, %v451
      %v468 = vadd.f32 %v386, %v452
      %v469 = vadd.f32 %v387, %v453
      %v470 = vadd.f32 %v388, %v454
      %v471 = vadd.f32 %v389, %v455
      %v472 = vadd.f32 %v390, %v456
      %v473 = vadd.f32 %v391, %v457
      %v474 = vadd.f32 %v392, %v458
      %v475 = vadd.f32 %v393, %v459
      %v476 = vadd.f32 %v394, %v460
      %v477 = vadd.f32 %v395, %v461
      %v478 = vadd.f32 %v396, %v462
      %v479 = vadd.f32 %v397, %v463
      %v480 = vadd.f32 %v398, %v464
      %v481 = vadd.f32 %v399, %v465
      %v482 = vadd.f32 %v400, %v466
      %483 = vset.pattern.permute.xlu0 3
      %484 = vperm.xlu0 %483, %v172
      %v485 = vpop.permute.xlu0 %484
      %487 = vset.pattern.permute.xlu0 3
      %488 = vperm.xlu0 %487, %v173
      %v489 = vpop.permute.xlu0 %488
      %491 = vset.pattern.permute.xlu0 3
      %492 = vperm.xlu0 %491, %v174
      %v493 = vpop.permute.xlu0 %492
      %495 = vset.pattern.permute.xlu0 3
      %496 = vperm.xlu0 %495, %v175
      %v497 = vpop.permute.xlu0 %496
      %499 = vset.pattern.permute.xlu0 3
      %500 = vperm.xlu0 %499, %v176
      %v501 = vpop.permute.xlu0 %500
      %503 = vset.pattern.permute.xlu0 3
      %504 = vperm.xlu0 %503, %v177
      %v505 = vpop.permute.xlu0 %504
      %507 = vset.pattern.permute.xlu0 3
      %508 = vperm.xlu0 %507, %v178
      %v509 = vpop.permute.xlu0 %508
      %511 = vset.pattern.permute.xlu0 3
      %512 = vperm.xlu0 %511, %v179
      %v513 = vpop.permute.xlu0 %512
      %v515 = vlaneseq
      %v516 = vshrl.u32 %v515, 7
      %v517 = vsub.s32 3, %v516
      %v518 = vrot.slane %v171, %v517
      %v519 = vlaneseq
      %v520 = vshrl.u32 %v519, 7
      %v521 = vsub.s32 7, %v520
      %v522 = vrot.slane %v171, %v521
      %v525 = vlaneseq
      %v526 = vshrl.u32 %v525, 7
      %v527 = vsub.s32 3, %v526
      %v528 = vrot.slane %v518, %v527
      %v529 = vlaneseq
      %v530 = vshrl.u32 %v529, 7
      %v531 = vsub.s32 3, %v530
      %v532 = vrot.slane %v522, %v531
      %v533 = vmul.f32 %v485, %v528
      %v534 = vmul.f32 %v485, %v532
      %v535 = vmul.f32 %v489, %v528
      %v536 = vmul.f32 %v489, %v532
      %v537 = vmul.f32 %v493, %v528
      %v538 = vmul.f32 %v493, %v532
      %v539 = vmul.f32 %v497, %v528
      %v540 = vmul.f32 %v497, %v532
      %v541 = vmul.f32 %v501, %v528
      %v542 = vmul.f32 %v501, %v532
      %v543 = vmul.f32 %v505, %v528
      %v544 = vmul.f32 %v505, %v532
      %v545 = vmul.f32 %v509, %v528
      %v546 = vmul.f32 %v509, %v532
      %v547 = vmul.f32 %v513, %v528
      %v548 = vmul.f32 %v513, %v532
      %v549 = vadd.f32 %v467, %v533
      %v550 = vadd.f32 %v468, %v534
      %v551 = vadd.f32 %v469, %v535
      %v552 = vadd.f32 %v470, %v536
      %v553 = vadd.f32 %v471, %v537
      %v554 = vadd.f32 %v472, %v538
      %v555 = vadd.f32 %v473, %v539
      %v556 = vadd.f32 %v474, %v540
      %v557 = vadd.f32 %v475, %v541
      %v558 = vadd.f32 %v476, %v542
      %v559 = vadd.f32 %v477, %v543
      %v560 = vadd.f32 %v478, %v544
      %v561 = vadd.f32 %v479, %v545
      %v562 = vadd.f32 %v480, %v546
      %v563 = vadd.f32 %v481, %v547
      %v564 = vadd.f32 %v482, %v548
      %565 = vst [vmem:[%s170] sm:$0xff] %v549
      %566 = vst [vmem:[%s170 + $0x8] sm:$0xff] %v550
      %567 = vst [vmem:[%s170 + $0x10] sm:$0xff] %v551
      %568 = vst [vmem:[%s170 + $0x18] sm:$0xff] %v552
      %569 = vst [vmem:[%s170 + $0x20] sm:$0xff] %v553
      %570 = vst [vmem:[%s170 + $0x28] sm:$0xff] %v554
      %571 = vst [vmem:[%s170 + $0x30] sm:$0xff] %v555
      %572 = vst [vmem:[%s170 + $0x38] sm:$0xff] %v556
      %573 = vst [vmem:[%s170 + $0x40] sm:$0xff] %v557
      %574 = vst [vmem:[%s170 + $0x48] sm:$0xff] %v558
      %575 = vst [vmem:[%s170 + $0x50] sm:$0xff] %v559
      %576 = vst [vmem:[%s170 + $0x58] sm:$0xff] %v560
      %577 = vst [vmem:[%s170 + $0x60] sm:$0xff] %v561
      %578 = vst [vmem:[%s170 + $0x68] sm:$0xff] %v562
      %579 = vst [vmem:[%s170 + $0x70] sm:$0xff] %v563
      %580 = vst [vmem:[%s170 + $0x78] sm:$0xff] %v564
      %v581 = vld [vmem:[%s1 + $0x40] sm:$0xff]
      %v582 = vld [vmem:[%s1 + $0x48] sm:$0xff]
      %v583 = vld [vmem:[%s1 + $0x50] sm:$0xff]
      %v584 = vld [vmem:[%s1 + $0x58] sm:$0xff]
      %v585 = vld [vmem:[%s1 + $0x60] sm:$0xff]
      %v586 = vld [vmem:[%s1 + $0x68] sm:$0xff]
      %v587 = vld [vmem:[%s1 + $0x70] sm:$0xff]
      %v588 = vld [vmem:[%s1 + $0x78] sm:$0xff]
      %590 = vset.pattern.permute.xlu0 0
      %591 = vperm.xlu0 %590, %v581
      %v592 = vpop.permute.xlu0 %591
      %595 = vset.pattern.permute.xlu0 0
      %596 = vperm.xlu0 %595, %v582
      %v597 = vpop.permute.xlu0 %596
      %600 = vset.pattern.permute.xlu0 0
      %601 = vperm.xlu0 %600, %v583
      %v602 = vpop.permute.xlu0 %601
      %605 = vset.pattern.permute.xlu0 0
      %606 = vperm.xlu0 %605, %v584
      %v607 = vpop.permute.xlu0 %606
      %610 = vset.pattern.permute.xlu0 0
      %611 = vperm.xlu0 %610, %v585
      %v612 = vpop.permute.xlu0 %611
      %615 = vset.pattern.permute.xlu0 0
      %616 = vperm.xlu0 %615, %v586
      %v617 = vpop.permute.xlu0 %616
      %620 = vset.pattern.permute.xlu0 0
      %621 = vperm.xlu0 %620, %v587
      %v622 = vpop.permute.xlu0 %621
      %625 = vset.pattern.permute.xlu0 0
      %626 = vperm.xlu0 %625, %v588
      %v627 = vpop.permute.xlu0 %626
      %v629 = vmul.f32 %v592, %v234
      %v630 = vmul.f32 %v592, %v238
      %v631 = vmul.f32 %v597, %v234
      %v632 = vmul.f32 %v597, %v238
      %v633 = vmul.f32 %v602, %v234
      %v634 = vmul.f32 %v602, %v238
      %v635 = vmul.f32 %v607, %v234
      %v636 = vmul.f32 %v607, %v238
      %v637 = vmul.f32 %v612, %v234
      %v638 = vmul.f32 %v612, %v238
      %v639 = vmul.f32 %v617, %v234
      %v640 = vmul.f32 %v617, %v238
      %v641 = vmul.f32 %v622, %v234
      %v642 = vmul.f32 %v622, %v238
      %v643 = vmul.f32 %v627, %v234
      %v644 = vmul.f32 %v627, %v238
      %v645 = vld [vmem:[%s2 + $0x40] sm:$0xff]
      %v646 = vld [vmem:[%s2 + $0x48] sm:$0xff]
      %v647 = vld [vmem:[%s2 + $0x50] sm:$0xff]
      %v648 = vld [vmem:[%s2 + $0x58] sm:$0xff]
      %v649 = vld [vmem:[%s2 + $0x60] sm:$0xff]
      %v650 = vld [vmem:[%s2 + $0x68] sm:$0xff]
      %v651 = vld [vmem:[%s2 + $0x70] sm:$0xff]
      %v652 = vld [vmem:[%s2 + $0x78] sm:$0xff]
      %654 = vset.pattern.permute.xlu0 0
      %655 = vperm.xlu0 %654, %v645
      %v656 = vpop.permute.xlu0 %655
      %659 = vset.pattern.permute.xlu0 0
      %660 = vperm.xlu0 %659, %v646
      %v661 = vpop.permute.xlu0 %660
      %664 = vset.pattern.permute.xlu0 0
      %665 = vperm.xlu0 %664, %v647
      %v666 = vpop.permute.xlu0 %665
      %669 = vset.pattern.permute.xlu0 0
      %670 = vperm.xlu0 %669, %v648
      %v671 = vpop.permute.xlu0 %670
      %674 = vset.pattern.permute.xlu0 0
      %675 = vperm.xlu0 %674, %v649
      %v676 = vpop.permute.xlu0 %675
      %679 = vset.pattern.permute.xlu0 0
      %680 = vperm.xlu0 %679, %v650
      %v681 = vpop.permute.xlu0 %680
      %684 = vset.pattern.permute.xlu0 0
      %685 = vperm.xlu0 %684, %v651
      %v686 = vpop.permute.xlu0 %685
      %689 = vset.pattern.permute.xlu0 0
      %690 = vperm.xlu0 %689, %v652
      %v691 = vpop.permute.xlu0 %690
      %v693 = vadd.f32 %v629, %v656
      %v694 = vadd.f32 %v630, %v656
      %v695 = vadd.f32 %v631, %v661
      %v696 = vadd.f32 %v632, %v661
      %v697 = vadd.f32 %v633, %v666
      %v698 = vadd.f32 %v634, %v666
      %v699 = vadd.f32 %v635, %v671
      %v700 = vadd.f32 %v636, %v671
      %v701 = vadd.f32 %v637, %v676
      %v702 = vadd.f32 %v638, %v676
      %v703 = vadd.f32 %v639, %v681
      %v704 = vadd.f32 %v640, %v681
      %v705 = vadd.f32 %v641, %v686
      %v706 = vadd.f32 %v642, %v686
      %v707 = vadd.f32 %v643, %v691
      %v708 = vadd.f32 %v644, %v691
      %709 = vset.pattern.permute.xlu0 1
      %710 = vperm.xlu0 %709, %v581
      %v711 = vpop.permute.xlu0 %710
      %713 = vset.pattern.permute.xlu0 1
      %714 = vperm.xlu0 %713, %v582
      %v715 = vpop.permute.xlu0 %714
      %717 = vset.pattern.permute.xlu0 1
      %718 = vperm.xlu0 %717, %v583
      %v719 = vpop.permute.xlu0 %718
      %721 = vset.pattern.permute.xlu0 1
      %722 = vperm.xlu0 %721, %v584
      %v723 = vpop.permute.xlu0 %722
      %725 = vset.pattern.permute.xlu0 1
      %726 = vperm.xlu0 %725, %v585
      %v727 = vpop.permute.xlu0 %726
      %729 = vset.pattern.permute.xlu0 1
      %730 = vperm.xlu0 %729, %v586
      %v731 = vpop.permute.xlu0 %730
      %733 = vset.pattern.permute.xlu0 1
      %734 = vperm.xlu0 %733, %v587
      %v735 = vpop.permute.xlu0 %734
      %737 = vset.pattern.permute.xlu0 1
      %738 = vperm.xlu0 %737, %v588
      %v739 = vpop.permute.xlu0 %738
      %v741 = vmul.f32 %v711, %v364
      %v742 = vmul.f32 %v711, %v368
      %v743 = vmul.f32 %v715, %v364
      %v744 = vmul.f32 %v715, %v368
      %v745 = vmul.f32 %v719, %v364
      %v746 = vmul.f32 %v719, %v368
      %v747 = vmul.f32 %v723, %v364
      %v748 = vmul.f32 %v723, %v368
      %v749 = vmul.f32 %v727, %v364
      %v750 = vmul.f32 %v727, %v368
      %v751 = vmul.f32 %v731, %v364
      %v752 = vmul.f32 %v731, %v368
      %v753 = vmul.f32 %v735, %v364
      %v754 = vmul.f32 %v735, %v368
      %v755 = vmul.f32 %v739, %v364
      %v756 = vmul.f32 %v739, %v368
      %v757 = vadd.f32 %v693, %v741
      %v758 = vadd.f32 %v694, %v742
      %v759 = vadd.f32 %v695, %v743
      %v760 = vadd.f32 %v696, %v744
      %v761 = vadd.f32 %v697, %v745
      %v762 = vadd.f32 %v698, %v746
      %v763 = vadd.f32 %v699, %v747
      %v764 = vadd.f32 %v700, %v748
      %v765 = vadd.f32 %v701, %v749
      %v766 = vadd.f32 %v702, %v750
      %v767 = vadd.f32 %v703, %v751
      %v768 = vadd.f32 %v704, %v752
      %v769 = vadd.f32 %v705, %v753
      %v770 = vadd.f32 %v706, %v754
      %v771 = vadd.f32 %v707, %v755
      %v772 = vadd.f32 %v708, %v756
      %773 = vset.pattern.permute.xlu0 2
      %774 = vperm.xlu0 %773, %v581
      %v775 = vpop.permute.xlu0 %774
      %777 = vset.pattern.permute.xlu0 2
      %778 = vperm.xlu0 %777, %v582
      %v779 = vpop.permute.xlu0 %778
      %781 = vset.pattern.permute.xlu0 2
      %782 = vperm.xlu0 %781, %v583
      %v783 = vpop.permute.xlu0 %782
      %785 = vset.pattern.permute.xlu0 2
      %786 = vperm.xlu0 %785, %v584
      %v787 = vpop.permute.xlu0 %786
      %789 = vset.pattern.permute.xlu0 2
      %790 = vperm.xlu0 %789, %v585
      %v791 = vpop.permute.xlu0 %790
      %793 = vset.pattern.permute.xlu0 2
      %794 = vperm.xlu0 %793, %v586
      %v795 = vpop.permute.xlu0 %794
      %797 = vset.pattern.permute.xlu0 2
      %798 = vperm.xlu0 %797, %v587
      %v799 = vpop.permute.xlu0 %798
      %801 = vset.pattern.permute.xlu0 2
      %802 = vperm.xlu0 %801, %v588
      %v803 = vpop.permute.xlu0 %802
      %v805 = vmul.f32 %v775, %v446
      %v806 = vmul.f32 %v775, %v450
      %v807 = vmul.f32 %v779, %v446
      %v808 = vmul.f32 %v779, %v450
      %v809 = vmul.f32 %v783, %v446
      %v810 = vmul.f32 %v783, %v450
      %v811 = vmul.f32 %v787, %v446
      %v812 = vmul.f32 %v787, %v450
      %v813 = vmul.f32 %v791, %v446
      %v814 = vmul.f32 %v791, %v450
      %v815 = vmul.f32 %v795, %v446
      %v816 = vmul.f32 %v795, %v450
      %v817 = vmul.f32 %v799, %v446
      %v818 = vmul.f32 %v799, %v450
      %v819 = vmul.f32 %v803, %v446
      %v820 = vmul.f32 %v803, %v450
      %v821 = vadd.f32 %v757, %v805
      %v822 = vadd.f32 %v758, %v806
      %v823 = vadd.f32 %v759, %v807
      %v824 = vadd.f32 %v760, %v808
      %v825 = vadd.f32 %v761, %v809
      %v826 = vadd.f32 %v762, %v810
      %v827 = vadd.f32 %v763, %v811
      %v828 = vadd.f32 %v764, %v812
      %v829 = vadd.f32 %v765, %v813
      %v830 = vadd.f32 %v766, %v814
      %v831 = vadd.f32 %v767, %v815
      %v832 = vadd.f32 %v768, %v816
      %v833 = vadd.f32 %v769, %v817
      %v834 = vadd.f32 %v770, %v818
      %v835 = vadd.f32 %v771, %v819
      %v836 = vadd.f32 %v772, %v820
      %837 = vset.pattern.permute.xlu0 3
      %838 = vperm.xlu0 %837, %v581
      %v839 = vpop.permute.xlu0 %838
      %841 = vset.pattern.permute.xlu0 3
      %842 = vperm.xlu0 %841, %v582
      %v843 = vpop.permute.xlu0 %842
      %845 = vset.pattern.permute.xlu0 3
      %846 = vperm.xlu0 %845, %v583
      %v847 = vpop.permute.xlu0 %846
      %849 = vset.pattern.permute.xlu0 3
      %850 = vperm.xlu0 %849, %v584
      %v851 = vpop.permute.xlu0 %850
      %853 = vset.pattern.permute.xlu0 3
      %854 = vperm.xlu0 %853, %v585
      %v855 = vpop.permute.xlu0 %854
      %857 = vset.pattern.permute.xlu0 3
      %858 = vperm.xlu0 %857, %v586
      %v859 = vpop.permute.xlu0 %858
      %861 = vset.pattern.permute.xlu0 3
      %862 = vperm.xlu0 %861, %v587
      %v863 = vpop.permute.xlu0 %862
      %865 = vset.pattern.permute.xlu0 3
      %866 = vperm.xlu0 %865, %v588
      %v867 = vpop.permute.xlu0 %866
      %v869 = vmul.f32 %v839, %v528
      %v870 = vmul.f32 %v839, %v532
      %v871 = vmul.f32 %v843, %v528
      %v872 = vmul.f32 %v843, %v532
      %v873 = vmul.f32 %v847, %v528
      %v874 = vmul.f32 %v847, %v532
      %v875 = vmul.f32 %v851, %v528
      %v876 = vmul.f32 %v851, %v532
      %v877 = vmul.f32 %v855, %v528
      %v878 = vmul.f32 %v855, %v532
      %v879 = vmul.f32 %v859, %v528
      %v880 = vmul.f32 %v859, %v532
      %v881 = vmul.f32 %v863, %v528
      %v882 = vmul.f32 %v863, %v532
      %v883 = vmul.f32 %v867, %v528
      %v884 = vmul.f32 %v867, %v532
      %v885 = vadd.f32 %v821, %v869
      %v886 = vadd.f32 %v822, %v870
      %v887 = vadd.f32 %v823, %v871
      %v888 = vadd.f32 %v824, %v872
      %v889 = vadd.f32 %v825, %v873
      %v890 = vadd.f32 %v826, %v874
      %v891 = vadd.f32 %v827, %v875
      %v892 = vadd.f32 %v828, %v876
      %v893 = vadd.f32 %v829, %v877
      %v894 = vadd.f32 %v830, %v878
      %v895 = vadd.f32 %v831, %v879
      %v896 = vadd.f32 %v832, %v880
      %v897 = vadd.f32 %v833, %v881
      %v898 = vadd.f32 %v834, %v882
      %v899 = vadd.f32 %v835, %v883
      %v900 = vadd.f32 %v836, %v884
      %901 = vst [vmem:[%s170 + $0x80] sm:$0xff] %v885
      %902 = vst [vmem:[%s170 + $0x88] sm:$0xff] %v886
      %903 = vst [vmem:[%s170 + $0x90] sm:$0xff] %v887
      %904 = vst [vmem:[%s170 + $0x98] sm:$0xff] %v888
      %905 = vst [vmem:[%s170 + $0xa0] sm:$0xff] %v889
      %906 = vst [vmem:[%s170 + $0xa8] sm:$0xff] %v890
      %907 = vst [vmem:[%s170 + $0xb0] sm:$0xff] %v891
      %908 = vst [vmem:[%s170 + $0xb8] sm:$0xff] %v892
      %909 = vst [vmem:[%s170 + $0xc0] sm:$0xff] %v893
      %910 = vst [vmem:[%s170 + $0xc8] sm:$0xff] %v894
      %911 = vst [vmem:[%s170 + $0xd0] sm:$0xff] %v895
      %912 = vst [vmem:[%s170 + $0xd8] sm:$0xff] %v896
      %913 = vst [vmem:[%s170 + $0xe0] sm:$0xff] %v897
      %914 = vst [vmem:[%s170 + $0xe8] sm:$0xff] %v898
      %915 = vst [vmem:[%s170 + $0xf0] sm:$0xff] %v899
      %916 = vst [vmem:[%s170 + $0xf8] sm:$0xff] %v900
      %v917 = vld [vmem:[%s1 + $0x80] sm:$0xff]
      %v918 = vld [vmem:[%s1 + $0x88] sm:$0xff]
      %v919 = vld [vmem:[%s1 + $0x90] sm:$0xff]
      %v920 = vld [vmem:[%s1 + $0x98] sm:$0xff]
      %v921 = vld [vmem:[%s1 + $0xa0] sm:$0xff]
      %v922 = vld [vmem:[%s1 + $0xa8] sm:$0xff]
      %v923 = vld [vmem:[%s1 + $0xb0] sm:$0xff]
      %v924 = vld [vmem:[%s1 + $0xb8] sm:$0xff]
      %926 = vset.pattern.permute.xlu0 0
      %927 = vperm.xlu0 %926, %v917
      %v928 = vpop.permute.xlu0 %927
      %931 = vset.pattern.permute.xlu0 0
      %932 = vperm.xlu0 %931, %v918
      %v933 = vpop.permute.xlu0 %932
      %936 = vset.pattern.permute.xlu0 0
      %937 = vperm.xlu0 %936, %v919
      %v938 = vpop.permute.xlu0 %937
      %941 = vset.pattern.permute.xlu0 0
      %942 = vperm.xlu0 %941, %v920
      %v943 = vpop.permute.xlu0 %942
      %946 = vset.pattern.permute.xlu0 0
      %947 = vperm.xlu0 %946, %v921
      %v948 = vpop.permute.xlu0 %947
      %951 = vset.pattern.permute.xlu0 0
      %952 = vperm.xlu0 %951, %v922
      %v953 = vpop.permute.xlu0 %952
      %956 = vset.pattern.permute.xlu0 0
      %957 = vperm.xlu0 %956, %v923
      %v958 = vpop.permute.xlu0 %957
      %961 = vset.pattern.permute.xlu0 0
      %962 = vperm.xlu0 %961, %v924
      %v963 = vpop.permute.xlu0 %962
      %v965 = vmul.f32 %v928, %v234
      %v966 = vmul.f32 %v928, %v238
      %v967 = vmul.f32 %v933, %v234
      %v968 = vmul.f32 %v933, %v238
      %v969 = vmul.f32 %v938, %v234
      %v970 = vmul.f32 %v938, %v238
      %v971 = vmul.f32 %v943, %v234
      %v972 = vmul.f32 %v943, %v238
      %v973 = vmul.f32 %v948, %v234
      %v974 = vmul.f32 %v948, %v238
      %v975 = vmul.f32 %v953, %v234
      %v976 = vmul.f32 %v953, %v238
      %v977 = vmul.f32 %v958, %v234
      %v978 = vmul.f32 %v958, %v238
      %v979 = vmul.f32 %v963, %v234
      %v980 = vmul.f32 %v963, %v238
      %v981 = vld [vmem:[%s2 + $0x80] sm:$0xff]
      %v982 = vld [vmem:[%s2 + $0x88] sm:$0xff]
      %v983 = vld [vmem:[%s2 + $0x90] sm:$0xff]
      %v984 = vld [vmem:[%s2 + $0x98] sm:$0xff]
      %v985 = vld [vmem:[%s2 + $0xa0] sm:$0xff]
      %v986 = vld [vmem:[%s2 + $0xa8] sm:$0xff]
      %v987 = vld [vmem:[%s2 + $0xb0] sm:$0xff]
      %v988 = vld [vmem:[%s2 + $0xb8] sm:$0xff]
      %990 = vset.pattern.permute.xlu0 0
      %991 = vperm.xlu0 %990, %v981
      %v992 = vpop.permute.xlu0 %991
      %995 = vset.pattern.permute.xlu0 0
      %996 = vperm.xlu0 %995, %v982
      %v997 = vpop.permute.xlu0 %996
      %1000 = vset.pattern.permute.xlu0 0
      %1001 = vperm.xlu0 %1000, %v983
      %v1002 = vpop.permute.xlu0 %1001
      %1005 = vset.pattern.permute.xlu0 0
      %1006 = vperm.xlu0 %1005, %v984
      %v1007 = vpop.permute.xlu0 %1006
      %1010 = vset.pattern.permute.xlu0 0
      %1011 = vperm.xlu0 %1010, %v985
      %v1012 = vpop.permute.xlu0 %1011
      %1015 = vset.pattern.permute.xlu0 0
      %1016 = vperm.xlu0 %1015, %v986
      %v1017 = vpop.permute.xlu0 %1016
      %1020 = vset.pattern.permute.xlu0 0
      %1021 = vperm.xlu0 %1020, %v987
      %v1022 = vpop.permute.xlu0 %1021
      %1025 = vset.pattern.permute.xlu0 0
      %1026 = vperm.xlu0 %1025, %v988
      %v1027 = vpop.permute.xlu0 %1026
      %v1029 = vadd.f32 %v965, %v992
      %v1030 = vadd.f32 %v966, %v992
      %v1031 = vadd.f32 %v967, %v997
      %v1032 = vadd.f32 %v968, %v997
      %v1033 = vadd.f32 %v969, %v1002
      %v1034 = vadd.f32 %v970, %v1002
      %v1035 = vadd.f32 %v971, %v1007
      %v1036 = vadd.f32 %v972, %v1007
      %v1037 = vadd.f32 %v973, %v1012
      %v1038 = vadd.f32 %v974, %v1012
      %v1039 = vadd.f32 %v975, %v1017
      %v1040 = vadd.f32 %v976, %v1017
      %v1041 = vadd.f32 %v977, %v1022
      %v1042 = vadd.f32 %v978, %v1022
      %v1043 = vadd.f32 %v979, %v1027
      %v1044 = vadd.f32 %v980, %v1027
      %1045 = vset.pattern.permute.xlu0 1
      %1046 = vperm.xlu0 %1045, %v917
      %v1047 = vpop.permute.xlu0 %1046
      %1049 = vset.pattern.permute.xlu0 1
      %1050 = vperm.xlu0 %1049, %v918
      %v1051 = vpop.permute.xlu0 %1050
      %1053 = vset.pattern.permute.xlu0 1
      %1054 = vperm.xlu0 %1053, %v919
      %v1055 = vpop.permute.xlu0 %1054
      %1057 = vset.pattern.permute.xlu0 1
      %1058 = vperm.xlu0 %1057, %v920
      %v1059 = vpop.permute.xlu0 %1058
      %1061 = vset.pattern.permute.xlu0 1
      %1062 = vperm.xlu0 %1061, %v921
      %v1063 = vpop.permute.xlu0 %1062
      %1065 = vset.pattern.permute.xlu0 1
      %1066 = vperm.xlu0 %1065, %v922
      %v1067 = vpop.permute.xlu0 %1066
      %1069 = vset.pattern.permute.xlu0 1
      %1070 = vperm.xlu0 %1069, %v923
      %v1071 = vpop.permute.xlu0 %1070
      %1073 = vset.pattern.permute.xlu0 1
      %1074 = vperm.xlu0 %1073, %v924
      %v1075 = vpop.permute.xlu0 %1074
      %v1077 = vmul.f32 %v1047, %v364
      %v1078 = vmul.f32 %v1047, %v368
      %v1079 = vmul.f32 %v1051, %v364
      %v1080 = vmul.f32 %v1051, %v368
      %v1081 = vmul.f32 %v1055, %v364
      %v1082 = vmul.f32 %v1055, %v368
      %v1083 = vmul.f32 %v1059, %v364
      %v1084 = vmul.f32 %v1059, %v368
      %v1085 = vmul.f32 %v1063, %v364
      %v1086 = vmul.f32 %v1063, %v368
      %v1087 = vmul.f32 %v1067, %v364
      %v1088 = vmul.f32 %v1067, %v368
      %v1089 = vmul.f32 %v1071, %v364
      %v1090 = vmul.f32 %v1071, %v368
      %v1091 = vmul.f32 %v1075, %v364
      %v1092 = vmul.f32 %v1075, %v368
      %v1093 = vadd.f32 %v1029, %v1077
      %v1094 = vadd.f32 %v1030, %v1078
      %v1095 = vadd.f32 %v1031, %v1079
      %v1096 = vadd.f32 %v1032, %v1080
      %v1097 = vadd.f32 %v1033, %v1081
      %v1098 = vadd.f32 %v1034, %v1082
      %v1099 = vadd.f32 %v1035, %v1083
      %v1100 = vadd.f32 %v1036, %v1084
      %v1101 = vadd.f32 %v1037, %v1085
      %v1102 = vadd.f32 %v1038, %v1086
      %v1103 = vadd.f32 %v1039, %v1087
      %v1104 = vadd.f32 %v1040, %v1088
      %v1105 = vadd.f32 %v1041, %v1089
      %v1106 = vadd.f32 %v1042, %v1090
      %v1107 = vadd.f32 %v1043, %v1091
      %v1108 = vadd.f32 %v1044, %v1092
      %1109 = vset.pattern.permute.xlu0 2
      %1110 = vperm.xlu0 %1109, %v917
      %v1111 = vpop.permute.xlu0 %1110
      %1113 = vset.pattern.permute.xlu0 2
      %1114 = vperm.xlu0 %1113, %v918
      %v1115 = vpop.permute.xlu0 %1114
      %1117 = vset.pattern.permute.xlu0 2
      %1118 = vperm.xlu0 %1117, %v919
      %v1119 = vpop.permute.xlu0 %1118
      %1121 = vset.pattern.permute.xlu0 2
      %1122 = vperm.xlu0 %1121, %v920
      %v1123 = vpop.permute.xlu0 %1122
      %1125 = vset.pattern.permute.xlu0 2
      %1126 = vperm.xlu0 %1125, %v921
      %v1127 = vpop.permute.xlu0 %1126
      %1129 = vset.pattern.permute.xlu0 2
      %1130 = vperm.xlu0 %1129, %v922
      %v1131 = vpop.permute.xlu0 %1130
      %1133 = vset.pattern.permute.xlu0 2
      %1134 = vperm.xlu0 %1133, %v923
      %v1135 = vpop.permute.xlu0 %1134
      %1137 = vset.pattern.permute.xlu0 2
      %1138 = vperm.xlu0 %1137, %v924
      %v1139 = vpop.permute.xlu0 %1138
      %v1141 = vmul.f32 %v1111, %v446
      %v1142 = vmul.f32 %v1111, %v450
      %v1143 = vmul.f32 %v1115, %v446
      %v1144 = vmul.f32 %v1115, %v450
      %v1145 = vmul.f32 %v1119, %v446
      %v1146 = vmul.f32 %v1119, %v450
      %v1147 = vmul.f32 %v1123, %v446
      %v1148 = vmul.f32 %v1123, %v450
      %v1149 = vmul.f32 %v1127, %v446
      %v1150 = vmul.f32 %v1127, %v450
      %v1151 = vmul.f32 %v1131, %v446
      %v1152 = vmul.f32 %v1131, %v450
      %v1153 = vmul.f32 %v1135, %v446
      %v1154 = vmul.f32 %v1135, %v450
      %v1155 = vmul.f32 %v1139, %v446
      %v1156 = vmul.f32 %v1139, %v450
      %v1157 = vadd.f32 %v1093, %v1141
      %v1158 = vadd.f32 %v1094, %v1142
      %v1159 = vadd.f32 %v1095, %v1143
      %v1160 = vadd.f32 %v1096, %v1144
      %v1161 = vadd.f32 %v1097, %v1145
      %v1162 = vadd.f32 %v1098, %v1146
      %v1163 = vadd.f32 %v1099, %v1147
      %v1164 = vadd.f32 %v1100, %v1148
      %v1165 = vadd.f32 %v1101, %v1149
      %v1166 = vadd.f32 %v1102, %v1150
      %v1167 = vadd.f32 %v1103, %v1151
      %v1168 = vadd.f32 %v1104, %v1152
      %v1169 = vadd.f32 %v1105, %v1153
      %v1170 = vadd.f32 %v1106, %v1154
      %v1171 = vadd.f32 %v1107, %v1155
      %v1172 = vadd.f32 %v1108, %v1156
      %1173 = vset.pattern.permute.xlu0 3
      %1174 = vperm.xlu0 %1173, %v917
      %v1175 = vpop.permute.xlu0 %1174
      %1177 = vset.pattern.permute.xlu0 3
      %1178 = vperm.xlu0 %1177, %v918
      %v1179 = vpop.permute.xlu0 %1178
      %1181 = vset.pattern.permute.xlu0 3
      %1182 = vperm.xlu0 %1181, %v919
      %v1183 = vpop.permute.xlu0 %1182
      %1185 = vset.pattern.permute.xlu0 3
      %1186 = vperm.xlu0 %1185, %v920
      %v1187 = vpop.permute.xlu0 %1186
      %1189 = vset.pattern.permute.xlu0 3
      %1190 = vperm.xlu0 %1189, %v921
      %v1191 = vpop.permute.xlu0 %1190
      %1193 = vset.pattern.permute.xlu0 3
      %1194 = vperm.xlu0 %1193, %v922
      %v1195 = vpop.permute.xlu0 %1194
      %1197 = vset.pattern.permute.xlu0 3
      %1198 = vperm.xlu0 %1197, %v923
      %v1199 = vpop.permute.xlu0 %1198
      %1201 = vset.pattern.permute.xlu0 3
      %1202 = vperm.xlu0 %1201, %v924
      %v1203 = vpop.permute.xlu0 %1202
      %v1205 = vmul.f32 %v1175, %v528
      %v1206 = vmul.f32 %v1175, %v532
      %v1207 = vmul.f32 %v1179, %v528
      %v1208 = vmul.f32 %v1179, %v532
      %v1209 = vmul.f32 %v1183, %v528
      %v1210 = vmul.f32 %v1183, %v532
      %v1211 = vmul.f32 %v1187, %v528
      %v1212 = vmul.f32 %v1187, %v532
      %v1213 = vmul.f32 %v1191, %v528
      %v1214 = vmul.f32 %v1191, %v532
      %v1215 = vmul.f32 %v1195, %v528
      %v1216 = vmul.f32 %v1195, %v532
      %v1217 = vmul.f32 %v1199, %v528
      %v1218 = vmul.f32 %v1199, %v532
      %v1219 = vmul.f32 %v1203, %v528
      %v1220 = vmul.f32 %v1203, %v532
      %v1221 = vadd.f32 %v1157, %v1205
      %v1222 = vadd.f32 %v1158, %v1206
      %v1223 = vadd.f32 %v1159, %v1207
      %v1224 = vadd.f32 %v1160, %v1208
      %v1225 = vadd.f32 %v1161, %v1209
      %v1226 = vadd.f32 %v1162, %v1210
      %v1227 = vadd.f32 %v1163, %v1211
      %v1228 = vadd.f32 %v1164, %v1212
      %v1229 = vadd.f32 %v1165, %v1213
      %v1230 = vadd.f32 %v1166, %v1214
      %v1231 = vadd.f32 %v1167, %v1215
      %v1232 = vadd.f32 %v1168, %v1216
      %v1233 = vadd.f32 %v1169, %v1217
      %v1234 = vadd.f32 %v1170, %v1218
      %v1235 = vadd.f32 %v1171, %v1219
      %v1236 = vadd.f32 %v1172, %v1220
      %1237 = vst [vmem:[%s170 + $0x100] sm:$0xff] %v1221
      %1238 = vst [vmem:[%s170 + $0x108] sm:$0xff] %v1222
      %1239 = vst [vmem:[%s170 + $0x110] sm:$0xff] %v1223
      %1240 = vst [vmem:[%s170 + $0x118] sm:$0xff] %v1224
      %1241 = vst [vmem:[%s170 + $0x120] sm:$0xff] %v1225
      %1242 = vst [vmem:[%s170 + $0x128] sm:$0xff] %v1226
      %1243 = vst [vmem:[%s170 + $0x130] sm:$0xff] %v1227
      %1244 = vst [vmem:[%s170 + $0x138] sm:$0xff] %v1228
      %1245 = vst [vmem:[%s170 + $0x140] sm:$0xff] %v1229
      %1246 = vst [vmem:[%s170 + $0x148] sm:$0xff] %v1230
      %1247 = vst [vmem:[%s170 + $0x150] sm:$0xff] %v1231
      %1248 = vst [vmem:[%s170 + $0x158] sm:$0xff] %v1232
      %1249 = vst [vmem:[%s170 + $0x160] sm:$0xff] %v1233
      %1250 = vst [vmem:[%s170 + $0x168] sm:$0xff] %v1234
      %1251 = vst [vmem:[%s170 + $0x170] sm:$0xff] %v1235
      %1252 = vst [vmem:[%s170 + $0x178] sm:$0xff] %v1236
      %p1253 = scmp.lt.s32.totalorder %s14, 1
      %s1254 = scalar_select %p1253, %s14, 1
      %s1255 = smul.addr %s1254, 48
      %s1256 = smul.addr %s1255, 8
      %s1257 = scalar_lea.vmem %s3, %s1256
      // Predicated region
      $region33: #{nystrom_multihead_forward.2} parent=31 // pred_check
        %p1258 = pneg %p100
      $region34: #{nystrom_multihead_forward.2} parent=31 // pred_check_branch
        %1260 = sbr.rel (%p1258) target = $region36
      $region35: #{nystrom_multihead_forward.2} parent=31 // pred_region
        _
      $region36: #{nystrom_multihead_forward.2} parent=31 // pred_fallthru
        _
    $region32: #{nystrom_multihead_forward.2} parent=5 // pred_fallthru
      _
    %p1261 = scmp.le.s32.totalorder 2, %s9
    // Predicated region
    $region37: #{nystrom_multihead_forward.2} parent=5 // pred_check
      %p1262 = pneg %p1261
    $region38: #{nystrom_multihead_forward.2} parent=5 // pred_check_branch
      %1264 = sbr.rel (%p1262) target = $region40
    $region39: #{nystrom_multihead_forward.2} parent=5 // pred_region
      %s1265 = ssub.s32 %s9, 2
      // Predicated region
      $region41: #{nystrom_multihead_forward.2} parent=39 // pred_check
        %p1266 = pneg %p106
      $region42: #{nystrom_multihead_forward.2} parent=39 // pred_check_branch
        %1268 = sbr.rel (%p1266) target = $region44
      $region43: #{nystrom_multihead_forward.2} parent=39 // pred_region
        %p1269 = scmp.lt.s32.totalorder %s15, 1
        %s1270 = scalar_select %p1269, %s15, 1
        %s1271 = smul.addr %s1270, 48
        %s1272 = smul.addr %s1271, 8
        %s1273 = scalar_lea.vmem %s3, %s1272
      $region44: #{nystrom_multihead_forward.2} parent=39 // pred_fallthru
        _
    $region40: #{nystrom_multihead_forward.2} parent=5 // pred_fallthru
      _
  $region6: #{nystrom_multihead_forward.2} parent=0 // loop_footer
    %s13 = sadd.s32 1, %s9
  $region7: #{nystrom_multihead_forward.2} parent=0 // loop_footer_branch
    %8 = sbr.rel target = $region3
  $region8: #{nystrom_multihead_forward.2} parent=0 // loop_exit
    _

// kernel: nystrom_multihead_forward.3
$region0: #{nystrom_multihead_forward.3}
  #allocation0 [shape = 'u32[]', space=smem, size = 0x4, offset = 0x4, fixed_abs, tag = 'smem constant byte address 0x4 - core index']
  #allocation1 [shape = 'u32[144,128]{1,0:T(1,128)}', space=vmem, size = 0x12000, scoped, tag = 'internal scratch']
  %s0 = inlined_call_operand.vmem [shape: f32[2,2,256,96], index: 0, kind: input, shape index: {}]
  %s1 = inlined_call_operand.vmem [shape: f32[4,256], index: 1, kind: input, shape index: {}]
  %s2 = inlined_call_operand.vmem [shape: f32[2,32,256], index: 2, kind: input, shape index: {}]
  %s3 = inlined_call_operand.vmem [shape: f32[32,32], index: 3, kind: input, shape index: {}]
  %s4 = inlined_call_operand.vmem [shape: f32[2,32,32], index: 4, kind: output, shape index: {}]
  %s5 = sld [smem:[#allocation0]]
  $region49: #{nystrom_multihead_forward.3} parent=0
    _
  %s7 = ssub.s32 1, %s5
  %s8 = scalar_select 0, %s7, %s5
  loop: start=0, step=1, limit=4
  $region2: #{nystrom_multihead_forward.3} parent=0 // loop_pre_header
    _
  $region3: #{nystrom_multihead_forward.3} parent=0 // loop_header
    %s10 = sphi 0, %s14
    %p11 = scmp.ge.s32.totalorder %s10, 4
    %s20 = sphi 0, %s22
    %s23 = sphi 0, %s20
    %s24 = sphi 0, %s23
    %s40 = sphi 0, %s24
    %s44 = sphi 0, %s44
    %s46 = sphi 0, %s44
    %s47 = sphi 0, %s46
    %s61 = sphi 0, %s47
    %s65 = sphi 0, %s65
    %s67 = sphi 0, %s65
    %s68 = sphi 0, %s67
    %s82 = sphi 0, %s68
    %s86 = sphi 0, %s86
    %s88 = sphi 0, %s86
    %s89 = sphi 0, %s88
    %s103 = sphi 0, %s89
    %s109 = sphi 0, %s111
    %s112 = sphi 0, %s109
    %s113 = sphi 0, %s112
    %s129 = sphi 0, %s113
  $region4: #{nystrom_multihead_forward.3} parent=0 // loop_header_branch
    %13 = sbr.rel (%p11) target = $region8
  $region5: #{nystrom_multihead_forward.3} parent=0 // loop_body
    %s15 = ssub.s32 %s10, 1
    %s16 = ssub.s32 %s10, 2
    %s17 = sadd.s32 %s10, 1
    %s18 = ssub.s32 %s10, %s17
    %p19 = scmp.eq.s32.totalorder %s18, 0
    %s21 = sadd.s32 %s20, 1
    %s22 = scalar_select %p19, %s20, %s21
    %p25 = pneg %p19
    %p26 = scmp.eq.s32.totalorder %s10, 1
    %p27 = por %p25, %p26
    %p28 = scmp.ne.s32.totalorder %s20, %s23
    %p29 = scmp.eq.s32.totalorder %s10, 0
    %p30 = por %p28, %p29
    %p31 = scmp.ne.s32.totalorder %s20, %s23
    %p32 = scmp.eq.s32.totalorder %s15, 1
    %p33 = por %p31, %p32
    %p34 = scmp.ne.s32.totalorder %s23, %s24
    %p35 = scmp.eq.s32.totalorder %s15, 0
    %p36 = por %p34, %p35
    %p37 = scmp.ne.s32.totalorder %s23, %s24
    %p38 = scmp.eq.s32.totalorder %s16, 1
    %p39 = por %p37, %p38
    %p41 = scmp.ne.s32.totalorder %s24, %s40
    %p42 = scmp.eq.s32.totalorder %s16, 0
    %p43 = por %p41, %p42
    %s45 = sadd.s32 %s44, 1
    %p48 = scmp.eq.s32.totalorder %s10, 1
    %p49 = scmp.ne.s32.totalorder %s44, %s46
    %p50 = scmp.eq.s32.totalorder %s10, 0
    %p51 = por %p49, %p50
    %p52 = scmp.ne.s32.totalorder %s44, %s46
    %p53 = scmp.eq.s32.totalorder %s15, 1
    %p54 = por %p52, %p53
    %p55 = scmp.ne.s32.totalorder %s46, %s47
    %p56 = scmp.eq.s32.totalorder %s15, 0
    %p57 = por %p55, %p56
    %p58 = scmp.ne.s32.totalorder %s46, %s47
    %p59 = scmp.eq.s32.totalorder %s16, 1
    %p60 = por %p58, %p59
    %p62 = scmp.ne.s32.totalorder %s47, %s61
    %p63 = scmp.eq.s32.totalorder %s16, 0
    %p64 = por %p62, %p63
    %s66 = sadd.s32 %s65, 1
    %p69 = scmp.eq.s32.totalorder %s10, 1
    %p70 = scmp.ne.s32.totalorder %s65, %s67
    %p71 = scmp.eq.s32.totalorder %s10, 0
    %p72 = por %p70, %p71
    %p73 = scmp.ne.s32.totalorder %s65, %s67
    %p74 = scmp.eq.s32.totalorder %s15, 1
    %p75 = por %p73, %p74
    %p76 = scmp.ne.s32.totalorder %s67, %s68
    %p77 = scmp.eq.s32.totalorder %s15, 0
    %p78 = por %p76, %p77
    %p79 = scmp.ne.s32.totalorder %s67, %s68
    %p80 = scmp.eq.s32.totalorder %s16, 1
    %p81 = por %p79, %p80
    %p83 = scmp.ne.s32.totalorder %s68, %s82
    %p84 = scmp.eq.s32.totalorder %s16, 0
    %p85 = por %p83, %p84
    %s87 = sadd.s32 %s86, 1
    %p90 = scmp.eq.s32.totalorder %s10, 1
    %p91 = scmp.ne.s32.totalorder %s86, %s88
    %p92 = scmp.eq.s32.totalorder %s10, 0
    %p93 = por %p91, %p92
    %p94 = scmp.ne.s32.totalorder %s86, %s88
    %p95 = scmp.eq.s32.totalorder %s15, 1
    %p96 = por %p94, %p95
    %p97 = scmp.ne.s32.totalorder %s88, %s89
    %p98 = scmp.eq.s32.totalorder %s15, 0
    %p99 = por %p97, %p98
    %p100 = scmp.ne.s32.totalorder %s88, %s89
    %p101 = scmp.eq.s32.totalorder %s16, 1
    %p102 = por %p100, %p101
    %p104 = scmp.ne.s32.totalorder %s89, %s103
    %p105 = scmp.eq.s32.totalorder %s16, 0
    %p106 = por %p104, %p105
    %s107 = ssub.s32 %s10, %s17
    %p108 = scmp.eq.s32.totalorder %s107, 0
    %s110 = sadd.s32 %s109, 1
    %s111 = scalar_select %p108, %s109, %s110
    %p114 = pneg %p108
    %p115 = scmp.eq.s32.totalorder %s10, 1
    %p116 = por %p114, %p115
    %p117 = scmp.ne.s32.totalorder %s109, %s112
    %p118 = scmp.eq.s32.totalorder %s10, 0
    %p119 = por %p117, %p118
    %p120 = scmp.ne.s32.totalorder %s109, %s112
    %p121 = scmp.eq.s32.totalorder %s15, 1
    %p122 = por %p120, %p121
    %p123 = scmp.ne.s32.totalorder %s112, %s113
    %p124 = scmp.eq.s32.totalorder %s15, 0
    %p125 = por %p123, %p124
    %p126 = scmp.ne.s32.totalorder %s112, %s113
    %p127 = scmp.eq.s32.totalorder %s16, 1
    %p128 = por %p126, %p127
    %p130 = scmp.ne.s32.totalorder %s113, %s129
    %p131 = scmp.eq.s32.totalorder %s16, 0
    %p132 = por %p130, %p131
    %p133 = scmp.le.s32.totalorder 1, %s10
    %p134 = scmp.lt.s32.totalorder %s10, 3
    %p135 = pnand %p133, %p134
    %p136 = pneg %p135
    // Predicated region
    $region9: #{nystrom_multihead_forward.3} parent=5 // pred_check
      _
    $region10: #{nystrom_multihead_forward.3} parent=5 // pred_check_branch
      %138 = sbr.rel (%p135) target = $region12
    $region11: #{nystrom_multihead_forward.3} parent=5 // pred_region
      %s139 = ssub.s32 %s10, 1
      // Predicated region
      $region13: #{nystrom_multihead_forward.3} parent=11 // pred_check
        %p140 = pneg %p57
      $region14: #{nystrom_multihead_forward.3} parent=11 // pred_check_branch
        %142 = sbr.rel (%p140) target = $region16
      $region15: #{nystrom_multihead_forward.3} parent=11 // pred_region
        _
      $region16: #{nystrom_multihead_forward.3} parent=11 // pred_fallthru
        _
      // Predicated region
      $region17: #{nystrom_multihead_forward.3} parent=11 // pred_check
        %p143 = pneg %p78
      $region18: #{nystrom_multihead_forward.3} parent=11 // pred_check_branch
        %145 = sbr.rel (%p143) target = $region20
      $region19: #{nystrom_multihead_forward.3} parent=11 // pred_region
        _
      $region20: #{nystrom_multihead_forward.3} parent=11 // pred_fallthru
        _
      // Predicated region
      $region21: #{nystrom_multihead_forward.3} parent=11 // pred_check
        %p146 = pneg %p99
      $region22: #{nystrom_multihead_forward.3} parent=11 // pred_check_branch
        %148 = sbr.rel (%p146) target = $region24
      $region23: #{nystrom_multihead_forward.3} parent=11 // pred_region
        _
      $region24: #{nystrom_multihead_forward.3} parent=11 // pred_fallthru
        _
    $region12: #{nystrom_multihead_forward.3} parent=5 // pred_fallthru
      _
    %p149 = scmp.lt.s32.totalorder %s10, 2
    // Predicated region
    $region25: #{nystrom_multihead_forward.3} parent=5 // pred_check
      %p150 = pneg %p149
    $region26: #{nystrom_multihead_forward.3} parent=5 // pred_check_branch
      %152 = sbr.rel (%p150) target = $region28
    $region27: #{nystrom_multihead_forward.3} parent=5 // pred_region
      // Predicated region
      $region29: #{nystrom_multihead_forward.3} parent=27 // pred_check
        %p153 = pneg %p30
      $region30: #{nystrom_multihead_forward.3} parent=27 // pred_check_branch
        %155 = sbr.rel (%p153) target = $region32
      $region31: #{nystrom_multihead_forward.3} parent=27 // pred_region
        %p156 = scmp.lt.s32.totalorder %s10, 1
        %s157 = scalar_select %p156, %s10, 1
        %s158 = smul.addr %s157, 64
        %s159 = smul.addr %s158, 8
        %s160 = scalar_lea.vmem %s0, %s159
      $region32: #{nystrom_multihead_forward.3} parent=27 // pred_fallthru
        _
    $region28: #{nystrom_multihead_forward.3} parent=5 // pred_fallthru
      _
    %p161 = scmp.le.s32.totalorder 1, %s10
    %p162 = scmp.lt.s32.totalorder %s10, 3
    %p163 = pnand %p161, %p162
    %p164 = pneg %p163
    // Predicated region
    $region33: #{nystrom_multihead_forward.3} parent=5 // pred_check
      _
    $region34: #{nystrom_multihead_forward.3} parent=5 // pred_check_branch
      %166 = sbr.rel (%p163) target = $region36
    $region35: #{nystrom_multihead_forward.3} parent=5 // pred_region
      %s167 = ssub.s32 %s10, 1
      %p168 = scmp.lt.s32.totalorder %s15, 1
      %s169 = scalar_select %p168, %s15, 1
      %s170 = smul.addr %s169, 64
      %s171 = smul.addr %s170, 8
      %s172 = scalar_lea.vmem %s0, %s171
      %p173 = pneg %p36
      %p174 = pneg %p33
      %p175 = pneg %p57
      %p176 = pneg %p54
      %p177 = pneg %p78
      %p178 = pneg %p75
      %p179 = pneg %p99
      %p180 = pneg %p96
      %p181 = pneg %p125
      %p182 = pneg %p122
      %p183 = scmp.lt.s32.totalorder %s15, 1
      %s184 = scalar_select %p183, %s15, 1
      %s185 = smul.addr %s184, 4
      %s186 = smul.addr %s185, 8
      %s187 = scalar_lea.vmem %s4, %s186
      %p188 = scmp.lt.s32.totalorder %s15, 1
      %s189 = scalar_select %p188, %s15, 1
      %s190 = smul.addr %s189, 64
      %s191 = smul.addr %s190, 8
      %s192 = scalar_lea.vmem %s0, %s191
      %p193 = scmp.lt.s32.totalorder %s15, 1
      %s194 = scalar_select %p193, %s15, 1
      %s195 = smul.addr %s194, 4
      %s196 = smul.addr %s195, 8
      %s197 = scalar_lea.vmem %s4, %s196
      %v198 = vlaneseq
      %v199 = vshrl.u32 %v198, 7
      %v200 = vlaneseq
      %v201 = vand.u32 %v200, 127
      %vm202 = vcmp.eq.s32.totalorder %v199, %v201
      %v203 = vsel %vm202, 1.0, 0.0
      %v204 = vmul.f32 %v203, 7.0
      %v205 = vmul.f32 %v203, 13.0
      %v206 = vmul.f32 %v203, 15.0
      %v207 = vld [vmem:[%s1] sm:$0xff]
      %v208 = vld [vmem:[%s3] sm:$0xff]
      %v209 = vld [vmem:[%s3 + $0x8] sm:$0xff]
      %v210 = vld [vmem:[%s3 + $0x10] sm:$0xff]
      %v211 = vld [vmem:[%s3 + $0x18] sm:$0xff]
      %v212 = vld [vmem:[%s192] sm:$0xff]
      %v213 = vld [vmem:[%s192 + $0x8] sm:$0xff]
      %v214 = vld [vmem:[%s192 + $0x10] sm:$0xff]
      %v215 = vld [vmem:[%s192 + $0x18] sm:$0xff]
      %v216 = vld [vmem:[%s192 + $0x20] sm:$0xff]
      %v217 = vld [vmem:[%s192 + $0x28] sm:$0xff]
      %v218 = vld [vmem:[%s192 + $0x30] sm:$0xff]
      %v219 = vld [vmem:[%s192 + $0x38] sm:$0xff]
      %v220 = vld [vmem:[%s192 + $0x40] sm:$0xff]
      %v221 = vld [vmem:[%s192 + $0x48] sm:$0xff]
      %v222 = vld [vmem:[%s192 + $0x50] sm:$0xff]
      %v223 = vld [vmem:[%s192 + $0x58] sm:$0xff]
      %v224 = vld [vmem:[%s192 + $0x60] sm:$0xff]
      %v225 = vld [vmem:[%s192 + $0x68] sm:$0xff]
      %v226 = vld [vmem:[%s192 + $0x70] sm:$0xff]
      %v227 = vld [vmem:[%s192 + $0x78] sm:$0xff]
      %v228 = vld [vmem:[%s192 + $0x80] sm:$0xff]
      %v229 = vld [vmem:[%s192 + $0x88] sm:$0xff]
      %v230 = vld [vmem:[%s192 + $0x90] sm:$0xff]
      %v231 = vld [vmem:[%s192 + $0x98] sm:$0xff]
      %v232 = vld [vmem:[%s192 + $0xa0] sm:$0xff]
      %v233 = vld [vmem:[%s192 + $0xa8] sm:$0xff]
      %v234 = vld [vmem:[%s192 + $0xb0] sm:$0xff]
      %v235 = vld [vmem:[%s192 + $0xb8] sm:$0xff]
      %v236 = vld [vmem:[%s192 + $0xc0] sm:$0xff]
      %v237 = vld [vmem:[%s192 + $0xc8] sm:$0xff]
      %v238 = vld [vmem:[%s192 + $0xd0] sm:$0xff]
      %v239 = vld [vmem:[%s192 + $0xd8] sm:$0xff]
      %v240 = vld [vmem:[%s192 + $0xe0] sm:$0xff]
      %v241 = vld [vmem:[%s192 + $0xe8] sm:$0xff]
      %v242 = vld [vmem:[%s192 + $0xf0] sm:$0xff]
      %v243 = vld [vmem:[%s192 + $0xf8] sm:$0xff]
      %v244 = vld [vmem:[%s2] sm:$0xff]
      %v245 = vld [vmem:[%s2 + $0x8] sm:$0xff]
      %v246 = vld [vmem:[%s2 + $0x10] sm:$0xff]
      %v247 = vld [vmem:[%s2 + $0x18] sm:$0xff]
      %v248 = vld [vmem:[%s2 + $0x20] sm:$0xff]
      %v249 = vld [vmem:[%s2 + $0x28] sm:$0xff]
      %v250 = vld [vmem:[%s2 + $0x30] sm:$0xff]
      %v251 = vld [vmem:[%s2 + $0x38] sm:$0xff]
      %v253 = vcombine.high %v207, %v207
      %255 = vmatprep.subr.mxu0 0.0
      %256 = vmatpush1.msra.mxu0 %v212
      %257 = vmatprep.subr.mxu0 0.0
      %258 = vmatpush1.msra.mxu0 %v213
      %259 = vmatprep.subr.mxu0 0.0
      %260 = vmatpush1.msra.mxu0 %v214
      %261 = vmatprep.subr.mxu0 0.0
      %262 = vmatpush1.msra.mxu0 %v215
      %263 = vmatprep.subr.mxu0 0.0
      %264 = vmatpush1.msra.mxu0 %v216
      %265 = vmatprep.subr.mxu0 0.0
      %266 = vmatpush1.msra.mxu0 %v217
      %267 = vmatprep.subr.mxu0 0.0
      %268 = vmatpush1.msra.mxu0 %v218
      %269 = vmatprep.subr.mxu0 0.0
      %270 = vmatpush1.msra.mxu0 %v219
      %271 = vmatprep.subr.mxu0 0.0
      %272 = vmatpush1.msra.mxu0 %v220
      %273 = vmatprep.subr.mxu0 0.0
      %274 = vmatpush1.msra.mxu0 %v221
      %275 = vmatprep.subr.mxu0 0.0
      %276 = vmatpush1.msra.mxu0 %v222
      %277 = vmatprep.subr.mxu0 0.0
      %278 = vmatpush1.msra.mxu0 %v223
      %279 = vmatprep.subr.mxu0 0.0
      %280 = vmatpush1.msra.mxu0 %v224
      %281 = vmatprep.subr.mxu0 0.0
      %282 = vmatpush1.msra.mxu0 %v225
      %283 = vmatprep.subr.mxu0 0.0
      %284 = vmatpush1.msra.mxu0 %v226
      %285 = vmatprep.subr.mxu0 0.0
      %286 = vmatpush1.msra.mxu0 %v227
      %287 = vmatprep.subr.mxu0 0.0
      %288 = vmatpush1.msra.mxu0 %v228
      %289 = vmatprep.subr.mxu0 0.0
      %290 = vmatpush1.msra.mxu0 %v229
      %291 = vmatprep.subr.mxu0 0.0
      %292 = vmatpush1.msra.mxu0 %v230
      %293 = vmatprep.subr.mxu0 0.0
      %294 = vmatpush1.msra.mxu0 %v231
      %295 = vmatprep.subr.mxu0 0.0
      %296 = vmatpush1.msra.mxu0 %v232
      %297 = vmatprep.subr.mxu0 0.0
      %298 = vmatpush1.msra.mxu0 %v233
      %299 = vmatprep.subr.mxu0 0.0
      %300 = vmatpush1.msra.mxu0 %v234
      %301 = vmatprep.subr.mxu0 0.0
      %302 = vmatpush1.msra.mxu0 %v235
      %303 = vmatprep.subr.mxu0 0.0
      %304 = vmatpush1.msra.mxu0 %v236
      %305 = vmatprep.subr.mxu0 0.0
      %306 = vmatpush1.msra.mxu0 %v237
      %307 = vmatprep.subr.mxu0 0.0
      %308 = vmatpush1.msra.mxu0 %v238
      %309 = vmatprep.subr.mxu0 0.0
      %310 = vmatpush1.msra.mxu0 %v239
      %311 = vmatprep.subr.mxu0 0.0
      %312 = vmatpush1.msra.mxu0 %v240
      %313 = vmatprep.subr.mxu0 0.0
      %314 = vmatpush1.msra.mxu0 %v241
      %315 = vmatprep.subr.mxu0 0.0
      %316 = vmatpush1.msra.mxu0 %v242
      %317 = vmatprep.subr.mxu0 0.0
      %318 = vmatpush1.msra.mxu0 %v243
      %319 = vmatprep.mubr.f32.mxu0 %v253
      %320 = vmatmul.mubr.f32.gmra.mrb[0].mxu0 %v207
      %v321 = vpop.f32.mrb[0].mxu0
      %v322 = vadd.f32 0.0, %v321
      %v323 = vpop.f32.mrb[0].mxu0
      %324 = vdwg.mxu0
      %326 = vrot.lane.b32.xlu0 %v322, 96
      %v327 = vpop.permute.xlu0 %326
      %vm329 = vcmask 261120
      %v330 = vsel %vm329, %v327, 0.0
      %vm331 = vcmask 523264
      %v332 = vsel %vm331, %v330, 0.0
      %333 = vrot.lane.b32.xlu0 %v322, 32
      %v334 = vpop.permute.xlu0 %333
      %v336 = vsel %vm329, 0.0, %v334
      %v337 = vsel %vm331, %v336, 0.0
      %v339 = vrot.slane %v337, 4
      %vm341 = vcmask 1043456
      %v342 = vsel %vm341, %v332, %v339
      %vm343 = vcmask 785408
      %v345 = vsel %vm343, %v342, 0
      %v348 = vsel %vm343, %v212, 0
      %v351 = vsel %vm343, %v213, 0
      %v354 = vsel %vm343, %v214, 0
      %v357 = vsel %vm343, %v215, 0
      %v360 = vsel %vm343, %v216, 0
      %v363 = vsel %vm343, %v217, 0
      %v366 = vsel %vm343, %v218, 0
      %v369 = vsel %vm343, %v219, 0
      %v372 = vsel %vm343, %v220, 0
      %v375 = vsel %vm343, %v221, 0
      %v378 = vsel %vm343, %v222, 0
      %v381 = vsel %vm343, %v223, 0
      %v384 = vsel %vm343, %v224, 0
      %v387 = vsel %vm343, %v225, 0
      %v390 = vsel %vm343, %v226, 0
      %v393 = vsel %vm343, %v227, 0
      %v396 = vsel %vm343, %v228, 0
      %v399 = vsel %vm343, %v229, 0
      %v402 = vsel %vm343, %v230, 0
      %v405 = vsel %vm343, %v231, 0
      %v408 = vsel %vm343, %v232, 0
      %v411 = vsel %vm343, %v233, 0
      %v414 = vsel %vm343, %v234, 0
      %v417 = vsel %vm343, %v235, 0
      %v420 = vsel %vm343, %v236, 0
      %v423 = vsel %vm343, %v237, 0
      %v426 = vsel %vm343, %v238, 0
      %v429 = vsel %vm343, %v239, 0
      %v432 = vsel %vm343, %v240, 0
      %v435 = vsel %vm343, %v241, 0
      %v438 = vsel %vm343, %v242, 0
      %v441 = vsel %vm343, %v243, 0
      %443 = vmatprep.subr.mxu0 0.0
      %444 = vmatpush1.xpose.msra.mxu0 %v348
      %445 = vmatprep.subr.mxu0 0.0
      %446 = vmatpush1.xpose.msra.mxu0 %v351
      %447 = vmatprep.subr.mxu0 0.0
      %448 = vmatpush1.xpose.msra.mxu0 %v354
      %449 = vmatprep.subr.mxu0 0.0
      %450 = vmatpush1.xpose.msra.mxu0 %v357
      %451 = vmatprep.subr.mxu0 0.0
      %452 = vmatpush1.xpose.msra.mxu0 %v360
      %453 = vmatprep.subr.mxu0 0.0
      %454 = vmatpush1.xpose.msra.mxu0 %v363
      %455 = vmatprep.subr.mxu0 0.0
      %456 = vmatpush1.xpose.msra.mxu0 %v366
      %457 = vmatprep.subr.mxu0 0.0
      %458 = vmatpush1.xpose.msra.mxu0 %v369
      %459 = vmatprep.subr.mxu0 0.0
      %460 = vmatpush1.xpose.msra.mxu0 %v372
      %461 = vmatprep.subr.mxu0 0.0
      %462 = vmatpush1.xpose.msra.mxu0 %v375
      %463 = vmatprep.subr.mxu0 0.0
      %464 = vmatpush1.xpose.msra.mxu0 %v378
      %465 = vmatprep.subr.mxu0 0.0
      %466 = vmatpush1.xpose.msra.mxu0 %v381
      %467 = vmatprep.subr.mxu0 0.0
      %468 = vmatpush1.xpose.msra.mxu0 %v384
      %469 = vmatprep.subr.mxu0 0.0
      %470 = vmatpush1.xpose.msra.mxu0 %v387
      %471 = vmatprep.subr.mxu0 0.0
      %472 = vmatpush1.xpose.msra.mxu0 %v390
      %473 = vmatprep.subr.mxu0 0.0
      %474 = vmatpush1.xpose.msra.mxu0 %v393
      %475 = vmatprep.subr.mxu0 0.0
      %476 = vmatpush1.xpose.msra.mxu0 %v396
      %477 = vmatprep.subr.mxu0 0.0
      %478 = vmatpush1.xpose.msra.mxu0 %v399
      %479 = vmatprep.subr.mxu0 0.0
      %480 = vmatpush1.xpose.msra.mxu0 %v402
      %481 = vmatprep.subr.mxu0 0.0
      %482 = vmatpush1.xpose.msra.mxu0 %v405
      %483 = vmatprep.subr.mxu0 0.0
      %484 = vmatpush1.xpose.msra.mxu0 %v408
      %485 = vmatprep.subr.mxu0 0.0
      %486 = vmatpush1.xpose.msra.mxu0 %v411
      %487 = vmatprep.subr.mxu0 0.0
      %488 = vmatpush1.xpose.msra.mxu0 %v414
      %489 = vmatprep.subr.mxu0 0.0
      %490 = vmatpush1.xpose.msra.mxu0 %v417
      %491 = vmatprep.subr.mxu0 0.0
      %492 = vmatpush1.xpose.msra.mxu0 %v420
      %493 = vmatprep.subr.mxu0 0.0
      %494 = vmatpush1.xpose.msra.mxu0 %v423
      %495 = vmatprep.subr.mxu0 0.0
      %496 = vmatpush1.xpose.msra.mxu0 %v426
      %497 = vmatprep.subr.mxu0 0.0
      %498 = vmatpush1.xpose.msra.mxu0 %v429
      %499 = vmatprep.subr.mxu0 0.0
      %500 = vmatpush1.xpose.msra.mxu0 %v432
      %501 = vmatprep.subr.mxu0 0.0
      %502 = vmatpush1.xpose.msra.mxu0 %v435
      %503 = vmatprep.subr.mxu0 0.0
      %504 = vmatpush1.xpose.msra.mxu0 %v438
      %505 = vmatprep.subr.mxu0 0.0
      %506 = vmatpush1.xpose.msra.mxu0 %v441
      %507 = vmatprep.mubr.f32.mxu0 0.0
      %508 = vmatmul.mubr.f32.gmra.mrb[0].mxu0 %v345
      %v509 = vpop.f32.mrb[0].mxu0
      %v510 = vadd.f32 0.0, %v509
      %v511 = vpop.f32.mrb[0].mxu0
      %v512 = vadd.f32 0.0, %v511
      %513 = vdwg.mxu0
      %v514 = vsel %vm341, %v510, -inf
      %v515 = vsel %vm341, %v512, -inf
      %v516 = vmax.f32 %v514, %v515
      %517 = vmax.xlane.f32.xlu0 %v516
      %v518 = vpop.xlane.xlu0 %517
      %v519 = vsub.f32 %v510, %v518
      %v520 = vsub.f32 %v512, %v518
      %v521 = vmul.f32 %v519, 1.442695
      %v522 = vpow.pop %v521
      %v523 = vmul.f32 %v520, 1.442695
      %v524 = vpow.pop %v523
      %v525 = vsel %vm341, %v522, 0.0
      %v526 = vsel %vm341, %v524, 0.0
      %v527 = vadd.f32 %v525, %v526
      %528 = vadd.xlane.f32.xlu0 %v527
      %v529 = vpop.xlane.xlu0 %528
      %v530 = vrcp.pop %v529
      %v531 = vmul.f32 %v522, %v530
      %v532 = vmul.f32 %v524, %v530
      %vm533 = vcmask 1047556
      %v534 = vsel %vm533, %v510, -inf
      %v535 = vrot.slane %v534, 4
      %v536 = vmax.f32 %v534, %v535
      %v537 = vrot.slane %v536, 2
      %v538 = vmax.f32 %v536, %v537
      %v539 = vrot.slane %v538, 1
      %v540 = vmax.f32 %v538, %v539
      %v541 = vsel %vm533, %v512, -inf
      %v542 = vrot.slane %v541, 4
      %v543 = vmax.f32 %v541, %v542
      %v544 = vrot.slane %v543, 2
      %v545 = vmax.f32 %v543, %v544
      %v546 = vrot.slane %v545, 1
      %v547 = vmax.f32 %v545, %v546
      %v548 = vsub.f32 %v510, %v540
      %v549 = vsub.f32 %v512, %v547
      %v550 = vmul.f32 %v548, 1.442695
      %v551 = vpow.pop %v550
      %v552 = vmul.f32 %v549, 1.442695
      %v553 = vpow.pop %v552
      %v556 = vrot.slane %v551, 4
      %v557 = vrot.slane %v553, 4
      %v560 = vsel %vm341, %v556, 0.0
      %v561 = vrot.slane %v560, 4
      %v562 = vadd.f32 %v560, %v561
      %v563 = vrot.slane %v562, 2
      %v564 = vadd.f32 %v562, %v563
      %v565 = vrot.slane %v564, 1
      %v566 = vadd.f32 %v564, %v565
      %v567 = vsel %vm341, %v557, 0.0
      %v568 = vrot.slane %v567, 4
      %v569 = vadd.f32 %v567, %v568
      %v570 = vrot.slane %v569, 2
      %v571 = vadd.f32 %v569, %v570
      %v572 = vrot.slane %v571, 1
      %v573 = vadd.f32 %v571, %v572
      %v574 = vrcp.pop %v566
      %v575 = vrcp.pop %v573
      %v576 = vmul.f32 %v551, %v574
      %v577 = vmul.f32 %v553, %v575
      %v578 = vsel %vm329, %v322, 0
      %v580 = vsel %vm329, %v327, 0
      %582 = vmatprep.subr.mxu0 0.0
      %583 = vmatpush1.xpose.msra.mxu0 %v580
      %584 = vmatprep.subr.mxu0 0.0
      %585 = vmatpush1.xpose.msra.mxu0 0.0
      %586 = vmatprep.subr.mxu0 0.0
      %587 = vmatpush1.xpose.msra.mxu0 0.0
      %588 = vmatprep.subr.mxu0 0.0
      %589 = vmatpush1.xpose.msra.mxu0 0.0
      %590 = vmatprep.subr.mxu0 0.0
      %591 = vmatpush1.xpose.msra.mxu0 0.0
      %592 = vmatprep.subr.mxu0 0.0
      %593 = vmatpush1.xpose.msra.mxu0 0.0
      %594 = vmatprep.subr.mxu0 0.0
      %595 = vmatpush1.xpose.msra.mxu0 0.0
      %596 = vmatprep.subr.mxu0 0.0
      %597 = vmatpush1.xpose.msra.mxu0 0.0
      %598 = vmatprep.subr.mxu0 0.0
      %599 = vmatpush1.xpose.msra.mxu0 0.0
      %600 = vmatprep.subr.mxu0 0.0
      %601 = vmatpush1.xpose.msra.mxu0 0.0
      %602 = vmatprep.subr.mxu0 0.0
      %603 = vmatpush1.xpose.msra.mxu0 0.0
      %604 = vmatprep.subr.mxu0 0.0
      %605 = vmatpush1.xpose.msra.mxu0 0.0
      %606 = vmatprep.subr.mxu0 0.0
      %607 = vmatpush1.xpose.msra.mxu0 0.0
      %608 = vmatprep.subr.mxu0 0.0
      %609 = vmatpush1.xpose.msra.mxu0 0.0
      %610 = vmatprep.subr.mxu0 0.0
      %611 = vmatpush1.xpose.msra.mxu0 0.0
      %612 = vmatprep.subr.mxu0 0.0
      %613 = vmatpush1.xpose.msra.mxu0 0.0
      %614 = vmatprep.subr.mxu0 0.0
      %615 = vmatpush1.xpose.msra.mxu0 0.0
      %616 = vmatprep.subr.mxu0 0.0
      %617 = vmatpush1.xpose.msra.mxu0 0.0
      %618 = vmatprep.subr.mxu0 0.0
      %619 = vmatpush1.xpose.msra.mxu0 0.0
      %620 = vmatprep.subr.mxu0 0.0
      %621 = vmatpush1.xpose.msra.mxu0 0.0
      %622 = vmatprep.subr.mxu0 0.0
      %623 = vmatpush1.xpose.msra.mxu0 0.0
      %624 = vmatprep.subr.mxu0 0.0
      %625 = vmatpush1.xpose.msra.mxu0 0.0
      %626 = vmatprep.subr.mxu0 0.0
      %627 = vmatpush1.xpose.msra.mxu0 0.0
      %628 = vmatprep.subr.mxu0 0.0
      %629 = vmatpush1.xpose.msra.mxu0 0.0
      %630 = vmatprep.subr.mxu0 0.0
      %631 = vmatpush1.xpose.msra.mxu0 0.0
      %632 = vmatprep.subr.mxu0 0.0
      %633 = vmatpush1.xpose.msra.mxu0 0.0
      %634 = vmatprep.subr.mxu0 0.0
      %635 = vmatpush1.xpose.msra.mxu0 0.0
      %636 = vmatprep.subr.mxu0 0.0
      %637 = vmatpush1.xpose.msra.mxu0 0.0
      %638 = vmatprep.subr.mxu0 0.0
      %639 = vmatpush1.xpose.msra.mxu0 0.0
      %640 = vmatprep.subr.mxu0 0.0
      %641 = vmatpush1.xpose.msra.mxu0 0.0
      %642 = vmatprep.subr.mxu0 0.0
      %643 = vmatpush1.xpose.msra.mxu0 0.0
      %644 = vmatprep.subr.mxu0 0.0
      %645 = vmatpush1.xpose.msra.mxu0 0.0
      %646 = vmatprep.mubr.f32.mxu0 0.0
      %647 = vmatmul.mubr.f32.gmra.mrb[0].mxu0 %v578
      %v648 = vpop.f32.mrb[0].mxu0
      %v649 = vadd.f32 0.0, %v648
      %v650 = vpop.f32.mrb[0].mxu0
      %651 = vdwg.mxu0
      %vm652 = vcmask 27648
      %v653 = vsel %vm652, %v649, -inf
      %v654 = vrot.slane %v653, 4
      %v655 = vmax.f32 %v653, %v654
      %v656 = vrot.slane %v655, 2
      %v657 = vmax.f32 %v655, %v656
      %v658 = vrot.slane %v657, 1
      %v659 = vmax.f32 %v657, %v658
      %v660 = vsub.f32 %v649, %v659
      %v661 = vmul.f32 %v660, 1.442695
      %v662 = vpow.pop %v661
      %v663 = vsel %vm652, %v662, 0.0
      %v664 = vrot.slane %v663, 4
      %v665 = vadd.f32 %v663, %v664
      %v666 = vrot.slane %v665, 2
      %v667 = vadd.f32 %v665, %v666
      %v668 = vrot.slane %v667, 1
      %v669 = vadd.f32 %v667, %v668
      %v670 = vrcp.pop %v669
      %v671 = vmul.f32 %v662, %v670
      %v672 = vand.u32 2147483647, %v671
      %v673 = vsel %vm652, %v672, 0.0
      %v674 = vrot.slane %v673, 4
      %v675 = vadd.f32 %v673, %v674
      %v676 = vrot.slane %v675, 2
      %v677 = vadd.f32 %v675, %v676
      %v678 = vrot.slane %v677, 1
      %v679 = vadd.f32 %v677, %v678
      %vm680 = vcmask 31744
      %v681 = vsel %vm680, %v679, -inf
      %682 = vmax.xlane.f32.xlu0 %v681
      %v683 = vpop.xlane.xlu0 %682
      %684 = vadd.xlane.f32.xlu0 %v673
      %v685 = vpop.xlane.xlu0 %684
      %v686 = vsel %vm341, %v685, -inf
      %v687 = vrot.slane %v686, 4
      %v688 = vmax.f32 %v686, %v687
      %v689 = vrot.slane %v688, 2
      %v690 = vmax.f32 %v688, %v689
      %v691 = vrot.slane %v690, 1
      %v692 = vmax.f32 %v690, %v691
      %693 = vxpose.xlu0.b32.start [1/16] %v671, 128
      %694 = vxpose.xlu0.b32.cont [2/16] 0.0, 128
      %695 = vxpose.xlu0.b32.cont [3/16] 0.0, 128
      %696 = vxpose.xlu0.b32.cont [4/16] 0.0, 128
      %697 = vxpose.xlu0.b32.cont [5/16] 0.0, 128
      %698 = vxpose.xlu0.b32.cont [6/16] 0.0, 128
      %699 = vxpose.xlu0.b32.cont [7/16] 0.0, 128
      %700 = vxpose.xlu0.b32.cont [8/16] 0.0, 128
      %701 = vxpose.xlu0.b32.cont [9/16] 0.0, 128
      %702 = vxpose.xlu0.b32.cont [10/16] 0.0, 128
      %703 = vxpose.xlu0.b32.cont [11/16] 0.0, 128
      %704 = vxpose.xlu0.b32.cont [12/16] 0.0, 128
      %705 = vxpose.xlu0.b32.cont [13/16] 0.0, 128
      %706 = vxpose.xlu0.b32.cont [14/16] 0.0, 128
      %707 = vxpose.xlu0.b32.cont [15/16] 0.0, 128
      %708 = vxpose.xlu0.b32.end [16/16] 0.0, 128
      %v709 = vpop.trf.xlu0
      %v710 = vpop.trf.xlu0
      %v711 = vpop.trf.xlu0
      %v712 = vpop.trf.xlu0
      %v713 = vpop.trf.xlu0
      %v714 = vpop.trf.xlu0
      %v715 = vpop.trf.xlu0
      %v716 = vpop.trf.xlu0
      %v717 = vpop.trf.xlu0
      %v718 = vpop.trf.xlu0
      %v719 = vpop.trf.xlu0
      %v720 = vpop.trf.xlu0
      %v721 = vpop.trf.xlu0
      %v722 = vpop.trf.xlu0
      %v723 = vpop.trf.xlu0
      %v724 = vpop.trf.xlu0
      %v725 = vmul.f32 %v683, %v692
      %v726 = vrcp.pop %v725
      %v727 = vmul.f32 %v709, %v726
      %729 = vset.pattern.permute.xlu0 0
      %730 = vperm.xlu0 %729, %v671
      %v731 = vpop.permute.xlu0 %730
      %v733 = vlaneseq
      %v734 = vshrl.u32 %v733, 7
      %v735 = vsub.s32 0, %v734
      %v736 = vrot.slane %v727, %v735
      %v737 = vmul.f32 %v731, %v736
      %738 = vset.pattern.permute.xlu0 1
      %739 = vperm.xlu0 %738, %v671
      %v740 = vpop.permute.xlu0 %739
      %v742 = vlaneseq
      %v743 = vshrl.u32 %v742, 7
      %v744 = vsub.s32 1, %v743
      %v745 = vrot.slane %v727, %v744
      %v746 = vmul.f32 %v740, %v745
      %v747 = vadd.f32 %v737, %v746
      %748 = vset.pattern.permute.xlu0 2
      %749 = vperm.xlu0 %748, %v671
      %v750 = vpop.permute.xlu0 %749
      %v752 = vlaneseq
      %v753 = vshrl.u32 %v752, 7
      %v754 = vsub.s32 2, %v753
      %v755 = vrot.slane %v727, %v754
      %v756 = vmul.f32 %v750, %v755
      %v757 = vadd.f32 %v747, %v756
      %758 = vset.pattern.permute.xlu0 3
      %759 = vperm.xlu0 %758, %v671
      %v760 = vpop.permute.xlu0 %759
      %v762 = vlaneseq
      %v763 = vshrl.u32 %v762, 7
      %v764 = vsub.s32 3, %v763
      %v765 = vrot.slane %v727, %v764
      %v766 = vmul.f32 %v760, %v765
      %v767 = vadd.f32 %v757, %v766
      %v768 = vsub.f32 %v204, %v767
      %770 = vset.pattern.permute.xlu0 0
      %771 = vperm.xlu0 %770, %v767
      %v772 = vpop.permute.xlu0 %771
      %v774 = vlaneseq
      %v775 = vshrl.u32 %v774, 7
      %v776 = vsub.s32 0, %v775
      %v777 = vrot.slane %v768, %v776
      %v778 = vmul.f32 %v772, %v777
      %779 = vset.pattern.permute.xlu0 1
      %780 = vperm.xlu0 %779, %v767
      %v781 = vpop.permute.xlu0 %780
      %v783 = vlaneseq
      %v784 = vshrl.u32 %v783, 7
      %v785 = vsub.s32 1, %v784
      %v786 = vrot.slane %v768, %v785
      %v787 = vmul.f32 %v781, %v786
      %v788 = vadd.f32 %v778, %v787
      %789 = vset.pattern.permute.xlu0 2
      %790 = vperm.xlu0 %789, %v767
      %v791 = vpop.permute.xlu0 %790
      %v793 = vlaneseq
      %v794 = vshrl.u32 %v793, 7
      %v795 = vsub.s32 2, %v794
      %v796 = vrot.slane %v768, %v795
      %v797 = vmul.f32 %v791, %v796
      %v798 = vadd.f32 %v788, %v797
      %799 = vset.pattern.permute.xlu0 3
      %800 = vperm.xlu0 %799, %v767
      %v801 = vpop.permute.xlu0 %800
      %v803 = vlaneseq
      %v804 = vshrl.u32 %v803, 7
      %v805 = vsub.s32 3, %v804
      %v806 = vrot.slane %v768, %v805
      %v807 = vmul.f32 %v801, %v806
      %v808 = vadd.f32 %v798, %v807
      %v809 = vsub.f32 %v206, %v808
      %v810 = vlaneseq
      %v811 = vshrl.u32 %v810, 7
      %v812 = vsub.s32 0, %v811
      %v813 = vrot.slane %v809, %v812
      %v814 = vmul.f32 %v772, %v813
      %v815 = vlaneseq
      %v816 = vshrl.u32 %v815, 7
      %v817 = vsub.s32 1, %v816
      %v818 = vrot.slane %v809, %v817
      %v819 = vmul.f32 %v781, %v818
      %v820 = vadd.f32 %v814, %v819
      %v821 = vlaneseq
      %v822 = vshrl.u32 %v821, 7
      %v823 = vsub.s32 2, %v822
      %v824 = vrot.slane %v809, %v823
      %v825 = vmul.f32 %v791, %v824
      %v826 = vadd.f32 %v820, %v825
      %v827 = vlaneseq
      %v828 = vshrl.u32 %v827, 7
      %v829 = vsub.s32 3, %v828
      %v830 = vrot.slane %v809, %v829
      %v831 = vmul.f32 %v801, %v830
      %v832 = vadd.f32 %v826, %v831
      %v833 = vsub.f32 %v205, %v832
      %835 = vset.pattern.permute.xlu0 0
      %836 = vperm.xlu0 %835, %v727
      %v837 = vpop.permute.xlu0 %836
      %v839 = vlaneseq
      %v840 = vshrl.u32 %v839, 7
      %v841 = vsub.s32 0, %v840
      %v842 = vrot.slane %v833, %v841
      %v843 = vmul.f32 %v837, %v842
      %844 = vset.pattern.permute.xlu0 1
      %845 = vperm.xlu0 %844, %v727
      %v846 = vpop.permute.xlu0 %845
      %v848 = vlaneseq
      %v849 = vshrl.u32 %v848, 7
      %v850 = vsub.s32 1, %v849
      %v851 = vrot.slane %v833, %v850
      %v852 = vmul.f32 %v846, %v851
      %v853 = vadd.f32 %v843, %v852
      %854 = vset.pattern.permute.xlu0 2
      %855 = vperm.xlu0 %854, %v727
      %v856 = vpop.permute.xlu0 %855
      %v858 = vlaneseq
      %v859 = vshrl.u32 %v858, 7
      %v860 = vsub.s32 2, %v859
      %v861 = vrot.slane %v833, %v860
      %v862 = vmul.f32 %v856, %v861
      %v863 = vadd.f32 %v853, %v862
      %864 = vset.pattern.permute.xlu0 3
      %865 = vperm.xlu0 %864, %v727
      %v866 = vpop.permute.xlu0 %865
      %v868 = vlaneseq
      %v869 = vshrl.u32 %v868, 7
      %v870 = vsub.s32 3, %v869
      %v871 = vrot.slane %v833, %v870
      %v872 = vmul.f32 %v866, %v871
      %v873 = vadd.f32 %v863, %v872
      %v874 = vmul.f32 %v873, 0.25
      %v875 = vlaneseq
      %v876 = vshrl.u32 %v875, 7
      %v877 = vsub.s32 0, %v876
      %v878 = vrot.slane %v874, %v877
      %v879 = vmul.f32 %v731, %v878
      %v880 = vlaneseq
      %v881 = vshrl.u32 %v880, 7
      %v882 = vsub.s32 1, %v881
      %v883 = vrot.slane %v874, %v882
      %v884 = vmul.f32 %v740, %v883
      %v885 = vadd.f32 %v879, %v884
      %v886 = vlaneseq
      %v887 = vshrl.u32 %v886, 7
      %v888 = vsub.s32 2, %v887
      %v889 = vrot.slane %v874, %v888
      %v890 = vmul.f32 %v750, %v889
      %v891 = vadd.f32 %v885, %v890
      %v892 = vlaneseq
      %v893 = vshrl.u32 %v892, 7
      %v894 = vsub.s32 3, %v893
      %v895 = vrot.slane %v874, %v894
      %v896 = vmul.f32 %v760, %v895
      %v897 = vadd.f32 %v891, %v896
      %v898 = vsub.f32 %v204, %v897
      %900 = vset.pattern.permute.xlu0 0
      %901 = vperm.xlu0 %900, %v897
      %v902 = vpop.permute.xlu0 %901
      %v904 = vlaneseq
      %v905 = vshrl.u32 %v904, 7
      %v906 = vsub.s32 0, %v905
      %v907 = vrot.slane %v898, %v906
      %v908 = vmul.f32 %v902, %v907
      %909 = vset.pattern.permute.xlu0 1
      %910 = vperm.xlu0 %909, %v897
      %v911 = vpop.permute.xlu0 %910
      %v913 = vlaneseq
      %v914 = vshrl.u32 %v913, 7
      %v915 = vsub.s32 1, %v914
      %v916 = vrot.slane %v898, %v915
      %v917 = vmul.f32 %v911, %v916
      %v918 = vadd.f32 %v908, %v917
      %919 = vset.pattern.permute.xlu0 2
      %920 = vperm.xlu0 %919, %v897
      %v921 = vpop.permute.xlu0 %920
      %v923 = vlaneseq
      %v924 = vshrl.u32 %v923, 7
      %v925 = vsub.s32 2, %v924
      %v926 = vrot.slane %v898, %v925
      %v927 = vmul.f32 %v921, %v926
      %v928 = vadd.f32 %v918, %v927
      %929 = vset.pattern.permute.xlu0 3
      %930 = vperm.xlu0 %929, %v897
      %v931 = vpop.permute.xlu0 %930
      %v933 = vlaneseq
      %v934 = vshrl.u32 %v933, 7
      %v935 = vsub.s32 3, %v934
      %v936 = vrot.slane %v898, %v935
      %v937 = vmul.f32 %v931, %v936
      %v938 = vadd.f32 %v928, %v937
      %v939 = vsub.f32 %v206, %v938
      %v940 = vlaneseq
      %v941 = vshrl.u32 %v940, 7
      %v942 = vsub.s32 0, %v941
      %v943 = vrot.slane %v939, %v942
      %v944 = vmul.f32 %v902, %v943
      %v945 = vlaneseq
      %v946 = vshrl.u32 %v945, 7
      %v947 = vsub.s32 1, %v946
      %v948 = vrot.slane %v939, %v947
      %v949 = vmul.f32 %v911, %v948
      %v950 = vadd.f32 %v944, %v949
      %v951 = vlaneseq
      %v952 = vshrl.u32 %v951, 7
      %v953 = vsub.s32 2, %v952
      %v954 = vrot.slane %v939, %v953
      %v955 = vmul.f32 %v921, %v954
      %v956 = vadd.f32 %v950, %v955
      %v957 = vlaneseq
      %v958 = vshrl.u32 %v957, 7
      %v959 = vsub.s32 3, %v958
      %v960 = vrot.slane %v939, %v959
      %v961 = vmul.f32 %v931, %v960
      %v962 = vadd.f32 %v956, %v961
      %v963 = vsub.f32 %v205, %v962
      %965 = vset.pattern.permute.xlu0 0
      %966 = vperm.xlu0 %965, %v874
      %v967 = vpop.permute.xlu0 %966
      %v969 = vlaneseq
      %v970 = vshrl.u32 %v969, 7
      %v971 = vsub.s32 0, %v970
      %v972 = vrot.slane %v963, %v971
      %v973 = vmul.f32 %v967, %v972
      %974 = vset.pattern.permute.xlu0 1
      %975 = vperm.xlu0 %974, %v874
      %v976 = vpop.permute.xlu0 %975
      %v978 = vlaneseq
      %v979 = vshrl.u32 %v978, 7
      %v980 = vsub.s32 1, %v979
      %v981 = vrot.slane %v963, %v980
      %v982 = vmul.f32 %v976, %v981
      %v983 = vadd.f32 %v973, %v982
      %984 = vset.pattern.permute.xlu0 2
      %985 = vperm.xlu0 %984, %v874
      %v986 = vpop.permute.xlu0 %985
      %v988 = vlaneseq
      %v989 = vshrl.u32 %v988, 7
      %v990 = vsub.s32 2, %v989
      %v991 = vrot.slane %v963, %v990
      %v992 = vmul.f32 %v986, %v991
      %v993 = vadd.f32 %v983, %v992
      %994 = vset.pattern.permute.xlu0 3
      %995 = vperm.xlu0 %994, %v874
      %v996 = vpop.permute.xlu0 %995
      %v998 = vlaneseq
      %v999 = vshrl.u32 %v998, 7
      %v1000 = vsub.s32 3, %v999
      %v1001 = vrot.slane %v963, %v1000
      %v1002 = vmul.f32 %v996, %v1001
      %v1003 = vadd.f32 %v993, %v1002
      %v1004 = vmul.f32 %v1003, 0.25
      %v1005 = vlaneseq
      %v1006 = vshrl.u32 %v1005, 7
      %v1007 = vsub.s32 0, %v1006
      %v1008 = vrot.slane %v1004, %v1007
      %v1009 = vmul.f32 %v731, %v1008
      %v1010 = vlaneseq
      %v1011 = vshrl.u32 %v1010, 7
      %v1012 = vsub.s32 1, %v1011
      %v1013 = vrot.slane %v1004, %v1012
      %v1014 = vmul.f32 %v740, %v1013
      %v1015 = vadd.f32 %v1009, %v1014
      %v1016 = vlaneseq
      %v1017 = vshrl.u32 %v1016, 7
      %v1018 = vsub.s32 2, %v1017
      %v1019 = vrot.slane %v1004, %v1018
      %v1020 = vmul.f32 %v750, %v1019
      %v1021 = vadd.f32 %v1015, %v1020
      %v1022 = vlaneseq
      %v1023 = vshrl.u32 %v1022, 7
      %v1024 = vsub.s32 3, %v1023
      %v1025 = vrot.slane %v1004, %v1024
      %v1026 = vmul.f32 %v760, %v1025
      %v1027 = vadd.f32 %v1021, %v1026
      %v1028 = vsub.f32 %v204, %v1027
      %1030 = vset.pattern.permute.xlu0 0
      %1031 = vperm.xlu0 %1030, %v1027
      %v1032 = vpop.permute.xlu0 %1031
      %v1034 = vlaneseq
      %v1035 = vshrl.u32 %v1034, 7
      %v1036 = vsub.s32 0, %v1035
      %v1037 = vrot.slane %v1028, %v1036
      %v1038 = vmul.f32 %v1032, %v1037
      %1039 = vset.pattern.permute.xlu0 1
      %1040 = vperm.xlu0 %1039, %v1027
      %v1041 = vpop.permute.xlu0 %1040
      %v1043 = vlaneseq
      %v1044 = vshrl.u32 %v1043, 7
      %v1045 = vsub.s32 1, %v1044
      %v1046 = vrot.slane %v1028, %v1045
      %v1047 = vmul.f32 %v1041, %v1046
      %v1048 = vadd.f32 %v1038, %v1047
      %1049 = vset.pattern.permute.xlu0 2
      %1050 = vperm.xlu0 %1049, %v1027
      %v1051 = vpop.permute.xlu0 %1050
      %v1053 = vlaneseq
      %v1054 = vshrl.u32 %v1053, 7
      %v1055 = vsub.s32 2, %v1054
      %v1056 = vrot.slane %v1028, %v1055
      %v1057 = vmul.f32 %v1051, %v1056
      %v1058 = vadd.f32 %v1048, %v1057
      %1059 = vset.pattern.permute.xlu0 3
      %1060 = vperm.xlu0 %1059, %v1027
      %v1061 = vpop.permute.xlu0 %1060
      %v1063 = vlaneseq
      %v1064 = vshrl.u32 %v1063, 7
      %v1065 = vsub.s32 3, %v1064
      %v1066 = vrot.slane %v1028, %v1065
      %v1067 = vmul.f32 %v1061, %v1066
      %v1068 = vadd.f32 %v1058, %v1067
      %v1069 = vsub.f32 %v206, %v1068
      %v1070 = vlaneseq
      %v1071 = vshrl.u32 %v1070, 7
      %v1072 = vsub.s32 0, %v1071
      %v1073 = vrot.slane %v1069, %v1072
      %v1074 = vmul.f32 %v1032, %v1073
      %v1075 = vlaneseq
      %v1076 = vshrl.u32 %v1075, 7
      %v1077 = vsub.s32 1, %v1076
      %v1078 = vrot.slane %v1069, %v1077
      %v1079 = vmul.f32 %v1041, %v1078
      %v1080 = vadd.f32 %v1074, %v1079
      %v1081 = vlaneseq
      %v1082 = vshrl.u32 %v1081, 7
      %v1083 = vsub.s32 2, %v1082
      %v1084 = vrot.slane %v1069, %v1083
      %v1085 = vmul.f32 %v1051, %v1084
      %v1086 = vadd.f32 %v1080, %v1085
      %v1087 = vlaneseq
      %v1088 = vshrl.u32 %v1087, 7
      %v1089 = vsub.s32 3, %v1088
      %v1090 = vrot.slane %v1069, %v1089
      %v1091 = vmul.f32 %v1061, %v1090
      %v1092 = vadd.f32 %v1086, %v1091
      %v1093 = vsub.f32 %v205, %v1092
      %1095 = vset.pattern.permute.xlu0 0
      %1096 = vperm.xlu0 %1095, %v1004
      %v1097 = vpop.permute.xlu0 %1096
      %v1099 = vlaneseq
      %v1100 = vshrl.u32 %v1099, 7
      %v1101 = vsub.s32 0, %v1100
      %v1102 = vrot.slane %v1093, %v1101
      %v1103 = vmul.f32 %v1097, %v1102
      %1104 = vset.pattern.permute.xlu0 1
      %1105 = vperm.xlu0 %1104, %v1004
      %v1106 = vpop.permute.xlu0 %1105
      %v1108 = vlaneseq
      %v1109 = vshrl.u32 %v1108, 7
      %v1110 = vsub.s32 1, %v1109
      %v1111 = vrot.slane %v1093, %v1110
      %v1112 = vmul.f32 %v1106, %v1111
      %v1113 = vadd.f32 %v1103, %v1112
      %1114 = vset.pattern.permute.xlu0 2
      %1115 = vperm.xlu0 %1114, %v1004
      %v1116 = vpop.permute.xlu0 %1115
      %v1118 = vlaneseq
      %v1119 = vshrl.u32 %v1118, 7
      %v1120 = vsub.s32 2, %v1119
      %v1121 = vrot.slane %v1093, %v1120
      %v1122 = vmul.f32 %v1116, %v1121
      %v1123 = vadd.f32 %v1113, %v1122
      %1124 = vset.pattern.permute.xlu0 3
      %1125 = vperm.xlu0 %1124, %v1004
      %v1126 = vpop.permute.xlu0 %1125
      %v1128 = vlaneseq
      %v1129 = vshrl.u32 %v1128, 7
      %v1130 = vsub.s32 3, %v1129
      %v1131 = vrot.slane %v1093, %v1130
      %v1132 = vmul.f32 %v1126, %v1131
      %v1133 = vadd.f32 %v1123, %v1132
      %v1134 = vmul.f32 %v1133, 0.25
      %v1135 = vlaneseq
      %v1136 = vshrl.u32 %v1135, 7
      %v1137 = vsub.s32 0, %v1136
      %v1138 = vrot.slane %v1134, %v1137
      %v1139 = vmul.f32 %v731, %v1138
      %v1140 = vlaneseq
      %v1141 = vshrl.u32 %v1140, 7
      %v1142 = vsub.s32 1, %v1141
      %v1143 = vrot.slane %v1134, %v1142
      %v1144 = vmul.f32 %v740, %v1143
      %v1145 = vadd.f32 %v1139, %v1144
      %v1146 = vlaneseq
      %v1147 = vshrl.u32 %v1146, 7
      %v1148 = vsub.s32 2, %v1147
      %v1149 = vrot.slane %v1134, %v1148
      %v1150 = vmul.f32 %v750, %v1149
      %v1151 = vadd.f32 %v1145, %v1150
      %v1152 = vlaneseq
      %v1153 = vshrl.u32 %v1152, 7
      %v1154 = vsub.s32 3, %v1153
      %v1155 = vrot.slane %v1134, %v1154
      %v1156 = vmul.f32 %v760, %v1155
      %v1157 = vadd.f32 %v1151, %v1156
      %v1158 = vsub.f32 %v204, %v1157
      %1160 = vset.pattern.permute.xlu0 0
      %1161 = vperm.xlu0 %1160, %v1157
      %v1162 = vpop.permute.xlu0 %1161
      %v1164 = vlaneseq
      %v1165 = vshrl.u32 %v1164, 7
      %v1166 = vsub.s32 0, %v1165
      %v1167 = vrot.slane %v1158, %v1166
      %v1168 = vmul.f32 %v1162, %v1167
      %1169 = vset.pattern.permute.xlu0 1
      %1170 = vperm.xlu0 %1169, %v1157
      %v1171 = vpop.permute.xlu0 %1170
      %v1173 = vlaneseq
      %v1174 = vshrl.u32 %v1173, 7
      %v1175 = vsub.s32 1, %v1174
      %v1176 = vrot.slane %v1158, %v1175
      %v1177 = vmul.f32 %v1171, %v1176
      %v1178 = vadd.f32 %v1168, %v1177
      %1179 = vset.pattern.permute.xlu0 2
      %1180 = vperm.xlu0 %1179, %v1157
      %v1181 = vpop.permute.xlu0 %1180
      %v1183 = vlaneseq
      %v1184 = vshrl.u32 %v1183, 7
      %v1185 = vsub.s32 2, %v1184
      %v1186 = vrot.slane %v1158, %v1185
      %v1187 = vmul.f32 %v1181, %v1186
      %v1188 = vadd.f32 %v1178, %v1187
      %1189 = vset.pattern.permute.xlu0 3
      %1190 = vperm.xlu0 %1189, %v1157
      %v1191 = vpop.permute.xlu0 %1190
      %v1193 = vlaneseq
      %v1194 = vshrl.u32 %v1193, 7
      %v1195 = vsub.s32 3, %v1194
      %v1196 = vrot.slane %v1158, %v1195
      %v1197 = vmul.f32 %v1191, %v1196
      %v1198 = vadd.f32 %v1188, %v1197
      %v1199 = vsub.f32 %v206, %v1198
      %v1200 = vlaneseq
      %v1201 = vshrl.u32 %v1200, 7
      %v1202 = vsub.s32 0, %v1201
      %v1203 = vrot.slane %v1199, %v1202
      %v1204 = vmul.f32 %v1162, %v1203
      %v1205 = vlaneseq
      %v1206 = vshrl.u32 %v1205, 7
      %v1207 = vsub.s32 1, %v1206
      %v1208 = vrot.slane %v1199, %v1207
      %v1209 = vmul.f32 %v1171, %v1208
      %v1210 = vadd.f32 %v1204, %v1209
      %v1211 = vlaneseq
      %v1212 = vshrl.u32 %v1211, 7
      %v1213 = vsub.s32 2, %v1212
      %v1214 = vrot.slane %v1199, %v1213
      %v1215 = vmul.f32 %v1181, %v1214
      %v1216 = vadd.f32 %v1210, %v1215
      %v1217 = vlaneseq
      %v1218 = vshrl.u32 %v1217, 7
      %v1219 = vsub.s32 3, %v1218
      %v1220 = vrot.slane %v1199, %v1219
      %v1221 = vmul.f32 %v1191, %v1220
      %v1222 = vadd.f32 %v1216, %v1221
      %v1223 = vsub.f32 %v205, %v1222
      %1225 = vset.pattern.permute.xlu0 0
      %1226 = vperm.xlu0 %1225, %v1134
      %v1227 = vpop.permute.xlu0 %1226
      %v1229 = vlaneseq
      %v1230 = vshrl.u32 %v1229, 7
      %v1231 = vsub.s32 0, %v1230
      %v1232 = vrot.slane %v1223, %v1231
      %v1233 = vmul.f32 %v1227, %v1232
      %1234 = vset.pattern.permute.xlu0 1
      %1235 = vperm.xlu0 %1234, %v1134
      %v1236 = vpop.permute.xlu0 %1235
      %v1238 = vlaneseq
      %v1239 = vshrl.u32 %v1238, 7
      %v1240 = vsub.s32 1, %v1239
      %v1241 = vrot.slane %v1223, %v1240
      %v1242 = vmul.f32 %v1236, %v1241
      %v1243 = vadd.f32 %v1233, %v1242
      %1244 = vset.pattern.permute.xlu0 2
      %1245 = vperm.xlu0 %1244, %v1134
      %v1246 = vpop.permute.xlu0 %1245
      %v1248 = vlaneseq
      %v1249 = vshrl.u32 %v1248, 7
      %v1250 = vsub.s32 2, %v1249
      %v1251 = vrot.slane %v1223, %v1250
      %v1252 = vmul.f32 %v1246, %v1251
      %v1253 = vadd.f32 %v1243, %v1252
      %1254 = vset.pattern.permute.xlu0 3
      %1255 = vperm.xlu0 %1254, %v1134
      %v1256 = vpop.permute.xlu0 %1255
      %v1258 = vlaneseq
      %v1259 = vshrl.u32 %v1258, 7
      %v1260 = vsub.s32 3, %v1259
      %v1261 = vrot.slane %v1223, %v1260
      %v1262 = vmul.f32 %v1256, %v1261
      %v1263 = vadd.f32 %v1253, %v1262
      %v1264 = vmul.f32 %v1263, 0.25
      %v1265 = vlaneseq
      %v1266 = vshrl.u32 %v1265, 7
      %v1267 = vsub.s32 0, %v1266
      %v1268 = vrot.slane %v1264, %v1267
      %v1269 = vmul.f32 %v731, %v1268
      %v1270 = vlaneseq
      %v1271 = vshrl.u32 %v1270, 7
      %v1272 = vsub.s32 1, %v1271
      %v1273 = vrot.slane %v1264, %v1272
      %v1274 = vmul.f32 %v740, %v1273
      %v1275 = vadd.f32 %v1269, %v1274
      %v1276 = vlaneseq
      %v1277 = vshrl.u32 %v1276, 7
      %v1278 = vsub.s32 2, %v1277
      %v1279 = vrot.slane %v1264, %v1278
      %v1280 = vmul.f32 %v750, %v1279
      %v1281 = vadd.f32 %v1275, %v1280
      %v1282 = vlaneseq
      %v1283 = vshrl.u32 %v1282, 7
      %v1284 = vsub.s32 3, %v1283
      %v1285 = vrot.slane %v1264, %v1284
      %v1286 = vmul.f32 %v760, %v1285
      %v1287 = vadd.f32 %v1281, %v1286
      %v1288 = vsub.f32 %v204, %v1287
      %1290 = vset.pattern.permute.xlu0 0
      %1291 = vperm.xlu0 %1290, %v1287
      %v1292 = vpop.permute.xlu0 %1291
      %v1294 = vlaneseq
      %v1295 = vshrl.u32 %v1294, 7
      %v1296 = vsub.s32 0, %v1295
      %v1297 = vrot.slane %v1288, %v1296
      %v1298 = vmul.f32 %v1292, %v1297
      %1299 = vset.pattern.permute.xlu0 1
      %1300 = vperm.xlu0 %1299, %v1287
      %v1301 = vpop.permute.xlu0 %1300
      %v1303 = vlaneseq
      %v1304 = vshrl.u32 %v1303, 7
      %v1305 = vsub.s32 1, %v1304
      %v1306 = vrot.slane %v1288, %v1305
      %v1307 = vmul.f32 %v1301, %v1306
      %v1308 = vadd.f32 %v1298, %v1307
      %1309 = vset.pattern.permute.xlu0 2
      %1310 = vperm.xlu0 %1309, %v1287
      %v1311 = vpop.permute.xlu0 %1310
      %v1313 = vlaneseq
      %v1314 = vshrl.u32 %v1313, 7
      %v1315 = vsub.s32 2, %v1314
      %v1316 = vrot.slane %v1288, %v1315
      %v1317 = vmul.f32 %v1311, %v1316
      %v1318 = vadd.f32 %v1308, %v1317
      %1319 = vset.pattern.permute.xlu0 3
      %1320 = vperm.xlu0 %1319, %v1287
      %v1321 = vpop.permute.xlu0 %1320
      %v1323 = vlaneseq
      %v1324 = vshrl.u32 %v1323, 7
      %v1325 = vsub.s32 3, %v1324
      %v1326 = vrot.slane %v1288, %v1325
      %v1327 = vmul.f32 %v1321, %v1326
      %v1328 = vadd.f32 %v1318, %v1327
      %v1329 = vsub.f32 %v206, %v1328
      %v1330 = vlaneseq
      %v1331 = vshrl.u32 %v1330, 7
      %v1332 = vsub.s32 0, %v1331
      %v1333 = vrot.slane %v1329, %v1332
      %v1334 = vmul.f32 %v1292, %v1333
      %v1335 = vlaneseq
      %v1336 = vshrl.u32 %v1335, 7
      %v1337 = vsub.s32 1, %v1336
      %v1338 = vrot.slane %v1329, %v1337
      %v1339 = vmul.f32 %v1301, %v1338
      %v1340 = vadd.f32 %v1334, %v1339
      %v1341 = vlaneseq
      %v1342 = vshrl.u32 %v1341, 7
      %v1343 = vsub.s32 2, %v1342
      %v1344 = vrot.slane %v1329, %v1343
      %v1345 = vmul.f32 %v1311, %v1344
      %v1346 = vadd.f32 %v1340, %v1345
      %v1347 = vlaneseq
      %v1348 = vshrl.u32 %v1347, 7
      %v1349 = vsub.s32 3, %v1348
      %v1350 = vrot.slane %v1329, %v1349
      %v1351 = vmul.f32 %v1321, %v1350
      %v1352 = vadd.f32 %v1346, %v1351
      %v1353 = vsub.f32 %v205, %v1352
      %1355 = vset.pattern.permute.xlu0 0
      %1356 = vperm.xlu0 %1355, %v1264
      %v1357 = vpop.permute.xlu0 %1356
      %v1359 = vlaneseq
      %v1360 = vshrl.u32 %v1359, 7
      %v1361 = vsub.s32 0, %v1360
      %v1362 = vrot.slane %v1353, %v1361
      %v1363 = vmul.f32 %v1357, %v1362
      %1364 = vset.pattern.permute.xlu0 1
      %1365 = vperm.xlu0 %1364, %v1264
      %v1366 = vpop.permute.xlu0 %1365
      %v1368 = vlaneseq
      %v1369 = vshrl.u32 %v1368, 7
      %v1370 = vsub.s32 1, %v1369
      %v1371 = vrot.slane %v1353, %v1370
      %v1372 = vmul.f32 %v1366, %v1371
      %v1373 = vadd.f32 %v1363, %v1372
      %1374 = vset.pattern.permute.xlu0 2
      %1375 = vperm.xlu0 %1374, %v1264
      %v1376 = vpop.permute.xlu0 %1375
      %v1378 = vlaneseq
      %v1379 = vshrl.u32 %v1378, 7
      %v1380 = vsub.s32 2, %v1379
      %v1381 = vrot.slane %v1353, %v1380
      %v1382 = vmul.f32 %v1376, %v1381
      %v1383 = vadd.f32 %v1373, %v1382
      %1384 = vset.pattern.permute.xlu0 3
      %1385 = vperm.xlu0 %1384, %v1264
      %v1386 = vpop.permute.xlu0 %1385
      %v1388 = vlaneseq
      %v1389 = vshrl.u32 %v1388, 7
      %v1390 = vsub.s32 3, %v1389
      %v1391 = vrot.slane %v1353, %v1390
      %v1392 = vmul.f32 %v1386, %v1391
      %v1393 = vadd.f32 %v1383, %v1392
      %v1394 = vmul.f32 %v1393, 0.25
      %v1395 = vlaneseq
      %v1396 = vshrl.u32 %v1395, 7
      %v1397 = vsub.s32 0, %v1396
      %v1398 = vrot.slane %v1394, %v1397
      %v1399 = vmul.f32 %v731, %v1398
      %v1400 = vlaneseq
      %v1401 = vshrl.u32 %v1400, 7
      %v1402 = vsub.s32 1, %v1401
      %v1403 = vrot.slane %v1394, %v1402
      %v1404 = vmul.f32 %v740, %v1403
      %v1405 = vadd.f32 %v1399, %v1404
      %v1406 = vlaneseq
      %v1407 = vshrl.u32 %v1406, 7
      %v1408 = vsub.s32 2, %v1407
      %v1409 = vrot.slane %v1394, %v1408
      %v1410 = vmul.f32 %v750, %v1409
      %v1411 = vadd.f32 %v1405, %v1410
      %v1412 = vlaneseq
      %v1413 = vshrl.u32 %v1412, 7
      %v1414 = vsub.s32 3, %v1413
      %v1415 = vrot.slane %v1394, %v1414
      %v1416 = vmul.f32 %v760, %v1415
      %v1417 = vadd.f32 %v1411, %v1416
      %v1418 = vsub.f32 %v204, %v1417
      %1420 = vset.pattern.permute.xlu0 0
      %1421 = vperm.xlu0 %1420, %v1417
      %v1422 = vpop.permute.xlu0 %1421
      %v1424 = vlaneseq
      %v1425 = vshrl.u32 %v1424, 7
      %v1426 = vsub.s32 0, %v1425
      %v1427 = vrot.slane %v1418, %v1426
      %v1428 = vmul.f32 %v1422, %v1427
      %1429 = vset.pattern.permute.xlu0 1
      %1430 = vperm.xlu0 %1429, %v1417
      %v1431 = vpop.permute.xlu0 %1430
      %v1433 = vlaneseq
      %v1434 = vshrl.u32 %v1433, 7
      %v1435 = vsub.s32 1, %v1434
      %v1436 = vrot.slane %v1418, %v1435
      %v1437 = vmul.f32 %v1431, %v1436
      %v1438 = vadd.f32 %v1428, %v1437
      %1439 = vset.pattern.permute.xlu0 2
      %1440 = vperm.xlu0 %1439, %v1417
      %v1441 = vpop.permute.xlu0 %1440
      %v1443 = vlaneseq
      %v1444 = vshrl.u32 %v1443, 7
      %v1445 = vsub.s32 2, %v1444
      %v1446 = vrot.slane %v1418, %v1445
      %v1447 = vmul.f32 %v1441, %v1446
      %v1448 = vadd.f32 %v1438, %v1447
      %1449 = vset.pattern.permute.xlu0 3
      %1450 = vperm.xlu0 %1449, %v1417
      %v1451 = vpop.permute.xlu0 %1450
      %v1453 = vlaneseq
      %v1454 = vshrl.u32 %v1453, 7
      %v1455 = vsub.s32 3, %v1454
      %v1456 = vrot.slane %v1418, %v1455
      %v1457 = vmul.f32 %v1451, %v1456
      %v1458 = vadd.f32 %v1448, %v1457
      %v1459 = vsub.f32 %v206, %v1458
      %v1460 = vlaneseq
      %v1461 = vshrl.u32 %v1460, 7
      %v1462 = vsub.s32 0, %v1461
      %v1463 = vrot.slane %v1459, %v1462
      %v1464 = vmul.f32 %v1422, %v1463
      %v1465 = vlaneseq
      %v1466 = vshrl.u32 %v1465, 7
      %v1467 = vsub.s32 1, %v1466
      %v1468 = vrot.slane %v1459, %v1467
      %v1469 = vmul.f32 %v1431, %v1468
      %v1470 = vadd.f32 %v1464, %v1469
      %v1471 = vlaneseq
      %v1472 = vshrl.u32 %v1471, 7
      %v1473 = vsub.s32 2, %v1472
      %v1474 = vrot.slane %v1459, %v1473
      %v1475 = vmul.f32 %v1441, %v1474
      %v1476 = vadd.f32 %v1470, %v1475
      %v1477 = vlaneseq
      %v1478 = vshrl.u32 %v1477, 7
      %v1479 = vsub.s32 3, %v1478
      %v1480 = vrot.slane %v1459, %v1479
      %v1481 = vmul.f32 %v1451, %v1480
      %v1482 = vadd.f32 %v1476, %v1481
      %v1483 = vsub.f32 %v205, %v1482
      %1485 = vset.pattern.permute.xlu0 0
      %1486 = vperm.xlu0 %1485, %v1394
      %v1487 = vpop.permute.xlu0 %1486
      %v1489 = vlaneseq
      %v1490 = vshrl.u32 %v1489, 7
      %v1491 = vsub.s32 0, %v1490
      %v1492 = vrot.slane %v1483, %v1491
      %v1493 = vmul.f32 %v1487, %v1492
      %1494 = vset.pattern.permute.xlu0 1
      %1495 = vperm.xlu0 %1494, %v1394
      %v1496 = vpop.permute.xlu0 %1495
      %v1498 = vlaneseq
      %v1499 = vshrl.u32 %v1498, 7
      %v1500 = vsub.s32 1, %v1499
      %v1501 = vrot.slane %v1483, %v1500
      %v1502 = vmul.f32 %v1496, %v1501
      %v1503 = vadd.f32 %v1493, %v1502
      %1504 = vset.pattern.permute.xlu0 2
      %1505 = vperm.xlu0 %1504, %v1394
      %v1506 = vpop.permute.xlu0 %1505
      %v1508 = vlaneseq
      %v1509 = vshrl.u32 %v1508, 7
      %v1510 = vsub.s32 2, %v1509
      %v1511 = vrot.slane %v1483, %v1510
      %v1512 = vmul.f32 %v1506, %v1511
      %v1513 = vadd.f32 %v1503, %v1512
      %1514 = vset.pattern.permute.xlu0 3
      %1515 = vperm.xlu0 %1514, %v1394
      %v1516 = vpop.permute.xlu0 %1515
      %v1518 = vlaneseq
      %v1519 = vshrl.u32 %v1518, 7
      %v1520 = vsub.s32 3, %v1519
      %v1521 = vrot.slane %v1483, %v1520
      %v1522 = vmul.f32 %v1516, %v1521
      %v1523 = vadd.f32 %v1513, %v1522
      %v1524 = vmul.f32 %v1523, 0.25
      %v1527 = vrot.slane %v576, 4
      %v1528 = vrot.slane %v577, 4
      %1531 = vmatprep.subr.mxu0 0.0
      %1532 = vmatpush1.msra.mxu0 %v212
      %1533 = vmatprep.subr.mxu0 0.0
      %1534 = vmatpush1.msra.mxu0 %v213
      %1535 = vmatprep.subr.mxu0 0.0
      %1536 = vmatpush1.msra.mxu0 %v214
      %1537 = vmatprep.subr.mxu0 0.0
      %1538 = vmatpush1.msra.mxu0 %v215
      %1539 = vmatprep.subr.mxu0 0.0
      %1540 = vmatpush1.msra.mxu0 %v216
      %1541 = vmatprep.subr.mxu0 0.0
      %1542 = vmatpush1.msra.mxu0 %v217
      %1543 = vmatprep.subr.mxu0 0.0
      %1544 = vmatpush1.msra.mxu0 %v218
      %1545 = vmatprep.subr.mxu0 0.0
      %1546 = vmatpush1.msra.mxu0 %v219
      %1547 = vmatprep.subr.mxu0 0.0
      %1548 = vmatpush1.msra.mxu0 %v220
      %1549 = vmatprep.subr.mxu0 0.0
      %1550 = vmatpush1.msra.mxu0 %v221
      %1551 = vmatprep.subr.mxu0 0.0
      %1552 = vmatpush1.msra.mxu0 %v222
      %1553 = vmatprep.subr.mxu0 0.0
      %1554 = vmatpush1.msra.mxu0 %v223
      %1555 = vmatprep.subr.mxu0 0.0
      %1556 = vmatpush1.msra.mxu0 %v224
      %1557 = vmatprep.subr.mxu0 0.0
      %1558 = vmatpush1.msra.mxu0 %v225
      %1559 = vmatprep.subr.mxu0 0.0
      %1560 = vmatpush1.msra.mxu0 %v226
      %1561 = vmatprep.subr.mxu0 0.0
      %1562 = vmatpush1.msra.mxu0 %v227
      %1563 = vmatprep.subr.mxu0 0.0
      %1564 = vmatpush1.msra.mxu0 %v228
      %1565 = vmatprep.subr.mxu0 0.0
      %1566 = vmatpush1.msra.mxu0 %v229
      %1567 = vmatprep.subr.mxu0 0.0
      %1568 = vmatpush1.msra.mxu0 %v230
      %1569 = vmatprep.subr.mxu0 0.0
      %1570 = vmatpush1.msra.mxu0 %v231
      %1571 = vmatprep.subr.mxu0 0.0
      %1572 = vmatpush1.msra.mxu0 %v232
      %1573 = vmatprep.subr.mxu0 0.0
      %1574 = vmatpush1.msra.mxu0 %v233
      %1575 = vmatprep.subr.mxu0 0.0
      %1576 = vmatpush1.msra.mxu0 %v234
      %1577 = vmatprep.subr.mxu0 0.0
      %1578 = vmatpush1.msra.mxu0 %v235
      %1579 = vmatprep.subr.mxu0 0.0
      %1580 = vmatpush1.msra.mxu0 %v236
      %1581 = vmatprep.subr.mxu0 0.0
      %1582 = vmatpush1.msra.mxu0 %v237
      %1583 = vmatprep.subr.mxu0 0.0
      %1584 = vmatpush1.msra.mxu0 %v238
      %1585 = vmatprep.subr.mxu0 0.0
      %1586 = vmatpush1.msra.mxu0 %v239
      %1587 = vmatprep.subr.mxu0 0.0
      %1588 = vmatpush1.msra.mxu0 %v240
      %1589 = vmatprep.subr.mxu0 0.0
      %1590 = vmatpush1.msra.mxu0 %v241
      %1591 = vmatprep.subr.mxu0 0.0
      %1592 = vmatpush1.msra.mxu0 %v242
      %1593 = vmatprep.subr.mxu0 0.0
      %1594 = vmatpush1.msra.mxu0 %v243
      %1595 = vmatprep.mubr.f32.mxu0 %v245
      %1596 = vmatmul.mubr.f32.gmra.mrb[0].mxu0 %v244
      %v1597 = vpop.f32.mrb[0].mxu0
      %v1598 = vadd.f32 0.0, %v1597
      %v1599 = vpop.f32.mrb[0].mxu0
      %1600 = vmatprep.mubr.f32.mxu0 %v247
      %1601 = vmatmul.mubr.f32.gmra.mrb[0].mxu0 %v246
      %v1602 = vpop.f32.mrb[0].mxu0
      %v1603 = vadd.f32 0.0, %v1602
      %v1604 = vpop.f32.mrb[0].mxu0
      %1605 = vmatprep.mubr.f32.mxu0 %v249
      %1606 = vmatmul.mubr.f32.gmra.mrb[0].mxu0 %v248
      %v1607 = vpop.f32.mrb[0].mxu0
      %v1608 = vadd.f32 0.0, %v1607
      %v1609 = vpop.f32.mrb[0].mxu0
      %1610 = vmatprep.mubr.f32.mxu0 %v251
      %1611 = vmatmul.mubr.f32.gmra.mrb[0].mxu0 %v250
      %v1612 = vpop.f32.mrb[0].mxu0
      %v1613 = vadd.f32 0.0, %v1612
      %v1614 = vpop.f32.mrb[0].mxu0
      %1615 = vmatprep.mubr.f32.mxu0 %v1528
      %1616 = vmatmul.mubr.f32.gmra.mrb[0].mxu0 %v1527
      %v1617 = vpop.f32.mrb[0].mxu0
      %v1618 = vadd.f32 0.0, %v1617
      %v1619 = vpop.f32.mrb[0].mxu0
      %1620 = vdwg.mxu0
      %1622 = vset.pattern.permute.xlu0 0
      %1623 = vperm.xlu0 %1622, %v1524
      %v1624 = vpop.permute.xlu0 %1623
      %v1626 = vlaneseq
      %v1627 = vshrl.u32 %v1626, 7
      %v1628 = vsub.s32 0, %v1627
      %v1629 = vrot.slane %v1618, %v1628
      %v1630 = vmul.f32 %v1624, %v1629
      %1631 = vset.pattern.permute.xlu0 1
      %1632 = vperm.xlu0 %1631, %v1524
      %v1633 = vpop.permute.xlu0 %1632
      %v1635 = vlaneseq
      %v1636 = vshrl.u32 %v1635, 7
      %v1637 = vsub.s32 1, %v1636
      %v1638 = vrot.slane %v1618, %v1637
      %v1639 = vmul.f32 %v1633, %v1638
      %v1640 = vadd.f32 %v1630, %v1639
      %1641 = vset.pattern.permute.xlu0 2
      %1642 = vperm.xlu0 %1641, %v1524
      %v1643 = vpop.permute.xlu0 %1642
      %v1645 = vlaneseq
      %v1646 = vshrl.u32 %v1645, 7
      %v1647 = vsub.s32 2, %v1646
      %v1648 = vrot.slane %v1618, %v1647
      %v1649 = vmul.f32 %v1643, %v1648
      %v1650 = vadd.f32 %v1640, %v1649
      %1651 = vset.pattern.permute.xlu0 3
      %1652 = vperm.xlu0 %1651, %v1524
      %v1653 = vpop.permute.xlu0 %1652
      %v1655 = vlaneseq
      %v1656 = vshrl.u32 %v1655, 7
      %v1657 = vsub.s32 3, %v1656
      %v1658 = vrot.slane %v1618, %v1657
      %v1659 = vmul.f32 %v1653, %v1658
      %v1660 = vadd.f32 %v1650, %v1659
      %1661 = vmatprep.subr.mxu0 %v532
      %1662 = vmatpush1.xpose.msra.mxu0 %v531
      %1663 = vmatprep.subr.mxu0 0.0
      %1664 = vmatpush1.xpose.msra.mxu0 0.0
      %1665 = vmatprep.subr.mxu0 0.0
      %1666 = vmatpush1.xpose.msra.mxu0 0.0
      %1667 = vmatprep.subr.mxu0 0.0
      %1668 = vmatpush1.xpose.msra.mxu0 0.0
      %1669 = vmatprep.subr.mxu0 0.0
      %1670 = vmatpush1.xpose.msra.mxu0 0.0
      %1671 = vmatprep.subr.mxu0 0.0
      %1672 = vmatpush1.xpose.msra.mxu0 0.0
      %1673 = vmatprep.subr.mxu0 0.0
      %1674 = vmatpush1.xpose.msra.mxu0 0.0
      %1675 = vmatprep.subr.mxu0 0.0
      %1676 = vmatpush1.xpose.msra.mxu0 0.0
      %1677 = vmatprep.subr.mxu0 0.0
      %1678 = vmatpush1.xpose.msra.mxu0 0.0
      %1679 = vmatprep.subr.mxu0 0.0
      %1680 = vmatpush1.xpose.msra.mxu0 0.0
      %1681 = vmatprep.subr.mxu0 0.0
      %1682 = vmatpush1.xpose.msra.mxu0 0.0
      %1683 = vmatprep.subr.mxu0 0.0
      %1684 = vmatpush1.xpose.msra.mxu0 0.0
      %1685 = vmatprep.subr.mxu0 0.0
      %1686 = vmatpush1.xpose.msra.mxu0 0.0
      %1687 = vmatprep.subr.mxu0 0.0
      %1688 = vmatpush1.xpose.msra.mxu0 0.0
      %1689 = vmatprep.subr.mxu0 0.0
      %1690 = vmatpush1.xpose.msra.mxu0 0.0
      %1691 = vmatprep.subr.mxu0 0.0
      %1692 = vmatpush1.xpose.msra.mxu0 0.0
      %1693 = vmatprep.subr.mxu0 0.0
      %1694 = vmatpush1.xpose.msra.mxu0 0.0
      %1695 = vmatprep.subr.mxu0 0.0
      %1696 = vmatpush1.xpose.msra.mxu0 0.0
      %1697 = vmatprep.subr.mxu0 0.0
      %1698 = vmatpush1.xpose.msra.mxu0 0.0
      %1699 = vmatprep.subr.mxu0 0.0
      %1700 = vmatpush1.xpose.msra.mxu0 0.0
      %1701 = vmatprep.subr.mxu0 0.0
      %1702 = vmatpush1.xpose.msra.mxu0 0.0
      %1703 = vmatprep.subr.mxu0 0.0
      %1704 = vmatpush1.xpose.msra.mxu0 0.0
      %1705 = vmatprep.subr.mxu0 0.0
      %1706 = vmatpush1.xpose.msra.mxu0 0.0
      %1707 = vmatprep.subr.mxu0 0.0
      %1708 = vmatpush1.xpose.msra.mxu0 0.0
      %1709 = vmatprep.subr.mxu0 0.0
      %1710 = vmatpush1.xpose.msra.mxu0 0.0
      %1711 = vmatprep.subr.mxu0 0.0
      %1712 = vmatpush1.xpose.msra.mxu0 0.0
      %1713 = vmatprep.subr.mxu0 0.0
      %1714 = vmatpush1.xpose.msra.mxu0 0.0
      %1715 = vmatprep.subr.mxu0 0.0
      %1716 = vmatpush1.xpose.msra.mxu0 0.0
      %1717 = vmatprep.subr.mxu0 0.0
      %1718 = vmatpush1.xpose.msra.mxu0 0.0
      %1719 = vmatprep.subr.mxu0 0.0
      %1720 = vmatpush1.xpose.msra.mxu0 0.0
      %1721 = vmatprep.subr.mxu0 0.0
      %1722 = vmatpush1.xpose.msra.mxu0 0.0
      %1723 = vmatprep.subr.mxu0 0.0
      %1724 = vmatpush1.xpose.msra.mxu0 0.0
      %1725 = vmatprep.mubr.f32.mxu0 %v245
      %1726 = vmatmul.mubr.f32.gmra.mrb[0].mxu0 %v244
      %v1727 = vpop.f32.mrb[0].mxu0
      %v1728 = vadd.f32 0.0, %v1727
      %v1729 = vpop.f32.mrb[0].mxu0
      %1730 = vmatprep.mubr.f32.mxu0 %v247
      %1731 = vmatmul.mubr.f32.gmra.mrb[0].mxu0 %v246
      %v1732 = vpop.f32.mrb[0].mxu0
      %v1733 = vadd.f32 0.0, %v1732
      %v1734 = vpop.f32.mrb[0].mxu0
      %1735 = vmatprep.mubr.f32.mxu0 %v249
      %1736 = vmatmul.mubr.f32.gmra.mrb[0].mxu0 %v248
      %v1737 = vpop.f32.mrb[0].mxu0
      %v1738 = vadd.f32 0.0, %v1737
      %v1739 = vpop.f32.mrb[0].mxu0
      %1740 = vmatprep.mubr.f32.mxu0 %v251
      %1741 = vmatmul.mubr.f32.gmra.mrb[0].mxu0 %v250
      %v1742 = vpop.f32.mrb[0].mxu0
      %v1743 = vadd.f32 0.0, %v1742
      %v1744 = vpop.f32.mrb[0].mxu0
      %1745 = vdwg.mxu0
      %1747 = vset.pattern.permute.xlu0 0
      %1748 = vperm.xlu0 %1747, %v1728
      %v1749 = vpop.permute.xlu0 %1748
      %1752 = vset.pattern.permute.xlu0 0
      %1753 = vperm.xlu0 %1752, %v1733
      %v1754 = vpop.permute.xlu0 %1753
      %1757 = vset.pattern.permute.xlu0 0
      %1758 = vperm.xlu0 %1757, %v1738
      %v1759 = vpop.permute.xlu0 %1758
      %1762 = vset.pattern.permute.xlu0 0
      %1763 = vperm.xlu0 %1762, %v1743
      %v1764 = vpop.permute.xlu0 %1763
      %v1766 = vlaneseq
      %v1767 = vshrl.u32 %v1766, 7
      %v1768 = vsub.s32 0, %v1767
      %v1769 = vrot.slane %v1660, %v1768
      %v1770 = vmul.f32 %v1749, %v1769
      %v1771 = vmul.f32 %v1754, %v1769
      %v1772 = vmul.f32 %v1759, %v1769
      %v1773 = vmul.f32 %v1764, %v1769
      %1774 = vset.pattern.permute.xlu0 1
      %1775 = vperm.xlu0 %1774, %v1728
      %v1776 = vpop.permute.xlu0 %1775
      %1778 = vset.pattern.permute.xlu0 1
      %1779 = vperm.xlu0 %1778, %v1733
      %v1780 = vpop.permute.xlu0 %1779
      %1782 = vset.pattern.permute.xlu0 1
      %1783 = vperm.xlu0 %1782, %v1738
      %v1784 = vpop.permute.xlu0 %1783
      %1786 = vset.pattern.permute.xlu0 1
      %1787 = vperm.xlu0 %1786, %v1743
      %v1788 = vpop.permute.xlu0 %1787
      %v1790 = vlaneseq
      %v1791 = vshrl.u32 %v1790, 7
      %v1792 = vsub.s32 1, %v1791
      %v1793 = vrot.slane %v1660, %v1792
      %v1794 = vmul.f32 %v1776, %v1793
      %v1795 = vmul.f32 %v1780, %v1793
      %v1796 = vmul.f32 %v1784, %v1793
      %v1797 = vmul.f32 %v1788, %v1793
      %v1798 = vadd.f32 %v1770, %v1794
      %v1799 = vadd.f32 %v1771, %v1795
      %v1800 = vadd.f32 %v1772, %v1796
      %v1801 = vadd.f32 %v1773, %v1797
      %1802 = vset.pattern.permute.xlu0 2
      %1803 = vperm.xlu0 %1802, %v1728
      %v1804 = vpop.permute.xlu0 %1803
      %1806 = vset.pattern.permute.xlu0 2
      %1807 = vperm.xlu0 %1806, %v1733
      %v1808 = vpop.permute.xlu0 %1807
      %1810 = vset.pattern.permute.xlu0 2
      %1811 = vperm.xlu0 %1810, %v1738
      %v1812 = vpop.permute.xlu0 %1811
      %1814 = vset.pattern.permute.xlu0 2
      %1815 = vperm.xlu0 %1814, %v1743
      %v1816 = vpop.permute.xlu0 %1815
      %v1818 = vlaneseq
      %v1819 = vshrl.u32 %v1818, 7
      %v1820 = vsub.s32 2, %v1819
      %v1821 = vrot.slane %v1660, %v1820
      %v1822 = vmul.f32 %v1804, %v1821
      %v1823 = vmul.f32 %v1808, %v1821
      %v1824 = vmul.f32 %v1812, %v1821
      %v1825 = vmul.f32 %v1816, %v1821
      %v1826 = vadd.f32 %v1798, %v1822
      %v1827 = vadd.f32 %v1799, %v1823
      %v1828 = vadd.f32 %v1800, %v1824
      %v1829 = vadd.f32 %v1801, %v1825
      %1830 = vset.pattern.permute.xlu0 3
      %1831 = vperm.xlu0 %1830, %v1728
      %v1832 = vpop.permute.xlu0 %1831
      %1834 = vset.pattern.permute.xlu0 3
      %1835 = vperm.xlu0 %1834, %v1733
      %v1836 = vpop.permute.xlu0 %1835
      %1838 = vset.pattern.permute.xlu0 3
      %1839 = vperm.xlu0 %1838, %v1738
      %v1840 = vpop.permute.xlu0 %1839
      %1842 = vset.pattern.permute.xlu0 3
      %1843 = vperm.xlu0 %1842, %v1743
      %v1844 = vpop.permute.xlu0 %1843
      %v1846 = vlaneseq
      %v1847 = vshrl.u32 %v1846, 7
      %v1848 = vsub.s32 3, %v1847
      %v1849 = vrot.slane %v1660, %v1848
      %v1850 = vmul.f32 %v1832, %v1849
      %v1851 = vmul.f32 %v1836, %v1849
      %v1852 = vmul.f32 %v1840, %v1849
      %v1853 = vmul.f32 %v1844, %v1849
      %v1854 = vadd.f32 %v1826, %v1850
      %v1855 = vadd.f32 %v1827, %v1851
      %v1856 = vadd.f32 %v1828, %v1852
      %v1857 = vadd.f32 %v1829, %v1853
      %1862 = vrot.lane.b32.xlu0 %v1854, 64
      %v1863 = vpop.permute.xlu0 %1862
      %1864 = vrot.lane.b32.xlu0 %v1855, 64
      %v1865 = vpop.permute.xlu0 %1864
      %1866 = vrot.lane.b32.xlu0 %v1856, 64
      %v1867 = vpop.permute.xlu0 %1866
      %1868 = vrot.lane.b32.xlu0 %v1857, 64
      %v1869 = vpop.permute.xlu0 %1868
      %v1874 = vadd.f32 %v208, %v1863
      %v1875 = vadd.f32 %v209, %v1865
      %v1876 = vadd.f32 %v210, %v1867
      %v1877 = vadd.f32 %v211, %v1869
      %1882 = vrot.lane.b32.xlu0 %v1598, 64
      %v1883 = vpop.permute.xlu0 %1882
      %1884 = vrot.lane.b32.xlu0 %v1603, 64
      %v1885 = vpop.permute.xlu0 %1884
      %1886 = vrot.lane.b32.xlu0 %v1608, 64
      %v1887 = vpop.permute.xlu0 %1886
      %1888 = vrot.lane.b32.xlu0 %v1613, 64
      %v1889 = vpop.permute.xlu0 %1888
      %v1894 = vadd.f32 %v1874, %v1883
      %v1895 = vadd.f32 %v1875, %v1885
      %v1896 = vadd.f32 %v1876, %v1887
      %v1897 = vadd.f32 %v1877, %v1889
      %s1898 = scalar_lea.vmem %s192, 256
      %v1899 = vld [vmem:[%s1898] sm:$0xff]
      %v1900 = vld [vmem:[%s1898 + $0x8] sm:$0xff]
      %v1901 = vld [vmem:[%s1898 + $0x10] sm:$0xff]
      %v1902 = vld [vmem:[%s1898 + $0x18] sm:$0xff]
      %v1903 = vld [vmem:[%s1898 + $0x20] sm:$0xff]
      %v1904 = vld [vmem:[%s1898 + $0x28] sm:$0xff]
      %v1905 = vld [vmem:[%s1898 + $0x30] sm:$0xff]
      %v1906 = vld [vmem:[%s1898 + $0x38] sm:$0xff]
      %v1907 = vld [vmem:[%s1898 + $0x40] sm:$0xff]
      %v1908 = vld [vmem:[%s1898 + $0x48] sm:$0xff]
      %v1909 = vld [vmem:[%s1898 + $0x50] sm:$0xff]
      %v1910 = vld [vmem:[%s1898 + $0x58] sm:$0xff]
      %v1911 = vld [vmem:[%s1898 + $0x60] sm:$0xff]
      %v1912 = vld [vmem:[%s1898 + $0x68] sm:$0xff]
      %v1913 = vld [vmem:[%s1898 + $0x70] sm:$0xff]
      %v1914 = vld [vmem:[%s1898 + $0x78] sm:$0xff]
      %v1915 = vld [vmem:[%s1898 + $0x80] sm:$0xff]
      %v1916 = vld [vmem:[%s1898 + $0x88] sm:$0xff]
      %v1917 = vld [vmem:[%s1898 + $0x90] sm:$0xff]
      %v1918 = vld [vmem:[%s1898 + $0x98] sm:$0xff]
      %v1919 = vld [vmem:[%s1898 + $0xa0] sm:$0xff]
      %v1920 = vld [vmem:[%s1898 + $0xa8] sm:$0xff]
      %v1921 = vld [vmem:[%s1898 + $0xb0] sm:$0xff]
      %v1922 = vld [vmem:[%s1898 + $0xb8] sm:$0xff]
      %v1923 = vld [vmem:[%s1898 + $0xc0] sm:$0xff]
      %v1924 = vld [vmem:[%s1898 + $0xc8] sm:$0xff]
      %v1925 = vld [vmem:[%s1898 + $0xd0] sm:$0xff]
      %v1926 = vld [vmem:[%s1898 + $0xd8] sm:$0xff]
      %v1927 = vld [vmem:[%s1898 + $0xe0] sm:$0xff]
      %v1928 = vld [vmem:[%s1898 + $0xe8] sm:$0xff]
      %v1929 = vld [vmem:[%s1898 + $0xf0] sm:$0xff]
      %v1930 = vld [vmem:[%s1898 + $0xf8] sm:$0xff]
      %s1931 = scalar_lea.vmem %s2, 64
      %v1932 = vld [vmem:[%s1931] sm:$0xff]
      %v1933 = vld [vmem:[%s1931 + $0x8] sm:$0xff]
      %v1934 = vld [vmem:[%s1931 + $0x10] sm:$0xff]
      %v1935 = vld [vmem:[%s1931 + $0x18] sm:$0xff]
      %v1936 = vld [vmem:[%s1931 + $0x20] sm:$0xff]
      %v1937 = vld [vmem:[%s1931 + $0x28] sm:$0xff]
      %v1938 = vld [vmem:[%s1931 + $0x30] sm:$0xff]
      %v1939 = vld [vmem:[%s1931 + $0x38] sm:$0xff]
      %1940 = vmatprep.subr.mxu0 0.0
      %1941 = vmatpush1.msra.mxu0 %v1899
      %1942 = vmatprep.subr.mxu0 0.0
      %1943 = vmatpush1.msra.mxu0 %v1900
      %1944 = vmatprep.subr.mxu0 0.0
      %1945 = vmatpush1.msra.mxu0 %v1901
      %1946 = vmatprep.subr.mxu0 0.0
      %1947 = vmatpush1.msra.mxu0 %v1902
      %1948 = vmatprep.subr.mxu0 0.0
      %1949 = vmatpush1.msra.mxu0 %v1903
      %1950 = vmatprep.subr.mxu0 0.0
      %1951 = vmatpush1.msra.mxu0 %v1904
      %1952 = vmatprep.subr.mxu0 0.0
      %1953 = vmatpush1.msra.mxu0 %v1905
      %1954 = vmatprep.subr.mxu0 0.0
      %1955 = vmatpush1.msra.mxu0 %v1906
      %1956 = vmatprep.subr.mxu0 0.0
      %1957 = vmatpush1.msra.mxu0 %v1907
      %1958 = vmatprep.subr.mxu0 0.0
      %1959 = vmatpush1.msra.mxu0 %v1908
      %1960 = vmatprep.subr.mxu0 0.0
      %1961 = vmatpush1.msra.mxu0 %v1909
      %1962 = vmatprep.subr.mxu0 0.0
      %1963 = vmatpush1.msra.mxu0 %v1910
      %1964 = vmatprep.subr.mxu0 0.0
      %1965 = vmatpush1.msra.mxu0 %v1911
      %1966 = vmatprep.subr.mxu0 0.0
      %1967 = vmatpush1.msra.mxu0 %v1912
      %1968 = vmatprep.subr.mxu0 0.0
      %1969 = vmatpush1.msra.mxu0 %v1913
      %1970 = vmatprep.subr.mxu0 0.0
      %1971 = vmatpush1.msra.mxu0 %v1914
      %1972 = vmatprep.subr.mxu0 0.0
      %1973 = vmatpush1.msra.mxu0 %v1915
      %1974 = vmatprep.subr.mxu0 0.0
      %1975 = vmatpush1.msra.mxu0 %v1916
      %1976 = vmatprep.subr.mxu0 0.0
      %1977 = vmatpush1.msra.mxu0 %v1917
      %1978 = vmatprep.subr.mxu0 0.0
      %1979 = vmatpush1.msra.mxu0 %v1918
      %1980 = vmatprep.subr.mxu0 0.0
      %1981 = vmatpush1.msra.mxu0 %v1919
      %1982 = vmatprep.subr.mxu0 0.0
      %1983 = vmatpush1.msra.mxu0 %v1920
      %1984 = vmatprep.subr.mxu0 0.0
      %1985 = vmatpush1.msra.mxu0 %v1921
      %1986 = vmatprep.subr.mxu0 0.0
      %1987 = vmatpush1.msra.mxu0 %v1922
      %1988 = vmatprep.subr.mxu0 0.0
      %1989 = vmatpush1.msra.mxu0 %v1923
      %1990 = vmatprep.subr.mxu0 0.0
      %1991 = vmatpush1.msra.mxu0 %v1924
      %1992 = vmatprep.subr.mxu0 0.0
      %1993 = vmatpush1.msra.mxu0 %v1925
      %1994 = vmatprep.subr.mxu0 0.0
      %1995 = vmatpush1.msra.mxu0 %v1926
      %1996 = vmatprep.subr.mxu0 0.0
      %1997 = vmatpush1.msra.mxu0 %v1927
      %1998 = vmatprep.subr.mxu0 0.0
      %1999 = vmatpush1.msra.mxu0 %v1928
      %2000 = vmatprep.subr.mxu0 0.0
      %2001 = vmatpush1.msra.mxu0 %v1929
      %2002 = vmatprep.subr.mxu0 0.0
      %2003 = vmatpush1.msra.mxu0 %v1930
      %2004 = vmatprep.mubr.f32.mxu0 %v253
      %2005 = vmatmul.mubr.f32.gmra.mrb[0].mxu0 %v207
      %v2006 = vpop.f32.mrb[0].mxu0
      %v2007 = vadd.f32 0.0, %v2006
      %v2008 = vpop.f32.mrb[0].mxu0
      %2009 = vdwg.mxu0
      %2011 = vrot.lane.b32.xlu0 %v2007, 96
      %v2012 = vpop.permute.xlu0 %2011
      %v2014 = vsel %vm329, %v2012, 0.0
      %v2015 = vsel %vm331, %v2014, 0.0
      %2016 = vrot.lane.b32.xlu0 %v2007, 32
      %v2017 = vpop.permute.xlu0 %2016
      %v2019 = vsel %vm329, 0.0, %v2017
      %v2020 = vsel %vm331, %v2019, 0.0
      %v2022 = vrot.slane %v2020, 4
      %v2024 = vsel %vm341, %v2015, %v2022
      %v2026 = vsel %vm343, %v2024, 0
      %v2029 = vsel %vm343, %v1899, 0
      %v2032 = vsel %vm343, %v1900, 0
      %v2035 = vsel %vm343, %v1901, 0
      %v2038 = vsel %vm343, %v1902, 0
      %v2041 = vsel %vm343, %v1903, 0
      %v2044 = vsel %vm343, %v1904, 0
      %v2047 = vsel %vm343, %v1905, 0
      %v2050 = vsel %vm343, %v1906, 0
      %v2053 = vsel %vm343, %v1907, 0
      %v2056 = vsel %vm343, %v1908, 0
      %v2059 = vsel %vm343, %v1909, 0
      %v2062 = vsel %vm343, %v1910, 0
      %v2065 = vsel %vm343, %v1911, 0
      %v2068 = vsel %vm343, %v1912, 0
      %v2071 = vsel %vm343, %v1913, 0
      %v2074 = vsel %vm343, %v1914, 0
      %v2077 = vsel %vm343, %v1915, 0
      %v2080 = vsel %vm343, %v1916, 0
      %v2083 = vsel %vm343, %v1917, 0
      %v2086 = vsel %vm343, %v1918, 0
      %v2089 = vsel %vm343, %v1919, 0
      %v2092 = vsel %vm343, %v1920, 0
      %v2095 = vsel %vm343, %v1921, 0
      %v2098 = vsel %vm343, %v1922, 0
      %v2101 = vsel %vm343, %v1923, 0
      %v2104 = vsel %vm343, %v1924, 0
      %v2107 = vsel %vm343, %v1925, 0
      %v2110 = vsel %vm343, %v1926, 0
      %v2113 = vsel %vm343, %v1927, 0
      %v2116 = vsel %vm343, %v1928, 0
      %v2119 = vsel %vm343, %v1929, 0
      %v2122 = vsel %vm343, %v1930, 0
      %2124 = vmatprep.subr.mxu0 0.0
      %2125 = vmatpush1.xpose.msra.mxu0 %v2029
      %2126 = vmatprep.subr.mxu0 0.0
      %2127 = vmatpush1.xpose.msra.mxu0 %v2032
      %2128 = vmatprep.subr.mxu0 0.0
      %2129 = vmatpush1.xpose.msra.mxu0 %v2035
      %2130 = vmatprep.subr.mxu0 0.0
      %2131 = vmatpush1.xpose.msra.mxu0 %v2038
      %2132 = vmatprep.subr.mxu0 0.0
      %2133 = vmatpush1.xpose.msra.mxu0 %v2041
      %2134 = vmatprep.subr.mxu0 0.0
      %2135 = vmatpush1.xpose.msra.mxu0 %v2044
      %2136 = vmatprep.subr.mxu0 0.0
      %2137 = vmatpush1.xpose.msra.mxu0 %v2047
      %2138 = vmatprep.subr.mxu0 0.0
      %2139 = vmatpush1.xpose.msra.mxu0 %v2050
      %2140 = vmatprep.subr.mxu0 0.0
      %2141 = vmatpush1.xpose.msra.mxu0 %v2053
      %2142 = vmatprep.subr.mxu0 0.0
      %2143 = vmatpush1.xpose.msra.mxu0 %v2056
      %2144 = vmatprep.subr.mxu0 0.0
      %2145 = vmatpush1.xpose.msra.mxu0 %v2059
      %2146 = vmatprep.subr.mxu0 0.0
      %2147 = vmatpush1.xpose.msra.mxu0 %v2062
      %2148 = vmatprep.subr.mxu0 0.0
      %2149 = vmatpush1.xpose.msra.mxu0 %v2065
      %2150 = vmatprep.subr.mxu0 0.0
      %2151 = vmatpush1.xpose.msra.mxu0 %v2068
      %2152 = vmatprep.subr.mxu0 0.0
      %2153 = vmatpush1.xpose.msra.mxu0 %v2071
      %2154 = vmatprep.subr.mxu0 0.0
      %2155 = vmatpush1.xpose.msra.mxu0 %v2074
      %2156 = vmatprep.subr.mxu0 0.0
      %2157 = vmatpush1.xpose.msra.mxu0 %v2077
      %2158 = vmatprep.subr.mxu0 0.0
      %2159 = vmatpush1.xpose.msra.mxu0 %v2080
      %2160 = vmatprep.subr.mxu0 0.0
      %2161 = vmatpush1.xpose.msra.mxu0 %v2083
      %2162 = vmatprep.subr.mxu0 0.0
      %2163 = vmatpush1.xpose.msra.mxu0 %v2086
      %2164 = vmatprep.subr.mxu0 0.0
      %2165 = vmatpush1.xpose.msra.mxu0 %v2089
      %2166 = vmatprep.subr.mxu0 0.0
      %2167 = vmatpush1.xpose.msra.mxu0 %v2092
      %2168 = vmatprep.subr.mxu0 0.0
      %2169 = vmatpush1.xpose.msra.mxu0 %v2095
      %2170 = vmatprep.subr.mxu0 0.0
      %2171 = vmatpush1.xpose.msra.mxu0 %v2098
      %2172 = vmatprep.subr.mxu0 0.0
      %2173 = vmatpush1.xpose.msra.mxu0 %v2101
      %2174 = vmatprep.subr.mxu0 0.0
      %2175 = vmatpush1.xpose.msra.mxu0 %v2104
      %2176 = vmatprep.subr.mxu0 0.0
      %2177 = vmatpush1.xpose.msra.mxu0 %v2107
      %2178 = vmatprep.subr.mxu0 0.0
      %2179 = vmatpush1.xpose.msra.mxu0 %v2110
      %2180 = vmatprep.subr.mxu0 0.0
      %2181 = vmatpush1.xpose.msra.mxu0 %v2113
      %2182 = vmatprep.subr.mxu0 0.0
      %2183 = vmatpush1.xpose.msra.mxu0 %v2116
      %2184 = vmatprep.subr.mxu0 0.0
      %2185 = vmatpush1.xpose.msra.mxu0 %v2119
      %2186 = vmatprep.subr.mxu0 0.0
      %2187 = vmatpush1.xpose.msra.mxu0 %v2122
      %2188 = vmatprep.mubr.f32.mxu0 0.0
      %2189 = vmatmul.mubr.f32.gmra.mrb[0].mxu0 %v2026
      %v2190 = vpop.f32.mrb[0].mxu0
      %v2191 = vadd.f32 0.0, %v2190
      %v2192 = vpop.f32.mrb[0].mxu0
      %v2193 = vadd.f32 0.0, %v2192
      %2194 = vdwg.mxu0
      %v2195 = vsel %vm341, %v2191, -inf
      %v2196 = vsel %vm341, %v2193, -inf
      %v2197 = vmax.f32 %v2195, %v2196
      %2198 = vmax.xlane.f32.xlu0 %v2197
      %v2199 = vpop.xlane.xlu0 %2198
      %v2200 = vsub.f32 %v2191, %v2199
      %v2201 = vsub.f32 %v2193, %v2199
      %v2202 = vmul.f32 %v2200, 1.442695
      %v2203 = vpow.pop %v2202
      %v2204 = vmul.f32 %v2201, 1.442695
      %v2205 = vpow.pop %v2204
      %v2206 = vsel %vm341, %v2203, 0.0
      %v2207 = vsel %vm341, %v2205, 0.0
      %v2208 = vadd.f32 %v2206, %v2207
      %2209 = vadd.xlane.f32.xlu0 %v2208
      %v2210 = vpop.xlane.xlu0 %2209
      %v2211 = vrcp.pop %v2210
      %v2212 = vmul.f32 %v2203, %v2211
      %v2213 = vmul.f32 %v2205, %v2211
      %v2214 = vsel %vm533, %v2191, -inf
      %v2215 = vrot.slane %v2214, 4
      %v2216 = vmax.f32 %v2214, %v2215
      %v2217 = vrot.slane %v2216, 2
      %v2218 = vmax.f32 %v2216, %v2217
      %v2219 = vrot.slane %v2218, 1
      %v2220 = vmax.f32 %v2218, %v2219
      %v2221 = vsel %vm533, %v2193, -inf
      %v2222 = vrot.slane %v2221, 4
      %v2223 = vmax.f32 %v2221, %v2222
      %v2224 = vrot.slane %v2223, 2
      %v2225 = vmax.f32 %v2223, %v2224
      %v2226 = vrot.slane %v2225, 1
      %v2227 = vmax.f32 %v2225, %v2226
      %v2228 = vsub.f32 %v2191, %v2220
      %v2229 = vsub.f32 %v2193, %v2227
      %v2230 = vmul.f32 %v2228, 1.442695
      %v2231 = vpow.pop %v2230
      %v2232 = vmul.f32 %v2229, 1.442695
      %v2233 = vpow.pop %v2232
      %v2236 = vrot.slane %v2231, 4
      %v2237 = vrot.slane %v2233, 4
      %v2240 = vsel %vm341, %v2236, 0.0
      %v2241 = vrot.slane %v2240, 4
      %v2242 = vadd.f32 %v2240, %v2241
      %v2243 = vrot.slane %v2242, 2
      %v2244 = vadd.f32 %v2242, %v2243
      %v2245 = vrot.slane %v2244, 1
      %v2246 = vadd.f32 %v2244, %v2245
      %v2247 = vsel %vm341, %v2237, 0.0
      %v2248 = vrot.slane %v2247, 4
      %v2249 = vadd.f32 %v2247, %v2248
      %v2250 = vrot.slane %v2249, 2
      %v2251 = vadd.f32 %v2249, %v2250
      %v2252 = vrot.slane %v2251, 1
      %v2253 = vadd.f32 %v2251, %v2252
      %v2254 = vrcp.pop %v2246
      %v2255 = vrcp.pop %v2253
      %v2256 = vmul.f32 %v2231, %v2254
      %v2257 = vmul.f32 %v2233, %v2255
      %v2258 = vsel %vm329, %v2007, 0
      %v2260 = vsel %vm329, %v2012, 0
      %2262 = vmatprep.subr.mxu0 0.0
      %2263 = vmatpush1.xpose.msra.mxu0 %v2260
      %2264 = vmatprep.subr.mxu0 0.0
      %2265 = vmatpush1.xpose.msra.mxu0 0.0
      %2266 = vmatprep.subr.mxu0 0.0
      %2267 = vmatpush1.xpose.msra.mxu0 0.0
      %2268 = vmatprep.subr.mxu0 0.0
      %2269 = vmatpush1.xpose.msra.mxu0 0.0
      %2270 = vmatprep.subr.mxu0 0.0
      %2271 = vmatpush1.xpose.msra.mxu0 0.0
      %2272 = vmatprep.subr.mxu0 0.0
      %2273 = vmatpush1.xpose.msra.mxu0 0.0
      %2274 = vmatprep.subr.mxu0 0.0
      %2275 = vmatpush1.xpose.msra.mxu0 0.0
      %2276 = vmatprep.subr.mxu0 0.0
      %2277 = vmatpush1.xpose.msra.mxu0 0.0
      %2278 = vmatprep.subr.mxu0 0.0
      %2279 = vmatpush1.xpose.msra.mxu0 0.0
      %2280 = vmatprep.subr.mxu0 0.0
      %2281 = vmatpush1.xpose.msra.mxu0 0.0
      %2282 = vmatprep.subr.mxu0 0.0
      %2283 = vmatpush1.xpose.msra.mxu0 0.0
      %2284 = vmatprep.subr.mxu0 0.0
      %2285 = vmatpush1.xpose.msra.mxu0 0.0
      %2286 = vmatprep.subr.mxu0 0.0
      %2287 = vmatpush1.xpose.msra.mxu0 0.0
      %2288 = vmatprep.subr.mxu0 0.0
      %2289 = vmatpush1.xpose.msra.mxu0 0.0
      %2290 = vmatprep.subr.mxu0 0.0
      %2291 = vmatpush1.xpose.msra.mxu0 0.0
      %2292 = vmatprep.subr.mxu0 0.0
      %2293 = vmatpush1.xpose.msra.mxu0 0.0
      %2294 = vmatprep.subr.mxu0 0.0
      %2295 = vmatpush1.xpose.msra.mxu0 0.0
      %2296 = vmatprep.subr.mxu0 0.0
      %2297 = vmatpush1.xpose.msra.mxu0 0.0
      %2298 = vmatprep.subr.mxu0 0.0
      %2299 = vmatpush1.xpose.msra.mxu0 0.0
      %2300 = vmatprep.subr.mxu0 0.0
      %2301 = vmatpush1.xpose.msra.mxu0 0.0
      %2302 = vmatprep.subr.mxu0 0.0
      %2303 = vmatpush1.xpose.msra.mxu0 0.0
      %2304 = vmatprep.subr.mxu0 0.0
      %2305 = vmatpush1.xpose.msra.mxu0 0.0
      %2306 = vmatprep.subr.mxu0 0.0
      %2307 = vmatpush1.xpose.msra.mxu0 0.0
      %2308 = vmatprep.subr.mxu0 0.0
      %2309 = vmatpush1.xpose.msra.mxu0 0.0
      %2310 = vmatprep.subr.mxu0 0.0
      %2311 = vmatpush1.xpose.msra.mxu0 0.0
      %2312 = vmatprep.subr.mxu0 0.0
      %2313 = vmatpush1.xpose.msra.mxu0 0.0
      %2314 = vmatprep.subr.mxu0 0.0
      %2315 = vmatpush1.xpose.msra.mxu0 0.0
      %2316 = vmatprep.subr.mxu0 0.0
      %2317 = vmatpush1.xpose.msra.mxu0 0.0
      %2318 = vmatprep.subr.mxu0 0.0
      %2319 = vmatpush1.xpose.msra.mxu0 0.0
      %2320 = vmatprep.subr.mxu0 0.0
      %2321 = vmatpush1.xpose.msra.mxu0 0.0
      %2322 = vmatprep.subr.mxu0 0.0
      %2323 = vmatpush1.xpose.msra.mxu0 0.0
      %2324 = vmatprep.subr.mxu0 0.0
      %2325 = vmatpush1.xpose.msra.mxu0 0.0
      %2326 = vmatprep.mubr.f32.mxu0 0.0
      %2327 = vmatmul.mubr.f32.gmra.mrb[0].mxu0 %v2258
      %v2328 = vpop.f32.mrb[0].mxu0
      %v2329 = vadd.f32 0.0, %v2328
      %v2330 = vpop.f32.mrb[0].mxu0
      %2331 = vdwg.mxu0
      %v2332 = vsel %vm652, %v2329, -inf
      %v2333 = vrot.slane %v2332, 4
      %v2334 = vmax.f32 %v2332, %v2333
      %v2335 = vrot.slane %v2334, 2
      %v2336 = vmax.f32 %v2334, %v2335
      %v2337 = vrot.slane %v2336, 1
      %v2338 = vmax.f32 %v2336, %v2337
      %v2339 = vsub.f32 %v2329, %v2338
      %v2340 = vmul.f32 %v2339, 1.442695
      %v2341 = vpow.pop %v2340
      %v2342 = vsel %vm652, %v2341, 0.0
      %v2343 = vrot.slane %v2342, 4
      %v2344 = vadd.f32 %v2342, %v2343
      %v2345 = vrot.slane %v2344, 2
      %v2346 = vadd.f32 %v2344, %v2345
      %v2347 = vrot.slane %v2346, 1
      %v2348 = vadd.f32 %v2346, %v2347
      %v2349 = vrcp.pop %v2348
      %v2350 = vmul.f32 %v2341, %v2349
      %v2351 = vand.u32 2147483647, %v2350
      %v2352 = vsel %vm652, %v2351, 0.0
      %v2353 = vrot.slane %v2352, 4
      %v2354 = vadd.f32 %v2352, %v2353
      %v2355 = vrot.slane %v2354, 2
      %v2356 = vadd.f32 %v2354, %v2355
      %v2357 = vrot.slane %v2356, 1
      %v2358 = vadd.f32 %v2356, %v2357
      %v2359 = vsel %vm680, %v2358, -inf
      %2360 = vmax.xlane.f32.xlu0 %v2359
      %v2361 = vpop.xlane.xlu0 %2360
      %2362 = vadd.xlane.f32.xlu0 %v2352
      %v2363 = vpop.xlane.xlu0 %2362
      %v2364 = vsel %vm341, %v2363, -inf
      %v2365 = vrot.slane %v2364, 4
      %v2366 = vmax.f32 %v2364, %v2365
      %v2367 = vrot.slane %v2366, 2
      %v2368 = vmax.f32 %v2366, %v2367
      %v2369 = vrot.slane %v2368, 1
      %v2370 = vmax.f32 %v2368, %v2369
      %2371 = vxpose.xlu0.b32.start [1/16] %v2350, 128
      %2372 = vxpose.xlu0.b32.cont [2/16] 0.0, 128
      %2373 = vxpose.xlu0.b32.cont [3/16] 0.0, 128
      %2374 = vxpose.xlu0.b32.cont [4/16] 0.0, 128
      %2375 = vxpose.xlu0.b32.cont [5/16] 0.0, 128
      %2376 = vxpose.xlu0.b32.cont [6/16] 0.0, 128
      %2377 = vxpose.xlu0.b32.cont [7/16] 0.0, 128
      %2378 = vxpose.xlu0.b32.cont [8/16] 0.0, 128
      %2379 = vxpose.xlu0.b32.cont [9/16] 0.0, 128
      %2380 = vxpose.xlu0.b32.cont [10/16] 0.0, 128
      %2381 = vxpose.xlu0.b32.cont [11/16] 0.0, 128
      %2382 = vxpose.xlu0.b32.cont [12/16] 0.0, 128
      %2383 = vxpose.xlu0.b32.cont [13/16] 0.0, 128
      %2384 = vxpose.xlu0.b32.cont [14/16] 0.0, 128
      %2385 = vxpose.xlu0.b32.cont [15/16] 0.0, 128
      %2386 = vxpose.xlu0.b32.end [16/16] 0.0, 128
      %v2387 = vpop.trf.xlu0
      %v2388 = vpop.trf.xlu0
      %v2389 = vpop.trf.xlu0
      %v2390 = vpop.trf.xlu0
      %v2391 = vpop.trf.xlu0
      %v2392 = vpop.trf.xlu0
      %v2393 = vpop.trf.xlu0
      %v2394 = vpop.trf.xlu0
      %v2395 = vpop.trf.xlu0
      %v2396 = vpop.trf.xlu0
      %v2397 = vpop.trf.xlu0
      %v2398 = vpop.trf.xlu0
      %v2399 = vpop.trf.xlu0
      %v2400 = vpop.trf.xlu0
      %v2401 = vpop.trf.xlu0
      %v2402 = vpop.trf.xlu0
      %v2403 = vmul.f32 %v2361, %v2370
      %v2404 = vrcp.pop %v2403
      %v2405 = vmul.f32 %v2387, %v2404
      %2407 = vset.pattern.permute.xlu0 0
      %2408 = vperm.xlu0 %2407, %v2350
      %v2409 = vpop.permute.xlu0 %2408
      %v2411 = vlaneseq
      %v2412 = vshrl.u32 %v2411, 7
      %v2413 = vsub.s32 0, %v2412
      %v2414 = vrot.slane %v2405, %v2413
      %v2415 = vmul.f32 %v2409, %v2414
      %2416 = vset.pattern.permute.xlu0 1
      %2417 = vperm.xlu0 %2416, %v2350
      %v2418 = vpop.permute.xlu0 %2417
      %v2420 = vlaneseq
      %v2421 = vshrl.u32 %v2420, 7
      %v2422 = vsub.s32 1, %v2421
      %v2423 = vrot.slane %v2405, %v2422
      %v2424 = vmul.f32 %v2418, %v2423
      %v2425 = vadd.f32 %v2415, %v2424
      %2426 = vset.pattern.permute.xlu0 2
      %2427 = vperm.xlu0 %2426, %v2350
      %v2428 = vpop.permute.xlu0 %2427
      %v2430 = vlaneseq
      %v2431 = vshrl.u32 %v2430, 7
      %v2432 = vsub.s32 2, %v2431
      %v2433 = vrot.slane %v2405, %v2432
      %v2434 = vmul.f32 %v2428, %v2433
      %v2435 = vadd.f32 %v2425, %v2434
      %2436 = vset.pattern.permute.xlu0 3
      %2437 = vperm.xlu0 %2436, %v2350
      %v2438 = vpop.permute.xlu0 %2437
      %v2440 = vlaneseq
      %v2441 = vshrl.u32 %v2440, 7
      %v2442 = vsub.s32 3, %v2441
      %v2443 = vrot.slane %v2405, %v2442
      %v2444 = vmul.f32 %v2438, %v2443
      %v2445 = vadd.f32 %v2435, %v2444
      %v2446 = vsub.f32 %v204, %v2445
      %2448 = vset.pattern.permute.xlu0 0
      %2449 = vperm.xlu0 %2448, %v2445
      %v2450 = vpop.permute.xlu0 %2449
      %v2452 = vlaneseq
      %v2453 = vshrl.u32 %v2452, 7
      %v2454 = vsub.s32 0, %v2453
      %v2455 = vrot.slane %v2446, %v2454
      %v2456 = vmul.f32 %v2450, %v2455
      %2457 = vset.pattern.permute.xlu0 1
      %2458 = vperm.xlu0 %2457, %v2445
      %v2459 = vpop.permute.xlu0 %2458
      %v2461 = vlaneseq
      %v2462 = vshrl.u32 %v2461, 7
      %v2463 = vsub.s32 1, %v2462
      %v2464 = vrot.slane %v2446, %v2463
      %v2465 = vmul.f32 %v2459, %v2464
      %v2466 = vadd.f32 %v2456, %v2465
      %2467 = vset.pattern.permute.xlu0 2
      %2468 = vperm.xlu0 %2467, %v2445
      %v2469 = vpop.permute.xlu0 %2468
      %v2471 = vlaneseq
      %v2472 = vshrl.u32 %v2471, 7
      %v2473 = vsub.s32 2, %v2472
      %v2474 = vrot.slane %v2446, %v2473
      %v2475 = vmul.f32 %v2469, %v2474
      %v2476 = vadd.f32 %v2466, %v2475
      %2477 = vset.pattern.permute.xlu0 3
      %2478 = vperm.xlu0 %2477, %v2445
      %v2479 = vpop.permute.xlu0 %2478
      %v2481 = vlaneseq
      %v2482 = vshrl.u32 %v2481, 7
      %v2483 = vsub.s32 3, %v2482
      %v2484 = vrot.slane %v2446, %v2483
      %v2485 = vmul.f32 %v2479, %v2484
      %v2486 = vadd.f32 %v2476, %v2485
      %v2487 = vsub.f32 %v206, %v2486
      %v2488 = vlaneseq
      %v2489 = vshrl.u32 %v2488, 7
      %v2490 = vsub.s32 0, %v2489
      %v2491 = vrot.slane %v2487, %v2490
      %v2492 = vmul.f32 %v2450, %v2491
      %v2493 = vlaneseq
      %v2494 = vshrl.u32 %v2493, 7
      %v2495 = vsub.s32 1, %v2494
      %v2496 = vrot.slane %v2487, %v2495
      %v2497 = vmul.f32 %v2459, %v2496
      %v2498 = vadd.f32 %v2492, %v2497
      %v2499 = vlaneseq
      %v2500 = vshrl.u32 %v2499, 7
      %v2501 = vsub.s32 2, %v2500
      %v2502 = vrot.slane %v2487, %v2501
      %v2503 = vmul.f32 %v2469, %v2502
      %v2504 = vadd.f32 %v2498, %v2503
      %v2505 = vlaneseq
      %v2506 = vshrl.u32 %v2505, 7
      %v2507 = vsub.s32 3, %v2506
      %v2508 = vrot.slane %v2487, %v2507
      %v2509 = vmul.f32 %v2479, %v2508
      %v2510 = vadd.f32 %v2504, %v2509
      %v2511 = vsub.f32 %v205, %v2510
      %2513 = vset.pattern.permute.xlu0 0
      %2514 = vperm.xlu0 %2513, %v2405
      %v2515 = vpop.permute.xlu0 %2514
      %v2517 = vlaneseq
      %v2518 = vshrl.u32 %v2517, 7
      %v2519 = vsub.s32 0, %v2518
      %v2520 = vrot.slane %v2511, %v2519
      %v2521 = vmul.f32 %v2515, %v2520
      %2522 = vset.pattern.permute.xlu0 1
      %2523 = vperm.xlu0 %2522, %v2405
      %v2524 = vpop.permute.xlu0 %2523
      %v2526 = vlaneseq
      %v2527 = vshrl.u32 %v2526, 7
      %v2528 = vsub.s32 1, %v2527
      %v2529 = vrot.slane %v2511, %v2528
      %v2530 = vmul.f32 %v2524, %v2529
      %v2531 = vadd.f32 %v2521, %v2530
      %2532 = vset.pattern.permute.xlu0 2
      %2533 = vperm.xlu0 %2532, %v2405
      %v2534 = vpop.permute.xlu0 %2533
      %v2536 = vlaneseq
      %v2537 = vshrl.u32 %v2536, 7
      %v2538 = vsub.s32 2, %v2537
      %v2539 = vrot.slane %v2511, %v2538
      %v2540 = vmul.f32 %v2534, %v2539
      %v2541 = vadd.f32 %v2531, %v2540
      %2542 = vset.pattern.permute.xlu0 3
      %2543 = vperm.xlu0 %2542, %v2405
      %v2544 = vpop.permute.xlu0 %2543
      %v2546 = vlaneseq
      %v2547 = vshrl.u32 %v2546, 7
      %v2548 = vsub.s32 3, %v2547
      %v2549 = vrot.slane %v2511, %v2548
      %v2550 = vmul.f32 %v2544, %v2549
      %v2551 = vadd.f32 %v2541, %v2550
      %v2552 = vmul.f32 %v2551, 0.25
      %v2553 = vlaneseq
      %v2554 = vshrl.u32 %v2553, 7
      %v2555 = vsub.s32 0, %v2554
      %v2556 = vrot.slane %v2552, %v2555
      %v2557 = vmul.f32 %v2409, %v2556
      %v2558 = vlaneseq
      %v2559 = vshrl.u32 %v2558, 7
      %v2560 = vsub.s32 1, %v2559
      %v2561 = vrot.slane %v2552, %v2560
      %v2562 = vmul.f32 %v2418, %v2561
      %v2563 = vadd.f32 %v2557, %v2562
      %v2564 = vlaneseq
      %v2565 = vshrl.u32 %v2564, 7
      %v2566 = vsub.s32 2, %v2565
      %v2567 = vrot.slane %v2552, %v2566
      %v2568 = vmul.f32 %v2428, %v2567
      %v2569 = vadd.f32 %v2563, %v2568
      %v2570 = vlaneseq
      %v2571 = vshrl.u32 %v2570, 7
      %v2572 = vsub.s32 3, %v2571
      %v2573 = vrot.slane %v2552, %v2572
      %v2574 = vmul.f32 %v2438, %v2573
      %v2575 = vadd.f32 %v2569, %v2574
      %v2576 = vsub.f32 %v204, %v2575
      %2578 = vset.pattern.permute.xlu0 0
      %2579 = vperm.xlu0 %2578, %v2575
      %v2580 = vpop.permute.xlu0 %2579
      %v2582 = vlaneseq
      %v2583 = vshrl.u32 %v2582, 7
      %v2584 = vsub.s32 0, %v2583
      %v2585 = vrot.slane %v2576, %v2584
      %v2586 = vmul.f32 %v2580, %v2585
      %2587 = vset.pattern.permute.xlu0 1
      %2588 = vperm.xlu0 %2587, %v2575
      %v2589 = vpop.permute.xlu0 %2588
      %v2591 = vlaneseq
      %v2592 = vshrl.u32 %v2591, 7
      %v2593 = vsub.s32 1, %v2592
      %v2594 = vrot.slane %v2576, %v2593
      %v2595 = vmul.f32 %v2589, %v2594
      %v2596 = vadd.f32 %v2586, %v2595
      %2597 = vset.pattern.permute.xlu0 2
      %2598 = vperm.xlu0 %2597, %v2575
      %v2599 = vpop.permute.xlu0 %2598
      %v2601 = vlaneseq
      %v2602 = vshrl.u32 %v2601, 7
      %v2603 = vsub.s32 2, %v2602
      %v2604 = vrot.slane %v2576, %v2603
      %v2605 = vmul.f32 %v2599, %v2604
      %v2606 = vadd.f32 %v2596, %v2605
      %2607 = vset.pattern.permute.xlu0 3
      %2608 = vperm.xlu0 %2607, %v2575
      %v2609 = vpop.permute.xlu0 %2608
      %v2611 = vlaneseq
      %v2612 = vshrl.u32 %v2611, 7
      %v2613 = vsub.s32 3, %v2612
      %v2614 = vrot.slane %v2576, %v2613
      %v2615 = vmul.f32 %v2609, %v2614
      %v2616 = vadd.f32 %v2606, %v2615
      %v2617 = vsub.f32 %v206, %v2616
      %v2618 = vlaneseq
      %v2619 = vshrl.u32 %v2618, 7
      %v2620 = vsub.s32 0, %v2619
      %v2621 = vrot.slane %v2617, %v2620
      %v2622 = vmul.f32 %v2580, %v2621
      %v2623 = vlaneseq
      %v2624 = vshrl.u32 %v2623, 7
      %v2625 = vsub.s32 1, %v2624
      %v2626 = vrot.slane %v2617, %v2625
      %v2627 = vmul.f32 %v2589, %v2626
      %v2628 = vadd.f32 %v2622, %v2627
      %v2629 = vlaneseq
      %v2630 = vshrl.u32 %v2629, 7
      %v2631 = vsub.s32 2, %v2630
      %v2632 = vrot.slane %v2617, %v2631
      %v2633 = vmul.f32 %v2599, %v2632
      %v2634 = vadd.f32 %v2628, %v2633
      %v2635 = vlaneseq
      %v2636 = vshrl.u32 %v2635, 7
      %v2637 = vsub.s32 3, %v2636
      %v2638 = vrot.slane %v2617, %v2637
      %v2639 = vmul.f32 %v2609, %v2638
      %v2640 = vadd.f32 %v2634, %v2639
      %v2641 = vsub.f32 %v205, %v2640
      %2643 = vset.pattern.permute.xlu0 0
      %2644 = vperm.xlu0 %2643, %v2552
      %v2645 = vpop.permute.xlu0 %2644
      %v2647 = vlaneseq
      %v2648 = vshrl.u32 %v2647, 7
      %v2649 = vsub.s32 0, %v2648
      %v2650 = vrot.slane %v2641, %v2649
      %v2651 = vmul.f32 %v2645, %v2650
      %2652 = vset.pattern.permute.xlu0 1
      %2653 = vperm.xlu0 %2652, %v2552
      %v2654 = vpop.permute.xlu0 %2653
      %v2656 = vlaneseq
      %v2657 = vshrl.u32 %v2656, 7
      %v2658 = vsub.s32 1, %v2657
      %v2659 = vrot.slane %v2641, %v2658
      %v2660 = vmul.f32 %v2654, %v2659
      %v2661 = vadd.f32 %v2651, %v2660
      %2662 = vset.pattern.permute.xlu0 2
      %2663 = vperm.xlu0 %2662, %v2552
      %v2664 = vpop.permute.xlu0 %2663
      %v2666 = vlaneseq
      %v2667 = vshrl.u32 %v2666, 7
      %v2668 = vsub.s32 2, %v2667
      %v2669 = vrot.slane %v2641, %v2668
      %v2670 = vmul.f32 %v2664, %v2669
      %v2671 = vadd.f32 %v2661, %v2670
      %2672 = vset.pattern.permute.xlu0 3
      %2673 = vperm.xlu0 %2672, %v2552
      %v2674 = vpop.permute.xlu0 %2673
      %v2676 = vlaneseq
      %v2677 = vshrl.u32 %v2676, 7
      %v2678 = vsub.s32 3, %v2677
      %v2679 = vrot.slane %v2641, %v2678
      %v2680 = vmul.f32 %v2674, %v2679
      %v2681 = vadd.f32 %v2671, %v2680
      %v2682 = vmul.f32 %v2681, 0.25
      %v2683 = vlaneseq
      %v2684 = vshrl.u32 %v2683, 7
      %v2685 = vsub.s32 0, %v2684
      %v2686 = vrot.slane %v2682, %v2685
      %v2687 = vmul.f32 %v2409, %v2686
      %v2688 = vlaneseq
      %v2689 = vshrl.u32 %v2688, 7
      %v2690 = vsub.s32 1, %v2689
      %v2691 = vrot.slane %v2682, %v2690
      %v2692 = vmul.f32 %v2418, %v2691
      %v2693 = vadd.f32 %v2687, %v2692
      %v2694 = vlaneseq
      %v2695 = vshrl.u32 %v2694, 7
      %v2696 = vsub.s32 2, %v2695
      %v2697 = vrot.slane %v2682, %v2696
      %v2698 = vmul.f32 %v2428, %v2697
      %v2699 = vadd.f32 %v2693, %v2698
      %v2700 = vlaneseq
      %v2701 = vshrl.u32 %v2700, 7
      %v2702 = vsub.s32 3, %v2701
      %v2703 = vrot.slane %v2682, %v2702
      %v2704 = vmul.f32 %v2438, %v2703
      %v2705 = vadd.f32 %v2699, %v2704
      %v2706 = vsub.f32 %v204, %v2705
      %2708 = vset.pattern.permute.xlu0 0
      %2709 = vperm.xlu0 %2708, %v2705
      %v2710 = vpop.permute.xlu0 %2709
      %v2712 = vlaneseq
      %v2713 = vshrl.u32 %v2712, 7
      %v2714 = vsub.s32 0, %v2713
      %v2715 = vrot.slane %v2706, %v2714
      %v2716 = vmul.f32 %v2710, %v2715
      %2717 = vset.pattern.permute.xlu0 1
      %2718 = vperm.xlu0 %2717, %v2705
      %v2719 = vpop.permute.xlu0 %2718
      %v2721 = vlaneseq
      %v2722 = vshrl.u32 %v2721, 7
      %v2723 = vsub.s32 1, %v2722
      %v2724 = vrot.slane %v2706, %v2723
      %v2725 = vmul.f32 %v2719, %v2724
      %v2726 = vadd.f32 %v2716, %v2725
      %2727 = vset.pattern.permute.xlu0 2
      %2728 = vperm.xlu0 %2727, %v2705
      %v2729 = vpop.permute.xlu0 %2728
      %v2731 = vlaneseq
      %v2732 = vshrl.u32 %v2731, 7
      %v2733 = vsub.s32 2, %v2732
      %v2734 = vrot.slane %v2706, %v2733
      %v2735 = vmul.f32 %v2729, %v2734
      %v2736 = vadd.f32 %v2726, %v2735
      %2737 = vset.pattern.permute.xlu0 3
      %2738 = vperm.xlu0 %2737, %v2705
      %v2739 = vpop.permute.xlu0 %2738
      %v2741 = vlaneseq
      %v2742 = vshrl.u32 %v2741, 7
      %v2743 = vsub.s32 3, %v2742
      %v2744 = vrot.slane %v2706, %v2743
      %v2745 = vmul.f32 %v2739, %v2744
      %v2746 = vadd.f32 %v2736, %v2745
      %v2747 = vsub.f32 %v206, %v2746
      %v2748 = vlaneseq
      %v2749 = vshrl.u32 %v2748, 7
      %v2750 = vsub.s32 0, %v2749
      %v2751 = vrot.slane %v2747, %v2750
      %v2752 = vmul.f32 %v2710, %v2751
      %v2753 = vlaneseq
      %v2754 = vshrl.u32 %v2753, 7
      %v2755 = vsub.s32 1, %v2754
      %v2756 = vrot.slane %v2747, %v2755
      %v2757 = vmul.f32 %v2719, %v2756
      %v2758 = vadd.f32 %v2752, %v2757
      %v2759 = vlaneseq
      %v2760 = vshrl.u32 %v2759, 7
      %v2761 = vsub.s32 2, %v2760
      %v2762 = vrot.slane %v2747, %v2761
      %v2763 = vmul.f32 %v2729, %v2762
      %v2764 = vadd.f32 %v2758, %v2763
      %v2765 = vlaneseq
      %v2766 = vshrl.u32 %v2765, 7
      %v2767 = vsub.s32 3, %v2766
      %v2768 = vrot.slane %v2747, %v2767
      %v2769 = vmul.f32 %v2739, %v2768
      %v2770 = vadd.f32 %v2764, %v2769
      %v2771 = vsub.f32 %v205, %v2770
      %2773 = vset.pattern.permute.xlu0 0
      %2774 = vperm.xlu0 %2773, %v2682
      %v2775 = vpop.permute.xlu0 %2774
      %v2777 = vlaneseq
      %v2778 = vshrl.u32 %v2777, 7
      %v2779 = vsub.s32 0, %v2778
      %v2780 = vrot.slane %v2771, %v2779
      %v2781 = vmul.f32 %v2775, %v2780
      %2782 = vset.pattern.permute.xlu0 1
      %2783 = vperm.xlu0 %2782, %v2682
      %v2784 = vpop.permute.xlu0 %2783
      %v2786 = vlaneseq
      %v2787 = vshrl.u32 %v2786, 7
      %v2788 = vsub.s32 1, %v2787
      %v2789 = vrot.slane %v2771, %v2788
      %v2790 = vmul.f32 %v2784, %v2789
      %v2791 = vadd.f32 %v2781, %v2790
      %2792 = vset.pattern.permute.xlu0 2
      %2793 = vperm.xlu0 %2792, %v2682
      %v2794 = vpop.permute.xlu0 %2793
      %v2796 = vlaneseq
      %v2797 = vshrl.u32 %v2796, 7
      %v2798 = vsub.s32 2, %v2797
      %v2799 = vrot.slane %v2771, %v2798
      %v2800 = vmul.f32 %v2794, %v2799
      %v2801 = vadd.f32 %v2791, %v2800
      %2802 = vset.pattern.permute.xlu0 3
      %2803 = vperm.xlu0 %2802, %v2682
      %v2804 = vpop.permute.xlu0 %2803
      %v2806 = vlaneseq
      %v2807 = vshrl.u32 %v2806, 7
      %v2808 = vsub.s32 3, %v2807
      %v2809 = vrot.slane %v2771, %v2808
      %v2810 = vmul.f32 %v2804, %v2809
      %v2811 = vadd.f32 %v2801, %v2810
      %v2812 = vmul.f32 %v2811, 0.25
      %v2813 = vlaneseq
      %v2814 = vshrl.u32 %v2813, 7
      %v2815 = vsub.s32 0, %v2814
      %v2816 = vrot.slane %v2812, %v2815
      %v2817 = vmul.f32 %v2409, %v2816
      %v2818 = vlaneseq
      %v2819 = vshrl.u32 %v2818, 7
      %v2820 = vsub.s32 1, %v2819
      %v2821 = vrot.slane %v2812, %v2820
      %v2822 = vmul.f32 %v2418, %v2821
      %v2823 = vadd.f32 %v2817, %v2822
      %v2824 = vlaneseq
      %v2825 = vshrl.u32 %v2824, 7
      %v2826 = vsub.s32 2, %v2825
      %v2827 = vrot.slane %v2812, %v2826
      %v2828 = vmul.f32 %v2428, %v2827
      %v2829 = vadd.f32 %v2823, %v2828
      %v2830 = vlaneseq
      %v2831 = vshrl.u32 %v2830, 7
      %v2832 = vsub.s32 3, %v2831
      %v2833 = vrot.slane %v2812, %v2832
      %v2834 = vmul.f32 %v2438, %v2833
      %v2835 = vadd.f32 %v2829, %v2834
      %v2836 = vsub.f32 %v204, %v2835
      %2838 = vset.pattern.permute.xlu0 0
      %2839 = vperm.xlu0 %2838, %v2835
      %v2840 = vpop.permute.xlu0 %2839
      %v2842 = vlaneseq
      %v2843 = vshrl.u32 %v2842, 7
      %v2844 = vsub.s32 0, %v2843
      %v2845 = vrot.slane %v2836, %v2844
      %v2846 = vmul.f32 %v2840, %v2845
      %2847 = vset.pattern.permute.xlu0 1
      %2848 = vperm.xlu0 %2847, %v2835
      %v2849 = vpop.permute.xlu0 %2848
      %v2851 = vlaneseq
      %v2852 = vshrl.u32 %v2851, 7
      %v2853 = vsub.s32 1, %v2852
      %v2854 = vrot.slane %v2836, %v2853
      %v2855 = vmul.f32 %v2849, %v2854
      %v2856 = vadd.f32 %v2846, %v2855
      %2857 = vset.pattern.permute.xlu0 2
      %2858 = vperm.xlu0 %2857, %v2835
      %v2859 = vpop.permute.xlu0 %2858
      %v2861 = vlaneseq
      %v2862 = vshrl.u32 %v2861, 7
      %v2863 = vsub.s32 2, %v2862
      %v2864 = vrot.slane %v2836, %v2863
      %v2865 = vmul.f32 %v2859, %v2864
      %v2866 = vadd.f32 %v2856, %v2865
      %2867 = vset.pattern.permute.xlu0 3
      %2868 = vperm.xlu0 %2867, %v2835
      %v2869 = vpop.permute.xlu0 %2868
      %v2871 = vlaneseq
      %v2872 = vshrl.u32 %v2871, 7
      %v2873 = vsub.s32 3, %v2872
      %v2874 = vrot.slane %v2836, %v2873
      %v2875 = vmul.f32 %v2869, %v2874
      %v2876 = vadd.f32 %v2866, %v2875
      %v2877 = vsub.f32 %v206, %v2876
      %v2878 = vlaneseq
      %v2879 = vshrl.u32 %v2878, 7
      %v2880 = vsub.s32 0, %v2879
      %v2881 = vrot.slane %v2877, %v2880
      %v2882 = vmul.f32 %v2840, %v2881
      %v2883 = vlaneseq
      %v2884 = vshrl.u32 %v2883, 7
      %v2885 = vsub.s32 1, %v2884
      %v2886 = vrot.slane %v2877, %v2885
      %v2887 = vmul.f32 %v2849, %v2886
      %v2888 = vadd.f32 %v2882, %v2887
      %v2889 = vlaneseq
      %v2890 = vshrl.u32 %v2889, 7
      %v2891 = vsub.s32 2, %v2890
      %v2892 = vrot.slane %v2877, %v2891
      %v2893 = vmul.f32 %v2859, %v2892
      %v2894 = vadd.f32 %v2888, %v2893
      %v2895 = vlaneseq
      %v2896 = vshrl.u32 %v2895, 7
      %v2897 = vsub.s32 3, %v2896
      %v2898 = vrot.slane %v2877, %v2897
      %v2899 = vmul.f32 %v2869, %v2898
      %v2900 = vadd.f32 %v2894, %v2899
      %v2901 = vsub.f32 %v205, %v2900
      %2903 = vset.pattern.permute.xlu0 0
      %2904 = vperm.xlu0 %2903, %v2812
      %v2905 = vpop.permute.xlu0 %2904
      %v2907 = vlaneseq
      %v2908 = vshrl.u32 %v2907, 7
      %v2909 = vsub.s32 0, %v2908
      %v2910 = vrot.slane %v2901, %v2909
      %v2911 = vmul.f32 %v2905, %v2910
      %2912 = vset.pattern.permute.xlu0 1
      %2913 = vperm.xlu0 %2912, %v2812
      %v2914 = vpop.permute.xlu0 %2913
      %v2916 = vlaneseq
      %v2917 = vshrl.u32 %v2916, 7
      %v2918 = vsub.s32 1, %v2917
      %v2919 = vrot.slane %v2901, %v2918
      %v2920 = vmul.f32 %v2914, %v2919
      %v2921 = vadd.f32 %v2911, %v2920
      %2922 = vset.pattern.permute.xlu0 2
      %2923 = vperm.xlu0 %2922, %v2812
      %v2924 = vpop.permute.xlu0 %2923
      %v2926 = vlaneseq
      %v2927 = vshrl.u32 %v2926, 7
      %v2928 = vsub.s32 2, %v2927
      %v2929 = vrot.slane %v2901, %v2928
      %v2930 = vmul.f32 %v2924, %v2929
      %v2931 = vadd.f32 %v2921, %v2930
      %2932 = vset.pattern.permute.xlu0 3
      %2933 = vperm.xlu0 %2932, %v2812
      %v2934 = vpop.permute.xlu0 %2933
      %v2936 = vlaneseq
      %v2937 = vshrl.u32 %v2936, 7
      %v2938 = vsub.s32 3, %v2937
      %v2939 = vrot.slane %v2901, %v2938
      %v2940 = vmul.f32 %v2934, %v2939
      %v2941 = vadd.f32 %v2931, %v2940
      %v2942 = vmul.f32 %v2941, 0.25
      %v2943 = vlaneseq
      %v2944 = vshrl.u32 %v2943, 7
      %v2945 = vsub.s32 0, %v2944
      %v2946 = vrot.slane %v2942, %v2945
      %v2947 = vmul.f32 %v2409, %v2946
      %v2948 = vlaneseq
      %v2949 = vshrl.u32 %v2948, 7
      %v2950 = vsub.s32 1, %v2949
      %v2951 = vrot.slane %v2942, %v2950
      %v2952 = vmul.f32 %v2418, %v2951
      %v2953 = vadd.f32 %v2947, %v2952
      %v2954 = vlaneseq
      %v2955 = vshrl.u32 %v2954, 7
      %v2956 = vsub.s32 2, %v2955
      %v2957 = vrot.slane %v2942, %v2956
      %v2958 = vmul.f32 %v2428, %v2957
      %v2959 = vadd.f32 %v2953, %v2958
      %v2960 = vlaneseq
      %v2961 = vshrl.u32 %v2960, 7
      %v2962 = vsub.s32 3, %v2961
      %v2963 = vrot.slane %v2942, %v2962
      %v2964 = vmul.f32 %v2438, %v2963
      %v2965 = vadd.f32 %v2959, %v2964
      %v2966 = vsub.f32 %v204, %v2965
      %2968 = vset.pattern.permute.xlu0 0
      %2969 = vperm.xlu0 %2968, %v2965
      %v2970 = vpop.permute.xlu0 %2969
      %v2972 = vlaneseq
      %v2973 = vshrl.u32 %v2972, 7
      %v2974 = vsub.s32 0, %v2973
      %v2975 = vrot.slane %v2966, %v2974
      %v2976 = vmul.f32 %v2970, %v2975
      %2977 = vset.pattern.permute.xlu0 1
      %2978 = vperm.xlu0 %2977, %v2965
      %v2979 = vpop.permute.xlu0 %2978
      %v2981 = vlaneseq
      %v2982 = vshrl.u32 %v2981, 7
      %v2983 = vsub.s32 1, %v2982
      %v2984 = vrot.slane %v2966, %v2983
      %v2985 = vmul.f32 %v2979, %v2984
      %v2986 = vadd.f32 %v2976, %v2985
      %2987 = vset.pattern.permute.xlu0 2
      %2988 = vperm.xlu0 %2987, %v2965
      %v2989 = vpop.permute.xlu0 %2988
      %v2991 = vlaneseq
      %v2992 = vshrl.u32 %v2991, 7
      %v2993 = vsub.s32 2, %v2992
      %v2994 = vrot.slane %v2966, %v2993
      %v2995 = vmul.f32 %v2989, %v2994
      %v2996 = vadd.f32 %v2986, %v2995
      %2997 = vset.pattern.permute.xlu0 3
      %2998 = vperm.xlu0 %2997, %v2965
      %v2999 = vpop.permute.xlu0 %2998
      %v3001 = vlaneseq
      %v3002 = vshrl.u32 %v3001, 7
      %v3003 = vsub.s32 3, %v3002
      %v3004 = vrot.slane %v2966, %v3003
      %v3005 = vmul.f32 %v2999, %v3004
      %v3006 = vadd.f32 %v2996, %v3005
      %v3007 = vsub.f32 %v206, %v3006
      %v3008 = vlaneseq
      %v3009 = vshrl.u32 %v3008, 7
      %v3010 = vsub.s32 0, %v3009
      %v3011 = vrot.slane %v3007, %v3010
      %v3012 = vmul.f32 %v2970, %v3011
      %v3013 = vlaneseq
      %v3014 = vshrl.u32 %v3013, 7
      %v3015 = vsub.s32 1, %v3014
      %v3016 = vrot.slane %v3007, %v3015
      %v3017 = vmul.f32 %v2979, %v3016
      %v3018 = vadd.f32 %v3012, %v3017
      %v3019 = vlaneseq
      %v3020 = vshrl.u32 %v3019, 7
      %v3021 = vsub.s32 2, %v3020
      %v3022 = vrot.slane %v3007, %v3021
      %v3023 = vmul.f32 %v2989, %v3022
      %v3024 = vadd.f32 %v3018, %v3023
      %v3025 = vlaneseq
      %v3026 = vshrl.u32 %v3025, 7
      %v3027 = vsub.s32 3, %v3026
      %v3028 = vrot.slane %v3007, %v3027
      %v3029 = vmul.f32 %v2999, %v3028
      %v3030 = vadd.f32 %v3024, %v3029
      %v3031 = vsub.f32 %v205, %v3030
      %3033 = vset.pattern.permute.xlu0 0
      %3034 = vperm.xlu0 %3033, %v2942
      %v3035 = vpop.permute.xlu0 %3034
      %v3037 = vlaneseq
      %v3038 = vshrl.u32 %v3037, 7
      %v3039 = vsub.s32 0, %v3038
      %v3040 = vrot.slane %v3031, %v3039
      %v3041 = vmul.f32 %v3035, %v3040
      %3042 = vset.pattern.permute.xlu0 1
      %3043 = vperm.xlu0 %3042, %v2942
      %v3044 = vpop.permute.xlu0 %3043
      %v3046 = vlaneseq
      %v3047 = vshrl.u32 %v3046, 7
      %v3048 = vsub.s32 1, %v3047
      %v3049 = vrot.slane %v3031, %v3048
      %v3050 = vmul.f32 %v3044, %v3049
      %v3051 = vadd.f32 %v3041, %v3050
      %3052 = vset.pattern.permute.xlu0 2
      %3053 = vperm.xlu0 %3052, %v2942
      %v3054 = vpop.permute.xlu0 %3053
      %v3056 = vlaneseq
      %v3057 = vshrl.u32 %v3056, 7
      %v3058 = vsub.s32 2, %v3057
      %v3059 = vrot.slane %v3031, %v3058
      %v3060 = vmul.f32 %v3054, %v3059
      %v3061 = vadd.f32 %v3051, %v3060
      %3062 = vset.pattern.permute.xlu0 3
      %3063 = vperm.xlu0 %3062, %v2942
      %v3064 = vpop.permute.xlu0 %3063
      %v3066 = vlaneseq
      %v3067 = vshrl.u32 %v3066, 7
      %v3068 = vsub.s32 3, %v3067
      %v3069 = vrot.slane %v3031, %v3068
      %v3070 = vmul.f32 %v3064, %v3069
      %v3071 = vadd.f32 %v3061, %v3070
      %v3072 = vmul.f32 %v3071, 0.25
      %v3073 = vlaneseq
      %v3074 = vshrl.u32 %v3073, 7
      %v3075 = vsub.s32 0, %v3074
      %v3076 = vrot.slane %v3072, %v3075
      %v3077 = vmul.f32 %v2409, %v3076
      %v3078 = vlaneseq
      %v3079 = vshrl.u32 %v3078, 7
      %v3080 = vsub.s32 1, %v3079
      %v3081 = vrot.slane %v3072, %v3080
      %v3082 = vmul.f32 %v2418, %v3081
      %v3083 = vadd.f32 %v3077, %v3082
      %v3084 = vlaneseq
      %v3085 = vshrl.u32 %v3084, 7
      %v3086 = vsub.s32 2, %v3085
      %v3087 = vrot.slane %v3072, %v3086
      %v3088 = vmul.f32 %v2428, %v3087
      %v3089 = vadd.f32 %v3083, %v3088
      %v3090 = vlaneseq
      %v3091 = vshrl.u32 %v3090, 7
      %v3092 = vsub.s32 3, %v3091
      %v3093 = vrot.slane %v3072, %v3092
      %v3094 = vmul.f32 %v2438, %v3093
      %v3095 = vadd.f32 %v3089, %v3094
      %v3096 = vsub.f32 %v204, %v3095
      %3098 = vset.pattern.permute.xlu0 0
      %3099 = vperm.xlu0 %3098, %v3095
      %v3100 = vpop.permute.xlu0 %3099
      %v3102 = vlaneseq
      %v3103 = vshrl.u32 %v3102, 7
      %v3104 = vsub.s32 0, %v3103
      %v3105 = vrot.slane %v3096, %v3104
      %v3106 = vmul.f32 %v3100, %v3105
      %3107 = vset.pattern.permute.xlu0 1
      %3108 = vperm.xlu0 %3107, %v3095
      %v3109 = vpop.permute.xlu0 %3108
      %v3111 = vlaneseq
      %v3112 = vshrl.u32 %v3111, 7
      %v3113 = vsub.s32 1, %v3112
      %v3114 = vrot.slane %v3096, %v3113
      %v3115 = vmul.f32 %v3109, %v3114
      %v3116 = vadd.f32 %v3106, %v3115
      %3117 = vset.pattern.permute.xlu0 2
      %3118 = vperm.xlu0 %3117, %v3095
      %v3119 = vpop.permute.xlu0 %3118
      %v3121 = vlaneseq
      %v3122 = vshrl.u32 %v3121, 7
      %v3123 = vsub.s32 2, %v3122
      %v3124 = vrot.slane %v3096, %v3123
      %v3125 = vmul.f32 %v3119, %v3124
      %v3126 = vadd.f32 %v3116, %v3125
      %3127 = vset.pattern.permute.xlu0 3
      %3128 = vperm.xlu0 %3127, %v3095
      %v3129 = vpop.permute.xlu0 %3128
      %v3131 = vlaneseq
      %v3132 = vshrl.u32 %v3131, 7
      %v3133 = vsub.s32 3, %v3132
      %v3134 = vrot.slane %v3096, %v3133
      %v3135 = vmul.f32 %v3129, %v3134
      %v3136 = vadd.f32 %v3126, %v3135
      %v3137 = vsub.f32 %v206, %v3136
      %v3138 = vlaneseq
      %v3139 = vshrl.u32 %v3138, 7
      %v3140 = vsub.s32 0, %v3139
      %v3141 = vrot.slane %v3137, %v3140
      %v3142 = vmul.f32 %v3100, %v3141
      %v3143 = vlaneseq
      %v3144 = vshrl.u32 %v3143, 7
      %v3145 = vsub.s32 1, %v3144
      %v3146 = vrot.slane %v3137, %v3145
      %v3147 = vmul.f32 %v3109, %v3146
      %v3148 = vadd.f32 %v3142, %v3147
      %v3149 = vlaneseq
      %v3150 = vshrl.u32 %v3149, 7
      %v3151 = vsub.s32 2, %v3150
      %v3152 = vrot.slane %v3137, %v3151
      %v3153 = vmul.f32 %v3119, %v3152
      %v3154 = vadd.f32 %v3148, %v3153
      %v3155 = vlaneseq
      %v3156 = vshrl.u32 %v3155, 7
      %v3157 = vsub.s32 3, %v3156
      %v3158 = vrot.slane %v3137, %v3157
      %v3159 = vmul.f32 %v3129, %v3158
      %v3160 = vadd.f32 %v3154, %v3159
      %v3161 = vsub.f32 %v205, %v3160
      %3163 = vset.pattern.permute.xlu0 0
      %3164 = vperm.xlu0 %3163, %v3072
      %v3165 = vpop.permute.xlu0 %3164
      %v3167 = vlaneseq
      %v3168 = vshrl.u32 %v3167, 7
      %v3169 = vsub.s32 0, %v3168
      %v3170 = vrot.slane %v3161, %v3169
      %v3171 = vmul.f32 %v3165, %v3170
      %3172 = vset.pattern.permute.xlu0 1
      %3173 = vperm.xlu0 %3172, %v3072
      %v3174 = vpop.permute.xlu0 %3173
      %v3176 = vlaneseq
      %v3177 = vshrl.u32 %v3176, 7
      %v3178 = vsub.s32 1, %v3177
      %v3179 = vrot.slane %v3161, %v3178
      %v3180 = vmul.f32 %v3174, %v3179
      %v3181 = vadd.f32 %v3171, %v3180
      %3182 = vset.pattern.permute.xlu0 2
      %3183 = vperm.xlu0 %3182, %v3072
      %v3184 = vpop.permute.xlu0 %3183
      %v3186 = vlaneseq
      %v3187 = vshrl.u32 %v3186, 7
      %v3188 = vsub.s32 2, %v3187
      %v3189 = vrot.slane %v3161, %v3188
      %v3190 = vmul.f32 %v3184, %v3189
      %v3191 = vadd.f32 %v3181, %v3190
      %3192 = vset.pattern.permute.xlu0 3
      %3193 = vperm.xlu0 %3192, %v3072
      %v3194 = vpop.permute.xlu0 %3193
      %v3196 = vlaneseq
      %v3197 = vshrl.u32 %v3196, 7
      %v3198 = vsub.s32 3, %v3197
      %v3199 = vrot.slane %v3161, %v3198
      %v3200 = vmul.f32 %v3194, %v3199
      %v3201 = vadd.f32 %v3191, %v3200
      %v3202 = vmul.f32 %v3201, 0.25
      %v3205 = vrot.slane %v2256, 4
      %v3206 = vrot.slane %v2257, 4
      %3209 = vmatprep.subr.mxu0 0.0
      %3210 = vmatpush1.msra.mxu0 %v1899
      %3211 = vmatprep.subr.mxu0 0.0
      %3212 = vmatpush1.msra.mxu0 %v1900
      %3213 = vmatprep.subr.mxu0 0.0
      %3214 = vmatpush1.msra.mxu0 %v1901
      %3215 = vmatprep.subr.mxu0 0.0
      %3216 = vmatpush1.msra.mxu0 %v1902
      %3217 = vmatprep.subr.mxu0 0.0
      %3218 = vmatpush1.msra.mxu0 %v1903
      %3219 = vmatprep.subr.mxu0 0.0
      %3220 = vmatpush1.msra.mxu0 %v1904
      %3221 = vmatprep.subr.mxu0 0.0
      %3222 = vmatpush1.msra.mxu0 %v1905
      %3223 = vmatprep.subr.mxu0 0.0
      %3224 = vmatpush1.msra.mxu0 %v1906
      %3225 = vmatprep.subr.mxu0 0.0
      %3226 = vmatpush1.msra.mxu0 %v1907
      %3227 = vmatprep.subr.mxu0 0.0
      %3228 = vmatpush1.msra.mxu0 %v1908
      %3229 = vmatprep.subr.mxu0 0.0
      %3230 = vmatpush1.msra.mxu0 %v1909
      %3231 = vmatprep.subr.mxu0 0.0
      %3232 = vmatpush1.msra.mxu0 %v1910
      %3233 = vmatprep.subr.mxu0 0.0
      %3234 = vmatpush1.msra.mxu0 %v1911
      %3235 = vmatprep.subr.mxu0 0.0
      %3236 = vmatpush1.msra.mxu0 %v1912
      %3237 = vmatprep.subr.mxu0 0.0
      %3238 = vmatpush1.msra.mxu0 %v1913
      %3239 = vmatprep.subr.mxu0 0.0
      %3240 = vmatpush1.msra.mxu0 %v1914
      %3241 = vmatprep.subr.mxu0 0.0
      %3242 = vmatpush1.msra.mxu0 %v1915
      %3243 = vmatprep.subr.mxu0 0.0
      %3244 = vmatpush1.msra.mxu0 %v1916
      %3245 = vmatprep.subr.mxu0 0.0
      %3246 = vmatpush1.msra.mxu0 %v1917
      %3247 = vmatprep.subr.mxu0 0.0
      %3248 = vmatpush1.msra.mxu0 %v1918
      %3249 = vmatprep.subr.mxu0 0.0
      %3250 = vmatpush1.msra.mxu0 %v1919
      %3251 = vmatprep.subr.mxu0 0.0
      %3252 = vmatpush1.msra.mxu0 %v1920
      %3253 = vmatprep.subr.mxu0 0.0
      %3254 = vmatpush1.msra.mxu0 %v1921
      %3255 = vmatprep.subr.mxu0 0.0
      %3256 = vmatpush1.msra.mxu0 %v1922
      %3257 = vmatprep.subr.mxu0 0.0
      %3258 = vmatpush1.msra.mxu0 %v1923
      %3259 = vmatprep.subr.mxu0 0.0
      %3260 = vmatpush1.msra.mxu0 %v1924
      %3261 = vmatprep.subr.mxu0 0.0
      %3262 = vmatpush1.msra.mxu0 %v1925
      %3263 = vmatprep.subr.mxu0 0.0
      %3264 = vmatpush1.msra.mxu0 %v1926
      %3265 = vmatprep.subr.mxu0 0.0
      %3266 = vmatpush1.msra.mxu0 %v1927
      %3267 = vmatprep.subr.mxu0 0.0
      %3268 = vmatpush1.msra.mxu0 %v1928
      %3269 = vmatprep.subr.mxu0 0.0
      %3270 = vmatpush1.msra.mxu0 %v1929
      %3271 = vmatprep.subr.mxu0 0.0
      %3272 = vmatpush1.msra.mxu0 %v1930
      %3273 = vmatprep.mubr.f32.mxu0 %v1933
      %3274 = vmatmul.mubr.f32.gmra.mrb[0].mxu0 %v1932
      %v3275 = vpop.f32.mrb[0].mxu0
      %v3276 = vadd.f32 0.0, %v3275
      %v3277 = vpop.f32.mrb[0].mxu0
      %3278 = vmatprep.mubr.f32.mxu0 %v1935
      %3279 = vmatmul.mubr.f32.gmra.mrb[0].mxu0 %v1934
      %v3280 = vpop.f32.mrb[0].mxu0
      %v3281 = vadd.f32 0.0, %v3280
      %v3282 = vpop.f32.mrb[0].mxu0
      %3283 = vmatprep.mubr.f32.mxu0 %v1937
      %3284 = vmatmul.mubr.f32.gmra.mrb[0].mxu0 %v1936
      %v3285 = vpop.f32.mrb[0].mxu0
      %v3286 = vadd.f32 0.0, %v3285
      %v3287 = vpop.f32.mrb[0].mxu0
      %3288 = vmatprep.mubr.f32.mxu0 %v1939
      %3289 = vmatmul.mubr.f32.gmra.mrb[0].mxu0 %v1938
      %v3290 = vpop.f32.mrb[0].mxu0
      %v3291 = vadd.f32 0.0, %v3290
      %v3292 = vpop.f32.mrb[0].mxu0
      %3293 = vmatprep.mubr.f32.mxu0 %v3206
      %3294 = vmatmul.mubr.f32.gmra.mrb[0].mxu0 %v3205
      %v3295 = vpop.f32.mrb[0].mxu0
      %v3296 = vadd.f32 0.0, %v3295
      %v3297 = vpop.f32.mrb[0].mxu0
      %3298 = vdwg.mxu0
      %3300 = vset.pattern.permute.xlu0 0
      %3301 = vperm.xlu0 %3300, %v3202
      %v3302 = vpop.permute.xlu0 %3301
      %v3304 = vlaneseq
      %v3305 = vshrl.u32 %v3304, 7
      %v3306 = vsub.s32 0, %v3305
      %v3307 = vrot.slane %v3296, %v3306
      %v3308 = vmul.f32 %v3302, %v3307
      %3309 = vset.pattern.permute.xlu0 1
      %3310 = vperm.xlu0 %3309, %v3202
      %v3311 = vpop.permute.xlu0 %3310
      %v3313 = vlaneseq
      %v3314 = vshrl.u32 %v3313, 7
      %v3315 = vsub.s32 1, %v3314
      %v3316 = vrot.slane %v3296, %v3315
      %v3317 = vmul.f32 %v3311, %v3316
      %v3318 = vadd.f32 %v3308, %v3317
      %3319 = vset.pattern.permute.xlu0 2
      %3320 = vperm.xlu0 %3319, %v3202
      %v3321 = vpop.permute.xlu0 %3320
      %v3323 = vlaneseq
      %v3324 = vshrl.u32 %v3323, 7
      %v3325 = vsub.s32 2, %v3324
      %v3326 = vrot.slane %v3296, %v3325
      %v3327 = vmul.f32 %v3321, %v3326
      %v3328 = vadd.f32 %v3318, %v3327
      %3329 = vset.pattern.permute.xlu0 3
      %3330 = vperm.xlu0 %3329, %v3202
      %v3331 = vpop.permute.xlu0 %3330
      %v3333 = vlaneseq
      %v3334 = vshrl.u32 %v3333, 7
      %v3335 = vsub.s32 3, %v3334
      %v3336 = vrot.slane %v3296, %v3335
      %v3337 = vmul.f32 %v3331, %v3336
      %v3338 = vadd.f32 %v3328, %v3337
      %3339 = vmatprep.subr.mxu0 %v2213
      %3340 = vmatpush1.xpose.msra.mxu0 %v2212
      %3341 = vmatprep.subr.mxu0 0.0
      %3342 = vmatpush1.xpose.msra.mxu0 0.0
      %3343 = vmatprep.subr.mxu0 0.0
      %3344 = vmatpush1.xpose.msra.mxu0 0.0
      %3345 = vmatprep.subr.mxu0 0.0
      %3346 = vmatpush1.xpose.msra.mxu0 0.0
      %3347 = vmatprep.subr.mxu0 0.0
      %3348 = vmatpush1.xpose.msra.mxu0 0.0
      %3349 = vmatprep.subr.mxu0 0.0
      %3350 = vmatpush1.xpose.msra.mxu0 0.0
      %3351 = vmatprep.subr.mxu0 0.0
      %3352 = vmatpush1.xpose.msra.mxu0 0.0
      %3353 = vmatprep.subr.mxu0 0.0
      %3354 = vmatpush1.xpose.msra.mxu0 0.0
      %3355 = vmatprep.subr.mxu0 0.0
      %3356 = vmatpush1.xpose.msra.mxu0 0.0
      %3357 = vmatprep.subr.mxu0 0.0
      %3358 = vmatpush1.xpose.msra.mxu0 0.0
      %3359 = vmatprep.subr.mxu0 0.0
      %3360 = vmatpush1.xpose.msra.mxu0 0.0
      %3361 = vmatprep.subr.mxu0 0.0
      %3362 = vmatpush1.xpose.msra.mxu0 0.0
      %3363 = vmatprep.subr.mxu0 0.0
      %3364 = vmatpush1.xpose.msra.mxu0 0.0
      %3365 = vmatprep.subr.mxu0 0.0
      %3366 = vmatpush1.xpose.msra.mxu0 0.0
      %3367 = vmatprep.subr.mxu0 0.0
      %3368 = vmatpush1.xpose.msra.mxu0 0.0
      %3369 = vmatprep.subr.mxu0 0.0
      %3370 = vmatpush1.xpose.msra.mxu0 0.0
      %3371 = vmatprep.subr.mxu0 0.0
      %3372 = vmatpush1.xpose.msra.mxu0 0.0
      %3373 = vmatprep.subr.mxu0 0.0
      %3374 = vmatpush1.xpose.msra.mxu0 0.0
      %3375 = vmatprep.subr.mxu0 0.0
      %3376 = vmatpush1.xpose.msra.mxu0 0.0
      %3377 = vmatprep.subr.mxu0 0.0
      %3378 = vmatpush1.xpose.msra.mxu0 0.0
      %3379 = vmatprep.subr.mxu0 0.0
      %3380 = vmatpush1.xpose.msra.mxu0 0.0
      %3381 = vmatprep.subr.mxu0 0.0
      %3382 = vmatpush1.xpose.msra.mxu0 0.0
      %3383 = vmatprep.subr.mxu0 0.0
      %3384 = vmatpush1.xpose.msra.mxu0 0.0
      %3385 = vmatprep.subr.mxu0 0.0
      %3386 = vmatpush1.xpose.msra.mxu0 0.0
      %3387 = vmatprep.subr.mxu0 0.0
      %3388 = vmatpush1.xpose.msra.mxu0 0.0
      %3389 = vmatprep.subr.mxu0 0.0
      %3390 = vmatpush1.xpose.msra.mxu0 0.0
      %3391 = vmatprep.subr.mxu0 0.0
      %3392 = vmatpush1.xpose.msra.mxu0 0.0
      %3393 = vmatprep.subr.mxu0 0.0
      %3394 = vmatpush1.xpose.msra.mxu0 0.0
      %3395 = vmatprep.subr.mxu0 0.0
      %3396 = vmatpush1.xpose.msra.mxu0 0.0
      %3397 = vmatprep.subr.mxu0 0.0
      %3398 = vmatpush1.xpose.msra.mxu0 0.0
      %3399 = vmatprep.subr.mxu0 0.0
      %3400 = vmatpush1.xpose.msra.mxu0 0.0
      %3401 = vmatprep.subr.mxu0 0.0
      %3402 = vmatpush1.xpose.msra.mxu0 0.0
      %3403 = vmatprep.mubr.f32.mxu0 %v1933
      %3404 = vmatmul.mubr.f32.gmra.mrb[0].mxu0 %v1932
      %v3405 = vpop.f32.mrb[0].mxu0
      %v3406 = vadd.f32 0.0, %v3405
      %v3407 = vpop.f32.mrb[0].mxu0
      %3408 = vmatprep.mubr.f32.mxu0 %v1935
      %3409 = vmatmul.mubr.f32.gmra.mrb[0].mxu0 %v1934
      %v3410 = vpop.f32.mrb[0].mxu0
      %v3411 = vadd.f32 0.0, %v3410
      %v3412 = vpop.f32.mrb[0].mxu0
      %3413 = vmatprep.mubr.f32.mxu0 %v1937
      %3414 = vmatmul.mubr.f32.gmra.mrb[0].mxu0 %v1936
      %v3415 = vpop.f32.mrb[0].mxu0
      %v3416 = vadd.f32 0.0, %v3415
      %v3417 = vpop.f32.mrb[0].mxu0
      %3418 = vmatprep.mubr.f32.mxu0 %v1939
      %3419 = vmatmul.mubr.f32.gmra.mrb[0].mxu0 %v1938
      %v3420 = vpop.f32.mrb[0].mxu0
      %v3421 = vadd.f32 0.0, %v3420
      %v3422 = vpop.f32.mrb[0].mxu0
      %3423 = vdwg.mxu0
      %3425 = vset.pattern.permute.xlu0 0
      %3426 = vperm.xlu0 %3425, %v3406
      %v3427 = vpop.permute.xlu0 %3426
      %3430 = vset.pattern.permute.xlu0 0
      %3431 = vperm.xlu0 %3430, %v3411
      %v3432 = vpop.permute.xlu0 %3431
      %3435 = vset.pattern.permute.xlu0 0
      %3436 = vperm.xlu0 %3435, %v3416
      %v3437 = vpop.permute.xlu0 %3436
      %3440 = vset.pattern.permute.xlu0 0
      %3441 = vperm.xlu0 %3440, %v3421
      %v3442 = vpop.permute.xlu0 %3441
      %v3444 = vlaneseq
      %v3445 = vshrl.u32 %v3444, 7
      %v3446 = vsub.s32 0, %v3445
      %v3447 = vrot.slane %v3338, %v3446
      %v3448 = vmul.f32 %v3427, %v3447
      %v3449 = vmul.f32 %v3432, %v3447
      %v3450 = vmul.f32 %v3437, %v3447
      %v3451 = vmul.f32 %v3442, %v3447
      %3452 = vset.pattern.permute.xlu0 1
      %3453 = vperm.xlu0 %3452, %v3406
      %v3454 = vpop.permute.xlu0 %3453
      %3456 = vset.pattern.permute.xlu0 1
      %3457 = vperm.xlu0 %3456, %v3411
      %v3458 = vpop.permute.xlu0 %3457
      %3460 = vset.pattern.permute.xlu0 1
      %3461 = vperm.xlu0 %3460, %v3416
      %v3462 = vpop.permute.xlu0 %3461
      %3464 = vset.pattern.permute.xlu0 1
      %3465 = vperm.xlu0 %3464, %v3421
      %v3466 = vpop.permute.xlu0 %3465
      %v3468 = vlaneseq
      %v3469 = vshrl.u32 %v3468, 7
      %v3470 = vsub.s32 1, %v3469
      %v3471 = vrot.slane %v3338, %v3470
      %v3472 = vmul.f32 %v3454, %v3471
      %v3473 = vmul.f32 %v3458, %v3471
      %v3474 = vmul.f32 %v3462, %v3471
      %v3475 = vmul.f32 %v3466, %v3471
      %v3476 = vadd.f32 %v3448, %v3472
      %v3477 = vadd.f32 %v3449, %v3473
      %v3478 = vadd.f32 %v3450, %v3474
      %v3479 = vadd.f32 %v3451, %v3475
      %3480 = vset.pattern.permute.xlu0 2
      %3481 = vperm.xlu0 %3480, %v3406
      %v3482 = vpop.permute.xlu0 %3481
      %3484 = vset.pattern.permute.xlu0 2
      %3485 = vperm.xlu0 %3484, %v3411
      %v3486 = vpop.permute.xlu0 %3485
      %3488 = vset.pattern.permute.xlu0 2
      %3489 = vperm.xlu0 %3488, %v3416
      %v3490 = vpop.permute.xlu0 %3489
      %3492 = vset.pattern.permute.xlu0 2
      %3493 = vperm.xlu0 %3492, %v3421
      %v3494 = vpop.permute.xlu0 %3493
      %v3496 = vlaneseq
      %v3497 = vshrl.u32 %v3496, 7
      %v3498 = vsub.s32 2, %v3497
      %v3499 = vrot.slane %v3338, %v3498
      %v3500 = vmul.f32 %v3482, %v3499
      %v3501 = vmul.f32 %v3486, %v3499
      %v3502 = vmul.f32 %v3490, %v3499
      %v3503 = vmul.f32 %v3494, %v3499
      %v3504 = vadd.f32 %v3476, %v3500
      %v3505 = vadd.f32 %v3477, %v3501
      %v3506 = vadd.f32 %v3478, %v3502
      %v3507 = vadd.f32 %v3479, %v3503
      %3508 = vset.pattern.permute.xlu0 3
      %3509 = vperm.xlu0 %3508, %v3406
      %v3510 = vpop.permute.xlu0 %3509
      %3512 = vset.pattern.permute.xlu0 3
      %3513 = vperm.xlu0 %3512, %v3411
      %v3514 = vpop.permute.xlu0 %3513
      %3516 = vset.pattern.permute.xlu0 3
      %3517 = vperm.xlu0 %3516, %v3416
      %v3518 = vpop.permute.xlu0 %3517
      %3520 = vset.pattern.permute.xlu0 3
      %3521 = vperm.xlu0 %3520, %v3421
      %v3522 = vpop.permute.xlu0 %3521
      %v3524 = vlaneseq
      %v3525 = vshrl.u32 %v3524, 7
      %v3526 = vsub.s32 3, %v3525
      %v3527 = vrot.slane %v3338, %v3526
      %v3528 = vmul.f32 %v3510, %v3527
      %v3529 = vmul.f32 %v3514, %v3527
      %v3530 = vmul.f32 %v3518, %v3527
      %v3531 = vmul.f32 %v3522, %v3527
      %v3532 = vadd.f32 %v3504, %v3528
      %v3533 = vadd.f32 %v3505, %v3529
      %v3534 = vadd.f32 %v3506, %v3530
      %v3535 = vadd.f32 %v3507, %v3531
      %3540 = vrot.lane.b32.xlu0 %v3532, 64
      %v3541 = vpop.permute.xlu0 %3540
      %3542 = vrot.lane.b32.xlu0 %v3533, 64
      %v3543 = vpop.permute.xlu0 %3542
      %3544 = vrot.lane.b32.xlu0 %v3534, 64
      %v3545 = vpop.permute.xlu0 %3544
      %3546 = vrot.lane.b32.xlu0 %v3535, 64
      %v3547 = vpop.permute.xlu0 %3546
      %v3552 = vadd.f32 %v1894, %v3541
      %v3553 = vadd.f32 %v1895, %v3543
      %v3554 = vadd.f32 %v1896, %v3545
      %v3555 = vadd.f32 %v1897, %v3547
      %3560 = vrot.lane.b32.xlu0 %v3276, 64
      %v3561 = vpop.permute.xlu0 %3560
      %3562 = vrot.lane.b32.xlu0 %v3281, 64
      %v3563 = vpop.permute.xlu0 %3562
      %3564 = vrot.lane.b32.xlu0 %v3286, 64
      %v3565 = vpop.permute.xlu0 %3564
      %3566 = vrot.lane.b32.xlu0 %v3291, 64
      %v3567 = vpop.permute.xlu0 %3566
      %v3572 = vadd.f32 %v3552, %v3561
      %v3573 = vadd.f32 %v3553, %v3563
      %v3574 = vadd.f32 %v3554, %v3565
      %v3575 = vadd.f32 %v3555, %v3567
      %3576 = vst.msk [vmem:[%s197] sm:$0xff] %vm329, %v3572
      %3577 = vst.msk [vmem:[%s197 + $0x8] sm:$0xff] %vm329, %v3573
      %3578 = vst.msk [vmem:[%s197 + $0x10] sm:$0xff] %vm329, %v3574
      %3579 = vst.msk [vmem:[%s197 + $0x18] sm:$0xff] %vm329, %v3575
      %p3580 = scmp.lt.s32.totalorder %s15, 1
      %s3581 = scalar_select %p3580, %s15, 1
      %s3582 = smul.addr %s3581, 4
      %s3583 = smul.addr %s3582, 8
      %s3584 = scalar_lea.vmem %s4, %s3583
      // Predicated region
      $region37: #{nystrom_multihead_forward.3} parent=35 // pred_check
        %p3585 = pneg %p122
      $region38: #{nystrom_multihead_forward.3} parent=35 // pred_check_branch
        %3587 = sbr.rel (%p3585) target = $region40
      $region39: #{nystrom_multihead_forward.3} parent=35 // pred_region
        _
      $region40: #{nystrom_multihead_forward.3} parent=35 // pred_fallthru
        _
    $region36: #{nystrom_multihead_forward.3} parent=5 // pred_fallthru
      _
    %p3588 = scmp.le.s32.totalorder 2, %s10
    // Predicated region
    $region41: #{nystrom_multihead_forward.3} parent=5 // pred_check
      %p3589 = pneg %p3588
    $region42: #{nystrom_multihead_forward.3} parent=5 // pred_check_branch
      %3591 = sbr.rel (%p3589) target = $region44
    $region43: #{nystrom_multihead_forward.3} parent=5 // pred_region
      %s3592 = ssub.s32 %s10, 2
      // Predicated region
      $region45: #{nystrom_multihead_forward.3} parent=43 // pred_check
        %p3593 = pneg %p128
      $region46: #{nystrom_multihead_forward.3} parent=43 // pred_check_branch
        %3595 = sbr.rel (%p3593) target = $region48
      $region47: #{nystrom_multihead_forward.3} parent=43 // pred_region
        %p3596 = scmp.lt.s32.totalorder %s16, 1
        %s3597 = scalar_select %p3596, %s16, 1
        %s3598 = smul.addr %s3597, 4
        %s3599 = smul.addr %s3598, 8
        %s3600 = scalar_lea.vmem %s4, %s3599
      $region48: #{nystrom_multihead_forward.3} parent=43 // pred_fallthru
        _
    $region44: #{nystrom_multihead_forward.3} parent=5 // pred_fallthru
      _
  $region6: #{nystrom_multihead_forward.3} parent=0 // loop_footer
    %s14 = sadd.s32 1, %s10
  $region7: #{nystrom_multihead_forward.3} parent=0 // loop_footer_branch
    %9 = sbr.rel target = $region3
  $region8: #{nystrom_multihead_forward.3} parent=0 // loop_exit
    _

</llo_original>
